<compile_context>
chip_gen: v7x
topology: tpu7x:2x2x1
jax: 0.10.0
libtpu: 0.0.40
codegen_flags: <defaults>
</compile_context>

<pallas_src>
import functools
import math

import jax
import jax.numpy as jnp
from jax import lax
from jax.experimental import pallas as pl
from jax.experimental.pallas import tpu as pltpu


_VMEM = pl.BlockSpec(memory_space=pltpu.MemorySpace.VMEM)


# ----------------------------------------------------------------------------
# Kernel 1: fused 5-stage conv stack (Conv1d + folded BN + ReLU + MaxPool)^5
# ----------------------------------------------------------------------------

def _bn_relu_pool(acc2d, scale_ref, shift_ref, L_half, Nb, C_out):
    y = jnp.maximum(acc2d * scale_ref[...] + shift_ref[...], 0.0)
    y = y[: 2 * L_half * Nb].reshape(L_half, 2, Nb, C_out)
    return jnp.maximum(y[:, 0], y[:, 1])            # (L_half, Nb, C_out)


def _conv_stage_first(x3d, w_ref, scale_ref, shift_ref):
    """C_in == 1 stage: K broadcast multiply-adds on the VPU (f32)."""
    L_in, Nb, _ = x3d.shape
    K, _, C_out = w_ref.shape
    L_out = L_in - K + 1
    L_half = L_out // 2
    acc = jnp.zeros((L_out, Nb, C_out), jnp.float32)
    for k in range(K):
        acc = acc + x3d[k:k + L_out] * w_ref[k].reshape(1, 1, C_out)
    return _bn_relu_pool(acc.reshape(L_out * Nb, C_out),
                         scale_ref, shift_ref, L_half, Nb, C_out)


def _conv_stage_mxu(h, w_ref, scale_ref, shift_ref):
    """C_in > 1 stage: per-tap MXU matmul on an aligned row window.

    The (L_in, Nb, C_in) block is flattened ONCE; each tap is a static,
    8-aligned row slice of that 2-D view (no per-tap reshape/relayout copies).
    """
    L_in, Nb, C_in = h.shape
    K, _, C_out = w_ref.shape
    L_out = L_in - K + 1
    L_half = L_out // 2
    x2d = h.reshape(L_in * Nb, C_in).astype(jnp.bfloat16)
    acc = jnp.zeros((L_out * Nb, C_out), jnp.float32)
    for k in range(K):
        acc = acc + jnp.dot(x2d[k * Nb:(k + L_out) * Nb, :], w_ref[k],
                            preferred_element_type=jnp.float32)
    return _bn_relu_pool(acc, scale_ref, shift_ref, L_half, Nb, C_out)


def _conv_stack_kernel(x_ref,
                       w1_ref, s1_ref, t1_ref,
                       w2_ref, s2_ref, t2_ref,
                       w3_ref, s3_ref, t3_ref,
                       w4_ref, s4_ref, t4_ref,
                       w5_ref, s5_ref, t5_ref,
                       o_ref):
    h = _conv_stage_first(x_ref[...], w1_ref, s1_ref, t1_ref)
    h = _conv_stage_mxu(h, w2_ref, s2_ref, t2_ref)
    h = _conv_stage_mxu(h, w3_ref, s3_ref, t3_ref)
    h = _conv_stage_mxu(h, w4_ref, s4_ref, t4_ref)
    h = _conv_stage_mxu(h, w5_ref, s5_ref, t5_ref)
    # final conv length is 1 for n_features == 128 -> lane-dense (Nb, 128) store
    o_ref[...] = h[0].astype(o_ref.dtype)


def conv_stack(x, conv_params):
    """x: (L, N, F) f32 -> (L*N, d_x) bf16 conv features."""
    L, N, F = x.shape
    Nb = L * N
    Lc = F
    for k in (6, 3, 3, 3, 3):
        Lc = Lc - k + 1
        Lc = (Lc - 2) // 2 + 1
    C_last = conv_params[-1]["scale"].shape[-1]
    # TODO(synk): general final conv length > 1 needs a transposed in-kernel flatten.
    assert Lc == 1, "fused conv kernel currently assumes final conv length == 1"
    xcol = x.reshape(Nb, F).T.reshape(F, Nb, 1)     # tiny one-time XLA transpose
    args = [xcol]
    for cp in conv_params:
        args += [cp["w"], cp["scale"], cp["shift"]]
    return pl.pallas_call(
        _conv_stack_kernel,
        out_shape=jax.ShapeDtypeStruct((Nb, C_last * Lc), jnp.bfloat16),
        in_specs=[_VMEM] * len(args),
        out_specs=_VMEM,
    )(*args)


# ----------------------------------------------------------------------------
# Kernel 2: encoder mega-kernel (proj+PE | all transformer layers | head)
# ----------------------------------------------------------------------------

def _layer_norm(x, g_row, b_row):
    mu = jnp.mean(x, axis=-1, keepdims=True)
    xc = x - mu
    var = jnp.mean(xc * xc, axis=-1, keepdims=True)
    return xc * lax.rsqrt(var + 1e-5) * g_row + b_row


def _encoder_kernel(xfeat_ref, projw_ref, initb_ref, abias_ref,
                    ln0g_ref, ln0b_ref, wqkv_ref, bqkv_ref, wo_ref, bo_ref,
                    ln1g_ref, ln1b_ref, w1_ref, b1_ref, w2_ref, b2_ref,
                    lnfg_ref, lnfb_ref, o1w_ref, o1b_ref, o2w_ref, o2b_ref,
                    out_ref, xs_ref, *, num_heads):
    E = wo_ref.shape[-1]
    dh = E // num_heads
    lyr = pl.program_id(0)

    # Layer 0 prologue: input projection (sqrt(E) folded into proj_w) + bias + PE.
    @pl.when(lyr == 0)
    def _():
        xs_ref[...] = (jnp.dot(xfeat_ref[...], projw_ref[...],
                               preferred_element_type=jnp.float32)
                       + initb_ref[...])

    x = xs_ref[...]

    # ---- pre-LN multi-head self-attention + residual (all in VMEM) ----
    xn = _layer_norm(x, ln0g_ref[0], ln0b_ref[0])
    qkv = (jnp.dot(xn.astype(jnp.bfloat16), wqkv_ref[0],
                   preferred_element_type=jnp.float32) + bqkv_ref[0])
    wo = wo_ref[0]
    abias = abias_ref[...]                          # blocks cross-batch attention
    proj = jnp.zeros_like(x)
    for h in range(num_heads):                      # unrolled: tiny 2-D matmuls
        q_h = qkv[:, h * dh:(h + 1) * dh].astype(jnp.bfloat16)   # q pre-scaled
        k_h = qkv[:, E + h * dh:E + (h + 1) * dh].astype(jnp.bfloat16)
        v_h = qkv[:, 2 * E + h * dh:2 * E + (h + 1) * dh].astype(jnp.bfloat16)
        s = lax.dot_general(q_h, k_h, (((1,), (1,)), ((), ())),
                            preferred_element_type=jnp.float32) + abias
        s = s - jnp.max(s, axis=-1, keepdims=True)
        p = jnp.exp(s)
        p = p * pl.reciprocal(jnp.sum(p, axis=-1, keepdims=True), approx=True)
        o_h = jnp.dot(p.astype(jnp.bfloat16), v_h,
                      preferred_element_type=jnp.float32)        # (M, dh)
        proj = proj + jnp.dot(o_h.astype(jnp.bfloat16),
                              wo[h * dh:(h + 1) * dh, :],
                              preferred_element_type=jnp.float32)
    x = x + proj + bo_ref[0]

    # ---- pre-LN position-wise FFN + residual ----
    xn = _layer_norm(x, ln1g_ref[0], ln1b_ref[0])
    hdn = jnp.maximum(jnp.dot(xn.astype(jnp.bfloat16), w1_ref[0],
                              preferred_element_type=jnp.float32) + b1_ref[0],
                      0.0)
    x = x + jnp.dot(hdn.astype(jnp.bfloat16), w2_ref[0],
                    preferred_element_type=jnp.float32) + b2_ref[0]
    xs_ref[...] = x

    # Last layer epilogue: final LayerNorm + out_fc1 + ReLU + out_fc2
    # (out_dropout is an eval no-op; cat([h_x], -1) is identity).
    @pl.when(lyr == pl.num_programs(0) - 1)
    def _():
        xn2 = _layer_norm(x, lnfg_ref[...], lnfb_ref[...])
        h1 = jnp.maximum(jnp.dot(xn2.astype(jnp.bfloat16), o1w_ref[...],
                                 preferred_element_type=jnp.float32)
                         + o1b_ref[...], 0.0)
        out_ref[...] = (jnp.dot(h1.astype(jnp.bfloat16), o2w_ref[...],
                                preferred_element_type=jnp.float32)
                        + o2b_ref[...])


def encoder_forward(xfeat, initb, attn_bias, params, num_heads):
    M, E = initb.shape
    nl = params["l_w_qkv"].shape[0]
    odim = params["out_fc2_b"].shape[-1]

    def full_spec(arr):
        shp = arr.shape
        return pl.BlockSpec(shp, lambda i, _n=len(shp): (0,) * _n)

    def layer_spec(arr):
        shp = arr.shape
        return pl.BlockSpec((1,) + shp[1:],
                            lambda i, _n=len(shp) - 1: (i,) + (0,) * _n)

    full_in = [xfeat, params["proj_w"], initb, attn_bias]
    layer_in = [params["l_ln0_g"], params["l_ln0_b"],
                params["l_w_qkv"], params["l_b_qkv"],
                params["l_w_o"], params["l_b_o"],
                params["l_ln1_g"], params["l_ln1_b"],
                params["l_w_fc1"], params["l_b_fc1"],
                params["l_w_fc2"], params["l_b_fc2"]]
    tail_in = [params["ln_g"], params["ln_b"],
               params["out_fc1_w"], params["out_fc1_b"],
               params["out_fc2_w"], params["out_fc2_b"]]
    inputs = full_in + layer_in + tail_in
    in_specs = ([full_spec(a) for a in full_in]
                + [layer_spec(a) for a in layer_in]
                + [full_spec(a) for a in tail_in])

    kernel = functools.partial(_encoder_kernel, num_heads=num_heads)
    return pl.pallas_call(
        kernel,
        out_shape=jax.ShapeDtypeStruct((M, odim), jnp.float32),
        grid_spec=pltpu.PrefetchScalarGridSpec(
            num_scalar_prefetch=0,
            grid=(nl,),
            in_specs=in_specs,
            out_specs=pl.BlockSpec((M, odim), lambda i: (0, 0)),
            scratch_shapes=[pltpu.VMEM((M, E), jnp.float32)]),
        compiler_params=pltpu.CompilerParams(
            dimension_semantics=("arbitrary",)),
    )(*inputs)


# ----------------------------------------------------------------------------
# Model forward (single jit, two Pallas kernels)
# ----------------------------------------------------------------------------

def sinusoidal_positional_embedding(length, dim):
    half = dim // 2
    emb = math.log(10000.0) / (half - 1)
    inv = jnp.exp(jnp.arange(half, dtype=jnp.float32) * -emb)
    pos = jnp.arange(length, dtype=jnp.float32)[:, None] * inv[None, :]
    pe = jnp.concatenate([jnp.sin(pos), jnp.cos(pos)], axis=1)
    if dim % 2 == 1:
        pe = jnp.concatenate([pe, jnp.zeros((length, 1), jnp.float32)], axis=1)
    return pe


@functools.partial(jax.jit, static_argnames=("num_heads",))
def transformer_model_forward(x, params, num_heads):
    L, N, F = x.shape
    M = L * N
    xfeat = conv_stack(x, params["conv"])                        # (M, d_x) bf16

    E = params["proj_b"].shape[-1]
    pe = sinusoidal_positional_embedding(L, E)
    initb = (jnp.broadcast_to(pe[:, None, :], (L, N, E)).reshape(M, E)
             + params["proj_b"])                                 # PE + proj bias
    n_idx = jnp.arange(M, dtype=jnp.int32) % N                   # batch id per row
    attn_bias = jnp.where(n_idx[:, None] == n_idx[None, :],
                          0.0, -1e30).astype(jnp.float32)

    out = encoder_forward(xfeat, initb, attn_bias, params, num_heads)
    return out.reshape(L, N, -1)


# ----------------------------------------------------------------------------
# Deterministic parameter initialization, pre-packed into fused-kernel layouts
# ----------------------------------------------------------------------------

def init_params(key, n_features, embed_dim, hidden_size, output_dim,
                num_layers, num_heads):
    keys = iter(jax.random.split(key, 512))

    def nrm(shape, std=0.02):
        return std * jax.random.normal(next(keys), shape, jnp.float32)

    # conv stack (eval-mode BatchNorm folded into per-channel scale/shift)
    conv_cfg = [(1, 16, 6), (16, 32, 3), (32, 64, 3), (64, 64, 3), (64, 128, 3)]
    conv = []
    for cin, cout, k in conv_cfg:
        w = nrm((cout, cin, k), std=0.1)                 # PyTorch (C_out, C_in, K)
        b = nrm((cout,), std=0.1)
        gamma = 1.0 + nrm((cout,), std=0.05)
        beta = nrm((cout,), std=0.05)
        mean = jnp.zeros((cout,), jnp.float32)           # eval running stats
        var = jnp.ones((cout,), jnp.float32)
        scale = gamma / jnp.sqrt(var + 1e-5)
        shift = (b - mean) * scale + beta
        wk = jnp.transpose(w, (2, 1, 0))                 # (K, C_in, C_out)
        wk = wk.astype(jnp.float32 if cin == 1 else jnp.bfloat16)
        conv.append(dict(w=wk, scale=scale.reshape(1, cout),
                         shift=shift.reshape(1, cout)))

    # same length arithmetic as the PyTorch module's `channels` expression
    Lc = n_features
    Lc = (Lc - 6) + 1
    Lc = (Lc - 2) // 2 + 1
    for _ in range(4):
        Lc = (Lc - 3) + 1
        Lc = (Lc - 2) // 2 + 1
    d_x = 128 * Lc

    E = embed_dim
    nl = num_layers
    scaling = (E // num_heads) ** -0.5

    def lin(din, dout, fold=1.0):
        return fold * nrm((din, dout)), fold * nrm((dout,), std=0.01)

    wqkv_l, bqkv_l, wo_l, bo_l, w1_l, b1_l, w2_l, b2_l = ([] for _ in range(8))
    for _ in range(nl):
        wq, bq = lin(E, E, fold=scaling)                 # q pre-scaled by dh**-0.5
        wk_, bk = lin(E, E)
        wv, bv = lin(E, E)
        wo, bo = lin(E, E)
        w1, b1 = lin(E, 4 * E)
        w2, b2 = lin(4 * E, E)
        wqkv_l.append(jnp.concatenate([wq, wk_, wv], axis=1))
        bqkv_l.append(jnp.concatenate([bq, bk, bv]).reshape(1, 3 * E))
        wo_l.append(wo)
        bo_l.append(bo.reshape(1, E))
        w1_l.append(w1)
        b1_l.append(b1.reshape(1, 4 * E))
        w2_l.append(w2)
        b2_l.append(b2.reshape(1, E))

    proj_w, proj_b = lin(d_x, E, fold=math.sqrt(E))      # sqrt(E) scale folded in
    o1w, o1b = lin(E, hidden_size)
    o2w, o2b = lin(hidden_size, output_dim)

    return dict(
        conv=conv,
        proj_w=proj_w.astype(jnp.bfloat16), proj_b=proj_b.reshape(1, E),
        l_ln0_g=jnp.ones((nl, 1, E), jnp.float32),
        l_ln0_b=jnp.zeros((nl, 1, E), jnp.float32),
        l_w_qkv=jnp.stack(wqkv_l).astype(jnp.bfloat16),
        l_b_qkv=jnp.stack(bqkv_l),
        l_w_o=jnp.stack(wo_l).astype(jnp.bfloat16),
        l_b_o=jnp.stack(bo_l),
        l_ln1_g=jnp.ones((nl, 1, E), jnp.float32),
        l_ln1_b=jnp.zeros((nl, 1, E), jnp.float32),
        l_w_fc1=jnp.stack(w1_l).astype(jnp.bfloat16),
        l_b_fc1=jnp.stack(b1_l),
        l_w_fc2=jnp.stack(w2_l).astype(jnp.bfloat16),
        l_b_fc2=jnp.stack(b2_l),
        ln_g=jnp.ones((1, E), jnp.float32), ln_b=jnp.zeros((1, E), jnp.float32),
        out_fc1_w=o1w.astype(jnp.bfloat16), out_fc1_b=o1b.reshape(1, hidden_size),
        out_fc2_w=o2w.astype(jnp.bfloat16), out_fc2_b=o2b.reshape(1, output_dim),
    )


# ----------------------------------------------------------------------------
# Main
# ----------------------------------------------------------------------------

if __name__ == "__main__":
    time_step, batch_size = 8, 2
    input_dims = [64, 64]            # orig_d_a == orig_d_b -> n_features = 128
    hidden_size = 32
    embed_dim = 32
    output_dim = 16
    num_heads = 4
    num_layers = 2
    n_features = sum(input_dims)

    root = jax.random.PRNGKey(0)
    pkey, dkey = jax.random.split(root)

    params = init_params(pkey, n_features, embed_dim, hidden_size, output_dim,
                         num_layers, num_heads)
    x = jax.random.normal(dkey, (time_step, batch_size, n_features), jnp.float32)

    out = transformer_model_forward(x, params, num_heads=num_heads)
    out = jax.block_until_ready(out)

    assert out.shape == (time_step, batch_size, output_dim), out.shape
    assert bool(jnp.all(jnp.isfinite(out)))
    print("KERNEL_OK")
</pallas_src>

<mosaic_0001>
module attributes {stable_mosaic.version = 11 : i64} {
  func.func @_conv_stack_kernel(%arg0: memref<128x16x1xf32, #tpu.memory_space<vmem>>, %arg1: memref<6x1x16xf32, #tpu.memory_space<vmem>>, %arg2: memref<1x16xf32, #tpu.memory_space<vmem>>, %arg3: memref<1x16xf32, #tpu.memory_space<vmem>>, %arg4: memref<3x16x32xbf16, #tpu.memory_space<vmem>>, %arg5: memref<1x32xf32, #tpu.memory_space<vmem>>, %arg6: memref<1x32xf32, #tpu.memory_space<vmem>>, %arg7: memref<3x32x64xbf16, #tpu.memory_space<vmem>>, %arg8: memref<1x64xf32, #tpu.memory_space<vmem>>, %arg9: memref<1x64xf32, #tpu.memory_space<vmem>>, %arg10: memref<3x64x64xbf16, #tpu.memory_space<vmem>>, %arg11: memref<1x64xf32, #tpu.memory_space<vmem>>, %arg12: memref<1x64xf32, #tpu.memory_space<vmem>>, %arg13: memref<3x64x128xbf16, #tpu.memory_space<vmem>>, %arg14: memref<1x128xf32, #tpu.memory_space<vmem>>, %arg15: memref<1x128xf32, #tpu.memory_space<vmem>>, %arg16: memref<16x128xbf16, #tpu.memory_space<vmem>>) attributes {dimension_semantics = [], scalar_prefetch = 0 : i64, scratch_operands = 0 : i64, tpu.core_type = #tpu.core_type<tc>} {
    %c0 = arith.constant 0 : index
    %c0_0 = arith.constant 0 : index
    %c0_1 = arith.constant 0 : index
    %0 = vector.load %arg0[%c0, %c0_0, %c0_1] : memref<128x16x1xf32, #tpu.memory_space<vmem>>, vector<128x16x1xf32>
    %cst = arith.constant 0.000000e+00 : f32
    %1 = vector.broadcast %cst : f32 to vector<123x16x16xf32>
    %2 = vector.extract_strided_slice %0 {offsets = [0, 0, 0], sizes = [123, 16, 1], strides = [1, 1, 1]} : vector<128x16x1xf32> to vector<123x16x1xf32>
    %c0_2 = arith.constant 0 : index
    %c0_3 = arith.constant 0 : index
    %c0_4 = arith.constant 0 : index
    %3 = vector.load %arg1[%c0_2, %c0_3, %c0_4] : memref<6x1x16xf32, #tpu.memory_space<vmem>>, vector<1x1x16xf32>
    %4 = vector.shape_cast %3 : vector<1x1x16xf32> to vector<1x16xf32>
    %5 = vector.shape_cast %4 : vector<1x16xf32> to vector<1x1x16xf32>
    %6 = vector.broadcast %2 : vector<123x16x1xf32> to vector<123x16x16xf32>
    %7 = vector.broadcast %5 : vector<1x1x16xf32> to vector<123x16x16xf32>
    %8 = arith.mulf %6, %7 : vector<123x16x16xf32>
    %9 = arith.addf %1, %8 : vector<123x16x16xf32>
    %10 = vector.extract_strided_slice %0 {offsets = [1, 0, 0], sizes = [123, 16, 1], strides = [1, 1, 1]} : vector<128x16x1xf32> to vector<123x16x1xf32>
    %c1 = arith.constant 1 : index
    %c0_5 = arith.constant 0 : index
    %c0_6 = arith.constant 0 : index
    %11 = vector.load %arg1[%c1, %c0_5, %c0_6] : memref<6x1x16xf32, #tpu.memory_space<vmem>>, vector<1x1x16xf32>
    %12 = vector.shape_cast %11 : vector<1x1x16xf32> to vector<1x16xf32>
    %13 = vector.shape_cast %12 : vector<1x16xf32> to vector<1x1x16xf32>
    %14 = vector.broadcast %10 : vector<123x16x1xf32> to vector<123x16x16xf32>
    %15 = vector.broadcast %13 : vector<1x1x16xf32> to vector<123x16x16xf32>
    %16 = arith.mulf %14, %15 : vector<123x16x16xf32>
    %17 = arith.addf %9, %16 : vector<123x16x16xf32>
    %18 = vector.extract_strided_slice %0 {offsets = [2, 0, 0], sizes = [123, 16, 1], strides = [1, 1, 1]} : vector<128x16x1xf32> to vector<123x16x1xf32>
    %c2 = arith.constant 2 : index
    %c0_7 = arith.constant 0 : index
    %c0_8 = arith.constant 0 : index
    %19 = vector.load %arg1[%c2, %c0_7, %c0_8] : memref<6x1x16xf32, #tpu.memory_space<vmem>>, vector<1x1x16xf32>
    %20 = vector.shape_cast %19 : vector<1x1x16xf32> to vector<1x16xf32>
    %21 = vector.shape_cast %20 : vector<1x16xf32> to vector<1x1x16xf32>
    %22 = vector.broadcast %18 : vector<123x16x1xf32> to vector<123x16x16xf32>
    %23 = vector.broadcast %21 : vector<1x1x16xf32> to vector<123x16x16xf32>
    %24 = arith.mulf %22, %23 : vector<123x16x16xf32>
    %25 = arith.addf %17, %24 : vector<123x16x16xf32>
    %26 = vector.extract_strided_slice %0 {offsets = [3, 0, 0], sizes = [123, 16, 1], strides = [1, 1, 1]} : vector<128x16x1xf32> to vector<123x16x1xf32>
    %c3 = arith.constant 3 : index
    %c0_9 = arith.constant 0 : index
    %c0_10 = arith.constant 0 : index
    %27 = vector.load %arg1[%c3, %c0_9, %c0_10] : memref<6x1x16xf32, #tpu.memory_space<vmem>>, vector<1x1x16xf32>
    %28 = vector.shape_cast %27 : vector<1x1x16xf32> to vector<1x16xf32>
    %29 = vector.shape_cast %28 : vector<1x16xf32> to vector<1x1x16xf32>
    %30 = vector.broadcast %26 : vector<123x16x1xf32> to vector<123x16x16xf32>
    %31 = vector.broadcast %29 : vector<1x1x16xf32> to vector<123x16x16xf32>
    %32 = arith.mulf %30, %31 : vector<123x16x16xf32>
    %33 = arith.addf %25, %32 : vector<123x16x16xf32>
    %34 = vector.extract_strided_slice %0 {offsets = [4, 0, 0], sizes = [123, 16, 1], strides = [1, 1, 1]} : vector<128x16x1xf32> to vector<123x16x1xf32>
    %c4 = arith.constant 4 : index
    %c0_11 = arith.constant 0 : index
    %c0_12 = arith.constant 0 : index
    %35 = vector.load %arg1[%c4, %c0_11, %c0_12] : memref<6x1x16xf32, #tpu.memory_space<vmem>>, vector<1x1x16xf32>
    %36 = vector.shape_cast %35 : vector<1x1x16xf32> to vector<1x16xf32>
    %37 = vector.shape_cast %36 : vector<1x16xf32> to vector<1x1x16xf32>
    %38 = vector.broadcast %34 : vector<123x16x1xf32> to vector<123x16x16xf32>
    %39 = vector.broadcast %37 : vector<1x1x16xf32> to vector<123x16x16xf32>
    %40 = arith.mulf %38, %39 : vector<123x16x16xf32>
    %41 = arith.addf %33, %40 : vector<123x16x16xf32>
    %42 = vector.extract_strided_slice %0 {offsets = [5, 0, 0], sizes = [123, 16, 1], strides = [1, 1, 1]} : vector<128x16x1xf32> to vector<123x16x1xf32>
    %c5 = arith.constant 5 : index
    %c0_13 = arith.constant 0 : index
    %c0_14 = arith.constant 0 : index
    %43 = vector.load %arg1[%c5, %c0_13, %c0_14] : memref<6x1x16xf32, #tpu.memory_space<vmem>>, vector<1x1x16xf32>
    %44 = vector.shape_cast %43 : vector<1x1x16xf32> to vector<1x16xf32>
    %45 = vector.shape_cast %44 : vector<1x16xf32> to vector<1x1x16xf32>
    %46 = vector.broadcast %42 : vector<123x16x1xf32> to vector<123x16x16xf32>
    %47 = vector.broadcast %45 : vector<1x1x16xf32> to vector<123x16x16xf32>
    %48 = arith.mulf %46, %47 : vector<123x16x16xf32>
    %49 = arith.addf %41, %48 : vector<123x16x16xf32>
    %50 = vector.shape_cast %49 : vector<123x16x16xf32> to vector<1968x16xf32>
    %c0_15 = arith.constant 0 : index
    %c0_16 = arith.constant 0 : index
    %51 = vector.load %arg2[%c0_15, %c0_16] : memref<1x16xf32, #tpu.memory_space<vmem>>, vector<1x16xf32>
    %52 = vector.broadcast %51 : vector<1x16xf32> to vector<1968x16xf32>
    %53 = arith.mulf %50, %52 : vector<1968x16xf32>
    %c0_17 = arith.constant 0 : index
    %c0_18 = arith.constant 0 : index
    %54 = vector.load %arg3[%c0_17, %c0_18] : memref<1x16xf32, #tpu.memory_space<vmem>>, vector<1x16xf32>
    %55 = vector.broadcast %54 : vector<1x16xf32> to vector<1968x16xf32>
    %56 = arith.addf %53, %55 : vector<1968x16xf32>
    %cst_19 = arith.constant 0.000000e+00 : f32
    %57 = vector.broadcast %cst_19 : f32 to vector<1968x16xf32>
    %58 = arith.maximumf %56, %57 : vector<1968x16xf32>
    %59 = vector.extract_strided_slice %58 {offsets = [0, 0], sizes = [1952, 16], strides = [1, 1]} : vector<1968x16xf32> to vector<1952x16xf32>
    %60 = vector.shape_cast %59 : vector<1952x16xf32> to vector<61x2x16x16xf32>
    %61 = vector.extract_strided_slice %60 {offsets = [0, 0, 0, 0], sizes = [61, 1, 16, 16], strides = [1, 1, 1, 1]} : vector<61x2x16x16xf32> to vector<61x1x16x16xf32>
    %62 = vector.shape_cast %61 : vector<61x1x16x16xf32> to vector<61x16x16xf32>
    %63 = vector.extract_strided_slice %60 {offsets = [0, 1, 0, 0], sizes = [61, 1, 16, 16], strides = [1, 1, 1, 1]} : vector<61x2x16x16xf32> to vector<61x1x16x16xf32>
    %64 = vector.shape_cast %63 : vector<61x1x16x16xf32> to vector<61x16x16xf32>
    %65 = arith.maximumf %62, %64 : vector<61x16x16xf32>
    %66 = vector.shape_cast %65 : vector<61x16x16xf32> to vector<976x16xf32>
    %67 = arith.truncf %66 : vector<976x16xf32> to vector<976x16xbf16>
    %cst_20 = arith.constant 0.000000e+00 : f32
    %68 = vector.broadcast %cst_20 : f32 to vector<944x32xf32>
    %69 = vector.extract_strided_slice %67 {offsets = [0, 0], sizes = [944, 16], strides = [1, 1]} : vector<976x16xbf16> to vector<944x16xbf16>
    %c0_21 = arith.constant 0 : index
    %c0_22 = arith.constant 0 : index
    %c0_23 = arith.constant 0 : index
    %70 = vector.load %arg4[%c0_21, %c0_22, %c0_23] : memref<3x16x32xbf16, #tpu.memory_space<vmem>>, vector<1x16x32xbf16>
    %71 = vector.shape_cast %70 : vector<1x16x32xbf16> to vector<16x32xbf16>
    %cst_24 = arith.constant dense<0.000000e+00> : vector<944x32xf32>
    %72 = tpu.matmul %69, %71, %cst_24 {dimension_numbers = #tpu.dot_dimension_numbers<[1], [0], [0], [1], [0, 0, 1, 1], [], []>} : vector<944x16xbf16>, vector<16x32xbf16>, vector<944x32xf32> -> vector<944x32xf32>
    %73 = arith.addf %68, %72 : vector<944x32xf32>
    %74 = vector.extract_strided_slice %67 {offsets = [16, 0], sizes = [944, 16], strides = [1, 1]} : vector<976x16xbf16> to vector<944x16xbf16>
    %c1_25 = arith.constant 1 : index
    %c0_26 = arith.constant 0 : index
    %c0_27 = arith.constant 0 : index
    %75 = vector.load %arg4[%c1_25, %c0_26, %c0_27] : memref<3x16x32xbf16, #tpu.memory_space<vmem>>, vector<1x16x32xbf16>
    %76 = vector.shape_cast %75 : vector<1x16x32xbf16> to vector<16x32xbf16>
    %cst_28 = arith.constant dense<0.000000e+00> : vector<944x32xf32>
    %77 = tpu.matmul %74, %76, %cst_28 {dimension_numbers = #tpu.dot_dimension_numbers<[1], [0], [0], [1], [0, 0, 1, 1], [], []>} : vector<944x16xbf16>, vector<16x32xbf16>, vector<944x32xf32> -> vector<944x32xf32>
    %78 = arith.addf %73, %77 : vector<944x32xf32>
    %79 = vector.extract_strided_slice %67 {offsets = [32, 0], sizes = [944, 16], strides = [1, 1]} : vector<976x16xbf16> to vector<944x16xbf16>
    %c2_29 = arith.constant 2 : index
    %c0_30 = arith.constant 0 : index
    %c0_31 = arith.constant 0 : index
    %80 = vector.load %arg4[%c2_29, %c0_30, %c0_31] : memref<3x16x32xbf16, #tpu.memory_space<vmem>>, vector<1x16x32xbf16>
    %81 = vector.shape_cast %80 : vector<1x16x32xbf16> to vector<16x32xbf16>
    %cst_32 = arith.constant dense<0.000000e+00> : vector<944x32xf32>
    %82 = tpu.matmul %79, %81, %cst_32 {dimension_numbers = #tpu.dot_dimension_numbers<[1], [0], [0], [1], [0, 0, 1, 1], [], []>} : vector<944x16xbf16>, vector<16x32xbf16>, vector<944x32xf32> -> vector<944x32xf32>
    %83 = arith.addf %78, %82 : vector<944x32xf32>
    %c0_33 = arith.constant 0 : index
    %c0_34 = arith.constant 0 : index
    %84 = vector.load %arg5[%c0_33, %c0_34] : memref<1x32xf32, #tpu.memory_space<vmem>>, vector<1x32xf32>
    %85 = vector.broadcast %84 : vector<1x32xf32> to vector<944x32xf32>
    %86 = arith.mulf %83, %85 : vector<944x32xf32>
    %c0_35 = arith.constant 0 : index
    %c0_36 = arith.constant 0 : index
    %87 = vector.load %arg6[%c0_35, %c0_36] : memref<1x32xf32, #tpu.memory_space<vmem>>, vector<1x32xf32>
    %88 = vector.broadcast %87 : vector<1x32xf32> to vector<944x32xf32>
    %89 = arith.addf %86, %88 : vector<944x32xf32>
    %cst_37 = arith.constant 0.000000e+00 : f32
    %90 = vector.broadcast %cst_37 : f32 to vector<944x32xf32>
    %91 = arith.maximumf %89, %90 : vector<944x32xf32>
    %92 = vector.extract_strided_slice %91 {offsets = [0, 0], sizes = [928, 32], strides = [1, 1]} : vector<944x32xf32> to vector<928x32xf32>
    %93 = vector.shape_cast %92 : vector<928x32xf32> to vector<29x2x16x32xf32>
    %94 = vector.extract_strided_slice %93 {offsets = [0, 0, 0, 0], sizes = [29, 1, 16, 32], strides = [1, 1, 1, 1]} : vector<29x2x16x32xf32> to vector<29x1x16x32xf32>
    %95 = vector.shape_cast %94 : vector<29x1x16x32xf32> to vector<29x16x32xf32>
    %96 = vector.extract_strided_slice %93 {offsets = [0, 1, 0, 0], sizes = [29, 1, 16, 32], strides = [1, 1, 1, 1]} : vector<29x2x16x32xf32> to vector<29x1x16x32xf32>
    %97 = vector.shape_cast %96 : vector<29x1x16x32xf32> to vector<29x16x32xf32>
    %98 = arith.maximumf %95, %97 : vector<29x16x32xf32>
    %99 = vector.shape_cast %98 : vector<29x16x32xf32> to vector<464x32xf32>
    %100 = arith.truncf %99 : vector<464x32xf32> to vector<464x32xbf16>
    %cst_38 = arith.constant 0.000000e+00 : f32
    %101 = vector.broadcast %cst_38 : f32 to vector<432x64xf32>
    %102 = vector.extract_strided_slice %100 {offsets = [0, 0], sizes = [432, 32], strides = [1, 1]} : vector<464x32xbf16> to vector<432x32xbf16>
    %c0_39 = arith.constant 0 : index
    %c0_40 = arith.constant 0 : index
    %c0_41 = arith.constant 0 : index
    %103 = vector.load %arg7[%c0_39, %c0_40, %c0_41] : memref<3x32x64xbf16, #tpu.memory_space<vmem>>, vector<1x32x64xbf16>
    %104 = vector.shape_cast %103 : vector<1x32x64xbf16> to vector<32x64xbf16>
    %cst_42 = arith.constant dense<0.000000e+00> : vector<432x64xf32>
    %105 = tpu.matmul %102, %104, %cst_42 {dimension_numbers = #tpu.dot_dimension_numbers<[1], [0], [0], [1], [0, 0, 1, 1], [], []>} : vector<432x32xbf16>, vector<32x64xbf16>, vector<432x64xf32> -> vector<432x64xf32>
    %106 = arith.addf %101, %105 : vector<432x64xf32>
    %107 = vector.extract_strided_slice %100 {offsets = [16, 0], sizes = [432, 32], strides = [1, 1]} : vector<464x32xbf16> to vector<432x32xbf16>
    %c1_43 = arith.constant 1 : index
    %c0_44 = arith.constant 0 : index
    %c0_45 = arith.constant 0 : index
    %108 = vector.load %arg7[%c1_43, %c0_44, %c0_45] : memref<3x32x64xbf16, #tpu.memory_space<vmem>>, vector<1x32x64xbf16>
    %109 = vector.shape_cast %108 : vector<1x32x64xbf16> to vector<32x64xbf16>
    %cst_46 = arith.constant dense<0.000000e+00> : vector<432x64xf32>
    %110 = tpu.matmul %107, %109, %cst_46 {dimension_numbers = #tpu.dot_dimension_numbers<[1], [0], [0], [1], [0, 0, 1, 1], [], []>} : vector<432x32xbf16>, vector<32x64xbf16>, vector<432x64xf32> -> vector<432x64xf32>
    %111 = arith.addf %106, %110 : vector<432x64xf32>
    %112 = vector.extract_strided_slice %100 {offsets = [32, 0], sizes = [432, 32], strides = [1, 1]} : vector<464x32xbf16> to vector<432x32xbf16>
    %c2_47 = arith.constant 2 : index
    %c0_48 = arith.constant 0 : index
    %c0_49 = arith.constant 0 : index
    %113 = vector.load %arg7[%c2_47, %c0_48, %c0_49] : memref<3x32x64xbf16, #tpu.memory_space<vmem>>, vector<1x32x64xbf16>
    %114 = vector.shape_cast %113 : vector<1x32x64xbf16> to vector<32x64xbf16>
    %cst_50 = arith.constant dense<0.000000e+00> : vector<432x64xf32>
    %115 = tpu.matmul %112, %114, %cst_50 {dimension_numbers = #tpu.dot_dimension_numbers<[1], [0], [0], [1], [0, 0, 1, 1], [], []>} : vector<432x32xbf16>, vector<32x64xbf16>, vector<432x64xf32> -> vector<432x64xf32>
    %116 = arith.addf %111, %115 : vector<432x64xf32>
    %c0_51 = arith.constant 0 : index
    %c0_52 = arith.constant 0 : index
    %117 = vector.load %arg8[%c0_51, %c0_52] : memref<1x64xf32, #tpu.memory_space<vmem>>, vector<1x64xf32>
    %118 = vector.broadcast %117 : vector<1x64xf32> to vector<432x64xf32>
    %119 = arith.mulf %116, %118 : vector<432x64xf32>
    %c0_53 = arith.constant 0 : index
    %c0_54 = arith.constant 0 : index
    %120 = vector.load %arg9[%c0_53, %c0_54] : memref<1x64xf32, #tpu.memory_space<vmem>>, vector<1x64xf32>
    %121 = vector.broadcast %120 : vector<1x64xf32> to vector<432x64xf32>
    %122 = arith.addf %119, %121 : vector<432x64xf32>
    %cst_55 = arith.constant 0.000000e+00 : f32
    %123 = vector.broadcast %cst_55 : f32 to vector<432x64xf32>
    %124 = arith.maximumf %122, %123 : vector<432x64xf32>
    %125 = vector.extract_strided_slice %124 {offsets = [0, 0], sizes = [416, 64], strides = [1, 1]} : vector<432x64xf32> to vector<416x64xf32>
    %126 = vector.shape_cast %125 : vector<416x64xf32> to vector<13x2x16x64xf32>
    %127 = vector.extract_strided_slice %126 {offsets = [0, 0, 0, 0], sizes = [13, 1, 16, 64], strides = [1, 1, 1, 1]} : vector<13x2x16x64xf32> to vector<13x1x16x64xf32>
    %128 = vector.shape_cast %127 : vector<13x1x16x64xf32> to vector<13x16x64xf32>
    %129 = vector.extract_strided_slice %126 {offsets = [0, 1, 0, 0], sizes = [13, 1, 16, 64], strides = [1, 1, 1, 1]} : vector<13x2x16x64xf32> to vector<13x1x16x64xf32>
    %130 = vector.shape_cast %129 : vector<13x1x16x64xf32> to vector<13x16x64xf32>
    %131 = arith.maximumf %128, %130 : vector<13x16x64xf32>
    %132 = vector.shape_cast %131 : vector<13x16x64xf32> to vector<208x64xf32>
    %133 = arith.truncf %132 : vector<208x64xf32> to vector<208x64xbf16>
    %cst_56 = arith.constant 0.000000e+00 : f32
    %134 = vector.broadcast %cst_56 : f32 to vector<176x64xf32>
    %135 = vector.extract_strided_slice %133 {offsets = [0, 0], sizes = [176, 64], strides = [1, 1]} : vector<208x64xbf16> to vector<176x64xbf16>
    %c0_57 = arith.constant 0 : index
    %c0_58 = arith.constant 0 : index
    %c0_59 = arith.constant 0 : index
    %136 = vector.load %arg10[%c0_57, %c0_58, %c0_59] : memref<3x64x64xbf16, #tpu.memory_space<vmem>>, vector<1x64x64xbf16>
    %137 = vector.shape_cast %136 : vector<1x64x64xbf16> to vector<64x64xbf16>
    %cst_60 = arith.constant dense<0.000000e+00> : vector<176x64xf32>
    %138 = tpu.matmul %135, %137, %cst_60 {dimension_numbers = #tpu.dot_dimension_numbers<[1], [0], [0], [1], [0, 0, 1, 1], [], []>} : vector<176x64xbf16>, vector<64x64xbf16>, vector<176x64xf32> -> vector<176x64xf32>
    %139 = arith.addf %134, %138 : vector<176x64xf32>
    %140 = vector.extract_strided_slice %133 {offsets = [16, 0], sizes = [176, 64], strides = [1, 1]} : vector<208x64xbf16> to vector<176x64xbf16>
    %c1_61 = arith.constant 1 : index
    %c0_62 = arith.constant 0 : index
    %c0_63 = arith.constant 0 : index
    %141 = vector.load %arg10[%c1_61, %c0_62, %c0_63] : memref<3x64x64xbf16, #tpu.memory_space<vmem>>, vector<1x64x64xbf16>
    %142 = vector.shape_cast %141 : vector<1x64x64xbf16> to vector<64x64xbf16>
    %cst_64 = arith.constant dense<0.000000e+00> : vector<176x64xf32>
    %143 = tpu.matmul %140, %142, %cst_64 {dimension_numbers = #tpu.dot_dimension_numbers<[1], [0], [0], [1], [0, 0, 1, 1], [], []>} : vector<176x64xbf16>, vector<64x64xbf16>, vector<176x64xf32> -> vector<176x64xf32>
    %144 = arith.addf %139, %143 : vector<176x64xf32>
    %145 = vector.extract_strided_slice %133 {offsets = [32, 0], sizes = [176, 64], strides = [1, 1]} : vector<208x64xbf16> to vector<176x64xbf16>
    %c2_65 = arith.constant 2 : index
    %c0_66 = arith.constant 0 : index
    %c0_67 = arith.constant 0 : index
    %146 = vector.load %arg10[%c2_65, %c0_66, %c0_67] : memref<3x64x64xbf16, #tpu.memory_space<vmem>>, vector<1x64x64xbf16>
    %147 = vector.shape_cast %146 : vector<1x64x64xbf16> to vector<64x64xbf16>
    %cst_68 = arith.constant dense<0.000000e+00> : vector<176x64xf32>
    %148 = tpu.matmul %145, %147, %cst_68 {dimension_numbers = #tpu.dot_dimension_numbers<[1], [0], [0], [1], [0, 0, 1, 1], [], []>} : vector<176x64xbf16>, vector<64x64xbf16>, vector<176x64xf32> -> vector<176x64xf32>
    %149 = arith.addf %144, %148 : vector<176x64xf32>
    %c0_69 = arith.constant 0 : index
    %c0_70 = arith.constant 0 : index
    %150 = vector.load %arg11[%c0_69, %c0_70] : memref<1x64xf32, #tpu.memory_space<vmem>>, vector<1x64xf32>
    %151 = vector.broadcast %150 : vector<1x64xf32> to vector<176x64xf32>
    %152 = arith.mulf %149, %151 : vector<176x64xf32>
    %c0_71 = arith.constant 0 : index
    %c0_72 = arith.constant 0 : index
    %153 = vector.load %arg12[%c0_71, %c0_72] : memref<1x64xf32, #tpu.memory_space<vmem>>, vector<1x64xf32>
    %154 = vector.broadcast %153 : vector<1x64xf32> to vector<176x64xf32>
    %155 = arith.addf %152, %154 : vector<176x64xf32>
    %cst_73 = arith.constant 0.000000e+00 : f32
    %156 = vector.broadcast %cst_73 : f32 to vector<176x64xf32>
    %157 = arith.maximumf %155, %156 : vector<176x64xf32>
    %158 = vector.extract_strided_slice %157 {offsets = [0, 0], sizes = [160, 64], strides = [1, 1]} : vector<176x64xf32> to vector<160x64xf32>
    %159 = vector.shape_cast %158 : vector<160x64xf32> to vector<5x2x16x64xf32>
    %160 = vector.extract_strided_slice %159 {offsets = [0, 0, 0, 0], sizes = [5, 1, 16, 64], strides = [1, 1, 1, 1]} : vector<5x2x16x64xf32> to vector<5x1x16x64xf32>
    %161 = vector.shape_cast %160 : vector<5x1x16x64xf32> to vector<5x16x64xf32>
    %162 = vector.extract_strided_slice %159 {offsets = [0, 1, 0, 0], sizes = [5, 1, 16, 64], strides = [1, 1, 1, 1]} : vector<5x2x16x64xf32> to vector<5x1x16x64xf32>
    %163 = vector.shape_cast %162 : vector<5x1x16x64xf32> to vector<5x16x64xf32>
    %164 = arith.maximumf %161, %163 : vector<5x16x64xf32>
    %165 = vector.shape_cast %164 : vector<5x16x64xf32> to vector<80x64xf32>
    %166 = arith.truncf %165 : vector<80x64xf32> to vector<80x64xbf16>
    %cst_74 = arith.constant 0.000000e+00 : f32
    %167 = vector.broadcast %cst_74 : f32 to vector<48x128xf32>
    %168 = vector.extract_strided_slice %166 {offsets = [0, 0], sizes = [48, 64], strides = [1, 1]} : vector<80x64xbf16> to vector<48x64xbf16>
    %c0_75 = arith.constant 0 : index
    %c0_76 = arith.constant 0 : index
    %c0_77 = arith.constant 0 : index
    %169 = vector.load %arg13[%c0_75, %c0_76, %c0_77] : memref<3x64x128xbf16, #tpu.memory_space<vmem>>, vector<1x64x128xbf16>
    %170 = vector.shape_cast %169 : vector<1x64x128xbf16> to vector<64x128xbf16>
    %cst_78 = arith.constant dense<0.000000e+00> : vector<48x128xf32>
    %171 = tpu.matmul %168, %170, %cst_78 {dimension_numbers = #tpu.dot_dimension_numbers<[1], [0], [0], [1], [0, 0, 1, 1], [], []>} : vector<48x64xbf16>, vector<64x128xbf16>, vector<48x128xf32> -> vector<48x128xf32>
    %172 = arith.addf %167, %171 : vector<48x128xf32>
    %173 = vector.extract_strided_slice %166 {offsets = [16, 0], sizes = [48, 64], strides = [1, 1]} : vector<80x64xbf16> to vector<48x64xbf16>
    %c1_79 = arith.constant 1 : index
    %c0_80 = arith.constant 0 : index
    %c0_81 = arith.constant 0 : index
    %174 = vector.load %arg13[%c1_79, %c0_80, %c0_81] : memref<3x64x128xbf16, #tpu.memory_space<vmem>>, vector<1x64x128xbf16>
    %175 = vector.shape_cast %174 : vector<1x64x128xbf16> to vector<64x128xbf16>
    %cst_82 = arith.constant dense<0.000000e+00> : vector<48x128xf32>
    %176 = tpu.matmul %173, %175, %cst_82 {dimension_numbers = #tpu.dot_dimension_numbers<[1], [0], [0], [1], [0, 0, 1, 1], [], []>} : vector<48x64xbf16>, vector<64x128xbf16>, vector<48x128xf32> -> vector<48x128xf32>
    %177 = arith.addf %172, %176 : vector<48x128xf32>
    %178 = vector.extract_strided_slice %166 {offsets = [32, 0], sizes = [48, 64], strides = [1, 1]} : vector<80x64xbf16> to vector<48x64xbf16>
    %c2_83 = arith.constant 2 : index
    %c0_84 = arith.constant 0 : index
    %c0_85 = arith.constant 0 : index
    %179 = vector.load %arg13[%c2_83, %c0_84, %c0_85] : memref<3x64x128xbf16, #tpu.memory_space<vmem>>, vector<1x64x128xbf16>
    %180 = vector.shape_cast %179 : vector<1x64x128xbf16> to vector<64x128xbf16>
    %cst_86 = arith.constant dense<0.000000e+00> : vector<48x128xf32>
    %181 = tpu.matmul %178, %180, %cst_86 {dimension_numbers = #tpu.dot_dimension_numbers<[1], [0], [0], [1], [0, 0, 1, 1], [], []>} : vector<48x64xbf16>, vector<64x128xbf16>, vector<48x128xf32> -> vector<48x128xf32>
    %182 = arith.addf %177, %181 : vector<48x128xf32>
    %c0_87 = arith.constant 0 : index
    %c0_88 = arith.constant 0 : index
    %183 = vector.load %arg14[%c0_87, %c0_88] : memref<1x128xf32, #tpu.memory_space<vmem>>, vector<1x128xf32>
    %184 = vector.broadcast %183 : vector<1x128xf32> to vector<48x128xf32>
    %185 = arith.mulf %182, %184 : vector<48x128xf32>
    %c0_89 = arith.constant 0 : index
    %c0_90 = arith.constant 0 : index
    %186 = vector.load %arg15[%c0_89, %c0_90] : memref<1x128xf32, #tpu.memory_space<vmem>>, vector<1x128xf32>
    %187 = vector.broadcast %186 : vector<1x128xf32> to vector<48x128xf32>
    %188 = arith.addf %185, %187 : vector<48x128xf32>
    %cst_91 = arith.constant 0.000000e+00 : f32
    %189 = vector.broadcast %cst_91 : f32 to vector<48x128xf32>
    %190 = arith.maximumf %188, %189 : vector<48x128xf32>
    %191 = vector.extract_strided_slice %190 {offsets = [0, 0], sizes = [32, 128], strides = [1, 1]} : vector<48x128xf32> to vector<32x128xf32>
    %192 = vector.shape_cast %191 : vector<32x128xf32> to vector<1x2x16x128xf32>
    %193 = vector.extract_strided_slice %192 {offsets = [0, 0, 0, 0], sizes = [1, 1, 16, 128], strides = [1, 1, 1, 1]} : vector<1x2x16x128xf32> to vector<1x1x16x128xf32>
    %194 = vector.shape_cast %193 : vector<1x1x16x128xf32> to vector<1x16x128xf32>
    %195 = vector.extract_strided_slice %192 {offsets = [0, 1, 0, 0], sizes = [1, 1, 16, 128], strides = [1, 1, 1, 1]} : vector<1x2x16x128xf32> to vector<1x1x16x128xf32>
    %196 = vector.shape_cast %195 : vector<1x1x16x128xf32> to vector<1x16x128xf32>
    %197 = arith.maximumf %194, %196 : vector<1x16x128xf32>
    %198 = vector.shape_cast %197 : vector<1x16x128xf32> to vector<16x128xf32>
    %199 = arith.truncf %198 : vector<16x128xf32> to vector<16x128xbf16>
    %c0_92 = arith.constant 0 : index
    %c0_93 = arith.constant 0 : index
    %200 = vector.load %arg16[%c0_92, %c0_93] : memref<16x128xbf16, #tpu.memory_space<vmem>>, vector<16x128xbf16>
    tpu.vector_store %arg16[%c0_92, %c0_93], %199 {strides = array<i32>} : memref<16x128xbf16, #tpu.memory_space<vmem>>, vector<16x128xbf16>,
    return
  }
}

module attributes {stable_mosaic.version = 11 : i64} {
  func.func @_encoder_kernel(%arg0: i32, %arg1: memref<16x128xbf16, #tpu.memory_space<vmem>>, %arg2: memref<128x32xbf16, #tpu.memory_space<vmem>>, %arg3: memref<16x32xf32, #tpu.memory_space<vmem>>, %arg4: memref<16x16xf32, #tpu.memory_space<vmem>>, %arg5: memref<1x1x32xf32, #tpu.memory_space<vmem>>, %arg6: memref<1x1x32xf32, #tpu.memory_space<vmem>>, %arg7: memref<1x32x96xbf16, #tpu.memory_space<vmem>>, %arg8: memref<1x1x96xf32, #tpu.memory_space<vmem>>, %arg9: memref<1x32x32xbf16, #tpu.memory_space<vmem>>, %arg10: memref<1x1x32xf32, #tpu.memory_space<vmem>>, %arg11: memref<1x1x32xf32, #tpu.memory_space<vmem>>, %arg12: memref<1x1x32xf32, #tpu.memory_space<vmem>>, %arg13: memref<1x32x128xbf16, #tpu.memory_space<vmem>>, %arg14: memref<1x1x128xf32, #tpu.memory_space<vmem>>, %arg15: memref<1x128x32xbf16, #tpu.memory_space<vmem>>, %arg16: memref<1x1x32xf32, #tpu.memory_space<vmem>>, %arg17: memref<1x32xf32, #tpu.memory_space<vmem>>, %arg18: memref<1x32xf32, #tpu.memory_space<vmem>>, %arg19: memref<32x32xbf16, #tpu.memory_space<vmem>>, %arg20: memref<1x32xf32, #tpu.memory_space<vmem>>, %arg21: memref<32x16xbf16, #tpu.memory_space<vmem>>, %arg22: memref<1x16xf32, #tpu.memory_space<vmem>>, %arg23: memref<16x16xf32, #tpu.memory_space<vmem>>, %arg24: memref<16x32xf32, #tpu.memory_space<vmem>>) attributes {dimension_semantics = [#tpu.dimension_semantics<arbitrary>], iteration_bounds = array<i64: 2>, scalar_prefetch = 0 : i64, scratch_operands = 1 : i64, tpu.core_type = #tpu.core_type<tc>, window_params = [{pipeline_mode = #tpu.pipeline_mode<synchronous>, transform_indices = @transform_0, window_bounds = array<i64: 16, 128>}, {pipeline_mode = #tpu.pipeline_mode<synchronous>, transform_indices = @transform_1, window_bounds = array<i64: 128, 32>}, {pipeline_mode = #tpu.pipeline_mode<synchronous>, transform_indices = @transform_2, window_bounds = array<i64: 16, 32>}, {pipeline_mode = #tpu.pipeline_mode<synchronous>, transform_indices = @transform_3, window_bounds = array<i64: 16, 16>}, {transform_indices = @transform_4, window_bounds = array<i64: 1, 1, 32>}, {transform_indices = @transform_5, window_bounds = array<i64: 1, 1, 32>}, {transform_indices = @transform_6, window_bounds = array<i64: 1, 32, 96>}, {transform_indices = @transform_7, window_bounds = array<i64: 1, 1, 96>}, {transform_indices = @transform_8, window_bounds = array<i64: 1, 32, 32>}, {transform_indices = @transform_9, window_bounds = array<i64: 1, 1, 32>}, {transform_indices = @transform_10, window_bounds = array<i64: 1, 1, 32>}, {transform_indices = @transform_11, window_bounds = array<i64: 1, 1, 32>}, {transform_indices = @transform_12, window_bounds = array<i64: 1, 32, 128>}, {transform_indices = @transform_13, window_bounds = array<i64: 1, 1, 128>}, {transform_indices = @transform_14, window_bounds = array<i64: 1, 128, 32>}, {transform_indices = @transform_15, window_bounds = array<i64: 1, 1, 32>}, {pipeline_mode = #tpu.pipeline_mode<synchronous>, transform_indices = @transform_16, window_bounds = array<i64: 1, 32>}, {pipeline_mode = #tpu.pipeline_mode<synchronous>, transform_indices = @transform_17, window_bounds = array<i64: 1, 32>}, {pipeline_mode = #tpu.pipeline_mode<synchronous>, transform_indices = @transform_18, window_bounds = array<i64: 32, 32>}, {pipeline_mode = #tpu.pipeline_mode<synchronous>, transform_indices = @transform_19, window_bounds = array<i64: 1, 32>}, {pipeline_mode = #tpu.pipeline_mode<synchronous>, transform_indices = @transform_20, window_bounds = array<i64: 32, 16>}, {pipeline_mode = #tpu.pipeline_mode<synchronous>, transform_indices = @transform_21, window_bounds = array<i64: 1, 16>}, {pipeline_mode = #tpu.pipeline_mode<synchronous>, transform_indices = @transform_22, window_bounds = array<i64: 16, 16>}]} {
    %c0_i32 = arith.constant 0 : i32
    %0 = arith.cmpi eq, %arg0, %c0_i32 : i32
    %1 = arith.extui %0 : i1 to i32
    %c0_i32_0 = arith.constant 0 : i32
    %2 = arith.cmpi ne, %1, %c0_i32_0 : i32
    scf.if %2 {
      %c0_77 = arith.constant 0 : index
      %c0_78 = arith.constant 0 : index
      %188 = vector.load %arg1[%c0_77, %c0_78] : memref<16x128xbf16, #tpu.memory_space<vmem>>, vector<16x128xbf16>
      %c0_79 = arith.constant 0 : index
      %c0_80 = arith.constant 0 : index
      %189 = vector.load %arg2[%c0_79, %c0_80] : memref<128x32xbf16, #tpu.memory_space<vmem>>, vector<128x32xbf16>
      %cst_81 = arith.constant dense<0.000000e+00> : vector<16x32xf32>
      %190 = tpu.matmul %188, %189, %cst_81 {dimension_numbers = #tpu.dot_dimension_numbers<[1], [0], [0], [1], [0, 0, 1, 1], [], []>} : vector<16x128xbf16>, vector<128x32xbf16>, vector<16x32xf32> -> vector<16x32xf32>
      %c0_82 = arith.constant 0 : index
      %c0_83 = arith.constant 0 : index
      %191 = vector.load %arg3[%c0_82, %c0_83] : memref<16x32xf32, #tpu.memory_space<vmem>>, vector<16x32xf32>
      %192 = arith.addf %190, %191 : vector<16x32xf32>
      %c0_84 = arith.constant 0 : index
      %c0_85 = arith.constant 0 : index
      %193 = vector.load %arg24[%c0_84, %c0_85] : memref<16x32xf32, #tpu.memory_space<vmem>>, vector<16x32xf32>
      tpu.vector_store %arg24[%c0_84, %c0_85], %192 {strides = array<i32>} : memref<16x32xf32, #tpu.memory_space<vmem>>, vector<16x32xf32>,
    } else {
    }
    %c0 = arith.constant 0 : index
    %c0_1 = arith.constant 0 : index
    %3 = vector.load %arg24[%c0, %c0_1] : memref<16x32xf32, #tpu.memory_space<vmem>>, vector<16x32xf32>
    %c0_2 = arith.constant 0 : index
    %c0_3 = arith.constant 0 : index
    %c0_4 = arith.constant 0 : index
    %4 = vector.load %arg5[%c0_2, %c0_3, %c0_4] : memref<1x1x32xf32, #tpu.memory_space<vmem>>, vector<1x1x32xf32>
    %5 = vector.shape_cast %4 : vector<1x1x32xf32> to vector<1x32xf32>
    %c0_5 = arith.constant 0 : index
    %c0_6 = arith.constant 0 : index
    %c0_7 = arith.constant 0 : index
    %6 = vector.load %arg6[%c0_5, %c0_6, %c0_7] : memref<1x1x32xf32, #tpu.memory_space<vmem>>, vector<1x1x32xf32>
    %7 = vector.shape_cast %6 : vector<1x1x32xf32> to vector<1x32xf32>
    %cst = arith.constant dense<0.000000e+00> : vector<16xf32>
    %8 = vector.multi_reduction <add>, %3, %cst [1] : vector<16x32xf32> to vector<16xf32>
    %9 = vector.shape_cast %8 : vector<16xf32> to vector<16x1xf32>
    %cst_8 = arith.constant 3.200000e+01 : f32
    %10 = vector.broadcast %cst_8 : f32 to vector<16x1xf32>
    %11 = arith.divf %9, %10 : vector<16x1xf32>
    %12 = vector.broadcast %11 : vector<16x1xf32> to vector<16x32xf32>
    %13 = arith.subf %3, %12 : vector<16x32xf32>
    %14 = arith.mulf %13, %13 : vector<16x32xf32>
    %cst_9 = arith.constant dense<0.000000e+00> : vector<16xf32>
    %15 = vector.multi_reduction <add>, %14, %cst_9 [1] : vector<16x32xf32> to vector<16xf32>
    %16 = vector.shape_cast %15 : vector<16xf32> to vector<16x1xf32>
    %cst_10 = arith.constant 3.200000e+01 : f32
    %17 = vector.broadcast %cst_10 : f32 to vector<16x1xf32>
    %18 = arith.divf %16, %17 : vector<16x1xf32>
    %cst_11 = arith.constant 9.99999974E-6 : f32
    %19 = vector.broadcast %cst_11 : f32 to vector<16x1xf32>
    %20 = arith.addf %18, %19 : vector<16x1xf32>
    %21 = math.rsqrt %20 : vector<16x1xf32>
    %22 = vector.broadcast %21 : vector<16x1xf32> to vector<16x32xf32>
    %23 = arith.mulf %13, %22 : vector<16x32xf32>
    %24 = vector.broadcast %5 : vector<1x32xf32> to vector<16x32xf32>
    %25 = arith.mulf %23, %24 : vector<16x32xf32>
    %26 = vector.broadcast %7 : vector<1x32xf32> to vector<16x32xf32>
    %27 = arith.addf %25, %26 : vector<16x32xf32>
    %28 = arith.truncf %27 : vector<16x32xf32> to vector<16x32xbf16>
    %c0_12 = arith.constant 0 : index
    %c0_13 = arith.constant 0 : index
    %c0_14 = arith.constant 0 : index
    %29 = vector.load %arg7[%c0_12, %c0_13, %c0_14] : memref<1x32x96xbf16, #tpu.memory_space<vmem>>, vector<1x32x96xbf16>
    %30 = vector.shape_cast %29 : vector<1x32x96xbf16> to vector<32x96xbf16>
    %cst_15 = arith.constant dense<0.000000e+00> : vector<16x96xf32>
    %31 = tpu.matmul %28, %30, %cst_15 {dimension_numbers = #tpu.dot_dimension_numbers<[1], [0], [0], [1], [0, 0, 1, 1], [], []>} : vector<16x32xbf16>, vector<32x96xbf16>, vector<16x96xf32> -> vector<16x96xf32>
    %c0_16 = arith.constant 0 : index
    %c0_17 = arith.constant 0 : index
    %c0_18 = arith.constant 0 : index
    %32 = vector.load %arg8[%c0_16, %c0_17, %c0_18] : memref<1x1x96xf32, #tpu.memory_space<vmem>>, vector<1x1x96xf32>
    %33 = vector.shape_cast %32 : vector<1x1x96xf32> to vector<1x96xf32>
    %34 = vector.broadcast %33 : vector<1x96xf32> to vector<16x96xf32>
    %35 = arith.addf %31, %34 : vector<16x96xf32>
    %c0_19 = arith.constant 0 : index
    %c0_20 = arith.constant 0 : index
    %c0_21 = arith.constant 0 : index
    %36 = vector.load %arg9[%c0_19, %c0_20, %c0_21] : memref<1x32x32xbf16, #tpu.memory_space<vmem>>, vector<1x32x32xbf16>
    %37 = vector.shape_cast %36 : vector<1x32x32xbf16> to vector<32x32xbf16>
    %c0_22 = arith.constant 0 : index
    %c0_23 = arith.constant 0 : index
    %38 = vector.load %arg4[%c0_22, %c0_23] : memref<16x16xf32, #tpu.memory_space<vmem>>, vector<16x16xf32>
    %cst_24 = arith.constant 0.000000e+00 : f32
    %39 = vector.broadcast %cst_24 : f32 to vector<16x32xf32>
    %40 = vector.extract_strided_slice %35 {offsets = [0, 0], sizes = [16, 8], strides = [1, 1]} : vector<16x96xf32> to vector<16x8xf32>
    %41 = arith.truncf %40 : vector<16x8xf32> to vector<16x8xbf16>
    %42 = vector.extract_strided_slice %35 {offsets = [0, 32], sizes = [16, 8], strides = [1, 1]} : vector<16x96xf32> to vector<16x8xf32>
    %43 = arith.truncf %42 : vector<16x8xf32> to vector<16x8xbf16>
    %44 = vector.extract_strided_slice %35 {offsets = [0, 64], sizes = [16, 8], strides = [1, 1]} : vector<16x96xf32> to vector<16x8xf32>
    %45 = arith.truncf %44 : vector<16x8xf32> to vector<16x8xbf16>
    %cst_25 = arith.constant dense<0.000000e+00> : vector<16x16xf32>
    %46 = tpu.matmul %41, %43, %cst_25 {dimension_numbers = #tpu.dot_dimension_numbers<[1], [1], [0], [0], [0, 0, 1, 0], [], []>} : vector<16x8xbf16>, vector<16x8xbf16>, vector<16x16xf32> -> vector<16x16xf32>
    %47 = arith.addf %46, %38 : vector<16x16xf32>
    %cst_26 = arith.constant dense<0xFF800000> : vector<16xf32>
    %48 = vector.multi_reduction <maximumf>, %47, %cst_26 [1] : vector<16x16xf32> to vector<16xf32>
    %49 = vector.shape_cast %48 : vector<16xf32> to vector<16x1xf32>
    %50 = vector.broadcast %49 : vector<16x1xf32> to vector<16x16xf32>
    %51 = arith.subf %47, %50 : vector<16x16xf32>
    %52 = math.exp %51 : vector<16x16xf32>
    %cst_27 = arith.constant dense<0.000000e+00> : vector<16xf32>
    %53 = vector.multi_reduction <add>, %52, %cst_27 [1] : vector<16x16xf32> to vector<16xf32>
    %54 = vector.shape_cast %53 : vector<16xf32> to vector<16x1xf32>
    %55 = tpu.reciprocal %54 {approx = true} : vector<16x1xf32> -> vector<16x1xf32>
    %56 = vector.broadcast %55 : vector<16x1xf32> to vector<16x16xf32>
    %57 = arith.mulf %52, %56 : vector<16x16xf32>
    %58 = arith.truncf %57 : vector<16x16xf32> to vector<16x16xbf16>
    %cst_28 = arith.constant dense<0.000000e+00> : vector<16x8xf32>
    %59 = tpu.matmul %58, %45, %cst_28 {dimension_numbers = #tpu.dot_dimension_numbers<[1], [0], [0], [1], [0, 0, 1, 1], [], []>} : vector<16x16xbf16>, vector<16x8xbf16>, vector<16x8xf32> -> vector<16x8xf32>
    %60 = arith.truncf %59 : vector<16x8xf32> to vector<16x8xbf16>
    %61 = vector.extract_strided_slice %37 {offsets = [0, 0], sizes = [8, 32], strides = [1, 1]} : vector<32x32xbf16> to vector<8x32xbf16>
    %cst_29 = arith.constant dense<0.000000e+00> : vector<16x32xf32>
    %62 = tpu.matmul %60, %61, %cst_29 {dimension_numbers = #tpu.dot_dimension_numbers<[1], [0], [0], [1], [0, 0, 1, 1], [], []>} : vector<16x8xbf16>, vector<8x32xbf16>, vector<16x32xf32> -> vector<16x32xf32>
    %63 = arith.addf %39, %62 : vector<16x32xf32>
    %64 = vector.extract_strided_slice %35 {offsets = [0, 8], sizes = [16, 8], strides = [1, 1]} : vector<16x96xf32> to vector<16x8xf32>
    %65 = arith.truncf %64 : vector<16x8xf32> to vector<16x8xbf16>
    %66 = vector.extract_strided_slice %35 {offsets = [0, 40], sizes = [16, 8], strides = [1, 1]} : vector<16x96xf32> to vector<16x8xf32>
    %67 = arith.truncf %66 : vector<16x8xf32> to vector<16x8xbf16>
    %68 = vector.extract_strided_slice %35 {offsets = [0, 72], sizes = [16, 8], strides = [1, 1]} : vector<16x96xf32> to vector<16x8xf32>
    %69 = arith.truncf %68 : vector<16x8xf32> to vector<16x8xbf16>
    %cst_30 = arith.constant dense<0.000000e+00> : vector<16x16xf32>
    %70 = tpu.matmul %65, %67, %cst_30 {dimension_numbers = #tpu.dot_dimension_numbers<[1], [1], [0], [0], [0, 0, 1, 0], [], []>} : vector<16x8xbf16>, vector<16x8xbf16>, vector<16x16xf32> -> vector<16x16xf32>
    %71 = arith.addf %70, %38 : vector<16x16xf32>
    %cst_31 = arith.constant dense<0xFF800000> : vector<16xf32>
    %72 = vector.multi_reduction <maximumf>, %71, %cst_31 [1] : vector<16x16xf32> to vector<16xf32>
    %73 = vector.shape_cast %72 : vector<16xf32> to vector<16x1xf32>
    %74 = vector.broadcast %73 : vector<16x1xf32> to vector<16x16xf32>
    %75 = arith.subf %71, %74 : vector<16x16xf32>
    %76 = math.exp %75 : vector<16x16xf32>
    %cst_32 = arith.constant dense<0.000000e+00> : vector<16xf32>
    %77 = vector.multi_reduction <add>, %76, %cst_32 [1] : vector<16x16xf32> to vector<16xf32>
    %78 = vector.shape_cast %77 : vector<16xf32> to vector<16x1xf32>
    %79 = tpu.reciprocal %78 {approx = true} : vector<16x1xf32> -> vector<16x1xf32>
    %80 = vector.broadcast %79 : vector<16x1xf32> to vector<16x16xf32>
    %81 = arith.mulf %76, %80 : vector<16x16xf32>
    %82 = arith.truncf %81 : vector<16x16xf32> to vector<16x16xbf16>
    %cst_33 = arith.constant dense<0.000000e+00> : vector<16x8xf32>
    %83 = tpu.matmul %82, %69, %cst_33 {dimension_numbers = #tpu.dot_dimension_numbers<[1], [0], [0], [1], [0, 0, 1, 1], [], []>} : vector<16x16xbf16>, vector<16x8xbf16>, vector<16x8xf32> -> vector<16x8xf32>
    %84 = arith.truncf %83 : vector<16x8xf32> to vector<16x8xbf16>
    %85 = vector.extract_strided_slice %37 {offsets = [8, 0], sizes = [8, 32], strides = [1, 1]} : vector<32x32xbf16> to vector<8x32xbf16>
    %cst_34 = arith.constant dense<0.000000e+00> : vector<16x32xf32>
    %86 = tpu.matmul %84, %85, %cst_34 {dimension_numbers = #tpu.dot_dimension_numbers<[1], [0], [0], [1], [0, 0, 1, 1], [], []>} : vector<16x8xbf16>, vector<8x32xbf16>, vector<16x32xf32> -> vector<16x32xf32>
    %87 = arith.addf %63, %86 : vector<16x32xf32>
    %88 = vector.extract_strided_slice %35 {offsets = [0, 16], sizes = [16, 8], strides = [1, 1]} : vector<16x96xf32> to vector<16x8xf32>
    %89 = arith.truncf %88 : vector<16x8xf32> to vector<16x8xbf16>
    %90 = vector.extract_strided_slice %35 {offsets = [0, 48], sizes = [16, 8], strides = [1, 1]} : vector<16x96xf32> to vector<16x8xf32>
    %91 = arith.truncf %90 : vector<16x8xf32> to vector<16x8xbf16>
    %92 = vector.extract_strided_slice %35 {offsets = [0, 80], sizes = [16, 8], strides = [1, 1]} : vector<16x96xf32> to vector<16x8xf32>
    %93 = arith.truncf %92 : vector<16x8xf32> to vector<16x8xbf16>
    %cst_35 = arith.constant dense<0.000000e+00> : vector<16x16xf32>
    %94 = tpu.matmul %89, %91, %cst_35 {dimension_numbers = #tpu.dot_dimension_numbers<[1], [1], [0], [0], [0, 0, 1, 0], [], []>} : vector<16x8xbf16>, vector<16x8xbf16>, vector<16x16xf32> -> vector<16x16xf32>
    %95 = arith.addf %94, %38 : vector<16x16xf32>
    %cst_36 = arith.constant dense<0xFF800000> : vector<16xf32>
    %96 = vector.multi_reduction <maximumf>, %95, %cst_36 [1] : vector<16x16xf32> to vector<16xf32>
    %97 = vector.shape_cast %96 : vector<16xf32> to vector<16x1xf32>
    %98 = vector.broadcast %97 : vector<16x1xf32> to vector<16x16xf32>
    %99 = arith.subf %95, %98 : vector<16x16xf32>
    %100 = math.exp %99 : vector<16x16xf32>
    %cst_37 = arith.constant dense<0.000000e+00> : vector<16xf32>
    %101 = vector.multi_reduction <add>, %100, %cst_37 [1] : vector<16x16xf32> to vector<16xf32>
    %102 = vector.shape_cast %101 : vector<16xf32> to vector<16x1xf32>
    %103 = tpu.reciprocal %102 {approx = true} : vector<16x1xf32> -> vector<16x1xf32>
    %104 = vector.broadcast %103 : vector<16x1xf32> to vector<16x16xf32>
    %105 = arith.mulf %100, %104 : vector<16x16xf32>
    %106 = arith.truncf %105 : vector<16x16xf32> to vector<16x16xbf16>
    %cst_38 = arith.constant dense<0.000000e+00> : vector<16x8xf32>
    %107 = tpu.matmul %106, %93, %cst_38 {dimension_numbers = #tpu.dot_dimension_numbers<[1], [0], [0], [1], [0, 0, 1, 1], [], []>} : vector<16x16xbf16>, vector<16x8xbf16>, vector<16x8xf32> -> vector<16x8xf32>
    %108 = arith.truncf %107 : vector<16x8xf32> to vector<16x8xbf16>
    %109 = vector.extract_strided_slice %37 {offsets = [16, 0], sizes = [8, 32], strides = [1, 1]} : vector<32x32xbf16> to vector<8x32xbf16>
    %cst_39 = arith.constant dense<0.000000e+00> : vector<16x32xf32>
    %110 = tpu.matmul %108, %109, %cst_39 {dimension_numbers = #tpu.dot_dimension_numbers<[1], [0], [0], [1], [0, 0, 1, 1], [], []>} : vector<16x8xbf16>, vector<8x32xbf16>, vector<16x32xf32> -> vector<16x32xf32>
    %111 = arith.addf %87, %110 : vector<16x32xf32>
    %112 = vector.extract_strided_slice %35 {offsets = [0, 24], sizes = [16, 8], strides = [1, 1]} : vector<16x96xf32> to vector<16x8xf32>
    %113 = arith.truncf %112 : vector<16x8xf32> to vector<16x8xbf16>
    %114 = vector.extract_strided_slice %35 {offsets = [0, 56], sizes = [16, 8], strides = [1, 1]} : vector<16x96xf32> to vector<16x8xf32>
    %115 = arith.truncf %114 : vector<16x8xf32> to vector<16x8xbf16>
    %116 = vector.extract_strided_slice %35 {offsets = [0, 88], sizes = [16, 8], strides = [1, 1]} : vector<16x96xf32> to vector<16x8xf32>
    %117 = arith.truncf %116 : vector<16x8xf32> to vector<16x8xbf16>
    %cst_40 = arith.constant dense<0.000000e+00> : vector<16x16xf32>
    %118 = tpu.matmul %113, %115, %cst_40 {dimension_numbers = #tpu.dot_dimension_numbers<[1], [1], [0], [0], [0, 0, 1, 0], [], []>} : vector<16x8xbf16>, vector<16x8xbf16>, vector<16x16xf32> -> vector<16x16xf32>
    %119 = arith.addf %118, %38 : vector<16x16xf32>
    %cst_41 = arith.constant dense<0xFF800000> : vector<16xf32>
    %120 = vector.multi_reduction <maximumf>, %119, %cst_41 [1] : vector<16x16xf32> to vector<16xf32>
    %121 = vector.shape_cast %120 : vector<16xf32> to vector<16x1xf32>
    %122 = vector.broadcast %121 : vector<16x1xf32> to vector<16x16xf32>
    %123 = arith.subf %119, %122 : vector<16x16xf32>
    %124 = math.exp %123 : vector<16x16xf32>
    %cst_42 = arith.constant dense<0.000000e+00> : vector<16xf32>
    %125 = vector.multi_reduction <add>, %124, %cst_42 [1] : vector<16x16xf32> to vector<16xf32>
    %126 = vector.shape_cast %125 : vector<16xf32> to vector<16x1xf32>
    %127 = tpu.reciprocal %126 {approx = true} : vector<16x1xf32> -> vector<16x1xf32>
    %128 = vector.broadcast %127 : vector<16x1xf32> to vector<16x16xf32>
    %129 = arith.mulf %124, %128 : vector<16x16xf32>
    %130 = arith.truncf %129 : vector<16x16xf32> to vector<16x16xbf16>
    %cst_43 = arith.constant dense<0.000000e+00> : vector<16x8xf32>
    %131 = tpu.matmul %130, %117, %cst_43 {dimension_numbers = #tpu.dot_dimension_numbers<[1], [0], [0], [1], [0, 0, 1, 1], [], []>} : vector<16x16xbf16>, vector<16x8xbf16>, vector<16x8xf32> -> vector<16x8xf32>
    %132 = arith.truncf %131 : vector<16x8xf32> to vector<16x8xbf16>
    %133 = vector.extract_strided_slice %37 {offsets = [24, 0], sizes = [8, 32], strides = [1, 1]} : vector<32x32xbf16> to vector<8x32xbf16>
    %cst_44 = arith.constant dense<0.000000e+00> : vector<16x32xf32>
    %134 = tpu.matmul %132, %133, %cst_44 {dimension_numbers = #tpu.dot_dimension_numbers<[1], [0], [0], [1], [0, 0, 1, 1], [], []>} : vector<16x8xbf16>, vector<8x32xbf16>, vector<16x32xf32> -> vector<16x32xf32>
    %135 = arith.addf %111, %134 : vector<16x32xf32>
    %136 = arith.addf %3, %135 : vector<16x32xf32>
    %c0_45 = arith.constant 0 : index
    %c0_46 = arith.constant 0 : index
    %c0_47 = arith.constant 0 : index
    %137 = vector.load %arg10[%c0_45, %c0_46, %c0_47] : memref<1x1x32xf32, #tpu.memory_space<vmem>>, vector<1x1x32xf32>
    %138 = vector.shape_cast %137 : vector<1x1x32xf32> to vector<1x32xf32>
    %139 = vector.broadcast %138 : vector<1x32xf32> to vector<16x32xf32>
    %140 = arith.addf %136, %139 : vector<16x32xf32>
    %c0_48 = arith.constant 0 : index
    %c0_49 = arith.constant 0 : index
    %c0_50 = arith.constant 0 : index
    %141 = vector.load %arg11[%c0_48, %c0_49, %c0_50] : memref<1x1x32xf32, #tpu.memory_space<vmem>>, vector<1x1x32xf32>
    %142 = vector.shape_cast %141 : vector<1x1x32xf32> to vector<1x32xf32>
    %c0_51 = arith.constant 0 : index
    %c0_52 = arith.constant 0 : index
    %c0_53 = arith.constant 0 : index
    %143 = vector.load %arg12[%c0_51, %c0_52, %c0_53] : memref<1x1x32xf32, #tpu.memory_space<vmem>>, vector<1x1x32xf32>
    %144 = vector.shape_cast %143 : vector<1x1x32xf32> to vector<1x32xf32>
    %cst_54 = arith.constant dense<0.000000e+00> : vector<16xf32>
    %145 = vector.multi_reduction <add>, %140, %cst_54 [1] : vector<16x32xf32> to vector<16xf32>
    %146 = vector.shape_cast %145 : vector<16xf32> to vector<16x1xf32>
    %cst_55 = arith.constant 3.200000e+01 : f32
    %147 = vector.broadcast %cst_55 : f32 to vector<16x1xf32>
    %148 = arith.divf %146, %147 : vector<16x1xf32>
    %149 = vector.broadcast %148 : vector<16x1xf32> to vector<16x32xf32>
    %150 = arith.subf %140, %149 : vector<16x32xf32>
    %151 = arith.mulf %150, %150 : vector<16x32xf32>
    %cst_56 = arith.constant dense<0.000000e+00> : vector<16xf32>
    %152 = vector.multi_reduction <add>, %151, %cst_56 [1] : vector<16x32xf32> to vector<16xf32>
    %153 = vector.shape_cast %152 : vector<16xf32> to vector<16x1xf32>
    %cst_57 = arith.constant 3.200000e+01 : f32
    %154 = vector.broadcast %cst_57 : f32 to vector<16x1xf32>
    %155 = arith.divf %153, %154 : vector<16x1xf32>
    %cst_58 = arith.constant 9.99999974E-6 : f32
    %156 = vector.broadcast %cst_58 : f32 to vector<16x1xf32>
    %157 = arith.addf %155, %156 : vector<16x1xf32>
    %158 = math.rsqrt %157 : vector<16x1xf32>
    %159 = vector.broadcast %158 : vector<16x1xf32> to vector<16x32xf32>
    %160 = arith.mulf %150, %159 : vector<16x32xf32>
    %161 = vector.broadcast %142 : vector<1x32xf32> to vector<16x32xf32>
    %162 = arith.mulf %160, %161 : vector<16x32xf32>
    %163 = vector.broadcast %144 : vector<1x32xf32> to vector<16x32xf32>
    %164 = arith.addf %162, %163 : vector<16x32xf32>
    %165 = arith.truncf %164 : vector<16x32xf32> to vector<16x32xbf16>
    %c0_59 = arith.constant 0 : index
    %c0_60 = arith.constant 0 : index
    %c0_61 = arith.constant 0 : index
    %166 = vector.load %arg13[%c0_59, %c0_60, %c0_61] : memref<1x32x128xbf16, #tpu.memory_space<vmem>>, vector<1x32x128xbf16>
    %167 = vector.shape_cast %166 : vector<1x32x128xbf16> to vector<32x128xbf16>
    %cst_62 = arith.constant dense<0.000000e+00> : vector<16x128xf32>
    %168 = tpu.matmul %165, %167, %cst_62 {dimension_numbers = #tpu.dot_dimension_numbers<[1], [0], [0], [1], [0, 0, 1, 1], [], []>} : vector<16x32xbf16>, vector<32x128xbf16>, vector<16x128xf32> -> vector<16x128xf32>
    %c0_63 = arith.constant 0 : index
    %c0_64 = arith.constant 0 : index
    %c0_65 = arith.constant 0 : index
    %169 = vector.load %arg14[%c0_63, %c0_64, %c0_65] : memref<1x1x128xf32, #tpu.memory_space<vmem>>, vector<1x1x128xf32>
    %170 = vector.shape_cast %169 : vector<1x1x128xf32> to vector<1x128xf32>
    %171 = vector.broadcast %170 : vector<1x128xf32> to vector<16x128xf32>
    %172 = arith.addf %168, %171 : vector<16x128xf32>
    %cst_66 = arith.constant 0.000000e+00 : f32
    %173 = vector.broadcast %cst_66 : f32 to vector<16x128xf32>
    %174 = arith.maximumf %172, %173 : vector<16x128xf32>
    %175 = arith.truncf %174 : vector<16x128xf32> to vector<16x128xbf16>
    %c0_67 = arith.constant 0 : index
    %c0_68 = arith.constant 0 : index
    %c0_69 = arith.constant 0 : index
    %176 = vector.load %arg15[%c0_67, %c0_68, %c0_69] : memref<1x128x32xbf16, #tpu.memory_space<vmem>>, vector<1x128x32xbf16>
    %177 = vector.shape_cast %176 : vector<1x128x32xbf16> to vector<128x32xbf16>
    %cst_70 = arith.constant dense<0.000000e+00> : vector<16x32xf32>
    %178 = tpu.matmul %175, %177, %cst_70 {dimension_numbers = #tpu.dot_dimension_numbers<[1], [0], [0], [1], [0, 0, 1, 1], [], []>} : vector<16x128xbf16>, vector<128x32xbf16>, vector<16x32xf32> -> vector<16x32xf32>
    %179 = arith.addf %140, %178 : vector<16x32xf32>
    %c0_71 = arith.constant 0 : index
    %c0_72 = arith.constant 0 : index
    %c0_73 = arith.constant 0 : index
    %180 = vector.load %arg16[%c0_71, %c0_72, %c0_73] : memref<1x1x32xf32, #tpu.memory_space<vmem>>, vector<1x1x32xf32>
    %181 = vector.shape_cast %180 : vector<1x1x32xf32> to vector<1x32xf32>
    %182 = vector.broadcast %181 : vector<1x32xf32> to vector<16x32xf32>
    %183 = arith.addf %179, %182 : vector<16x32xf32>
    %c0_74 = arith.constant 0 : index
    %c0_75 = arith.constant 0 : index
    %184 = vector.load %arg24[%c0_74, %c0_75] : memref<16x32xf32, #tpu.memory_space<vmem>>, vector<16x32xf32>
    tpu.vector_store %arg24[%c0_74, %c0_75], %183 {strides = array<i32>} : memref<16x32xf32, #tpu.memory_space<vmem>>, vector<16x32xf32>,
    %c1_i32 = arith.constant 1 : i32
    %185 = arith.cmpi eq, %arg0, %c1_i32 : i32
    %186 = arith.extui %185 : i1 to i32
    %c0_i32_76 = arith.constant 0 : i32
    %187 = arith.cmpi ne, %186, %c0_i32_76 : i32
    scf.if %187 {
      %c0_77 = arith.constant 0 : index
      %c0_78 = arith.constant 0 : index
      %188 = vector.load %arg17[%c0_77, %c0_78] : memref<1x32xf32, #tpu.memory_space<vmem>>, vector<1x32xf32>
      %c0_79 = arith.constant 0 : index
      %c0_80 = arith.constant 0 : index
      %189 = vector.load %arg18[%c0_79, %c0_80] : memref<1x32xf32, #tpu.memory_space<vmem>>, vector<1x32xf32>
      %cst_81 = arith.constant dense<0.000000e+00> : vector<16xf32>
      %190 = vector.multi_reduction <add>, %183, %cst_81 [1] : vector<16x32xf32> to vector<16xf32>
      %191 = vector.shape_cast %190 : vector<16xf32> to vector<16x1xf32>
      %cst_82 = arith.constant 3.200000e+01 : f32
      %192 = vector.broadcast %cst_82 : f32 to vector<16x1xf32>
      %193 = arith.divf %191, %192 : vector<16x1xf32>
      %194 = vector.broadcast %193 : vector<16x1xf32> to vector<16x32xf32>
      %195 = arith.subf %183, %194 : vector<16x32xf32>
      %196 = arith.mulf %195, %195 : vector<16x32xf32>
      %cst_83 = arith.constant dense<0.000000e+00> : vector<16xf32>
      %197 = vector.multi_reduction <add>, %196, %cst_83 [1] : vector<16x32xf32> to vector<16xf32>
      %198 = vector.shape_cast %197 : vector<16xf32> to vector<16x1xf32>
      %cst_84 = arith.constant 3.200000e+01 : f32
      %199 = vector.broadcast %cst_84 : f32 to vector<16x1xf32>
      %200 = arith.divf %198, %199 : vector<16x1xf32>
      %cst_85 = arith.constant 9.99999974E-6 : f32
      %201 = vector.broadcast %cst_85 : f32 to vector<16x1xf32>
      %202 = arith.addf %200, %201 : vector<16x1xf32>
      %203 = math.rsqrt %202 : vector<16x1xf32>
      %204 = vector.broadcast %203 : vector<16x1xf32> to vector<16x32xf32>
      %205 = arith.mulf %195, %204 : vector<16x32xf32>
      %206 = vector.broadcast %188 : vector<1x32xf32> to vector<16x32xf32>
      %207 = arith.mulf %205, %206 : vector<16x32xf32>
      %208 = vector.broadcast %189 : vector<1x32xf32> to vector<16x32xf32>
      %209 = arith.addf %207, %208 : vector<16x32xf32>
      %210 = arith.truncf %209 : vector<16x32xf32> to vector<16x32xbf16>
      %c0_86 = arith.constant 0 : index
      %c0_87 = arith.constant 0 : index
      %211 = vector.load %arg19[%c0_86, %c0_87] : memref<32x32xbf16, #tpu.memory_space<vmem>>, vector<32x32xbf16>
      %cst_88 = arith.constant dense<0.000000e+00> : vector<16x32xf32>
      %212 = tpu.matmul %210, %211, %cst_88 {dimension_numbers = #tpu.dot_dimension_numbers<[1], [0], [0], [1], [0, 0, 1, 1], [], []>} : vector<16x32xbf16>, vector<32x32xbf16>, vector<16x32xf32> -> vector<16x32xf32>
      %c0_89 = arith.constant 0 : index
      %c0_90 = arith.constant 0 : index
      %213 = vector.load %arg20[%c0_89, %c0_90] : memref<1x32xf32, #tpu.memory_space<vmem>>, vector<1x32xf32>
      %214 = vector.broadcast %213 : vector<1x32xf32> to vector<16x32xf32>
      %215 = arith.addf %212, %214 : vector<16x32xf32>
      %cst_91 = arith.constant 0.000000e+00 : f32
      %216 = vector.broadcast %cst_91 : f32 to vector<16x32xf32>
      %217 = arith.maximumf %215, %216 : vector<16x32xf32>
      %218 = arith.truncf %217 : vector<16x32xf32> to vector<16x32xbf16>
      %c0_92 = arith.constant 0 : index
      %c0_93 = arith.constant 0 : index
      %219 = vector.load %arg21[%c0_92, %c0_93] : memref<32x16xbf16, #tpu.memory_space<vmem>>, vector<32x16xbf16>
      %cst_94 = arith.constant dense<0.000000e+00> : vector<16x16xf32>
      %220 = tpu.matmul %218, %219, %cst_94 {dimension_numbers = #tpu.dot_dimension_numbers<[1], [0], [0], [1], [0, 0, 1, 1], [], []>} : vector<16x32xbf16>, vector<32x16xbf16>, vector<16x16xf32> -> vector<16x16xf32>
      %c0_95 = arith.constant 0 : index
      %c0_96 = arith.constant 0 : index
      %221 = vector.load %arg22[%c0_95, %c0_96] : memref<1x16xf32, #tpu.memory_space<vmem>>, vector<1x16xf32>
      %222 = vector.broadcast %221 : vector<1x16xf32> to vector<16x16xf32>
      %223 = arith.addf %220, %222 : vector<16x16xf32>
      %c0_97 = arith.constant 0 : index
      %c0_98 = arith.constant 0 : index
      %224 = vector.load %arg23[%c0_97, %c0_98] : memref<16x16xf32, #tpu.memory_space<vmem>>, vector<16x16xf32>
      tpu.vector_store %arg23[%c0_97, %c0_98], %223 {strides = array<i32>} : memref<16x16xf32, #tpu.memory_space<vmem>>, vector<16x16xf32>,
    } else {
    }
    return
  }
  func.func @transform_0(%arg0: i32) -> (i32, i32) {
    %c0_i32 = arith.constant 0 : i32
    %c0_i32_0 = arith.constant 0 : i32
    %c0_i32_1 = arith.constant 0 : i32
    return %c0_i32, %c0_i32_0 : i32, i32
  }
  func.func @transform_1(%arg0: i32) -> (i32, i32) {
    %c0_i32 = arith.constant 0 : i32
    %c0_i32_0 = arith.constant 0 : i32
    %c0_i32_1 = arith.constant 0 : i32
    return %c0_i32, %c0_i32_0 : i32, i32
  }
  func.func @transform_2(%arg0: i32) -> (i32, i32) {
    %c0_i32 = arith.constant 0 : i32
    %c0_i32_0 = arith.constant 0 : i32
    %c0_i32_1 = arith.constant 0 : i32
    return %c0_i32, %c0_i32_0 : i32, i32
  }
  func.func @transform_3(%arg0: i32) -> (i32, i32) {
    %c0_i32 = arith.constant 0 : i32
    %c0_i32_0 = arith.constant 0 : i32
    %c0_i32_1 = arith.constant 0 : i32
    return %c0_i32, %c0_i32_0 : i32, i32
  }
  func.func @transform_4(%arg0: i32) -> (i32, i32, i32) {
    %c0_i32 = arith.constant 0 : i32
    %c0_i32_0 = arith.constant 0 : i32
    %c0_i32_1 = arith.constant 0 : i32
    return %arg0, %c0_i32, %c0_i32_0 : i32, i32, i32
  }
  func.func @transform_5(%arg0: i32) -> (i32, i32, i32) {
    %c0_i32 = arith.constant 0 : i32
    %c0_i32_0 = arith.constant 0 : i32
    %c0_i32_1 = arith.constant 0 : i32
    return %arg0, %c0_i32, %c0_i32_0 : i32, i32, i32
  }
  func.func @transform_6(%arg0: i32) -> (i32, i32, i32) {
    %c0_i32 = arith.constant 0 : i32
    %c0_i32_0 = arith.constant 0 : i32
    %c0_i32_1 = arith.constant 0 : i32
    return %arg0, %c0_i32, %c0_i32_0 : i32, i32, i32
  }
  func.func @transform_7(%arg0: i32) -> (i32, i32, i32) {
    %c0_i32 = arith.constant 0 : i32
    %c0_i32_0 = arith.constant 0 : i32
    %c0_i32_1 = arith.constant 0 : i32
    return %arg0, %c0_i32, %c0_i32_0 : i32, i32, i32
  }
  func.func @transform_8(%arg0: i32) -> (i32, i32, i32) {
    %c0_i32 = arith.constant 0 : i32
    %c0_i32_0 = arith.constant 0 : i32
    %c0_i32_1 = arith.constant 0 : i32
    return %arg0, %c0_i32, %c0_i32_0 : i32, i32, i32
  }
  func.func @transform_9(%arg0: i32) -> (i32, i32, i32) {
    %c0_i32 = arith.constant 0 : i32
    %c0_i32_0 = arith.constant 0 : i32
    %c0_i32_1 = arith.constant 0 : i32
    return %arg0, %c0_i32, %c0_i32_0 : i32, i32, i32
  }
  func.func @transform_10(%arg0: i32) -> (i32, i32, i32) {
    %c0_i32 = arith.constant 0 : i32
    %c0_i32_0 = arith.constant 0 : i32
    %c0_i32_1 = arith.constant 0 : i32
    return %arg0, %c0_i32, %c0_i32_0 : i32, i32, i32
  }
  func.func @transform_11(%arg0: i32) -> (i32, i32, i32) {
    %c0_i32 = arith.constant 0 : i32
    %c0_i32_0 = arith.constant 0 : i32
    %c0_i32_1 = arith.constant 0 : i32
    return %arg0, %c0_i32, %c0_i32_0 : i32, i32, i32
  }
  func.func @transform_12(%arg0: i32) -> (i32, i32, i32) {
    %c0_i32 = arith.constant 0 : i32
    %c0_i32_0 = arith.constant 0 : i32
    %c0_i32_1 = arith.constant 0 : i32
    return %arg0, %c0_i32, %c0_i32_0 : i32, i32, i32
  }
  func.func @transform_13(%arg0: i32) -> (i32, i32, i32) {
    %c0_i32 = arith.constant 0 : i32
    %c0_i32_0 = arith.constant 0 : i32
    %c0_i32_1 = arith.constant 0 : i32
    return %arg0, %c0_i32, %c0_i32_0 : i32, i32, i32
  }
  func.func @transform_14(%arg0: i32) -> (i32, i32, i32) {
    %c0_i32 = arith.constant 0 : i32
    %c0_i32_0 = arith.constant 0 : i32
    %c0_i32_1 = arith.constant 0 : i32
    return %arg0, %c0_i32, %c0_i32_0 : i32, i32, i32
  }
  func.func @transform_15(%arg0: i32) -> (i32, i32, i32) {
    %c0_i32 = arith.constant 0 : i32
    %c0_i32_0 = arith.constant 0 : i32
    %c0_i32_1 = arith.constant 0 : i32
    return %arg0, %c0_i32, %c0_i32_0 : i32, i32, i32
  }
  func.func @transform_16(%arg0: i32) -> (i32, i32) {
    %c0_i32 = arith.constant 0 : i32
    %c0_i32_0 = arith.constant 0 : i32
    %c0_i32_1 = arith.constant 0 : i32
    return %c0_i32, %c0_i32_0 : i32, i32
  }
  func.func @transform_17(%arg0: i32) -> (i32, i32) {
    %c0_i32 = arith.constant 0 : i32
    %c0_i32_0 = arith.constant 0 : i32
    %c0_i32_1 = arith.constant 0 : i32
    return %c0_i32, %c0_i32_0 : i32, i32
  }
  func.func @transform_18(%arg0: i32) -> (i32, i32) {
    %c0_i32 = arith.constant 0 : i32
    %c0_i32_0 = arith.constant 0 : i32
    %c0_i32_1 = arith.constant 0 : i32
    return %c0_i32, %c0_i32_0 : i32, i32
  }
  func.func @transform_19(%arg0: i32) -> (i32, i32) {
    %c0_i32 = arith.constant 0 : i32
    %c0_i32_0 = arith.constant 0 : i32
    %c0_i32_1 = arith.constant 0 : i32
    return %c0_i32, %c0_i32_0 : i32, i32
  }
  func.func @transform_20(%arg0: i32) -> (i32, i32) {
    %c0_i32 = arith.constant 0 : i32
    %c0_i32_0 = arith.constant 0 : i32
    %c0_i32_1 = arith.constant 0 : i32
    return %c0_i32, %c0_i32_0 : i32, i32
  }
  func.func @transform_21(%arg0: i32) -> (i32, i32) {
    %c0_i32 = arith.constant 0 : i32
    %c0_i32_0 = arith.constant 0 : i32
    %c0_i32_1 = arith.constant 0 : i32
    return %c0_i32, %c0_i32_0 : i32, i32
  }
  func.func @transform_22(%arg0: i32) -> (i32, i32) {
    %c0_i32 = arith.constant 0 : i32
    %c0_i32_0 = arith.constant 0 : i32
    %c0_i32_1 = arith.constant 0 : i32
    return %c0_i32, %c0_i32_0 : i32, i32
  }
}

</mosaic_0001>

<llo_original>
// kernel: transformer_model_forward.3
$region0: #{transformer_model_forward.3}
  #allocation0 [shape = 'u32[]', space=smem, size = 0x4, offset = 0x4, fixed_abs, tag = 'smem constant byte address 0x4 - core index']
  #allocation1 [shape = 'u32[144,128]{1,0:T(1,128)}', space=vmem, size = 0x12000, scoped, tag = 'internal scratch']
  #allocation2 [shape = 'f32[16,32]{1,0:T(8,128)}', space=vmem, size = 0x2000, scoped, tag = 'scratch operand']
  %s0 = inlined_call_operand.vmem [shape: bf16[16,128], index: 0, kind: input, shape index: {}]
  %s1 = inlined_call_operand.vmem [shape: bf16[128,32], index: 1, kind: input, shape index: {}]
  %s2 = inlined_call_operand.vmem [shape: f32[16,32], index: 2, kind: input, shape index: {}]
  %s3 = inlined_call_operand.vmem [shape: f32[16,16], index: 3, kind: input, shape index: {}]
  %s4 = inlined_call_operand.vmem [shape: f32[2,1,32], index: 4, kind: input, shape index: {}]
  %s5 = inlined_call_operand.vmem [shape: f32[2,1,32], index: 5, kind: input, shape index: {}]
  %s6 = inlined_call_operand.vmem [shape: bf16[2,32,96], index: 6, kind: input, shape index: {}]
  %s7 = inlined_call_operand.vmem [shape: f32[2,1,96], index: 7, kind: input, shape index: {}]
  %s8 = inlined_call_operand.vmem [shape: bf16[2,32,32], index: 8, kind: input, shape index: {}]
  %s9 = inlined_call_operand.vmem [shape: f32[2,1,32], index: 9, kind: input, shape index: {}]
  %s10 = inlined_call_operand.vmem [shape: f32[2,1,32], index: 10, kind: input, shape index: {}]
  %s11 = inlined_call_operand.vmem [shape: f32[2,1,32], index: 11, kind: input, shape index: {}]
  %s12 = inlined_call_operand.vmem [shape: bf16[2,32,128], index: 12, kind: input, shape index: {}]
  %s13 = inlined_call_operand.vmem [shape: f32[2,1,128], index: 13, kind: input, shape index: {}]
  %s14 = inlined_call_operand.vmem [shape: bf16[2,128,32], index: 14, kind: input, shape index: {}]
  %s15 = inlined_call_operand.vmem [shape: f32[2,1,32], index: 15, kind: input, shape index: {}]
  %s16 = inlined_call_operand.vmem [shape: f32[1,32], index: 16, kind: input, shape index: {}]
  %s17 = inlined_call_operand.vmem [shape: f32[1,32], index: 17, kind: input, shape index: {}]
  %s18 = inlined_call_operand.vmem [shape: bf16[32,32], index: 18, kind: input, shape index: {}]
  %s19 = inlined_call_operand.vmem [shape: f32[1,32], index: 19, kind: input, shape index: {}]
  %s20 = inlined_call_operand.vmem [shape: bf16[32,16], index: 20, kind: input, shape index: {}]
  %s21 = inlined_call_operand.vmem [shape: f32[1,16], index: 21, kind: input, shape index: {}]
  %s22 = inlined_call_operand.hbm [shape: f32[16,16], index: 22, kind: output, shape index: {}]
  %s23 = sld [smem:[#allocation0]]
  $region129: #{transformer_model_forward.3} parent=0
    _
  %s25 = ssub.s32 1, %s23
  %s26 = scalar_select 0, %s25, %s23
  $region1: #{transformer_model_forward.3} parent=0
    #allocation3 [shape = 'u8[8192]{0}', space=vmem, size = 0x2000, scoped, tag = 'output window, operand 0, single buffered']
    #allocation4 [shape = 's32[2]{0}', space=sflag, size = 0x8, scoped, tag = 'scoped memory for transformer_model_forward.3']
    %27 = vsyncpa [#allocation4], 0
    loop: start=0, step=1, limit=4
    $region2: #{transformer_model_forward.3} parent=1 // loop_pre_header
      _
    $region3: #{transformer_model_forward.3} parent=1 // loop_header
      %s29 = sphi 0, %s33
      %p30 = scmp.ge.s32.totalorder %s29, 4
      %s37 = sphi 0, %s37
      %s39 = sphi 0, %s37
      %s40 = sphi 0, %s39
      %s54 = sphi 0, %s40
      %s58 = sphi 0, %s58
      %s60 = sphi 0, %s58
      %s61 = sphi 0, %s60
      %s75 = sphi 0, %s61
      %s79 = sphi 0, %s79
      %s81 = sphi 0, %s79
      %s82 = sphi 0, %s81
      %s96 = sphi 0, %s82
      %s100 = sphi 0, %s100
      %s102 = sphi 0, %s100
      %s103 = sphi 0, %s102
      %s117 = sphi 0, %s103
      %s123 = sphi 0, %s125
      %s126 = sphi 0, %s123
      %s127 = sphi 0, %s126
      %s143 = sphi 0, %s127
      %s149 = sphi 0, %s151
      %s152 = sphi 0, %s149
      %s153 = sphi 0, %s152
      %s169 = sphi 0, %s153
      %s175 = sphi 0, %s177
      %s178 = sphi 0, %s175
      %s179 = sphi 0, %s178
      %s195 = sphi 0, %s179
      %s201 = sphi 0, %s203
      %s204 = sphi 0, %s201
      %s205 = sphi 0, %s204
      %s221 = sphi 0, %s205
      %s227 = sphi 0, %s229
      %s230 = sphi 0, %s227
      %s231 = sphi 0, %s230
      %s247 = sphi 0, %s231
      %s253 = sphi 0, %s255
      %s256 = sphi 0, %s253
      %s257 = sphi 0, %s256
      %s273 = sphi 0, %s257
      %s279 = sphi 0, %s281
      %s282 = sphi 0, %s279
      %s283 = sphi 0, %s282
      %s299 = sphi 0, %s283
      %s305 = sphi 0, %s307
      %s308 = sphi 0, %s305
      %s309 = sphi 0, %s308
      %s325 = sphi 0, %s309
      %s331 = sphi 0, %s333
      %s334 = sphi 0, %s331
      %s335 = sphi 0, %s334
      %s351 = sphi 0, %s335
      %s357 = sphi 0, %s359
      %s360 = sphi 0, %s357
      %s361 = sphi 0, %s360
      %s377 = sphi 0, %s361
      %s383 = sphi 0, %s385
      %s386 = sphi 0, %s383
      %s387 = sphi 0, %s386
      %s403 = sphi 0, %s387
      %s409 = sphi 0, %s411
      %s412 = sphi 0, %s409
      %s413 = sphi 0, %s412
      %s429 = sphi 0, %s413
      %s433 = sphi 0, %s433
      %s435 = sphi 0, %s433
      %s436 = sphi 0, %s435
      %s450 = sphi 0, %s436
      %s454 = sphi 0, %s454
      %s456 = sphi 0, %s454
      %s457 = sphi 0, %s456
      %s471 = sphi 0, %s457
      %s475 = sphi 0, %s475
      %s477 = sphi 0, %s475
      %s478 = sphi 0, %s477
      %s492 = sphi 0, %s478
      %s496 = sphi 0, %s496
      %s498 = sphi 0, %s496
      %s499 = sphi 0, %s498
      %s513 = sphi 0, %s499
      %s517 = sphi 0, %s517
      %s519 = sphi 0, %s517
      %s520 = sphi 0, %s519
      %s534 = sphi 0, %s520
      %s538 = sphi 0, %s538
      %s540 = sphi 0, %s538
      %s541 = sphi 0, %s540
      %s555 = sphi 0, %s541
      %s559 = sphi 0, %s559
      %s561 = sphi 0, %s559
      %s562 = sphi 0, %s561
      %s576 = sphi 0, %s562
    $region4: #{transformer_model_forward.3} parent=1 // loop_header_branch
      %32 = sbr.rel (%p30) target = $region8
    $region5: #{transformer_model_forward.3} parent=1 // loop_body
      %s34 = ssub.s32 %s29, 1
      %s35 = ssub.s32 %s29, 2
      %s36 = sadd.s32 %s29, 1
      %s38 = sadd.s32 %s37, 1
      %p41 = scmp.eq.s32.totalorder %s29, 1
      %p42 = scmp.ne.s32.totalorder %s37, %s39
      %p43 = scmp.eq.s32.totalorder %s29, 0
      %p44 = por %p42, %p43
      %p45 = scmp.ne.s32.totalorder %s37, %s39
      %p46 = scmp.eq.s32.totalorder %s34, 1
      %p47 = por %p45, %p46
      %p48 = scmp.ne.s32.totalorder %s39, %s40
      %p49 = scmp.eq.s32.totalorder %s34, 0
      %p50 = por %p48, %p49
      %p51 = scmp.ne.s32.totalorder %s39, %s40
      %p52 = scmp.eq.s32.totalorder %s35, 1
      %p53 = por %p51, %p52
      %p55 = scmp.ne.s32.totalorder %s40, %s54
      %p56 = scmp.eq.s32.totalorder %s35, 0
      %p57 = por %p55, %p56
      %s59 = sadd.s32 %s58, 1
      %p62 = scmp.eq.s32.totalorder %s29, 1
      %p63 = scmp.ne.s32.totalorder %s58, %s60
      %p64 = scmp.eq.s32.totalorder %s29, 0
      %p65 = por %p63, %p64
      %p66 = scmp.ne.s32.totalorder %s58, %s60
      %p67 = scmp.eq.s32.totalorder %s34, 1
      %p68 = por %p66, %p67
      %p69 = scmp.ne.s32.totalorder %s60, %s61
      %p70 = scmp.eq.s32.totalorder %s34, 0
      %p71 = por %p69, %p70
      %p72 = scmp.ne.s32.totalorder %s60, %s61
      %p73 = scmp.eq.s32.totalorder %s35, 1
      %p74 = por %p72, %p73
      %p76 = scmp.ne.s32.totalorder %s61, %s75
      %p77 = scmp.eq.s32.totalorder %s35, 0
      %p78 = por %p76, %p77
      %s80 = sadd.s32 %s79, 1
      %p83 = scmp.eq.s32.totalorder %s29, 1
      %p84 = scmp.ne.s32.totalorder %s79, %s81
      %p85 = scmp.eq.s32.totalorder %s29, 0
      %p86 = por %p84, %p85
      %p87 = scmp.ne.s32.totalorder %s79, %s81
      %p88 = scmp.eq.s32.totalorder %s34, 1
      %p89 = por %p87, %p88
      %p90 = scmp.ne.s32.totalorder %s81, %s82
      %p91 = scmp.eq.s32.totalorder %s34, 0
      %p92 = por %p90, %p91
      %p93 = scmp.ne.s32.totalorder %s81, %s82
      %p94 = scmp.eq.s32.totalorder %s35, 1
      %p95 = por %p93, %p94
      %p97 = scmp.ne.s32.totalorder %s82, %s96
      %p98 = scmp.eq.s32.totalorder %s35, 0
      %p99 = por %p97, %p98
      %s101 = sadd.s32 %s100, 1
      %p104 = scmp.eq.s32.totalorder %s29, 1
      %p105 = scmp.ne.s32.totalorder %s100, %s102
      %p106 = scmp.eq.s32.totalorder %s29, 0
      %p107 = por %p105, %p106
      %p108 = scmp.ne.s32.totalorder %s100, %s102
      %p109 = scmp.eq.s32.totalorder %s34, 1
      %p110 = por %p108, %p109
      %p111 = scmp.ne.s32.totalorder %s102, %s103
      %p112 = scmp.eq.s32.totalorder %s34, 0
      %p113 = por %p111, %p112
      %p114 = scmp.ne.s32.totalorder %s102, %s103
      %p115 = scmp.eq.s32.totalorder %s35, 1
      %p116 = por %p114, %p115
      %p118 = scmp.ne.s32.totalorder %s103, %s117
      %p119 = scmp.eq.s32.totalorder %s35, 0
      %p120 = por %p118, %p119
      %s121 = ssub.s32 %s29, %s36
      %p122 = scmp.eq.s32.totalorder %s121, 0
      %s124 = sadd.s32 %s123, 1
      %s125 = scalar_select %p122, %s123, %s124
      %p128 = pneg %p122
      %p129 = scmp.eq.s32.totalorder %s29, 1
      %p130 = por %p128, %p129
      %p131 = scmp.ne.s32.totalorder %s123, %s126
      %p132 = scmp.eq.s32.totalorder %s29, 0
      %p133 = por %p131, %p132
      %p134 = scmp.ne.s32.totalorder %s123, %s126
      %p135 = scmp.eq.s32.totalorder %s34, 1
      %p136 = por %p134, %p135
      %p137 = scmp.ne.s32.totalorder %s126, %s127
      %p138 = scmp.eq.s32.totalorder %s34, 0
      %p139 = por %p137, %p138
      %p140 = scmp.ne.s32.totalorder %s126, %s127
      %p141 = scmp.eq.s32.totalorder %s35, 1
      %p142 = por %p140, %p141
      %p144 = scmp.ne.s32.totalorder %s127, %s143
      %p145 = scmp.eq.s32.totalorder %s35, 0
      %p146 = por %p144, %p145
      %s147 = ssub.s32 %s29, %s36
      %p148 = scmp.eq.s32.totalorder %s147, 0
      %s150 = sadd.s32 %s149, 1
      %s151 = scalar_select %p148, %s149, %s150
      %p154 = pneg %p148
      %p155 = scmp.eq.s32.totalorder %s29, 1
      %p156 = por %p154, %p155
      %p157 = scmp.ne.s32.totalorder %s149, %s152
      %p158 = scmp.eq.s32.totalorder %s29, 0
      %p159 = por %p157, %p158
      %p160 = scmp.ne.s32.totalorder %s149, %s152
      %p161 = scmp.eq.s32.totalorder %s34, 1
      %p162 = por %p160, %p161
      %p163 = scmp.ne.s32.totalorder %s152, %s153
      %p164 = scmp.eq.s32.totalorder %s34, 0
      %p165 = por %p163, %p164
      %p166 = scmp.ne.s32.totalorder %s152, %s153
      %p167 = scmp.eq.s32.totalorder %s35, 1
      %p168 = por %p166, %p167
      %p170 = scmp.ne.s32.totalorder %s153, %s169
      %p171 = scmp.eq.s32.totalorder %s35, 0
      %p172 = por %p170, %p171
      %s173 = ssub.s32 %s29, %s36
      %p174 = scmp.eq.s32.totalorder %s173, 0
      %s176 = sadd.s32 %s175, 1
      %s177 = scalar_select %p174, %s175, %s176
      %p180 = pneg %p174
      %p181 = scmp.eq.s32.totalorder %s29, 1
      %p182 = por %p180, %p181
      %p183 = scmp.ne.s32.totalorder %s175, %s178
      %p184 = scmp.eq.s32.totalorder %s29, 0
      %p185 = por %p183, %p184
      %p186 = scmp.ne.s32.totalorder %s175, %s178
      %p187 = scmp.eq.s32.totalorder %s34, 1
      %p188 = por %p186, %p187
      %p189 = scmp.ne.s32.totalorder %s178, %s179
      %p190 = scmp.eq.s32.totalorder %s34, 0
      %p191 = por %p189, %p190
      %p192 = scmp.ne.s32.totalorder %s178, %s179
      %p193 = scmp.eq.s32.totalorder %s35, 1
      %p194 = por %p192, %p193
      %p196 = scmp.ne.s32.totalorder %s179, %s195
      %p197 = scmp.eq.s32.totalorder %s35, 0
      %p198 = por %p196, %p197
      %s199 = ssub.s32 %s29, %s36
      %p200 = scmp.eq.s32.totalorder %s199, 0
      %s202 = sadd.s32 %s201, 1
      %s203 = scalar_select %p200, %s201, %s202
      %p206 = pneg %p200
      %p207 = scmp.eq.s32.totalorder %s29, 1
      %p208 = por %p206, %p207
      %p209 = scmp.ne.s32.totalorder %s201, %s204
      %p210 = scmp.eq.s32.totalorder %s29, 0
      %p211 = por %p209, %p210
      %p212 = scmp.ne.s32.totalorder %s201, %s204
      %p213 = scmp.eq.s32.totalorder %s34, 1
      %p214 = por %p212, %p213
      %p215 = scmp.ne.s32.totalorder %s204, %s205
      %p216 = scmp.eq.s32.totalorder %s34, 0
      %p217 = por %p215, %p216
      %p218 = scmp.ne.s32.totalorder %s204, %s205
      %p219 = scmp.eq.s32.totalorder %s35, 1
      %p220 = por %p218, %p219
      %p222 = scmp.ne.s32.totalorder %s205, %s221
      %p223 = scmp.eq.s32.totalorder %s35, 0
      %p224 = por %p222, %p223
      %s225 = ssub.s32 %s29, %s36
      %p226 = scmp.eq.s32.totalorder %s225, 0
      %s228 = sadd.s32 %s227, 1
      %s229 = scalar_select %p226, %s227, %s228
      %p232 = pneg %p226
      %p233 = scmp.eq.s32.totalorder %s29, 1
      %p234 = por %p232, %p233
      %p235 = scmp.ne.s32.totalorder %s227, %s230
      %p236 = scmp.eq.s32.totalorder %s29, 0
      %p237 = por %p235, %p236
      %p238 = scmp.ne.s32.totalorder %s227, %s230
      %p239 = scmp.eq.s32.totalorder %s34, 1
      %p240 = por %p238, %p239
      %p241 = scmp.ne.s32.totalorder %s230, %s231
      %p242 = scmp.eq.s32.totalorder %s34, 0
      %p243 = por %p241, %p242
      %p244 = scmp.ne.s32.totalorder %s230, %s231
      %p245 = scmp.eq.s32.totalorder %s35, 1
      %p246 = por %p244, %p245
      %p248 = scmp.ne.s32.totalorder %s231, %s247
      %p249 = scmp.eq.s32.totalorder %s35, 0
      %p250 = por %p248, %p249
      %s251 = ssub.s32 %s29, %s36
      %p252 = scmp.eq.s32.totalorder %s251, 0
      %s254 = sadd.s32 %s253, 1
      %s255 = scalar_select %p252, %s253, %s254
      %p258 = pneg %p252
      %p259 = scmp.eq.s32.totalorder %s29, 1
      %p260 = por %p258, %p259
      %p261 = scmp.ne.s32.totalorder %s253, %s256
      %p262 = scmp.eq.s32.totalorder %s29, 0
      %p263 = por %p261, %p262
      %p264 = scmp.ne.s32.totalorder %s253, %s256
      %p265 = scmp.eq.s32.totalorder %s34, 1
      %p266 = por %p264, %p265
      %p267 = scmp.ne.s32.totalorder %s256, %s257
      %p268 = scmp.eq.s32.totalorder %s34, 0
      %p269 = por %p267, %p268
      %p270 = scmp.ne.s32.totalorder %s256, %s257
      %p271 = scmp.eq.s32.totalorder %s35, 1
      %p272 = por %p270, %p271
      %p274 = scmp.ne.s32.totalorder %s257, %s273
      %p275 = scmp.eq.s32.totalorder %s35, 0
      %p276 = por %p274, %p275
      %s277 = ssub.s32 %s29, %s36
      %p278 = scmp.eq.s32.totalorder %s277, 0
      %s280 = sadd.s32 %s279, 1
      %s281 = scalar_select %p278, %s279, %s280
      %p284 = pneg %p278
      %p285 = scmp.eq.s32.totalorder %s29, 1
      %p286 = por %p284, %p285
      %p287 = scmp.ne.s32.totalorder %s279, %s282
      %p288 = scmp.eq.s32.totalorder %s29, 0
      %p289 = por %p287, %p288
      %p290 = scmp.ne.s32.totalorder %s279, %s282
      %p291 = scmp.eq.s32.totalorder %s34, 1
      %p292 = por %p290, %p291
      %p293 = scmp.ne.s32.totalorder %s282, %s283
      %p294 = scmp.eq.s32.totalorder %s34, 0
      %p295 = por %p293, %p294
      %p296 = scmp.ne.s32.totalorder %s282, %s283
      %p297 = scmp.eq.s32.totalorder %s35, 1
      %p298 = por %p296, %p297
      %p300 = scmp.ne.s32.totalorder %s283, %s299
      %p301 = scmp.eq.s32.totalorder %s35, 0
      %p302 = por %p300, %p301
      %s303 = ssub.s32 %s29, %s36
      %p304 = scmp.eq.s32.totalorder %s303, 0
      %s306 = sadd.s32 %s305, 1
      %s307 = scalar_select %p304, %s305, %s306
      %p310 = pneg %p304
      %p311 = scmp.eq.s32.totalorder %s29, 1
      %p312 = por %p310, %p311
      %p313 = scmp.ne.s32.totalorder %s305, %s308
      %p314 = scmp.eq.s32.totalorder %s29, 0
      %p315 = por %p313, %p314
      %p316 = scmp.ne.s32.totalorder %s305, %s308
      %p317 = scmp.eq.s32.totalorder %s34, 1
      %p318 = por %p316, %p317
      %p319 = scmp.ne.s32.totalorder %s308, %s309
      %p320 = scmp.eq.s32.totalorder %s34, 0
      %p321 = por %p319, %p320
      %p322 = scmp.ne.s32.totalorder %s308, %s309
      %p323 = scmp.eq.s32.totalorder %s35, 1
      %p324 = por %p322, %p323
      %p326 = scmp.ne.s32.totalorder %s309, %s325
      %p327 = scmp.eq.s32.totalorder %s35, 0
      %p328 = por %p326, %p327
      %s329 = ssub.s32 %s29, %s36
      %p330 = scmp.eq.s32.totalorder %s329, 0
      %s332 = sadd.s32 %s331, 1
      %s333 = scalar_select %p330, %s331, %s332
      %p336 = pneg %p330
      %p337 = scmp.eq.s32.totalorder %s29, 1
      %p338 = por %p336, %p337
      %p339 = scmp.ne.s32.totalorder %s331, %s334
      %p340 = scmp.eq.s32.totalorder %s29, 0
      %p341 = por %p339, %p340
      %p342 = scmp.ne.s32.totalorder %s331, %s334
      %p343 = scmp.eq.s32.totalorder %s34, 1
      %p344 = por %p342, %p343
      %p345 = scmp.ne.s32.totalorder %s334, %s335
      %p346 = scmp.eq.s32.totalorder %s34, 0
      %p347 = por %p345, %p346
      %p348 = scmp.ne.s32.totalorder %s334, %s335
      %p349 = scmp.eq.s32.totalorder %s35, 1
      %p350 = por %p348, %p349
      %p352 = scmp.ne.s32.totalorder %s335, %s351
      %p353 = scmp.eq.s32.totalorder %s35, 0
      %p354 = por %p352, %p353
      %s355 = ssub.s32 %s29, %s36
      %p356 = scmp.eq.s32.totalorder %s355, 0
      %s358 = sadd.s32 %s357, 1
      %s359 = scalar_select %p356, %s357, %s358
      %p362 = pneg %p356
      %p363 = scmp.eq.s32.totalorder %s29, 1
      %p364 = por %p362, %p363
      %p365 = scmp.ne.s32.totalorder %s357, %s360
      %p366 = scmp.eq.s32.totalorder %s29, 0
      %p367 = por %p365, %p366
      %p368 = scmp.ne.s32.totalorder %s357, %s360
      %p369 = scmp.eq.s32.totalorder %s34, 1
      %p370 = por %p368, %p369
      %p371 = scmp.ne.s32.totalorder %s360, %s361
      %p372 = scmp.eq.s32.totalorder %s34, 0
      %p373 = por %p371, %p372
      %p374 = scmp.ne.s32.totalorder %s360, %s361
      %p375 = scmp.eq.s32.totalorder %s35, 1
      %p376 = por %p374, %p375
      %p378 = scmp.ne.s32.totalorder %s361, %s377
      %p379 = scmp.eq.s32.totalorder %s35, 0
      %p380 = por %p378, %p379
      %s381 = ssub.s32 %s29, %s36
      %p382 = scmp.eq.s32.totalorder %s381, 0
      %s384 = sadd.s32 %s383, 1
      %s385 = scalar_select %p382, %s383, %s384
      %p388 = pneg %p382
      %p389 = scmp.eq.s32.totalorder %s29, 1
      %p390 = por %p388, %p389
      %p391 = scmp.ne.s32.totalorder %s383, %s386
      %p392 = scmp.eq.s32.totalorder %s29, 0
      %p393 = por %p391, %p392
      %p394 = scmp.ne.s32.totalorder %s383, %s386
      %p395 = scmp.eq.s32.totalorder %s34, 1
      %p396 = por %p394, %p395
      %p397 = scmp.ne.s32.totalorder %s386, %s387
      %p398 = scmp.eq.s32.totalorder %s34, 0
      %p399 = por %p397, %p398
      %p400 = scmp.ne.s32.totalorder %s386, %s387
      %p401 = scmp.eq.s32.totalorder %s35, 1
      %p402 = por %p400, %p401
      %p404 = scmp.ne.s32.totalorder %s387, %s403
      %p405 = scmp.eq.s32.totalorder %s35, 0
      %p406 = por %p404, %p405
      %s407 = ssub.s32 %s29, %s36
      %p408 = scmp.eq.s32.totalorder %s407, 0
      %s410 = sadd.s32 %s409, 1
      %s411 = scalar_select %p408, %s409, %s410
      %p414 = pneg %p408
      %p415 = scmp.eq.s32.totalorder %s29, 1
      %p416 = por %p414, %p415
      %p417 = scmp.ne.s32.totalorder %s409, %s412
      %p418 = scmp.eq.s32.totalorder %s29, 0
      %p419 = por %p417, %p418
      %p420 = scmp.ne.s32.totalorder %s409, %s412
      %p421 = scmp.eq.s32.totalorder %s34, 1
      %p422 = por %p420, %p421
      %p423 = scmp.ne.s32.totalorder %s412, %s413
      %p424 = scmp.eq.s32.totalorder %s34, 0
      %p425 = por %p423, %p424
      %p426 = scmp.ne.s32.totalorder %s412, %s413
      %p427 = scmp.eq.s32.totalorder %s35, 1
      %p428 = por %p426, %p427
      %p430 = scmp.ne.s32.totalorder %s413, %s429
      %p431 = scmp.eq.s32.totalorder %s35, 0
      %p432 = por %p430, %p431
      %s434 = sadd.s32 %s433, 1
      %p437 = scmp.eq.s32.totalorder %s29, 1
      %p438 = scmp.ne.s32.totalorder %s433, %s435
      %p439 = scmp.eq.s32.totalorder %s29, 0
      %p440 = por %p438, %p439
      %p441 = scmp.ne.s32.totalorder %s433, %s435
      %p442 = scmp.eq.s32.totalorder %s34, 1
      %p443 = por %p441, %p442
      %p444 = scmp.ne.s32.totalorder %s435, %s436
      %p445 = scmp.eq.s32.totalorder %s34, 0
      %p446 = por %p444, %p445
      %p447 = scmp.ne.s32.totalorder %s435, %s436
      %p448 = scmp.eq.s32.totalorder %s35, 1
      %p449 = por %p447, %p448
      %p451 = scmp.ne.s32.totalorder %s436, %s450
      %p452 = scmp.eq.s32.totalorder %s35, 0
      %p453 = por %p451, %p452
      %s455 = sadd.s32 %s454, 1
      %p458 = scmp.eq.s32.totalorder %s29, 1
      %p459 = scmp.ne.s32.totalorder %s454, %s456
      %p460 = scmp.eq.s32.totalorder %s29, 0
      %p461 = por %p459, %p460
      %p462 = scmp.ne.s32.totalorder %s454, %s456
      %p463 = scmp.eq.s32.totalorder %s34, 1
      %p464 = por %p462, %p463
      %p465 = scmp.ne.s32.totalorder %s456, %s457
      %p466 = scmp.eq.s32.totalorder %s34, 0
      %p467 = por %p465, %p466
      %p468 = scmp.ne.s32.totalorder %s456, %s457
      %p469 = scmp.eq.s32.totalorder %s35, 1
      %p470 = por %p468, %p469
      %p472 = scmp.ne.s32.totalorder %s457, %s471
      %p473 = scmp.eq.s32.totalorder %s35, 0
      %p474 = por %p472, %p473
      %s476 = sadd.s32 %s475, 1
      %p479 = scmp.eq.s32.totalorder %s29, 1
      %p480 = scmp.ne.s32.totalorder %s475, %s477
      %p481 = scmp.eq.s32.totalorder %s29, 0
      %p482 = por %p480, %p481
      %p483 = scmp.ne.s32.totalorder %s475, %s477
      %p484 = scmp.eq.s32.totalorder %s34, 1
      %p485 = por %p483, %p484
      %p486 = scmp.ne.s32.totalorder %s477, %s478
      %p487 = scmp.eq.s32.totalorder %s34, 0
      %p488 = por %p486, %p487
      %p489 = scmp.ne.s32.totalorder %s477, %s478
      %p490 = scmp.eq.s32.totalorder %s35, 1
      %p491 = por %p489, %p490
      %p493 = scmp.ne.s32.totalorder %s478, %s492
      %p494 = scmp.eq.s32.totalorder %s35, 0
      %p495 = por %p493, %p494
      %s497 = sadd.s32 %s496, 1
      %p500 = scmp.eq.s32.totalorder %s29, 1
      %p501 = scmp.ne.s32.totalorder %s496, %s498
      %p502 = scmp.eq.s32.totalorder %s29, 0
      %p503 = por %p501, %p502
      %p504 = scmp.ne.s32.totalorder %s496, %s498
      %p505 = scmp.eq.s32.totalorder %s34, 1
      %p506 = por %p504, %p505
      %p507 = scmp.ne.s32.totalorder %s498, %s499
      %p508 = scmp.eq.s32.totalorder %s34, 0
      %p509 = por %p507, %p508
      %p510 = scmp.ne.s32.totalorder %s498, %s499
      %p511 = scmp.eq.s32.totalorder %s35, 1
      %p512 = por %p510, %p511
      %p514 = scmp.ne.s32.totalorder %s499, %s513
      %p515 = scmp.eq.s32.totalorder %s35, 0
      %p516 = por %p514, %p515
      %s518 = sadd.s32 %s517, 1
      %p521 = scmp.eq.s32.totalorder %s29, 1
      %p522 = scmp.ne.s32.totalorder %s517, %s519
      %p523 = scmp.eq.s32.totalorder %s29, 0
      %p524 = por %p522, %p523
      %p525 = scmp.ne.s32.totalorder %s517, %s519
      %p526 = scmp.eq.s32.totalorder %s34, 1
      %p527 = por %p525, %p526
      %p528 = scmp.ne.s32.totalorder %s519, %s520
      %p529 = scmp.eq.s32.totalorder %s34, 0
      %p530 = por %p528, %p529
      %p531 = scmp.ne.s32.totalorder %s519, %s520
      %p532 = scmp.eq.s32.totalorder %s35, 1
      %p533 = por %p531, %p532
      %p535 = scmp.ne.s32.totalorder %s520, %s534
      %p536 = scmp.eq.s32.totalorder %s35, 0
      %p537 = por %p535, %p536
      %s539 = sadd.s32 %s538, 1
      %p542 = scmp.eq.s32.totalorder %s29, 1
      %p543 = scmp.ne.s32.totalorder %s538, %s540
      %p544 = scmp.eq.s32.totalorder %s29, 0
      %p545 = por %p543, %p544
      %p546 = scmp.ne.s32.totalorder %s538, %s540
      %p547 = scmp.eq.s32.totalorder %s34, 1
      %p548 = por %p546, %p547
      %p549 = scmp.ne.s32.totalorder %s540, %s541
      %p550 = scmp.eq.s32.totalorder %s34, 0
      %p551 = por %p549, %p550
      %p552 = scmp.ne.s32.totalorder %s540, %s541
      %p553 = scmp.eq.s32.totalorder %s35, 1
      %p554 = por %p552, %p553
      %p556 = scmp.ne.s32.totalorder %s541, %s555
      %p557 = scmp.eq.s32.totalorder %s35, 0
      %p558 = por %p556, %p557
      %s560 = sadd.s32 %s559, 1
      %p563 = scmp.eq.s32.totalorder %s29, 1
      %p564 = scmp.ne.s32.totalorder %s559, %s561
      %p565 = scmp.eq.s32.totalorder %s29, 0
      %p566 = por %p564, %p565
      %p567 = scmp.ne.s32.totalorder %s559, %s561
      %p568 = scmp.eq.s32.totalorder %s34, 1
      %p569 = por %p567, %p568
      %p570 = scmp.ne.s32.totalorder %s561, %s562
      %p571 = scmp.eq.s32.totalorder %s34, 0
      %p572 = por %p570, %p571
      %p573 = scmp.ne.s32.totalorder %s561, %s562
      %p574 = scmp.eq.s32.totalorder %s35, 1
      %p575 = por %p573, %p574
      %p577 = scmp.ne.s32.totalorder %s562, %s576
      %p578 = scmp.eq.s32.totalorder %s35, 0
      %p579 = por %p577, %p578
      %p580 = scmp.le.s32.totalorder 1, %s29
      %p581 = scmp.lt.s32.totalorder %s29, 3
      %p582 = pnand %p580, %p581
      %p583 = pneg %p582
      // Predicated region
      $region9: #{transformer_model_forward.3} parent=5 // pred_check
        _
      $region10: #{transformer_model_forward.3} parent=5 // pred_check_branch
        %585 = sbr.rel (%p582) target = $region12
      $region11: #{transformer_model_forward.3} parent=5 // pred_region
        %s586 = ssub.s32 %s29, 1
        // Predicated region
        $region13: #{transformer_model_forward.3} parent=11 // pred_check
          %p587 = pneg %p50
        $region14: #{transformer_model_forward.3} parent=11 // pred_check_branch
          %589 = sbr.rel (%p587) target = $region16
        $region15: #{transformer_model_forward.3} parent=11 // pred_region
          _
        $region16: #{transformer_model_forward.3} parent=11 // pred_fallthru
          _
        // Predicated region
        $region17: #{transformer_model_forward.3} parent=11 // pred_check
          %p590 = pneg %p71
        $region18: #{transformer_model_forward.3} parent=11 // pred_check_branch
          %592 = sbr.rel (%p590) target = $region20
        $region19: #{transformer_model_forward.3} parent=11 // pred_region
          _
        $region20: #{transformer_model_forward.3} parent=11 // pred_fallthru
          _
        // Predicated region
        $region21: #{transformer_model_forward.3} parent=11 // pred_check
          %p593 = pneg %p92
        $region22: #{transformer_model_forward.3} parent=11 // pred_check_branch
          %595 = sbr.rel (%p593) target = $region24
        $region23: #{transformer_model_forward.3} parent=11 // pred_region
          _
        $region24: #{transformer_model_forward.3} parent=11 // pred_fallthru
          _
        // Predicated region
        $region25: #{transformer_model_forward.3} parent=11 // pred_check
          %p596 = pneg %p113
        $region26: #{transformer_model_forward.3} parent=11 // pred_check_branch
          %598 = sbr.rel (%p596) target = $region28
        $region27: #{transformer_model_forward.3} parent=11 // pred_region
          _
        $region28: #{transformer_model_forward.3} parent=11 // pred_fallthru
          _
        // Predicated region
        $region29: #{transformer_model_forward.3} parent=11 // pred_check
          %p599 = pneg %p446
        $region30: #{transformer_model_forward.3} parent=11 // pred_check_branch
          %601 = sbr.rel (%p599) target = $region32
        $region31: #{transformer_model_forward.3} parent=11 // pred_region
          _
        $region32: #{transformer_model_forward.3} parent=11 // pred_fallthru
          _
        // Predicated region
        $region33: #{transformer_model_forward.3} parent=11 // pred_check
          %p602 = pneg %p467
        $region34: #{transformer_model_forward.3} parent=11 // pred_check_branch
          %604 = sbr.rel (%p602) target = $region36
        $region35: #{transformer_model_forward.3} parent=11 // pred_region
          _
        $region36: #{transformer_model_forward.3} parent=11 // pred_fallthru
          _
        // Predicated region
        $region37: #{transformer_model_forward.3} parent=11 // pred_check
          %p605 = pneg %p488
        $region38: #{transformer_model_forward.3} parent=11 // pred_check_branch
          %607 = sbr.rel (%p605) target = $region40
        $region39: #{transformer_model_forward.3} parent=11 // pred_region
          _
        $region40: #{transformer_model_forward.3} parent=11 // pred_fallthru
          _
        // Predicated region
        $region41: #{transformer_model_forward.3} parent=11 // pred_check
          %p608 = pneg %p509
        $region42: #{transformer_model_forward.3} parent=11 // pred_check_branch
          %610 = sbr.rel (%p608) target = $region44
        $region43: #{transformer_model_forward.3} parent=11 // pred_region
          _
        $region44: #{transformer_model_forward.3} parent=11 // pred_fallthru
          _
        // Predicated region
        $region45: #{transformer_model_forward.3} parent=11 // pred_check
          %p611 = pneg %p530
        $region46: #{transformer_model_forward.3} parent=11 // pred_check_branch
          %613 = sbr.rel (%p611) target = $region48
        $region47: #{transformer_model_forward.3} parent=11 // pred_region
          _
        $region48: #{transformer_model_forward.3} parent=11 // pred_fallthru
          _
        // Predicated region
        $region49: #{transformer_model_forward.3} parent=11 // pred_check
          %p614 = pneg %p551
        $region50: #{transformer_model_forward.3} parent=11 // pred_check_branch
          %616 = sbr.rel (%p614) target = $region52
        $region51: #{transformer_model_forward.3} parent=11 // pred_region
          _
        $region52: #{transformer_model_forward.3} parent=11 // pred_fallthru
          _
      $region12: #{transformer_model_forward.3} parent=5 // pred_fallthru
        _
      %p617 = scmp.lt.s32.totalorder %s29, 2
      // Predicated region
      $region53: #{transformer_model_forward.3} parent=5 // pred_check
        %p618 = pneg %p617
      $region54: #{transformer_model_forward.3} parent=5 // pred_check_branch
        %620 = sbr.rel (%p618) target = $region56
      $region55: #{transformer_model_forward.3} parent=5 // pred_region
        // Predicated region
        $region57: #{transformer_model_forward.3} parent=55 // pred_check
          %p621 = pneg %p133
        $region58: #{transformer_model_forward.3} parent=55 // pred_check_branch
          %623 = sbr.rel (%p621) target = $region60
        $region59: #{transformer_model_forward.3} parent=55 // pred_region
          %p624 = scmp.lt.s32.totalorder %s29, 1
          %s625 = scalar_select %p624, %s29, 1
          %s626 = scalar_lea.vmem %s4, %s625
        $region60: #{transformer_model_forward.3} parent=55 // pred_fallthru
          _
        // Predicated region
        $region61: #{transformer_model_forward.3} parent=55 // pred_check
          %p627 = pneg %p159
        $region62: #{transformer_model_forward.3} parent=55 // pred_check_branch
          %629 = sbr.rel (%p627) target = $region64
        $region63: #{transformer_model_forward.3} parent=55 // pred_region
          %p630 = scmp.lt.s32.totalorder %s29, 1
          %s631 = scalar_select %p630, %s29, 1
          %s632 = scalar_lea.vmem %s5, %s631
        $region64: #{transformer_model_forward.3} parent=55 // pred_fallthru
          _
        // Predicated region
        $region65: #{transformer_model_forward.3} parent=55 // pred_check
          %p633 = pneg %p185
        $region66: #{transformer_model_forward.3} parent=55 // pred_check_branch
          %635 = sbr.rel (%p633) target = $region68
        $region67: #{transformer_model_forward.3} parent=55 // pred_region
          %p636 = scmp.lt.s32.totalorder %s29, 1
          %s637 = scalar_select %p636, %s29, 1
          %s638 = smul.addr %s637, 4
          %s639 = smul.addr %s638, 4
          %s640 = scalar_lea.vmem %s6, %s639
        $region68: #{transformer_model_forward.3} parent=55 // pred_fallthru
          _
        // Predicated region
        $region69: #{transformer_model_forward.3} parent=55 // pred_check
          %p641 = pneg %p211
        $region70: #{transformer_model_forward.3} parent=55 // pred_check_branch
          %643 = sbr.rel (%p641) target = $region72
        $region71: #{transformer_model_forward.3} parent=55 // pred_region
          %p644 = scmp.lt.s32.totalorder %s29, 1
          %s645 = scalar_select %p644, %s29, 1
          %s646 = scalar_lea.vmem %s7, %s645
        $region72: #{transformer_model_forward.3} parent=55 // pred_fallthru
          _
        // Predicated region
        $region73: #{transformer_model_forward.3} parent=55 // pred_check
          %p647 = pneg %p237
        $region74: #{transformer_model_forward.3} parent=55 // pred_check_branch
          %649 = sbr.rel (%p647) target = $region76
        $region75: #{transformer_model_forward.3} parent=55 // pred_region
          %p650 = scmp.lt.s32.totalorder %s29, 1
          %s651 = scalar_select %p650, %s29, 1
          %s652 = smul.addr %s651, 4
          %s653 = smul.addr %s652, 4
          %s654 = scalar_lea.vmem %s8, %s653
        $region76: #{transformer_model_forward.3} parent=55 // pred_fallthru
          _
        // Predicated region
        $region77: #{transformer_model_forward.3} parent=55 // pred_check
          %p655 = pneg %p263
        $region78: #{transformer_model_forward.3} parent=55 // pred_check_branch
          %657 = sbr.rel (%p655) target = $region80
        $region79: #{transformer_model_forward.3} parent=55 // pred_region
          %p658 = scmp.lt.s32.totalorder %s29, 1
          %s659 = scalar_select %p658, %s29, 1
          %s660 = scalar_lea.vmem %s9, %s659
        $region80: #{transformer_model_forward.3} parent=55 // pred_fallthru
          _
        // Predicated region
        $region81: #{transformer_model_forward.3} parent=55 // pred_check
          %p661 = pneg %p289
        $region82: #{transformer_model_forward.3} parent=55 // pred_check_branch
          %663 = sbr.rel (%p661) target = $region84
        $region83: #{transformer_model_forward.3} parent=55 // pred_region
          %p664 = scmp.lt.s32.totalorder %s29, 1
          %s665 = scalar_select %p664, %s29, 1
          %s666 = scalar_lea.vmem %s10, %s665
        $region84: #{transformer_model_forward.3} parent=55 // pred_fallthru
          _
        // Predicated region
        $region85: #{transformer_model_forward.3} parent=55 // pred_check
          %p667 = pneg %p315
        $region86: #{transformer_model_forward.3} parent=55 // pred_check_branch
          %669 = sbr.rel (%p667) target = $region88
        $region87: #{transformer_model_forward.3} parent=55 // pred_region
          %p670 = scmp.lt.s32.totalorder %s29, 1
          %s671 = scalar_select %p670, %s29, 1
          %s672 = scalar_lea.vmem %s11, %s671
        $region88: #{transformer_model_forward.3} parent=55 // pred_fallthru
          _
        // Predicated region
        $region89: #{transformer_model_forward.3} parent=55 // pred_check
          %p673 = pneg %p341
        $region90: #{transformer_model_forward.3} parent=55 // pred_check_branch
          %675 = sbr.rel (%p673) target = $region92
        $region91: #{transformer_model_forward.3} parent=55 // pred_region
          %p676 = scmp.lt.s32.totalorder %s29, 1
          %s677 = scalar_select %p676, %s29, 1
          %s678 = smul.addr %s677, 4
          %s679 = smul.addr %s678, 4
          %s680 = scalar_lea.vmem %s12, %s679
        $region92: #{transformer_model_forward.3} parent=55 // pred_fallthru
          _
        // Predicated region
        $region93: #{transformer_model_forward.3} parent=55 // pred_check
          %p681 = pneg %p367
        $region94: #{transformer_model_forward.3} parent=55 // pred_check_branch
          %683 = sbr.rel (%p681) target = $region96
        $region95: #{transformer_model_forward.3} parent=55 // pred_region
          %p684 = scmp.lt.s32.totalorder %s29, 1
          %s685 = scalar_select %p684, %s29, 1
          %s686 = scalar_lea.vmem %s13, %s685
        $region96: #{transformer_model_forward.3} parent=55 // pred_fallthru
          _
        // Predicated region
        $region97: #{transformer_model_forward.3} parent=55 // pred_check
          %p687 = pneg %p393
        $region98: #{transformer_model_forward.3} parent=55 // pred_check_branch
          %689 = sbr.rel (%p687) target = $region100
        $region99: #{transformer_model_forward.3} parent=55 // pred_region
          %p690 = scmp.lt.s32.totalorder %s29, 1
          %s691 = scalar_select %p690, %s29, 1
          %s692 = smul.addr %s691, 16
          %s693 = smul.addr %s692, 4
          %s694 = scalar_lea.vmem %s14, %s693
        $region100: #{transformer_model_forward.3} parent=55 // pred_fallthru
          _
        // Predicated region
        $region101: #{transformer_model_forward.3} parent=55 // pred_check
          %p695 = pneg %p419
        $region102: #{transformer_model_forward.3} parent=55 // pred_check_branch
          %697 = sbr.rel (%p695) target = $region104
        $region103: #{transformer_model_forward.3} parent=55 // pred_region
          %p698 = scmp.lt.s32.totalorder %s29, 1
          %s699 = scalar_select %p698, %s29, 1
          %s700 = scalar_lea.vmem %s15, %s699
        $region104: #{transformer_model_forward.3} parent=55 // pred_fallthru
          _
      $region56: #{transformer_model_forward.3} parent=5 // pred_fallthru
        _
      %p701 = scmp.le.s32.totalorder 1, %s29
      %p702 = scmp.lt.s32.totalorder %s29, 3
      %p703 = pnand %p701, %p702
      %p704 = pneg %p703
      // Predicated region
      $region105: #{transformer_model_forward.3} parent=5 // pred_check
        _
      $region106: #{transformer_model_forward.3} parent=5 // pred_check_branch
        %706 = sbr.rel (%p703) target = $region108
      $region107: #{transformer_model_forward.3} parent=5 // pred_region
        %s707 = ssub.s32 %s29, 1
        %p708 = pneg %p50
        %p709 = pneg %p47
        %p710 = pneg %p71
        %p711 = pneg %p68
        %p712 = pneg %p92
        %p713 = pneg %p89
        %p714 = pneg %p113
        %p715 = pneg %p110
        %p716 = scmp.lt.s32.totalorder %s34, 1
        %s717 = scalar_select %p716, %s34, 1
        %s718 = scalar_lea.vmem %s4, %s717
        %p719 = pneg %p139
        %p720 = pneg %p136
        %p721 = scmp.lt.s32.totalorder %s34, 1
        %s722 = scalar_select %p721, %s34, 1
        %s723 = scalar_lea.vmem %s5, %s722
        %p724 = pneg %p165
        %p725 = pneg %p162
        %p726 = scmp.lt.s32.totalorder %s34, 1
        %s727 = scalar_select %p726, %s34, 1
        %s728 = smul.addr %s727, 4
        %s729 = smul.addr %s728, 4
        %s730 = scalar_lea.vmem %s6, %s729
        %p731 = pneg %p191
        %p732 = pneg %p188
        %p733 = scmp.lt.s32.totalorder %s34, 1
        %s734 = scalar_select %p733, %s34, 1
        %s735 = scalar_lea.vmem %s7, %s734
        %p736 = pneg %p217
        %p737 = pneg %p214
        %p738 = scmp.lt.s32.totalorder %s34, 1
        %s739 = scalar_select %p738, %s34, 1
        %s740 = smul.addr %s739, 4
        %s741 = smul.addr %s740, 4
        %s742 = scalar_lea.vmem %s8, %s741
        %p743 = pneg %p243
        %p744 = pneg %p240
        %p745 = scmp.lt.s32.totalorder %s34, 1
        %s746 = scalar_select %p745, %s34, 1
        %s747 = scalar_lea.vmem %s9, %s746
        %p748 = pneg %p269
        %p749 = pneg %p266
        %p750 = scmp.lt.s32.totalorder %s34, 1
        %s751 = scalar_select %p750, %s34, 1
        %s752 = scalar_lea.vmem %s10, %s751
        %p753 = pneg %p295
        %p754 = pneg %p292
        %p755 = scmp.lt.s32.totalorder %s34, 1
        %s756 = scalar_select %p755, %s34, 1
        %s757 = scalar_lea.vmem %s11, %s756
        %p758 = pneg %p321
        %p759 = pneg %p318
        %p760 = scmp.lt.s32.totalorder %s34, 1
        %s761 = scalar_select %p760, %s34, 1
        %s762 = smul.addr %s761, 4
        %s763 = smul.addr %s762, 4
        %s764 = scalar_lea.vmem %s12, %s763
        %p765 = pneg %p347
        %p766 = pneg %p344
        %p767 = scmp.lt.s32.totalorder %s34, 1
        %s768 = scalar_select %p767, %s34, 1
        %s769 = scalar_lea.vmem %s13, %s768
        %p770 = pneg %p373
        %p771 = pneg %p370
        %p772 = scmp.lt.s32.totalorder %s34, 1
        %s773 = scalar_select %p772, %s34, 1
        %s774 = smul.addr %s773, 16
        %s775 = smul.addr %s774, 4
        %s776 = scalar_lea.vmem %s14, %s775
        %p777 = pneg %p399
        %p778 = pneg %p396
        %p779 = scmp.lt.s32.totalorder %s34, 1
        %s780 = scalar_select %p779, %s34, 1
        %s781 = scalar_lea.vmem %s15, %s780
        %p782 = pneg %p425
        %p783 = pneg %p422
        %p784 = pneg %p446
        %p785 = pneg %p443
        %p786 = pneg %p467
        %p787 = pneg %p464
        %p788 = pneg %p488
        %p789 = pneg %p485
        %p790 = pneg %p509
        %p791 = pneg %p506
        %p792 = pneg %p530
        %p793 = pneg %p527
        %p794 = pneg %p551
        %p795 = pneg %p548
        %p796 = pneg %p572
        %p797 = pneg %p569
        %p798 = scmp.lt.s32.totalorder %s34, 1
        %s799 = scalar_select %p798, %s34, 1
        %s800 = scalar_lea.vmem %s4, %s799
        %p801 = scmp.lt.s32.totalorder %s34, 1
        %s802 = scalar_select %p801, %s34, 1
        %s803 = scalar_lea.vmem %s5, %s802
        %p804 = scmp.lt.s32.totalorder %s34, 1
        %s805 = scalar_select %p804, %s34, 1
        %s806 = smul.addr %s805, 4
        %s807 = smul.addr %s806, 4
        %s808 = scalar_lea.vmem %s6, %s807
        %p809 = scmp.lt.s32.totalorder %s34, 1
        %s810 = scalar_select %p809, %s34, 1
        %s811 = scalar_lea.vmem %s7, %s810
        %p812 = scmp.lt.s32.totalorder %s34, 1
        %s813 = scalar_select %p812, %s34, 1
        %s814 = smul.addr %s813, 4
        %s815 = smul.addr %s814, 4
        %s816 = scalar_lea.vmem %s8, %s815
        %p817 = scmp.lt.s32.totalorder %s34, 1
        %s818 = scalar_select %p817, %s34, 1
        %s819 = scalar_lea.vmem %s9, %s818
        %p820 = scmp.lt.s32.totalorder %s34, 1
        %s821 = scalar_select %p820, %s34, 1
        %s822 = scalar_lea.vmem %s10, %s821
        %p823 = scmp.lt.s32.totalorder %s34, 1
        %s824 = scalar_select %p823, %s34, 1
        %s825 = scalar_lea.vmem %s11, %s824
        %p826 = scmp.lt.s32.totalorder %s34, 1
        %s827 = scalar_select %p826, %s34, 1
        %s828 = smul.addr %s827, 4
        %s829 = smul.addr %s828, 4
        %s830 = scalar_lea.vmem %s12, %s829
        %p831 = scmp.lt.s32.totalorder %s34, 1
        %s832 = scalar_select %p831, %s34, 1
        %s833 = scalar_lea.vmem %s13, %s832
        %p834 = scmp.lt.s32.totalorder %s34, 1
        %s835 = scalar_select %p834, %s34, 1
        %s836 = smul.addr %s835, 16
        %s837 = smul.addr %s836, 4
        %s838 = scalar_lea.vmem %s14, %s837
        %p839 = scmp.lt.s32.totalorder %s34, 1
        %s840 = scalar_select %p839, %s34, 1
        %s841 = scalar_lea.vmem %s15, %s840
        %p843 = scmp.eq.s32.totalorder %s34, 0
        // Predicated region
        $region109: #{transformer_model_forward.3} parent=107 // pred_check
          %p844 = pneg %p843
        $region110: #{transformer_model_forward.3} parent=107 // pred_check_branch
          %846 = sbr.rel (%p844) target = $region112
        $region111: #{transformer_model_forward.3} parent=107 // pred_region
          %v847 = vld [vmem:[%s0] sm:$0xf]
          %v848 = vld [vmem:[%s0 + $0x4] sm:$0xf]
          %v849 = vld [vmem:[%s1] sm:$0xf]
          %v850 = vld [vmem:[%s1 + $0x4] sm:$0xf]
          %v851 = vld [vmem:[%s1 + $0x8] sm:$0xf]
          %v852 = vld [vmem:[%s1 + $0xc] sm:$0xf]
          %v853 = vld [vmem:[%s1 + $0x10] sm:$0xf]
          %v854 = vld [vmem:[%s1 + $0x14] sm:$0xf]
          %v855 = vld [vmem:[%s1 + $0x18] sm:$0xf]
          %v856 = vld [vmem:[%s1 + $0x1c] sm:$0xf]
          %v857 = vld [vmem:[%s1 + $0x20] sm:$0xf]
          %v858 = vld [vmem:[%s1 + $0x24] sm:$0xf]
          %v859 = vld [vmem:[%s1 + $0x28] sm:$0xf]
          %v860 = vld [vmem:[%s1 + $0x2c] sm:$0xf]
          %v861 = vld [vmem:[%s1 + $0x30] sm:$0xf]
          %v862 = vld [vmem:[%s1 + $0x34] sm:$0xf]
          %v863 = vld [vmem:[%s1 + $0x38] sm:$0xf]
          %v864 = vld [vmem:[%s1 + $0x3c] sm:$0xf]
          %v865 = vld [vmem:[%s2] sm:$0xff]
          %v866 = vld [vmem:[%s2 + $0x8] sm:$0xff]
          %v869 = vunpack.c.l.b16 %v847
          %v870 = vunpack.c.l.b16 %v848
          %v871 = vpack.c.b16 %v870, %v869
          %v889 = vunpack.c.l.b16 %v849
          %v890 = vunpack.c.l.b16 %v850
          %v891 = vunpack.c.l.b16 %v851
          %v892 = vunpack.c.l.b16 %v852
          %v893 = vunpack.c.l.b16 %v853
          %v894 = vunpack.c.l.b16 %v854
          %v895 = vunpack.c.l.b16 %v855
          %v896 = vunpack.c.l.b16 %v856
          %v897 = vunpack.c.l.b16 %v857
          %v898 = vunpack.c.l.b16 %v858
          %v899 = vunpack.c.l.b16 %v859
          %v900 = vunpack.c.l.b16 %v860
          %v901 = vunpack.c.l.b16 %v861
          %v902 = vunpack.c.l.b16 %v862
          %v903 = vunpack.c.l.b16 %v863
          %v904 = vunpack.c.l.b16 %v864
          %v905 = vpack.c.b16 %v890, %v889
          %v906 = vpack.c.b16 %v892, %v891
          %v907 = vpack.c.b16 %v894, %v893
          %v908 = vpack.c.b16 %v896, %v895
          %v909 = vpack.c.b16 %v898, %v897
          %v910 = vpack.c.b16 %v900, %v899
          %v911 = vpack.c.b16 %v902, %v901
          %v912 = vpack.c.b16 %v904, %v903
          %921 = vmatprep.subr.bf16.mxu0 0
          %922 = vmatpush1.bf16.msra.mxu0 %v905
          %923 = vmatprep.subr.bf16.mxu0 0
          %924 = vmatpush1.bf16.msra.mxu0 %v906
          %925 = vmatprep.subr.bf16.mxu0 0
          %926 = vmatpush1.bf16.msra.mxu0 %v907
          %927 = vmatprep.subr.bf16.mxu0 0
          %928 = vmatpush1.bf16.msra.mxu0 %v908
          %929 = vmatprep.subr.bf16.mxu0 0
          %930 = vmatpush1.bf16.msra.mxu0 %v909
          %931 = vmatprep.subr.bf16.mxu0 0
          %932 = vmatpush1.bf16.msra.mxu0 %v910
          %933 = vmatprep.subr.bf16.mxu0 0
          %934 = vmatpush1.bf16.msra.mxu0 %v911
          %935 = vmatprep.subr.bf16.mxu0 0
          %936 = vmatpush1.bf16.msra.mxu0 %v912
          %937 = vmatprep.subr.bf16.mxu0 0
          %938 = vmatpush1.bf16.msra.mxu0 0
          %939 = vmatprep.subr.bf16.mxu0 0
          %940 = vmatpush1.bf16.msra.mxu0 0
          %941 = vmatprep.subr.bf16.mxu0 0
          %942 = vmatpush1.bf16.msra.mxu0 0
          %943 = vmatprep.subr.bf16.mxu0 0
          %944 = vmatpush1.bf16.msra.mxu0 0
          %945 = vmatprep.subr.bf16.mxu0 0
          %946 = vmatpush1.bf16.msra.mxu0 0
          %947 = vmatprep.subr.bf16.mxu0 0
          %948 = vmatpush1.bf16.msra.mxu0 0
          %949 = vmatprep.subr.bf16.mxu0 0
          %950 = vmatpush1.bf16.msra.mxu0 0
          %951 = vmatprep.subr.bf16.mxu0 0
          %952 = vmatpush1.bf16.msra.mxu0 0
          %953 = vmatprep.mubr.bf16.mxu0 0
          %954 = vmatmul.mubr.bf16.gmra.mrb[0].mxu0 %v871
          %v955 = vpop.f32.mrb[0].mxu0
          %v956 = vadd.f32 %v865, %v955
          %v957 = vpop.f32.mrb[0].mxu0
          %v958 = vpop.f32.mrb[0].mxu0
          %v959 = vadd.f32 %v866, %v958
          %v960 = vpop.f32.mrb[0].mxu0
          %961 = vdwg.mxu0
          %vm962 = vcmask 261120
          %963 = vst.msk [vmem:[#allocation2] sm:$0xff] %vm962, %v956
          %964 = vst.msk [vmem:[#allocation2 + $0x8] sm:$0xff] %vm962, %v959
        $region112: #{transformer_model_forward.3} parent=107 // pred_fallthru
          _
        %v965 = vld [vmem:[#allocation2] sm:$0xff]
        %v966 = vld [vmem:[#allocation2 + $0x8] sm:$0xff]
        %v967 = vld [vmem:[%s800] sm:$0x1]
        %v968 = vld [vmem:[%s803] sm:$0x1]
        %vm969 = vcmask 261120
        %v970 = vsel %vm969, %v965, 0.0
        %971 = vadd.xlane.f32.xlu0 %v970
        %v972 = vpop.xlane.xlu0 %971
        %v973 = vsel %vm969, %v966, 0.0
        %974 = vadd.xlane.f32.xlu0 %v973
        %v975 = vpop.xlane.xlu0 %974
        %v976 = vrcp.pop 32.0
        %v977 = vmul.f32 %v972, %v976
        %v978 = vmul.f32 %v975, %v976
        %v979 = vsub.f32 %v965, %v977
        %v980 = vsub.f32 %v966, %v978
        %v981 = vmul.f32 %v979, %v979
        %v982 = vmul.f32 %v980, %v980
        %v983 = vsel %vm969, %v981, 0.0
        %984 = vadd.xlane.f32.xlu0 %v983
        %v985 = vpop.xlane.xlu0 %984
        %v986 = vsel %vm969, %v982, 0.0
        %987 = vadd.xlane.f32.xlu0 %v986
        %v988 = vpop.xlane.xlu0 %987
        %v989 = vmul.f32 %v985, %v976
        %v990 = vmul.f32 %v988, %v976
        %v991 = vadd.f32 %v989, 1e-05
        %v992 = vadd.f32 %v990, 1e-05
        %v993 = vrsqrt.pop %v991
        %v994 = vrsqrt.pop %v992
        %v995 = vmul.f32 %v979, %v993
        %v996 = vmul.f32 %v980, %v994
        %v998 = vlaneseq
        %v999 = vshrl.u32 %v998, 7
        %v1000 = vsub.s32 0, %v999
        %v1001 = vrot.slane %v967, %v1000
        %v1003 = vmul.f32 %v995, %v1001
        %v1004 = vmul.f32 %v996, %v1001
        %v1006 = vlaneseq
        %v1007 = vshrl.u32 %v1006, 7
        %v1008 = vsub.s32 0, %v1007
        %v1009 = vrot.slane %v968, %v1008
        %v1011 = vadd.f32 %v1003, %v1009
        %v1012 = vadd.f32 %v1004, %v1009
        %v1013 = vpack.c.bf16 %v1012, %v1011
        %v1014 = vld [vmem:[%s808] sm:$0xf]
        %v1015 = vld [vmem:[%s808 + $0x4] sm:$0xf]
        %v1016 = vld [vmem:[%s808 + $0x8] sm:$0xf]
        %v1017 = vld [vmem:[%s808 + $0xc] sm:$0xf]
        %v1018 = vld [vmem:[%s811] sm:$0x1]
        %v1020 = vlaneseq
        %v1021 = vshrl.u32 %v1020, 7
        %v1022 = vsub.s32 0, %v1021
        %v1023 = vrot.slane %v1018, %v1022
        %v1029 = vunpack.c.l.b16 %v1014
        %v1030 = vunpack.c.l.b16 %v1015
        %v1031 = vunpack.c.l.b16 %v1016
        %v1032 = vunpack.c.l.b16 %v1017
        %v1033 = vpack.c.b16 %v1030, %v1029
        %v1034 = vpack.c.b16 %v1032, %v1031
        %v1038 = vsel %vm969, %v1013, 0
        %1040 = vmatprep.subr.bf16.mxu0 0
        %1041 = vmatpush1.bf16.msra.mxu0 %v1033
        %1042 = vmatprep.subr.bf16.mxu0 0
        %1043 = vmatpush1.bf16.msra.mxu0 %v1034
        %1044 = vmatprep.subr.bf16.mxu0 0
        %1045 = vmatpush1.bf16.msra.mxu0 0
        %1046 = vmatprep.subr.bf16.mxu0 0
        %1047 = vmatpush1.bf16.msra.mxu0 0
        %1048 = vmatprep.subr.bf16.mxu0 0
        %1049 = vmatpush1.bf16.msra.mxu0 0
        %1050 = vmatprep.subr.bf16.mxu0 0
        %1051 = vmatpush1.bf16.msra.mxu0 0
        %1052 = vmatprep.subr.bf16.mxu0 0
        %1053 = vmatpush1.bf16.msra.mxu0 0
        %1054 = vmatprep.subr.bf16.mxu0 0
        %1055 = vmatpush1.bf16.msra.mxu0 0
        %1056 = vmatprep.subr.bf16.mxu0 0
        %1057 = vmatpush1.bf16.msra.mxu0 0
        %1058 = vmatprep.subr.bf16.mxu0 0
        %1059 = vmatpush1.bf16.msra.mxu0 0
        %1060 = vmatprep.subr.bf16.mxu0 0
        %1061 = vmatpush1.bf16.msra.mxu0 0
        %1062 = vmatprep.subr.bf16.mxu0 0
        %1063 = vmatpush1.bf16.msra.mxu0 0
        %1064 = vmatprep.subr.bf16.mxu0 0
        %1065 = vmatpush1.bf16.msra.mxu0 0
        %1066 = vmatprep.subr.bf16.mxu0 0
        %1067 = vmatpush1.bf16.msra.mxu0 0
        %1068 = vmatprep.subr.bf16.mxu0 0
        %1069 = vmatpush1.bf16.msra.mxu0 0
        %1070 = vmatprep.subr.bf16.mxu0 0
        %1071 = vmatpush1.bf16.msra.mxu0 0
        %1072 = vmatprep.mubr.bf16.mxu0 0
        %1073 = vmatmul.mubr.bf16.gmra.mrb[0].mxu0 %v1038
        %v1074 = vpop.f32.mrb[0].mxu0
        %v1075 = vadd.f32 %v1023, %v1074
        %v1076 = vpop.f32.mrb[0].mxu0
        %v1077 = vpop.f32.mrb[0].mxu0
        %v1078 = vadd.f32 %v1023, %v1077
        %v1079 = vpop.f32.mrb[0].mxu0
        %1080 = vdwg.mxu0
        %v1081 = vld [vmem:[%s816] sm:$0xf]
        %v1082 = vld [vmem:[%s816 + $0x4] sm:$0xf]
        %v1083 = vld [vmem:[%s816 + $0x8] sm:$0xf]
        %v1084 = vld [vmem:[%s816 + $0xc] sm:$0xf]
        %v1085 = vld [vmem:[%s3] sm:$0xff]
        %v1086 = vld [vmem:[%s3 + $0x8] sm:$0xff]
        %v1087 = vpack.c.bf16 %v1078, %v1075
        %1089 = vrot.lane.b32.xlu0 %v1087, 96
        %v1090 = vpop.permute.xlu0 %1089
        %vm1091 = vcmask 64512
        %v1093 = vsel %vm1091, %v1087, 0
        %v1096 = vsel %vm1091, %v1090, 0
        %1098 = vmatprep.subr.bf16.mxu0 0
        %1099 = vmatpush1.bf16.xpose.msra.mxu0 %v1096
        %1100 = vmatprep.subr.bf16.mxu0 0
        %1101 = vmatpush1.bf16.xpose.msra.mxu0 0
        %1102 = vmatprep.subr.bf16.mxu0 0
        %1103 = vmatpush1.bf16.xpose.msra.mxu0 0
        %1104 = vmatprep.subr.bf16.mxu0 0
        %1105 = vmatpush1.bf16.xpose.msra.mxu0 0
        %1106 = vmatprep.subr.bf16.mxu0 0
        %1107 = vmatpush1.bf16.xpose.msra.mxu0 0
        %1108 = vmatprep.subr.bf16.mxu0 0
        %1109 = vmatpush1.bf16.xpose.msra.mxu0 0
        %1110 = vmatprep.subr.bf16.mxu0 0
        %1111 = vmatpush1.bf16.xpose.msra.mxu0 0
        %1112 = vmatprep.subr.bf16.mxu0 0
        %1113 = vmatpush1.bf16.xpose.msra.mxu0 0
        %1114 = vmatprep.subr.bf16.mxu0 0
        %1115 = vmatpush1.bf16.xpose.msra.mxu0 0
        %1116 = vmatprep.subr.bf16.mxu0 0
        %1117 = vmatpush1.bf16.xpose.msra.mxu0 0
        %1118 = vmatprep.subr.bf16.mxu0 0
        %1119 = vmatpush1.bf16.xpose.msra.mxu0 0
        %1120 = vmatprep.subr.bf16.mxu0 0
        %1121 = vmatpush1.bf16.xpose.msra.mxu0 0
        %1122 = vmatprep.subr.bf16.mxu0 0
        %1123 = vmatpush1.bf16.xpose.msra.mxu0 0
        %1124 = vmatprep.subr.bf16.mxu0 0
        %1125 = vmatpush1.bf16.xpose.msra.mxu0 0
        %1126 = vmatprep.subr.bf16.mxu0 0
        %1127 = vmatpush1.bf16.xpose.msra.mxu0 0
        %1128 = vmatprep.subr.bf16.mxu0 0
        %1129 = vmatpush1.bf16.xpose.msra.mxu0 0
        %1130 = vmatprep.mubr.bf16.mxu0 0
        %1131 = vmatmul.mubr.bf16.gmra.mrb[0].mxu0 %v1093
        %v1132 = vpop.f32.mrb[0].mxu0
        %v1133 = vadd.f32 %v1085, %v1132
        %v1134 = vpop.f32.mrb[0].mxu0
        %v1135 = vpop.f32.mrb[0].mxu0
        %v1136 = vadd.f32 %v1086, %v1135
        %v1137 = vpop.f32.mrb[0].mxu0
        %1138 = vdwg.mxu0
        %vm1139 = vcmask 130048
        %v1140 = vsel %vm1139, %v1133, -inf
        %1141 = vmax.xlane.f32.xlu0 %v1140
        %v1142 = vpop.xlane.xlu0 %1141
        %v1143 = vsel %vm1139, %v1136, -inf
        %1144 = vmax.xlane.f32.xlu0 %v1143
        %v1145 = vpop.xlane.xlu0 %1144
        %v1146 = vsub.f32 %v1133, %v1142
        %v1147 = vsub.f32 %v1136, %v1145
        %v1148 = vmul.f32 %v1146, 1.442695
        %v1149 = vpow.pop %v1148
        %v1150 = vmul.f32 %v1147, 1.442695
        %v1151 = vpow.pop %v1150
        %v1152 = vsel %vm1139, %v1149, 0.0
        %1153 = vadd.xlane.f32.xlu0 %v1152
        %v1154 = vpop.xlane.xlu0 %1153
        %v1155 = vsel %vm1139, %v1151, 0.0
        %1156 = vadd.xlane.f32.xlu0 %v1155
        %v1157 = vpop.xlane.xlu0 %1156
        %v1158 = vrcp.pop %v1154
        %v1159 = vrcp.pop %v1157
        %v1160 = vmul.f32 %v1149, %v1158
        %v1161 = vmul.f32 %v1151, %v1159
        %v1162 = vpack.c.bf16 %v1161, %v1160
        %1163 = vrot.lane.b32.xlu0 %v1087, 64
        %v1164 = vpop.permute.xlu0 %1163
        %v1167 = vsel %vm1139, %v1162, 0
        %1169 = vmatprep.subr.bf16.mxu0 0
        %1170 = vmatpush1.bf16.msra.mxu0 %v1164
        %1171 = vmatprep.subr.bf16.mxu0 0
        %1172 = vmatpush1.bf16.msra.mxu0 0
        %1173 = vmatprep.subr.bf16.mxu0 0
        %1174 = vmatpush1.bf16.msra.mxu0 0
        %1175 = vmatprep.subr.bf16.mxu0 0
        %1176 = vmatpush1.bf16.msra.mxu0 0
        %1177 = vmatprep.subr.bf16.mxu0 0
        %1178 = vmatpush1.bf16.msra.mxu0 0
        %1179 = vmatprep.subr.bf16.mxu0 0
        %1180 = vmatpush1.bf16.msra.mxu0 0
        %1181 = vmatprep.subr.bf16.mxu0 0
        %1182 = vmatpush1.bf16.msra.mxu0 0
        %1183 = vmatprep.subr.bf16.mxu0 0
        %1184 = vmatpush1.bf16.msra.mxu0 0
        %1185 = vmatprep.subr.bf16.mxu0 0
        %1186 = vmatpush1.bf16.msra.mxu0 0
        %1187 = vmatprep.subr.bf16.mxu0 0
        %1188 = vmatpush1.bf16.msra.mxu0 0
        %1189 = vmatprep.subr.bf16.mxu0 0
        %1190 = vmatpush1.bf16.msra.mxu0 0
        %1191 = vmatprep.subr.bf16.mxu0 0
        %1192 = vmatpush1.bf16.msra.mxu0 0
        %1193 = vmatprep.subr.bf16.mxu0 0
        %1194 = vmatpush1.bf16.msra.mxu0 0
        %1195 = vmatprep.subr.bf16.mxu0 0
        %1196 = vmatpush1.bf16.msra.mxu0 0
        %1197 = vmatprep.subr.bf16.mxu0 0
        %1198 = vmatpush1.bf16.msra.mxu0 0
        %1199 = vmatprep.subr.bf16.mxu0 0
        %1200 = vmatpush1.bf16.msra.mxu0 0
        %1201 = vmatprep.mubr.bf16.mxu0 0
        %1202 = vmatmul.mubr.bf16.gmra.mrb[0].mxu0 %v1167
        %v1203 = vpop.f32.mrb[0].mxu0
        %v1204 = vadd.f32 0.0, %v1203
        %v1205 = vpop.f32.mrb[0].mxu0
        %v1206 = vpop.f32.mrb[0].mxu0
        %v1207 = vadd.f32 0.0, %v1206
        %v1208 = vpop.f32.mrb[0].mxu0
        %1209 = vdwg.mxu0
        %v1210 = vpack.c.bf16 %v1207, %v1204
        %1211 = vrot.lane.b32.xlu0 %v1087, 120
        %v1212 = vpop.permute.xlu0 %1211
        %1213 = vrot.lane.b32.xlu0 %v1087, 88
        %v1214 = vpop.permute.xlu0 %1213
        %v1216 = vsel %vm1091, %v1212, 0
        %v1219 = vsel %vm1091, %v1214, 0
        %1221 = vmatprep.subr.bf16.mxu0 0
        %1222 = vmatpush1.bf16.xpose.msra.mxu0 %v1219
        %1223 = vmatprep.subr.bf16.mxu0 0
        %1224 = vmatpush1.bf16.xpose.msra.mxu0 0
        %1225 = vmatprep.subr.bf16.mxu0 0
        %1226 = vmatpush1.bf16.xpose.msra.mxu0 0
        %1227 = vmatprep.subr.bf16.mxu0 0
        %1228 = vmatpush1.bf16.xpose.msra.mxu0 0
        %1229 = vmatprep.subr.bf16.mxu0 0
        %1230 = vmatpush1.bf16.xpose.msra.mxu0 0
        %1231 = vmatprep.subr.bf16.mxu0 0
        %1232 = vmatpush1.bf16.xpose.msra.mxu0 0
        %1233 = vmatprep.subr.bf16.mxu0 0
        %1234 = vmatpush1.bf16.xpose.msra.mxu0 0
        %1235 = vmatprep.subr.bf16.mxu0 0
        %1236 = vmatpush1.bf16.xpose.msra.mxu0 0
        %1237 = vmatprep.subr.bf16.mxu0 0
        %1238 = vmatpush1.bf16.xpose.msra.mxu0 0
        %1239 = vmatprep.subr.bf16.mxu0 0
        %1240 = vmatpush1.bf16.xpose.msra.mxu0 0
        %1241 = vmatprep.subr.bf16.mxu0 0
        %1242 = vmatpush1.bf16.xpose.msra.mxu0 0
        %1243 = vmatprep.subr.bf16.mxu0 0
        %1244 = vmatpush1.bf16.xpose.msra.mxu0 0
        %1245 = vmatprep.subr.bf16.mxu0 0
        %1246 = vmatpush1.bf16.xpose.msra.mxu0 0
        %1247 = vmatprep.subr.bf16.mxu0 0
        %1248 = vmatpush1.bf16.xpose.msra.mxu0 0
        %1249 = vmatprep.subr.bf16.mxu0 0
        %1250 = vmatpush1.bf16.xpose.msra.mxu0 0
        %1251 = vmatprep.subr.bf16.mxu0 0
        %1252 = vmatpush1.bf16.xpose.msra.mxu0 0
        %1253 = vmatprep.mubr.bf16.mxu0 0
        %1254 = vmatmul.mubr.bf16.gmra.mrb[0].mxu0 %v1216
        %v1255 = vpop.f32.mrb[0].mxu0
        %v1256 = vadd.f32 %v1085, %v1255
        %v1257 = vpop.f32.mrb[0].mxu0
        %v1258 = vpop.f32.mrb[0].mxu0
        %v1259 = vadd.f32 %v1086, %v1258
        %v1260 = vpop.f32.mrb[0].mxu0
        %1261 = vdwg.mxu0
        %v1262 = vsel %vm1139, %v1256, -inf
        %1263 = vmax.xlane.f32.xlu0 %v1262
        %v1264 = vpop.xlane.xlu0 %1263
        %v1265 = vsel %vm1139, %v1259, -inf
        %1266 = vmax.xlane.f32.xlu0 %v1265
        %v1267 = vpop.xlane.xlu0 %1266
        %v1268 = vsub.f32 %v1256, %v1264
        %v1269 = vsub.f32 %v1259, %v1267
        %v1270 = vmul.f32 %v1268, 1.442695
        %v1271 = vpow.pop %v1270
        %v1272 = vmul.f32 %v1269, 1.442695
        %v1273 = vpow.pop %v1272
        %v1274 = vsel %vm1139, %v1271, 0.0
        %1275 = vadd.xlane.f32.xlu0 %v1274
        %v1276 = vpop.xlane.xlu0 %1275
        %v1277 = vsel %vm1139, %v1273, 0.0
        %1278 = vadd.xlane.f32.xlu0 %v1277
        %v1279 = vpop.xlane.xlu0 %1278
        %v1280 = vrcp.pop %v1276
        %v1281 = vrcp.pop %v1279
        %v1282 = vmul.f32 %v1271, %v1280
        %v1283 = vmul.f32 %v1273, %v1281
        %v1284 = vpack.c.bf16 %v1283, %v1282
        %1285 = vrot.lane.b32.xlu0 %v1087, 56
        %v1286 = vpop.permute.xlu0 %1285
        %v1289 = vsel %vm1139, %v1284, 0
        %1291 = vmatprep.subr.bf16.mxu0 0
        %1292 = vmatpush1.bf16.msra.mxu0 %v1286
        %1293 = vmatprep.subr.bf16.mxu0 0
        %1294 = vmatpush1.bf16.msra.mxu0 0
        %1295 = vmatprep.subr.bf16.mxu0 0
        %1296 = vmatpush1.bf16.msra.mxu0 0
        %1297 = vmatprep.subr.bf16.mxu0 0
        %1298 = vmatpush1.bf16.msra.mxu0 0
        %1299 = vmatprep.subr.bf16.mxu0 0
        %1300 = vmatpush1.bf16.msra.mxu0 0
        %1301 = vmatprep.subr.bf16.mxu0 0
        %1302 = vmatpush1.bf16.msra.mxu0 0
        %1303 = vmatprep.subr.bf16.mxu0 0
        %1304 = vmatpush1.bf16.msra.mxu0 0
        %1305 = vmatprep.subr.bf16.mxu0 0
        %1306 = vmatpush1.bf16.msra.mxu0 0
        %1307 = vmatprep.subr.bf16.mxu0 0
        %1308 = vmatpush1.bf16.msra.mxu0 0
        %1309 = vmatprep.subr.bf16.mxu0 0
        %1310 = vmatpush1.bf16.msra.mxu0 0
        %1311 = vmatprep.subr.bf16.mxu0 0
        %1312 = vmatpush1.bf16.msra.mxu0 0
        %1313 = vmatprep.subr.bf16.mxu0 0
        %1314 = vmatpush1.bf16.msra.mxu0 0
        %1315 = vmatprep.subr.bf16.mxu0 0
        %1316 = vmatpush1.bf16.msra.mxu0 0
        %1317 = vmatprep.subr.bf16.mxu0 0
        %1318 = vmatpush1.bf16.msra.mxu0 0
        %1319 = vmatprep.subr.bf16.mxu0 0
        %1320 = vmatpush1.bf16.msra.mxu0 0
        %1321 = vmatprep.subr.bf16.mxu0 0
        %1322 = vmatpush1.bf16.msra.mxu0 0
        %1323 = vmatprep.mubr.bf16.mxu0 0
        %1324 = vmatmul.mubr.bf16.gmra.mrb[0].mxu0 %v1289
        %v1325 = vpop.f32.mrb[0].mxu0
        %v1326 = vadd.f32 0.0, %v1325
        %v1327 = vpop.f32.mrb[0].mxu0
        %v1328 = vpop.f32.mrb[0].mxu0
        %v1329 = vadd.f32 0.0, %v1328
        %v1330 = vpop.f32.mrb[0].mxu0
        %1331 = vdwg.mxu0
        %v1332 = vpack.c.bf16 %v1329, %v1326
        %v1334 = vsel %vm1091, %v1332, 0
        %vm1336 = vcmask 1043456
        %v1338 = vsel %vm1336, %v1082, 0
        %1340 = vmatprep.subr.bf16.mxu0 0
        %1341 = vmatpush1.bf16.msra.mxu0 %v1338
        %1342 = vmatprep.subr.bf16.mxu0 0
        %1343 = vmatpush1.bf16.msra.mxu0 0
        %1344 = vmatprep.subr.bf16.mxu0 0
        %1345 = vmatpush1.bf16.msra.mxu0 0
        %1346 = vmatprep.subr.bf16.mxu0 0
        %1347 = vmatpush1.bf16.msra.mxu0 0
        %1348 = vmatprep.subr.bf16.mxu0 0
        %1349 = vmatpush1.bf16.msra.mxu0 0
        %1350 = vmatprep.subr.bf16.mxu0 0
        %1351 = vmatpush1.bf16.msra.mxu0 0
        %1352 = vmatprep.subr.bf16.mxu0 0
        %1353 = vmatpush1.bf16.msra.mxu0 0
        %1354 = vmatprep.subr.bf16.mxu0 0
        %1355 = vmatpush1.bf16.msra.mxu0 0
        %1356 = vmatprep.subr.bf16.mxu0 0
        %1357 = vmatpush1.bf16.msra.mxu0 0
        %1358 = vmatprep.subr.bf16.mxu0 0
        %1359 = vmatpush1.bf16.msra.mxu0 0
        %1360 = vmatprep.subr.bf16.mxu0 0
        %1361 = vmatpush1.bf16.msra.mxu0 0
        %1362 = vmatprep.subr.bf16.mxu0 0
        %1363 = vmatpush1.bf16.msra.mxu0 0
        %1364 = vmatprep.subr.bf16.mxu0 0
        %1365 = vmatpush1.bf16.msra.mxu0 0
        %1366 = vmatprep.subr.bf16.mxu0 0
        %1367 = vmatpush1.bf16.msra.mxu0 0
        %1368 = vmatprep.subr.bf16.mxu0 0
        %1369 = vmatpush1.bf16.msra.mxu0 0
        %1370 = vmatprep.subr.bf16.mxu0 0
        %1371 = vmatpush1.bf16.msra.mxu0 0
        %1372 = vmatprep.mubr.bf16.mxu0 0
        %1373 = vmatmul.mubr.bf16.gmra.mrb[0].mxu0 %v1334
        %v1374 = vpop.f32.mrb[0].mxu0
        %v1375 = vadd.f32 0.0, %v1374
        %v1376 = vpop.f32.mrb[0].mxu0
        %v1377 = vpop.f32.mrb[0].mxu0
        %v1378 = vadd.f32 0.0, %v1377
        %v1379 = vpop.f32.mrb[0].mxu0
        %1380 = vdwg.mxu0
        %v1382 = vsel %vm1091, %v1210, 0
        %v1385 = vsel %vm1336, %v1081, 0
        %1387 = vmatprep.subr.bf16.mxu0 0
        %1388 = vmatpush1.bf16.msra.mxu0 %v1385
        %1389 = vmatprep.subr.bf16.mxu0 0
        %1390 = vmatpush1.bf16.msra.mxu0 0
        %1391 = vmatprep.subr.bf16.mxu0 0
        %1392 = vmatpush1.bf16.msra.mxu0 0
        %1393 = vmatprep.subr.bf16.mxu0 0
        %1394 = vmatpush1.bf16.msra.mxu0 0
        %1395 = vmatprep.subr.bf16.mxu0 0
        %1396 = vmatpush1.bf16.msra.mxu0 0
        %1397 = vmatprep.subr.bf16.mxu0 0
        %1398 = vmatpush1.bf16.msra.mxu0 0
        %1399 = vmatprep.subr.bf16.mxu0 0
        %1400 = vmatpush1.bf16.msra.mxu0 0
        %1401 = vmatprep.subr.bf16.mxu0 0
        %1402 = vmatpush1.bf16.msra.mxu0 0
        %1403 = vmatprep.subr.bf16.mxu0 0
        %1404 = vmatpush1.bf16.msra.mxu0 0
        %1405 = vmatprep.subr.bf16.mxu0 0
        %1406 = vmatpush1.bf16.msra.mxu0 0
        %1407 = vmatprep.subr.bf16.mxu0 0
        %1408 = vmatpush1.bf16.msra.mxu0 0
        %1409 = vmatprep.subr.bf16.mxu0 0
        %1410 = vmatpush1.bf16.msra.mxu0 0
        %1411 = vmatprep.subr.bf16.mxu0 0
        %1412 = vmatpush1.bf16.msra.mxu0 0
        %1413 = vmatprep.subr.bf16.mxu0 0
        %1414 = vmatpush1.bf16.msra.mxu0 0
        %1415 = vmatprep.subr.bf16.mxu0 0
        %1416 = vmatpush1.bf16.msra.mxu0 0
        %1417 = vmatprep.subr.bf16.mxu0 0
        %1418 = vmatpush1.bf16.msra.mxu0 0
        %1419 = vmatprep.mubr.bf16.mxu0 0
        %1420 = vmatmul.mubr.bf16.gmra.mrb[0].mxu0 %v1382
        %v1421 = vpop.f32.mrb[0].mxu0
        %v1422 = vadd.f32 %v1375, %v1421
        %v1423 = vpop.f32.mrb[0].mxu0
        %v1424 = vpop.f32.mrb[0].mxu0
        %v1425 = vadd.f32 %v1378, %v1424
        %v1426 = vpop.f32.mrb[0].mxu0
        %1427 = vdwg.mxu0
        %1428 = vrot.lane.b32.xlu0 %v1087, 112
        %v1429 = vpop.permute.xlu0 %1428
        %1430 = vrot.lane.b32.xlu0 %v1087, 80
        %v1431 = vpop.permute.xlu0 %1430
        %v1433 = vsel %vm1091, %v1429, 0
        %v1436 = vsel %vm1091, %v1431, 0
        %1438 = vmatprep.subr.bf16.mxu0 0
        %1439 = vmatpush1.bf16.xpose.msra.mxu0 %v1436
        %1440 = vmatprep.subr.bf16.mxu0 0
        %1441 = vmatpush1.bf16.xpose.msra.mxu0 0
        %1442 = vmatprep.subr.bf16.mxu0 0
        %1443 = vmatpush1.bf16.xpose.msra.mxu0 0
        %1444 = vmatprep.subr.bf16.mxu0 0
        %1445 = vmatpush1.bf16.xpose.msra.mxu0 0
        %1446 = vmatprep.subr.bf16.mxu0 0
        %1447 = vmatpush1.bf16.xpose.msra.mxu0 0
        %1448 = vmatprep.subr.bf16.mxu0 0
        %1449 = vmatpush1.bf16.xpose.msra.mxu0 0
        %1450 = vmatprep.subr.bf16.mxu0 0
        %1451 = vmatpush1.bf16.xpose.msra.mxu0 0
        %1452 = vmatprep.subr.bf16.mxu0 0
        %1453 = vmatpush1.bf16.xpose.msra.mxu0 0
        %1454 = vmatprep.subr.bf16.mxu0 0
        %1455 = vmatpush1.bf16.xpose.msra.mxu0 0
        %1456 = vmatprep.subr.bf16.mxu0 0
        %1457 = vmatpush1.bf16.xpose.msra.mxu0 0
        %1458 = vmatprep.subr.bf16.mxu0 0
        %1459 = vmatpush1.bf16.xpose.msra.mxu0 0
        %1460 = vmatprep.subr.bf16.mxu0 0
        %1461 = vmatpush1.bf16.xpose.msra.mxu0 0
        %1462 = vmatprep.subr.bf16.mxu0 0
        %1463 = vmatpush1.bf16.xpose.msra.mxu0 0
        %1464 = vmatprep.subr.bf16.mxu0 0
        %1465 = vmatpush1.bf16.xpose.msra.mxu0 0
        %1466 = vmatprep.subr.bf16.mxu0 0
        %1467 = vmatpush1.bf16.xpose.msra.mxu0 0
        %1468 = vmatprep.subr.bf16.mxu0 0
        %1469 = vmatpush1.bf16.xpose.msra.mxu0 0
        %1470 = vmatprep.mubr.bf16.mxu0 0
        %1471 = vmatmul.mubr.bf16.gmra.mrb[0].mxu0 %v1433
        %v1472 = vpop.f32.mrb[0].mxu0
        %v1473 = vadd.f32 %v1085, %v1472
        %v1474 = vpop.f32.mrb[0].mxu0
        %v1475 = vpop.f32.mrb[0].mxu0
        %v1476 = vadd.f32 %v1086, %v1475
        %v1477 = vpop.f32.mrb[0].mxu0
        %1478 = vdwg.mxu0
        %v1479 = vsel %vm1139, %v1473, -inf
        %1480 = vmax.xlane.f32.xlu0 %v1479
        %v1481 = vpop.xlane.xlu0 %1480
        %v1482 = vsel %vm1139, %v1476, -inf
        %1483 = vmax.xlane.f32.xlu0 %v1482
        %v1484 = vpop.xlane.xlu0 %1483
        %v1485 = vsub.f32 %v1473, %v1481
        %v1486 = vsub.f32 %v1476, %v1484
        %v1487 = vmul.f32 %v1485, 1.442695
        %v1488 = vpow.pop %v1487
        %v1489 = vmul.f32 %v1486, 1.442695
        %v1490 = vpow.pop %v1489
        %v1491 = vsel %vm1139, %v1488, 0.0
        %1492 = vadd.xlane.f32.xlu0 %v1491
        %v1493 = vpop.xlane.xlu0 %1492
        %v1494 = vsel %vm1139, %v1490, 0.0
        %1495 = vadd.xlane.f32.xlu0 %v1494
        %v1496 = vpop.xlane.xlu0 %1495
        %v1497 = vrcp.pop %v1493
        %v1498 = vrcp.pop %v1496
        %v1499 = vmul.f32 %v1488, %v1497
        %v1500 = vmul.f32 %v1490, %v1498
        %v1501 = vpack.c.bf16 %v1500, %v1499
        %1502 = vrot.lane.b32.xlu0 %v1087, 48
        %v1503 = vpop.permute.xlu0 %1502
        %v1506 = vsel %vm1139, %v1501, 0
        %1508 = vmatprep.subr.bf16.mxu0 0
        %1509 = vmatpush1.bf16.msra.mxu0 %v1503
        %1510 = vmatprep.subr.bf16.mxu0 0
        %1511 = vmatpush1.bf16.msra.mxu0 0
        %1512 = vmatprep.subr.bf16.mxu0 0
        %1513 = vmatpush1.bf16.msra.mxu0 0
        %1514 = vmatprep.subr.bf16.mxu0 0
        %1515 = vmatpush1.bf16.msra.mxu0 0
        %1516 = vmatprep.subr.bf16.mxu0 0
        %1517 = vmatpush1.bf16.msra.mxu0 0
        %1518 = vmatprep.subr.bf16.mxu0 0
        %1519 = vmatpush1.bf16.msra.mxu0 0
        %1520 = vmatprep.subr.bf16.mxu0 0
        %1521 = vmatpush1.bf16.msra.mxu0 0
        %1522 = vmatprep.subr.bf16.mxu0 0
        %1523 = vmatpush1.bf16.msra.mxu0 0
        %1524 = vmatprep.subr.bf16.mxu0 0
        %1525 = vmatpush1.bf16.msra.mxu0 0
        %1526 = vmatprep.subr.bf16.mxu0 0
        %1527 = vmatpush1.bf16.msra.mxu0 0
        %1528 = vmatprep.subr.bf16.mxu0 0
        %1529 = vmatpush1.bf16.msra.mxu0 0
        %1530 = vmatprep.subr.bf16.mxu0 0
        %1531 = vmatpush1.bf16.msra.mxu0 0
        %1532 = vmatprep.subr.bf16.mxu0 0
        %1533 = vmatpush1.bf16.msra.mxu0 0
        %1534 = vmatprep.subr.bf16.mxu0 0
        %1535 = vmatpush1.bf16.msra.mxu0 0
        %1536 = vmatprep.subr.bf16.mxu0 0
        %1537 = vmatpush1.bf16.msra.mxu0 0
        %1538 = vmatprep.subr.bf16.mxu0 0
        %1539 = vmatpush1.bf16.msra.mxu0 0
        %1540 = vmatprep.mubr.bf16.mxu0 0
        %1541 = vmatmul.mubr.bf16.gmra.mrb[0].mxu0 %v1506
        %v1542 = vpop.f32.mrb[0].mxu0
        %v1543 = vadd.f32 0.0, %v1542
        %v1544 = vpop.f32.mrb[0].mxu0
        %v1545 = vpop.f32.mrb[0].mxu0
        %v1546 = vadd.f32 0.0, %v1545
        %v1547 = vpop.f32.mrb[0].mxu0
        %1548 = vdwg.mxu0
        %v1549 = vpack.c.bf16 %v1546, %v1543
        %v1551 = vsel %vm1091, %v1549, 0
        %v1554 = vsel %vm1336, %v1083, 0
        %1556 = vmatprep.subr.bf16.mxu0 0
        %1557 = vmatpush1.bf16.msra.mxu0 %v1554
        %1558 = vmatprep.subr.bf16.mxu0 0
        %1559 = vmatpush1.bf16.msra.mxu0 0
        %1560 = vmatprep.subr.bf16.mxu0 0
        %1561 = vmatpush1.bf16.msra.mxu0 0
        %1562 = vmatprep.subr.bf16.mxu0 0
        %1563 = vmatpush1.bf16.msra.mxu0 0
        %1564 = vmatprep.subr.bf16.mxu0 0
        %1565 = vmatpush1.bf16.msra.mxu0 0
        %1566 = vmatprep.subr.bf16.mxu0 0
        %1567 = vmatpush1.bf16.msra.mxu0 0
        %1568 = vmatprep.subr.bf16.mxu0 0
        %1569 = vmatpush1.bf16.msra.mxu0 0
        %1570 = vmatprep.subr.bf16.mxu0 0
        %1571 = vmatpush1.bf16.msra.mxu0 0
        %1572 = vmatprep.subr.bf16.mxu0 0
        %1573 = vmatpush1.bf16.msra.mxu0 0
        %1574 = vmatprep.subr.bf16.mxu0 0
        %1575 = vmatpush1.bf16.msra.mxu0 0
        %1576 = vmatprep.subr.bf16.mxu0 0
        %1577 = vmatpush1.bf16.msra.mxu0 0
        %1578 = vmatprep.subr.bf16.mxu0 0
        %1579 = vmatpush1.bf16.msra.mxu0 0
        %1580 = vmatprep.subr.bf16.mxu0 0
        %1581 = vmatpush1.bf16.msra.mxu0 0
        %1582 = vmatprep.subr.bf16.mxu0 0
        %1583 = vmatpush1.bf16.msra.mxu0 0
        %1584 = vmatprep.subr.bf16.mxu0 0
        %1585 = vmatpush1.bf16.msra.mxu0 0
        %1586 = vmatprep.subr.bf16.mxu0 0
        %1587 = vmatpush1.bf16.msra.mxu0 0
        %1588 = vmatprep.mubr.bf16.mxu0 0
        %1589 = vmatmul.mubr.bf16.gmra.mrb[0].mxu0 %v1551
        %v1590 = vpop.f32.mrb[0].mxu0
        %v1591 = vadd.f32 0.0, %v1590
        %v1592 = vpop.f32.mrb[0].mxu0
        %v1593 = vpop.f32.mrb[0].mxu0
        %v1594 = vadd.f32 0.0, %v1593
        %v1595 = vpop.f32.mrb[0].mxu0
        %1596 = vdwg.mxu0
        %v1597 = vadd.f32 %v1422, %v1591
        %v1598 = vadd.f32 %v1425, %v1594
        %1599 = vrot.lane.b32.xlu0 %v1087, 104
        %v1600 = vpop.permute.xlu0 %1599
        %1601 = vrot.lane.b32.xlu0 %v1087, 72
        %v1602 = vpop.permute.xlu0 %1601
        %v1604 = vsel %vm1091, %v1600, 0
        %v1607 = vsel %vm1091, %v1602, 0
        %1609 = vmatprep.subr.bf16.mxu0 0
        %1610 = vmatpush1.bf16.xpose.msra.mxu0 %v1607
        %1611 = vmatprep.subr.bf16.mxu0 0
        %1612 = vmatpush1.bf16.xpose.msra.mxu0 0
        %1613 = vmatprep.subr.bf16.mxu0 0
        %1614 = vmatpush1.bf16.xpose.msra.mxu0 0
        %1615 = vmatprep.subr.bf16.mxu0 0
        %1616 = vmatpush1.bf16.xpose.msra.mxu0 0
        %1617 = vmatprep.subr.bf16.mxu0 0
        %1618 = vmatpush1.bf16.xpose.msra.mxu0 0
        %1619 = vmatprep.subr.bf16.mxu0 0
        %1620 = vmatpush1.bf16.xpose.msra.mxu0 0
        %1621 = vmatprep.subr.bf16.mxu0 0
        %1622 = vmatpush1.bf16.xpose.msra.mxu0 0
        %1623 = vmatprep.subr.bf16.mxu0 0
        %1624 = vmatpush1.bf16.xpose.msra.mxu0 0
        %1625 = vmatprep.subr.bf16.mxu0 0
        %1626 = vmatpush1.bf16.xpose.msra.mxu0 0
        %1627 = vmatprep.subr.bf16.mxu0 0
        %1628 = vmatpush1.bf16.xpose.msra.mxu0 0
        %1629 = vmatprep.subr.bf16.mxu0 0
        %1630 = vmatpush1.bf16.xpose.msra.mxu0 0
        %1631 = vmatprep.subr.bf16.mxu0 0
        %1632 = vmatpush1.bf16.xpose.msra.mxu0 0
        %1633 = vmatprep.subr.bf16.mxu0 0
        %1634 = vmatpush1.bf16.xpose.msra.mxu0 0
        %1635 = vmatprep.subr.bf16.mxu0 0
        %1636 = vmatpush1.bf16.xpose.msra.mxu0 0
        %1637 = vmatprep.subr.bf16.mxu0 0
        %1638 = vmatpush1.bf16.xpose.msra.mxu0 0
        %1639 = vmatprep.subr.bf16.mxu0 0
        %1640 = vmatpush1.bf16.xpose.msra.mxu0 0
        %1641 = vmatprep.mubr.bf16.mxu0 0
        %1642 = vmatmul.mubr.bf16.gmra.mrb[0].mxu0 %v1604
        %v1643 = vpop.f32.mrb[0].mxu0
        %v1644 = vadd.f32 %v1085, %v1643
        %v1645 = vpop.f32.mrb[0].mxu0
        %v1646 = vpop.f32.mrb[0].mxu0
        %v1647 = vadd.f32 %v1086, %v1646
        %v1648 = vpop.f32.mrb[0].mxu0
        %1649 = vdwg.mxu0
        %v1650 = vsel %vm1139, %v1644, -inf
        %1651 = vmax.xlane.f32.xlu0 %v1650
        %v1652 = vpop.xlane.xlu0 %1651
        %v1653 = vsel %vm1139, %v1647, -inf
        %1654 = vmax.xlane.f32.xlu0 %v1653
        %v1655 = vpop.xlane.xlu0 %1654
        %v1656 = vsub.f32 %v1644, %v1652
        %v1657 = vsub.f32 %v1647, %v1655
        %v1658 = vmul.f32 %v1656, 1.442695
        %v1659 = vpow.pop %v1658
        %v1660 = vmul.f32 %v1657, 1.442695
        %v1661 = vpow.pop %v1660
        %v1662 = vsel %vm1139, %v1659, 0.0
        %1663 = vadd.xlane.f32.xlu0 %v1662
        %v1664 = vpop.xlane.xlu0 %1663
        %v1665 = vsel %vm1139, %v1661, 0.0
        %1666 = vadd.xlane.f32.xlu0 %v1665
        %v1667 = vpop.xlane.xlu0 %1666
        %v1668 = vrcp.pop %v1664
        %v1669 = vrcp.pop %v1667
        %v1670 = vmul.f32 %v1659, %v1668
        %v1671 = vmul.f32 %v1661, %v1669
        %v1672 = vpack.c.bf16 %v1671, %v1670
        %1673 = vrot.lane.b32.xlu0 %v1087, 40
        %v1674 = vpop.permute.xlu0 %1673
        %v1677 = vsel %vm1139, %v1672, 0
        %1679 = vmatprep.subr.bf16.mxu0 0
        %1680 = vmatpush1.bf16.msra.mxu0 %v1674
        %1681 = vmatprep.subr.bf16.mxu0 0
        %1682 = vmatpush1.bf16.msra.mxu0 0
        %1683 = vmatprep.subr.bf16.mxu0 0
        %1684 = vmatpush1.bf16.msra.mxu0 0
        %1685 = vmatprep.subr.bf16.mxu0 0
        %1686 = vmatpush1.bf16.msra.mxu0 0
        %1687 = vmatprep.subr.bf16.mxu0 0
        %1688 = vmatpush1.bf16.msra.mxu0 0
        %1689 = vmatprep.subr.bf16.mxu0 0
        %1690 = vmatpush1.bf16.msra.mxu0 0
        %1691 = vmatprep.subr.bf16.mxu0 0
        %1692 = vmatpush1.bf16.msra.mxu0 0
        %1693 = vmatprep.subr.bf16.mxu0 0
        %1694 = vmatpush1.bf16.msra.mxu0 0
        %1695 = vmatprep.subr.bf16.mxu0 0
        %1696 = vmatpush1.bf16.msra.mxu0 0
        %1697 = vmatprep.subr.bf16.mxu0 0
        %1698 = vmatpush1.bf16.msra.mxu0 0
        %1699 = vmatprep.subr.bf16.mxu0 0
        %1700 = vmatpush1.bf16.msra.mxu0 0
        %1701 = vmatprep.subr.bf16.mxu0 0
        %1702 = vmatpush1.bf16.msra.mxu0 0
        %1703 = vmatprep.subr.bf16.mxu0 0
        %1704 = vmatpush1.bf16.msra.mxu0 0
        %1705 = vmatprep.subr.bf16.mxu0 0
        %1706 = vmatpush1.bf16.msra.mxu0 0
        %1707 = vmatprep.subr.bf16.mxu0 0
        %1708 = vmatpush1.bf16.msra.mxu0 0
        %1709 = vmatprep.subr.bf16.mxu0 0
        %1710 = vmatpush1.bf16.msra.mxu0 0
        %1711 = vmatprep.mubr.bf16.mxu0 0
        %1712 = vmatmul.mubr.bf16.gmra.mrb[0].mxu0 %v1677
        %v1713 = vpop.f32.mrb[0].mxu0
        %v1714 = vadd.f32 0.0, %v1713
        %v1715 = vpop.f32.mrb[0].mxu0
        %v1716 = vpop.f32.mrb[0].mxu0
        %v1717 = vadd.f32 0.0, %v1716
        %v1718 = vpop.f32.mrb[0].mxu0
        %1719 = vdwg.mxu0
        %v1720 = vpack.c.bf16 %v1717, %v1714
        %v1722 = vsel %vm1091, %v1720, 0
        %v1725 = vsel %vm1336, %v1084, 0
        %1727 = vmatprep.subr.bf16.mxu0 0
        %1728 = vmatpush1.bf16.msra.mxu0 %v1725
        %1729 = vmatprep.subr.bf16.mxu0 0
        %1730 = vmatpush1.bf16.msra.mxu0 0
        %1731 = vmatprep.subr.bf16.mxu0 0
        %1732 = vmatpush1.bf16.msra.mxu0 0
        %1733 = vmatprep.subr.bf16.mxu0 0
        %1734 = vmatpush1.bf16.msra.mxu0 0
        %1735 = vmatprep.subr.bf16.mxu0 0
        %1736 = vmatpush1.bf16.msra.mxu0 0
        %1737 = vmatprep.subr.bf16.mxu0 0
        %1738 = vmatpush1.bf16.msra.mxu0 0
        %1739 = vmatprep.subr.bf16.mxu0 0
        %1740 = vmatpush1.bf16.msra.mxu0 0
        %1741 = vmatprep.subr.bf16.mxu0 0
        %1742 = vmatpush1.bf16.msra.mxu0 0
        %1743 = vmatprep.subr.bf16.mxu0 0
        %1744 = vmatpush1.bf16.msra.mxu0 0
        %1745 = vmatprep.subr.bf16.mxu0 0
        %1746 = vmatpush1.bf16.msra.mxu0 0
        %1747 = vmatprep.subr.bf16.mxu0 0
        %1748 = vmatpush1.bf16.msra.mxu0 0
        %1749 = vmatprep.subr.bf16.mxu0 0
        %1750 = vmatpush1.bf16.msra.mxu0 0
        %1751 = vmatprep.subr.bf16.mxu0 0
        %1752 = vmatpush1.bf16.msra.mxu0 0
        %1753 = vmatprep.subr.bf16.mxu0 0
        %1754 = vmatpush1.bf16.msra.mxu0 0
        %1755 = vmatprep.subr.bf16.mxu0 0
        %1756 = vmatpush1.bf16.msra.mxu0 0
        %1757 = vmatprep.subr.bf16.mxu0 0
        %1758 = vmatpush1.bf16.msra.mxu0 0
        %1759 = vmatprep.mubr.bf16.mxu0 0
        %1760 = vmatmul.mubr.bf16.gmra.mrb[0].mxu0 %v1722
        %v1761 = vpop.f32.mrb[0].mxu0
        %v1762 = vadd.f32 0.0, %v1761
        %v1763 = vpop.f32.mrb[0].mxu0
        %v1764 = vpop.f32.mrb[0].mxu0
        %v1765 = vadd.f32 0.0, %v1764
        %v1766 = vpop.f32.mrb[0].mxu0
        %1767 = vdwg.mxu0
        %v1768 = vadd.f32 %v1597, %v1762
        %v1769 = vadd.f32 %v1598, %v1765
        %v1770 = vadd.f32 %v965, %v1768
        %v1771 = vadd.f32 %v966, %v1769
        %v1772 = vld [vmem:[%s819] sm:$0x1]
        %v1774 = vlaneseq
        %v1775 = vshrl.u32 %v1774, 7
        %v1776 = vsub.s32 0, %v1775
        %v1777 = vrot.slane %v1772, %v1776
        %v1779 = vadd.f32 %v1770, %v1777
        %v1780 = vadd.f32 %v1771, %v1777
        %v1781 = vld [vmem:[%s822] sm:$0x1]
        %v1782 = vld [vmem:[%s825] sm:$0x1]
        %v1783 = vsel %vm969, %v1779, 0.0
        %1784 = vadd.xlane.f32.xlu0 %v1783
        %v1785 = vpop.xlane.xlu0 %1784
        %v1786 = vsel %vm969, %v1780, 0.0
        %1787 = vadd.xlane.f32.xlu0 %v1786
        %v1788 = vpop.xlane.xlu0 %1787
        %v1789 = vmul.f32 %v1785, %v976
        %v1790 = vmul.f32 %v1788, %v976
        %v1791 = vsub.f32 %v1779, %v1789
        %v1792 = vsub.f32 %v1780, %v1790
        %v1793 = vmul.f32 %v1791, %v1791
        %v1794 = vmul.f32 %v1792, %v1792
        %v1795 = vsel %vm969, %v1793, 0.0
        %1796 = vadd.xlane.f32.xlu0 %v1795
        %v1797 = vpop.xlane.xlu0 %1796
        %v1798 = vsel %vm969, %v1794, 0.0
        %1799 = vadd.xlane.f32.xlu0 %v1798
        %v1800 = vpop.xlane.xlu0 %1799
        %v1801 = vmul.f32 %v1797, %v976
        %v1802 = vmul.f32 %v1800, %v976
        %v1803 = vadd.f32 %v1801, 1e-05
        %v1804 = vadd.f32 %v1802, 1e-05
        %v1805 = vrsqrt.pop %v1803
        %v1806 = vrsqrt.pop %v1804
        %v1807 = vmul.f32 %v1791, %v1805
        %v1808 = vmul.f32 %v1792, %v1806
        %v1810 = vlaneseq
        %v1811 = vshrl.u32 %v1810, 7
        %v1812 = vsub.s32 0, %v1811
        %v1813 = vrot.slane %v1781, %v1812
        %v1815 = vmul.f32 %v1807, %v1813
        %v1816 = vmul.f32 %v1808, %v1813
        %v1818 = vlaneseq
        %v1819 = vshrl.u32 %v1818, 7
        %v1820 = vsub.s32 0, %v1819
        %v1821 = vrot.slane %v1782, %v1820
        %v1823 = vadd.f32 %v1815, %v1821
        %v1824 = vadd.f32 %v1816, %v1821
        %v1825 = vpack.c.bf16 %v1824, %v1823
        %v1826 = vld [vmem:[%s830] sm:$0xf]
        %v1827 = vld [vmem:[%s830 + $0x4] sm:$0xf]
        %v1828 = vld [vmem:[%s830 + $0x8] sm:$0xf]
        %v1829 = vld [vmem:[%s830 + $0xc] sm:$0xf]
        %v1830 = vld [vmem:[%s833] sm:$0x1]
        %v1832 = vlaneseq
        %v1833 = vshrl.u32 %v1832, 7
        %v1834 = vsub.s32 0, %v1833
        %v1835 = vrot.slane %v1830, %v1834
        %v1841 = vunpack.c.l.b16 %v1826
        %v1842 = vunpack.c.l.b16 %v1827
        %v1843 = vunpack.c.l.b16 %v1828
        %v1844 = vunpack.c.l.b16 %v1829
        %v1845 = vpack.c.b16 %v1842, %v1841
        %v1846 = vpack.c.b16 %v1844, %v1843
        %v1850 = vsel %vm969, %v1825, 0
        %1852 = vmatprep.subr.bf16.mxu0 0
        %1853 = vmatpush1.bf16.msra.mxu0 %v1845
        %1854 = vmatprep.subr.bf16.mxu0 0
        %1855 = vmatpush1.bf16.msra.mxu0 %v1846
        %1856 = vmatprep.subr.bf16.mxu0 0
        %1857 = vmatpush1.bf16.msra.mxu0 0
        %1858 = vmatprep.subr.bf16.mxu0 0
        %1859 = vmatpush1.bf16.msra.mxu0 0
        %1860 = vmatprep.subr.bf16.mxu0 0
        %1861 = vmatpush1.bf16.msra.mxu0 0
        %1862 = vmatprep.subr.bf16.mxu0 0
        %1863 = vmatpush1.bf16.msra.mxu0 0
        %1864 = vmatprep.subr.bf16.mxu0 0
        %1865 = vmatpush1.bf16.msra.mxu0 0
        %1866 = vmatprep.subr.bf16.mxu0 0
        %1867 = vmatpush1.bf16.msra.mxu0 0
        %1868 = vmatprep.subr.bf16.mxu0 0
        %1869 = vmatpush1.bf16.msra.mxu0 0
        %1870 = vmatprep.subr.bf16.mxu0 0
        %1871 = vmatpush1.bf16.msra.mxu0 0
        %1872 = vmatprep.subr.bf16.mxu0 0
        %1873 = vmatpush1.bf16.msra.mxu0 0
        %1874 = vmatprep.subr.bf16.mxu0 0
        %1875 = vmatpush1.bf16.msra.mxu0 0
        %1876 = vmatprep.subr.bf16.mxu0 0
        %1877 = vmatpush1.bf16.msra.mxu0 0
        %1878 = vmatprep.subr.bf16.mxu0 0
        %1879 = vmatpush1.bf16.msra.mxu0 0
        %1880 = vmatprep.subr.bf16.mxu0 0
        %1881 = vmatpush1.bf16.msra.mxu0 0
        %1882 = vmatprep.subr.bf16.mxu0 0
        %1883 = vmatpush1.bf16.msra.mxu0 0
        %1884 = vmatprep.mubr.bf16.mxu0 0
        %1885 = vmatmul.mubr.bf16.gmra.mrb[0].mxu0 %v1850
        %v1886 = vpop.f32.mrb[0].mxu0
        %v1887 = vadd.f32 %v1835, %v1886
        %v1888 = vpop.f32.mrb[0].mxu0
        %v1889 = vpop.f32.mrb[0].mxu0
        %v1890 = vadd.f32 %v1835, %v1889
        %v1891 = vpop.f32.mrb[0].mxu0
        %1892 = vdwg.mxu0
        %v1893 = vmax.f32 %v1887, 0.0
        %v1894 = vmax.f32 %v1890, 0.0
        %v1895 = vpack.c.bf16 %v1894, %v1893
        %v1896 = vld [vmem:[%s838] sm:$0xf]
        %v1897 = vld [vmem:[%s838 + $0x4] sm:$0xf]
        %v1898 = vld [vmem:[%s838 + $0x8] sm:$0xf]
        %v1899 = vld [vmem:[%s838 + $0xc] sm:$0xf]
        %v1900 = vld [vmem:[%s838 + $0x10] sm:$0xf]
        %v1901 = vld [vmem:[%s838 + $0x14] sm:$0xf]
        %v1902 = vld [vmem:[%s838 + $0x18] sm:$0xf]
        %v1903 = vld [vmem:[%s838 + $0x1c] sm:$0xf]
        %v1904 = vld [vmem:[%s838 + $0x20] sm:$0xf]
        %v1905 = vld [vmem:[%s838 + $0x24] sm:$0xf]
        %v1906 = vld [vmem:[%s838 + $0x28] sm:$0xf]
        %v1907 = vld [vmem:[%s838 + $0x2c] sm:$0xf]
        %v1908 = vld [vmem:[%s838 + $0x30] sm:$0xf]
        %v1909 = vld [vmem:[%s838 + $0x34] sm:$0xf]
        %v1910 = vld [vmem:[%s838 + $0x38] sm:$0xf]
        %v1911 = vld [vmem:[%s838 + $0x3c] sm:$0xf]
        %v1928 = vunpack.c.l.b16 %v1896
        %v1929 = vunpack.c.l.b16 %v1897
        %v1930 = vunpack.c.l.b16 %v1898
        %v1931 = vunpack.c.l.b16 %v1899
        %v1932 = vunpack.c.l.b16 %v1900
        %v1933 = vunpack.c.l.b16 %v1901
        %v1934 = vunpack.c.l.b16 %v1902
        %v1935 = vunpack.c.l.b16 %v1903
        %v1936 = vunpack.c.l.b16 %v1904
        %v1937 = vunpack.c.l.b16 %v1905
        %v1938 = vunpack.c.l.b16 %v1906
        %v1939 = vunpack.c.l.b16 %v1907
        %v1940 = vunpack.c.l.b16 %v1908
        %v1941 = vunpack.c.l.b16 %v1909
        %v1942 = vunpack.c.l.b16 %v1910
        %v1943 = vunpack.c.l.b16 %v1911
        %v1944 = vpack.c.b16 %v1929, %v1928
        %v1945 = vpack.c.b16 %v1931, %v1930
        %v1946 = vpack.c.b16 %v1933, %v1932
        %v1947 = vpack.c.b16 %v1935, %v1934
        %v1948 = vpack.c.b16 %v1937, %v1936
        %v1949 = vpack.c.b16 %v1939, %v1938
        %v1950 = vpack.c.b16 %v1941, %v1940
        %v1951 = vpack.c.b16 %v1943, %v1942
        %1960 = vmatprep.subr.bf16.mxu0 0
        %1961 = vmatpush1.bf16.msra.mxu0 %v1944
        %1962 = vmatprep.subr.bf16.mxu0 0
        %1963 = vmatpush1.bf16.msra.mxu0 %v1945
        %1964 = vmatprep.subr.bf16.mxu0 0
        %1965 = vmatpush1.bf16.msra.mxu0 %v1946
        %1966 = vmatprep.subr.bf16.mxu0 0
        %1967 = vmatpush1.bf16.msra.mxu0 %v1947
        %1968 = vmatprep.subr.bf16.mxu0 0
        %1969 = vmatpush1.bf16.msra.mxu0 %v1948
        %1970 = vmatprep.subr.bf16.mxu0 0
        %1971 = vmatpush1.bf16.msra.mxu0 %v1949
        %1972 = vmatprep.subr.bf16.mxu0 0
        %1973 = vmatpush1.bf16.msra.mxu0 %v1950
        %1974 = vmatprep.subr.bf16.mxu0 0
        %1975 = vmatpush1.bf16.msra.mxu0 %v1951
        %1976 = vmatprep.subr.bf16.mxu0 0
        %1977 = vmatpush1.bf16.msra.mxu0 0
        %1978 = vmatprep.subr.bf16.mxu0 0
        %1979 = vmatpush1.bf16.msra.mxu0 0
        %1980 = vmatprep.subr.bf16.mxu0 0
        %1981 = vmatpush1.bf16.msra.mxu0 0
        %1982 = vmatprep.subr.bf16.mxu0 0
        %1983 = vmatpush1.bf16.msra.mxu0 0
        %1984 = vmatprep.subr.bf16.mxu0 0
        %1985 = vmatpush1.bf16.msra.mxu0 0
        %1986 = vmatprep.subr.bf16.mxu0 0
        %1987 = vmatpush1.bf16.msra.mxu0 0
        %1988 = vmatprep.subr.bf16.mxu0 0
        %1989 = vmatpush1.bf16.msra.mxu0 0
        %1990 = vmatprep.subr.bf16.mxu0 0
        %1991 = vmatpush1.bf16.msra.mxu0 0
        %1992 = vmatprep.mubr.bf16.mxu0 0
        %1993 = vmatmul.mubr.bf16.gmra.mrb[0].mxu0 %v1895
        %v1994 = vpop.f32.mrb[0].mxu0
        %v1995 = vadd.f32 0.0, %v1994
        %v1996 = vpop.f32.mrb[0].mxu0
        %v1997 = vpop.f32.mrb[0].mxu0
        %v1998 = vadd.f32 0.0, %v1997
        %v1999 = vpop.f32.mrb[0].mxu0
        %2000 = vdwg.mxu0
        %v2001 = vadd.f32 %v1779, %v1995
        %v2002 = vadd.f32 %v1780, %v1998
        %v2003 = vld [vmem:[%s841] sm:$0x1]
        %v2005 = vlaneseq
        %v2006 = vshrl.u32 %v2005, 7
        %v2007 = vsub.s32 0, %v2006
        %v2008 = vrot.slane %v2003, %v2007
        %v2010 = vadd.f32 %v2001, %v2008
        %v2011 = vadd.f32 %v2002, %v2008
        %2012 = vst.msk [vmem:[#allocation2] sm:$0xff] %vm969, %v2010
        %2013 = vst.msk [vmem:[#allocation2 + $0x8] sm:$0xff] %vm969, %v2011
        %p2014 = scmp.eq.s32.totalorder %s34, 1
        // Predicated region
        $region113: #{transformer_model_forward.3} parent=107 // pred_check
          %p2015 = pneg %p2014
        $region114: #{transformer_model_forward.3} parent=107 // pred_check_branch
          %2017 = sbr.rel (%p2015) target = $region116
        $region115: #{transformer_model_forward.3} parent=107 // pred_region
          %v2018 = vld [vmem:[%s16] sm:$0x1]
          %v2019 = vld [vmem:[%s17] sm:$0x1]
          %v2020 = vsel %vm969, %v2010, 0.0
          %2021 = vadd.xlane.f32.xlu0 %v2020
          %v2022 = vpop.xlane.xlu0 %2021
          %v2023 = vsel %vm969, %v2011, 0.0
          %2024 = vadd.xlane.f32.xlu0 %v2023
          %v2025 = vpop.xlane.xlu0 %2024
          %v2026 = vmul.f32 %v2022, %v976
          %v2027 = vmul.f32 %v2025, %v976
          %v2028 = vsub.f32 %v2010, %v2026
          %v2029 = vsub.f32 %v2011, %v2027
          %v2030 = vmul.f32 %v2028, %v2028
          %v2031 = vmul.f32 %v2029, %v2029
          %v2032 = vsel %vm969, %v2030, 0.0
          %2033 = vadd.xlane.f32.xlu0 %v2032
          %v2034 = vpop.xlane.xlu0 %2033
          %v2035 = vsel %vm969, %v2031, 0.0
          %2036 = vadd.xlane.f32.xlu0 %v2035
          %v2037 = vpop.xlane.xlu0 %2036
          %v2038 = vmul.f32 %v2034, %v976
          %v2039 = vmul.f32 %v2037, %v976
          %v2040 = vadd.f32 %v2038, 1e-05
          %v2041 = vadd.f32 %v2039, 1e-05
          %v2042 = vrsqrt.pop %v2040
          %v2043 = vrsqrt.pop %v2041
          %v2044 = vmul.f32 %v2028, %v2042
          %v2045 = vmul.f32 %v2029, %v2043
          %v2047 = vlaneseq
          %v2048 = vshrl.u32 %v2047, 7
          %v2049 = vsub.s32 0, %v2048
          %v2050 = vrot.slane %v2018, %v2049
          %v2052 = vmul.f32 %v2044, %v2050
          %v2053 = vmul.f32 %v2045, %v2050
          %v2055 = vlaneseq
          %v2056 = vshrl.u32 %v2055, 7
          %v2057 = vsub.s32 0, %v2056
          %v2058 = vrot.slane %v2019, %v2057
          %v2060 = vadd.f32 %v2052, %v2058
          %v2061 = vadd.f32 %v2053, %v2058
          %v2062 = vpack.c.bf16 %v2061, %v2060
          %v2063 = vld [vmem:[%s18] sm:$0xf]
          %v2064 = vld [vmem:[%s18 + $0x4] sm:$0xf]
          %v2065 = vld [vmem:[%s18 + $0x8] sm:$0xf]
          %v2066 = vld [vmem:[%s18 + $0xc] sm:$0xf]
          %v2067 = vld [vmem:[%s19] sm:$0x1]
          %v2069 = vlaneseq
          %v2070 = vshrl.u32 %v2069, 7
          %v2071 = vsub.s32 0, %v2070
          %v2072 = vrot.slane %v2067, %v2071
          %v2078 = vunpack.c.l.b16 %v2063
          %v2079 = vunpack.c.l.b16 %v2064
          %v2080 = vunpack.c.l.b16 %v2065
          %v2081 = vunpack.c.l.b16 %v2066
          %v2082 = vpack.c.b16 %v2079, %v2078
          %v2083 = vpack.c.b16 %v2081, %v2080
          %v2087 = vsel %vm969, %v2062, 0
          %2089 = vmatprep.subr.bf16.mxu0 0
          %2090 = vmatpush1.bf16.msra.mxu0 %v2082
          %2091 = vmatprep.subr.bf16.mxu0 0
          %2092 = vmatpush1.bf16.msra.mxu0 %v2083
          %2093 = vmatprep.subr.bf16.mxu0 0
          %2094 = vmatpush1.bf16.msra.mxu0 0
          %2095 = vmatprep.subr.bf16.mxu0 0
          %2096 = vmatpush1.bf16.msra.mxu0 0
          %2097 = vmatprep.subr.bf16.mxu0 0
          %2098 = vmatpush1.bf16.msra.mxu0 0
          %2099 = vmatprep.subr.bf16.mxu0 0
          %2100 = vmatpush1.bf16.msra.mxu0 0
          %2101 = vmatprep.subr.bf16.mxu0 0
          %2102 = vmatpush1.bf16.msra.mxu0 0
          %2103 = vmatprep.subr.bf16.mxu0 0
          %2104 = vmatpush1.bf16.msra.mxu0 0
          %2105 = vmatprep.subr.bf16.mxu0 0
          %2106 = vmatpush1.bf16.msra.mxu0 0
          %2107 = vmatprep.subr.bf16.mxu0 0
          %2108 = vmatpush1.bf16.msra.mxu0 0
          %2109 = vmatprep.subr.bf16.mxu0 0
          %2110 = vmatpush1.bf16.msra.mxu0 0
          %2111 = vmatprep.subr.bf16.mxu0 0
          %2112 = vmatpush1.bf16.msra.mxu0 0
          %2113 = vmatprep.subr.bf16.mxu0 0
          %2114 = vmatpush1.bf16.msra.mxu0 0
          %2115 = vmatprep.subr.bf16.mxu0 0
          %2116 = vmatpush1.bf16.msra.mxu0 0
          %2117 = vmatprep.subr.bf16.mxu0 0
          %2118 = vmatpush1.bf16.msra.mxu0 0
          %2119 = vmatprep.subr.bf16.mxu0 0
          %2120 = vmatpush1.bf16.msra.mxu0 0
          %2121 = vmatprep.mubr.bf16.mxu0 0
          %2122 = vmatmul.mubr.bf16.gmra.mrb[0].mxu0 %v2087
          %v2123 = vpop.f32.mrb[0].mxu0
          %v2124 = vadd.f32 %v2072, %v2123
          %v2125 = vpop.f32.mrb[0].mxu0
          %v2126 = vpop.f32.mrb[0].mxu0
          %v2127 = vadd.f32 %v2072, %v2126
          %v2128 = vpop.f32.mrb[0].mxu0
          %2129 = vdwg.mxu0
          %v2130 = vmax.f32 %v2124, 0.0
          %v2131 = vmax.f32 %v2127, 0.0
          %v2132 = vpack.c.bf16 %v2131, %v2130
          %v2133 = vld [vmem:[%s20] sm:$0xf]
          %v2134 = vld [vmem:[%s20 + $0x4] sm:$0xf]
          %v2135 = vld [vmem:[%s20 + $0x8] sm:$0xf]
          %v2136 = vld [vmem:[%s20 + $0xc] sm:$0xf]
          %v2137 = vld [vmem:[%s21] sm:$0x1]
          %v2139 = vlaneseq
          %v2140 = vshrl.u32 %v2139, 7
          %v2141 = vsub.s32 0, %v2140
          %v2142 = vrot.slane %v2137, %v2141
          %v2148 = vunpack.c.l.b16 %v2133
          %v2149 = vunpack.c.l.b16 %v2134
          %v2150 = vunpack.c.l.b16 %v2135
          %v2151 = vunpack.c.l.b16 %v2136
          %v2152 = vpack.c.b16 %v2149, %v2148
          %v2153 = vpack.c.b16 %v2151, %v2150
          %v2157 = vsel %vm969, %v2132, 0
          %2159 = vmatprep.subr.bf16.mxu0 0
          %2160 = vmatpush1.bf16.msra.mxu0 %v2152
          %2161 = vmatprep.subr.bf16.mxu0 0
          %2162 = vmatpush1.bf16.msra.mxu0 %v2153
          %2163 = vmatprep.subr.bf16.mxu0 0
          %2164 = vmatpush1.bf16.msra.mxu0 0
          %2165 = vmatprep.subr.bf16.mxu0 0
          %2166 = vmatpush1.bf16.msra.mxu0 0
          %2167 = vmatprep.subr.bf16.mxu0 0
          %2168 = vmatpush1.bf16.msra.mxu0 0
          %2169 = vmatprep.subr.bf16.mxu0 0
          %2170 = vmatpush1.bf16.msra.mxu0 0
          %2171 = vmatprep.subr.bf16.mxu0 0
          %2172 = vmatpush1.bf16.msra.mxu0 0
          %2173 = vmatprep.subr.bf16.mxu0 0
          %2174 = vmatpush1.bf16.msra.mxu0 0
          %2175 = vmatprep.subr.bf16.mxu0 0
          %2176 = vmatpush1.bf16.msra.mxu0 0
          %2177 = vmatprep.subr.bf16.mxu0 0
          %2178 = vmatpush1.bf16.msra.mxu0 0
          %2179 = vmatprep.subr.bf16.mxu0 0
          %2180 = vmatpush1.bf16.msra.mxu0 0
          %2181 = vmatprep.subr.bf16.mxu0 0
          %2182 = vmatpush1.bf16.msra.mxu0 0
          %2183 = vmatprep.subr.bf16.mxu0 0
          %2184 = vmatpush1.bf16.msra.mxu0 0
          %2185 = vmatprep.subr.bf16.mxu0 0
          %2186 = vmatpush1.bf16.msra.mxu0 0
          %2187 = vmatprep.subr.bf16.mxu0 0
          %2188 = vmatpush1.bf16.msra.mxu0 0
          %2189 = vmatprep.subr.bf16.mxu0 0
          %2190 = vmatpush1.bf16.msra.mxu0 0
          %2191 = vmatprep.mubr.bf16.mxu0 0
          %2192 = vmatmul.mubr.bf16.gmra.mrb[0].mxu0 %v2157
          %v2193 = vpop.f32.mrb[0].mxu0
          %v2194 = vadd.f32 %v2142, %v2193
          %v2195 = vpop.f32.mrb[0].mxu0
          %v2196 = vpop.f32.mrb[0].mxu0
          %v2197 = vadd.f32 %v2142, %v2196
          %v2198 = vpop.f32.mrb[0].mxu0
          %2199 = vdwg.mxu0
          %2200 = vst.msk [vmem:[#allocation3] sm:$0xff] %vm1139, %v2194
          %2201 = vst.msk [vmem:[#allocation3 + $0x8] sm:$0xff] %vm1139, %v2197
        $region116: #{transformer_model_forward.3} parent=107 // pred_fallthru
          _
        // Predicated region
        $region117: #{transformer_model_forward.3} parent=107 // pred_check
          %p2202 = pneg %p569
        $region118: #{transformer_model_forward.3} parent=107 // pred_check_branch
          %2204 = sbr.rel (%p2202) target = $region120
        $region119: #{transformer_model_forward.3} parent=107 // pred_region
          %s2206 = ssub.s32 256, 256
          %2207 = vsyncadd [#allocation4], %s2206
          %s2208 = sshll.u32 [#allocation3], 4
          %s2209 = int_to_ptr.vmem [resolvable:$true] %s2208
          %2214 = dma.vmem_to_hbm [thread:$0]  %s2209, 256, %s22, [#allocation4], 128, 128, 8
        $region120: #{transformer_model_forward.3} parent=107 // pred_fallthru
          _
        // Predicated region
        $region121: #{transformer_model_forward.3} parent=107 // pred_check
          %p2215 = pneg %p569
        $region122: #{transformer_model_forward.3} parent=107 // pred_check_branch
          %2217 = sbr.rel (%p2215) target = $region124
        $region123: #{transformer_model_forward.3} parent=107 // pred_region
          %2218 = dma.done [#allocation4], 256
        $region124: #{transformer_model_forward.3} parent=107 // pred_fallthru
          _
      $region108: #{transformer_model_forward.3} parent=5 // pred_fallthru
        _
      %p2219 = scmp.le.s32.totalorder 2, %s29
      // Predicated region
      $region125: #{transformer_model_forward.3} parent=5 // pred_check
        %p2220 = pneg %p2219
      $region126: #{transformer_model_forward.3} parent=5 // pred_check_branch
        %2222 = sbr.rel (%p2220) target = $region128
      $region127: #{transformer_model_forward.3} parent=5 // pred_region
        %s2223 = ssub.s32 %s29, 2
      $region128: #{transformer_model_forward.3} parent=5 // pred_fallthru
        _
    $region6: #{transformer_model_forward.3} parent=1 // loop_footer
      %s33 = sadd.s32 1, %s29
    $region7: #{transformer_model_forward.3} parent=1 // loop_footer_branch
      %28 = sbr.rel target = $region3
    $region8: #{transformer_model_forward.3} parent=1 // loop_exit
      _
    %2224 = vsyncpa [#allocation4], 1
    %s2225 = scalar_lea.sflag [#allocation4], 1
    %2226 = vsyncpa %s2225, 1

// kernel: transformer_model_forward.2
$region0: #{transformer_model_forward.2}
  #allocation0 [shape = 'u32[]', space=smem, size = 0x4, offset = 0x4, fixed_abs, tag = 'smem constant byte address 0x4 - core index']
  #allocation1 [shape = 'u32[144,128]{1,0:T(1,128)}', space=vmem, size = 0x12000, scoped, tag = 'internal scratch']
  %s0 = inlined_call_operand.vmem [shape: f32[128,16,1], index: 0, kind: input, shape index: {}]
  %s1 = inlined_call_operand.vmem [shape: f32[6,1,16], index: 1, kind: input, shape index: {}]
  %s2 = inlined_call_operand.vmem [shape: f32[1,16], index: 2, kind: input, shape index: {}]
  %s3 = inlined_call_operand.vmem [shape: f32[1,16], index: 3, kind: input, shape index: {}]
  %s4 = inlined_call_operand.vmem [shape: bf16[3,16,32], index: 4, kind: input, shape index: {}]
  %s5 = inlined_call_operand.vmem [shape: f32[1,32], index: 5, kind: input, shape index: {}]
  %s6 = inlined_call_operand.vmem [shape: f32[1,32], index: 6, kind: input, shape index: {}]
  %s7 = inlined_call_operand.vmem [shape: bf16[3,32,64], index: 7, kind: input, shape index: {}]
  %s8 = inlined_call_operand.vmem [shape: f32[1,64], index: 8, kind: input, shape index: {}]
  %s9 = inlined_call_operand.vmem [shape: f32[1,64], index: 9, kind: input, shape index: {}]
  %s10 = inlined_call_operand.vmem [shape: bf16[3,64,64], index: 10, kind: input, shape index: {}]
  %s11 = inlined_call_operand.vmem [shape: f32[1,64], index: 11, kind: input, shape index: {}]
  %s12 = inlined_call_operand.vmem [shape: f32[1,64], index: 12, kind: input, shape index: {}]
  %s13 = inlined_call_operand.vmem [shape: bf16[3,64,128], index: 13, kind: input, shape index: {}]
  %s14 = inlined_call_operand.vmem [shape: f32[1,128], index: 14, kind: input, shape index: {}]
  %s15 = inlined_call_operand.vmem [shape: f32[1,128], index: 15, kind: input, shape index: {}]
  %s16 = inlined_call_operand.vmem [shape: bf16[16,128], index: 16, kind: output, shape index: {}]
  %s17 = sld [smem:[#allocation0]]
  $region74: #{transformer_model_forward.2} parent=0
    _
  %s19 = ssub.s32 1, %s17
  %s20 = scalar_select 0, %s19, %s17
  // Predicated region
  $region2: #{transformer_model_forward.2} parent=0 // pred_check
    _
  $region3: #{transformer_model_forward.2} parent=0 // pred_check_branch
    %22 = sbr.rel (0) target = $region5
  $region4: #{transformer_model_forward.2} parent=0 // pred_region
    _
  $region5: #{transformer_model_forward.2} parent=0 // pred_fallthru
    _
  // Predicated region
  $region6: #{transformer_model_forward.2} parent=0 // pred_check
    _
  $region7: #{transformer_model_forward.2} parent=0 // pred_check_branch
    %24 = sbr.rel (0) target = $region9
  $region8: #{transformer_model_forward.2} parent=0 // pred_region
    _
  $region9: #{transformer_model_forward.2} parent=0 // pred_fallthru
    _
  // Predicated region
  $region10: #{transformer_model_forward.2} parent=0 // pred_check
    _
  $region11: #{transformer_model_forward.2} parent=0 // pred_check_branch
    %26 = sbr.rel (0) target = $region13
  $region12: #{transformer_model_forward.2} parent=0 // pred_region
    _
  $region13: #{transformer_model_forward.2} parent=0 // pred_fallthru
    _
  // Predicated region
  $region14: #{transformer_model_forward.2} parent=0 // pred_check
    _
  $region15: #{transformer_model_forward.2} parent=0 // pred_check_branch
    %28 = sbr.rel (0) target = $region17
  $region16: #{transformer_model_forward.2} parent=0 // pred_region
    _
  $region17: #{transformer_model_forward.2} parent=0 // pred_fallthru
    _
  // Predicated region
  $region18: #{transformer_model_forward.2} parent=0 // pred_check
    _
  $region19: #{transformer_model_forward.2} parent=0 // pred_check_branch
    %30 = sbr.rel (0) target = $region21
  $region20: #{transformer_model_forward.2} parent=0 // pred_region
    _
  $region21: #{transformer_model_forward.2} parent=0 // pred_fallthru
    _
  // Predicated region
  $region22: #{transformer_model_forward.2} parent=0 // pred_check
    _
  $region23: #{transformer_model_forward.2} parent=0 // pred_check_branch
    %32 = sbr.rel (0) target = $region25
  $region24: #{transformer_model_forward.2} parent=0 // pred_region
    _
  $region25: #{transformer_model_forward.2} parent=0 // pred_fallthru
    _
  // Predicated region
  $region26: #{transformer_model_forward.2} parent=0 // pred_check
    _
  $region27: #{transformer_model_forward.2} parent=0 // pred_check_branch
    %34 = sbr.rel (0) target = $region29
  $region28: #{transformer_model_forward.2} parent=0 // pred_region
    _
  $region29: #{transformer_model_forward.2} parent=0 // pred_fallthru
    _
  // Predicated region
  $region30: #{transformer_model_forward.2} parent=0 // pred_check
    _
  $region31: #{transformer_model_forward.2} parent=0 // pred_check_branch
    %36 = sbr.rel (0) target = $region33
  $region32: #{transformer_model_forward.2} parent=0 // pred_region
    _
  $region33: #{transformer_model_forward.2} parent=0 // pred_fallthru
    _
  // Predicated region
  $region34: #{transformer_model_forward.2} parent=0 // pred_check
    _
  $region35: #{transformer_model_forward.2} parent=0 // pred_check_branch
    %38 = sbr.rel (0) target = $region37
  $region36: #{transformer_model_forward.2} parent=0 // pred_region
    _
  $region37: #{transformer_model_forward.2} parent=0 // pred_fallthru
    _
  // Predicated region
  $region38: #{transformer_model_forward.2} parent=0 // pred_check
    _
  $region39: #{transformer_model_forward.2} parent=0 // pred_check_branch
    %40 = sbr.rel (0) target = $region41
  $region40: #{transformer_model_forward.2} parent=0 // pred_region
    _
  $region41: #{transformer_model_forward.2} parent=0 // pred_fallthru
    _
  // Predicated region
  $region42: #{transformer_model_forward.2} parent=0 // pred_check
    _
  $region43: #{transformer_model_forward.2} parent=0 // pred_check_branch
    %42 = sbr.rel (0) target = $region45
  $region44: #{transformer_model_forward.2} parent=0 // pred_region
    _
  $region45: #{transformer_model_forward.2} parent=0 // pred_fallthru
    _
  // Predicated region
  $region46: #{transformer_model_forward.2} parent=0 // pred_check
    _
  $region47: #{transformer_model_forward.2} parent=0 // pred_check_branch
    %44 = sbr.rel (0) target = $region49
  $region48: #{transformer_model_forward.2} parent=0 // pred_region
    _
  $region49: #{transformer_model_forward.2} parent=0 // pred_fallthru
    _
  // Predicated region
  $region50: #{transformer_model_forward.2} parent=0 // pred_check
    _
  $region51: #{transformer_model_forward.2} parent=0 // pred_check_branch
    %46 = sbr.rel (0) target = $region53
  $region52: #{transformer_model_forward.2} parent=0 // pred_region
    _
  $region53: #{transformer_model_forward.2} parent=0 // pred_fallthru
    _
  // Predicated region
  $region54: #{transformer_model_forward.2} parent=0 // pred_check
    _
  $region55: #{transformer_model_forward.2} parent=0 // pred_check_branch
    %48 = sbr.rel (0) target = $region57
  $region56: #{transformer_model_forward.2} parent=0 // pred_region
    _
  $region57: #{transformer_model_forward.2} parent=0 // pred_fallthru
    _
  // Predicated region
  $region58: #{transformer_model_forward.2} parent=0 // pred_check
    _
  $region59: #{transformer_model_forward.2} parent=0 // pred_check_branch
    %50 = sbr.rel (0) target = $region61
  $region60: #{transformer_model_forward.2} parent=0 // pred_region
    _
  $region61: #{transformer_model_forward.2} parent=0 // pred_fallthru
    _
  // Predicated region
  $region62: #{transformer_model_forward.2} parent=0 // pred_check
    _
  $region63: #{transformer_model_forward.2} parent=0 // pred_check_branch
    %52 = sbr.rel (0) target = $region65
  $region64: #{transformer_model_forward.2} parent=0 // pred_region
    _
  $region65: #{transformer_model_forward.2} parent=0 // pred_fallthru
    _
  %v54 = vld [vmem:[%s0] sm:$0xff]
  %v55 = vld [vmem:[%s0 + $0x8] sm:$0xff]
  %v56 = vld [vmem:[%s0 + $0x10] sm:$0xff]
  %v57 = vld [vmem:[%s0 + $0x18] sm:$0xff]
  %v58 = vld [vmem:[%s0 + $0x20] sm:$0xff]
  %v59 = vld [vmem:[%s0 + $0x28] sm:$0xff]
  %v60 = vld [vmem:[%s0 + $0x30] sm:$0xff]
  %v61 = vld [vmem:[%s0 + $0x38] sm:$0xff]
  %v62 = vld [vmem:[%s0 + $0x40] sm:$0xff]
  %v63 = vld [vmem:[%s0 + $0x48] sm:$0xff]
  %v64 = vld [vmem:[%s0 + $0x50] sm:$0xff]
  %v65 = vld [vmem:[%s0 + $0x58] sm:$0xff]
  %v66 = vld [vmem:[%s0 + $0x60] sm:$0xff]
  %v67 = vld [vmem:[%s0 + $0x68] sm:$0xff]
  %v68 = vld [vmem:[%s0 + $0x70] sm:$0xff]
  %v69 = vld [vmem:[%s0 + $0x78] sm:$0xff]
  %v70 = vld [vmem:[%s0 + $0x80] sm:$0xff]
  %v71 = vld [vmem:[%s0 + $0x88] sm:$0xff]
  %v72 = vld [vmem:[%s0 + $0x90] sm:$0xff]
  %v73 = vld [vmem:[%s0 + $0x98] sm:$0xff]
  %v74 = vld [vmem:[%s0 + $0xa0] sm:$0xff]
  %v75 = vld [vmem:[%s0 + $0xa8] sm:$0xff]
  %v76 = vld [vmem:[%s0 + $0xb0] sm:$0xff]
  %v77 = vld [vmem:[%s0 + $0xb8] sm:$0xff]
  %v78 = vld [vmem:[%s0 + $0xc0] sm:$0xff]
  %v79 = vld [vmem:[%s0 + $0xc8] sm:$0xff]
  %v80 = vld [vmem:[%s0 + $0xd0] sm:$0xff]
  %v81 = vld [vmem:[%s0 + $0xd8] sm:$0xff]
  %v82 = vld [vmem:[%s0 + $0xe0] sm:$0xff]
  %v83 = vld [vmem:[%s0 + $0xe8] sm:$0xff]
  %v84 = vld [vmem:[%s0 + $0xf0] sm:$0xff]
  %v85 = vld [vmem:[%s0 + $0xf8] sm:$0xff]
  %v86 = vld [vmem:[%s0 + $0x100] sm:$0xff]
  %v87 = vld [vmem:[%s0 + $0x108] sm:$0xff]
  %v88 = vld [vmem:[%s0 + $0x110] sm:$0xff]
  %v89 = vld [vmem:[%s0 + $0x118] sm:$0xff]
  %v90 = vld [vmem:[%s0 + $0x120] sm:$0xff]
  %v91 = vld [vmem:[%s0 + $0x128] sm:$0xff]
  %v92 = vld [vmem:[%s0 + $0x130] sm:$0xff]
  %v93 = vld [vmem:[%s0 + $0x138] sm:$0xff]
  %v94 = vld [vmem:[%s0 + $0x140] sm:$0xff]
  %v95 = vld [vmem:[%s0 + $0x148] sm:$0xff]
  %v96 = vld [vmem:[%s0 + $0x150] sm:$0xff]
  %v97 = vld [vmem:[%s0 + $0x158] sm:$0xff]
  %v98 = vld [vmem:[%s0 + $0x160] sm:$0xff]
  %v99 = vld [vmem:[%s0 + $0x168] sm:$0xff]
  %v100 = vld [vmem:[%s0 + $0x170] sm:$0xff]
  %v101 = vld [vmem:[%s0 + $0x178] sm:$0xff]
  %v102 = vld [vmem:[%s0 + $0x180] sm:$0xff]
  %v103 = vld [vmem:[%s0 + $0x188] sm:$0xff]
  %v104 = vld [vmem:[%s0 + $0x190] sm:$0xff]
  %v105 = vld [vmem:[%s0 + $0x198] sm:$0xff]
  %v106 = vld [vmem:[%s0 + $0x1a0] sm:$0xff]
  %v107 = vld [vmem:[%s0 + $0x1a8] sm:$0xff]
  %v108 = vld [vmem:[%s0 + $0x1b0] sm:$0xff]
  %v109 = vld [vmem:[%s0 + $0x1b8] sm:$0xff]
  %v110 = vld [vmem:[%s0 + $0x1c0] sm:$0xff]
  %v111 = vld [vmem:[%s0 + $0x1c8] sm:$0xff]
  %v112 = vld [vmem:[%s0 + $0x1d0] sm:$0xff]
  %v113 = vld [vmem:[%s0 + $0x1d8] sm:$0xff]
  %v114 = vld [vmem:[%s0 + $0x1e0] sm:$0xff]
  %v115 = vld [vmem:[%s0 + $0x1e8] sm:$0xff]
  %v116 = vld [vmem:[%s0 + $0x1f0] sm:$0xff]
  %v117 = vld [vmem:[%s0 + $0x1f8] sm:$0xff]
  %v118 = vld [vmem:[%s0 + $0x200] sm:$0xff]
  %v119 = vld [vmem:[%s0 + $0x208] sm:$0xff]
  %v120 = vld [vmem:[%s0 + $0x210] sm:$0xff]
  %v121 = vld [vmem:[%s0 + $0x218] sm:$0xff]
  %v122 = vld [vmem:[%s0 + $0x220] sm:$0xff]
  %v123 = vld [vmem:[%s0 + $0x228] sm:$0xff]
  %v124 = vld [vmem:[%s0 + $0x230] sm:$0xff]
  %v125 = vld [vmem:[%s0 + $0x238] sm:$0xff]
  %v126 = vld [vmem:[%s0 + $0x240] sm:$0xff]
  %v127 = vld [vmem:[%s0 + $0x248] sm:$0xff]
  %v128 = vld [vmem:[%s0 + $0x250] sm:$0xff]
  %v129 = vld [vmem:[%s0 + $0x258] sm:$0xff]
  %v130 = vld [vmem:[%s0 + $0x260] sm:$0xff]
  %v131 = vld [vmem:[%s0 + $0x268] sm:$0xff]
  %v132 = vld [vmem:[%s0 + $0x270] sm:$0xff]
  %v133 = vld [vmem:[%s0 + $0x278] sm:$0xff]
  %v134 = vld [vmem:[%s0 + $0x280] sm:$0xff]
  %v135 = vld [vmem:[%s0 + $0x288] sm:$0xff]
  %v136 = vld [vmem:[%s0 + $0x290] sm:$0xff]
  %v137 = vld [vmem:[%s0 + $0x298] sm:$0xff]
  %v138 = vld [vmem:[%s0 + $0x2a0] sm:$0xff]
  %v139 = vld [vmem:[%s0 + $0x2a8] sm:$0xff]
  %v140 = vld [vmem:[%s0 + $0x2b0] sm:$0xff]
  %v141 = vld [vmem:[%s0 + $0x2b8] sm:$0xff]
  %v142 = vld [vmem:[%s0 + $0x2c0] sm:$0xff]
  %v143 = vld [vmem:[%s0 + $0x2c8] sm:$0xff]
  %v144 = vld [vmem:[%s0 + $0x2d0] sm:$0xff]
  %v145 = vld [vmem:[%s0 + $0x2d8] sm:$0xff]
  %v146 = vld [vmem:[%s0 + $0x2e0] sm:$0xff]
  %v147 = vld [vmem:[%s0 + $0x2e8] sm:$0xff]
  %v148 = vld [vmem:[%s0 + $0x2f0] sm:$0xff]
  %v149 = vld [vmem:[%s0 + $0x2f8] sm:$0xff]
  %v150 = vld [vmem:[%s0 + $0x300] sm:$0xff]
  %v151 = vld [vmem:[%s0 + $0x308] sm:$0xff]
  %v152 = vld [vmem:[%s0 + $0x310] sm:$0xff]
  %v153 = vld [vmem:[%s0 + $0x318] sm:$0xff]
  %v154 = vld [vmem:[%s0 + $0x320] sm:$0xff]
  %v155 = vld [vmem:[%s0 + $0x328] sm:$0xff]
  %v156 = vld [vmem:[%s0 + $0x330] sm:$0xff]
  %v157 = vld [vmem:[%s0 + $0x338] sm:$0xff]
  %v158 = vld [vmem:[%s0 + $0x340] sm:$0xff]
  %v159 = vld [vmem:[%s0 + $0x348] sm:$0xff]
  %v160 = vld [vmem:[%s0 + $0x350] sm:$0xff]
  %v161 = vld [vmem:[%s0 + $0x358] sm:$0xff]
  %v162 = vld [vmem:[%s0 + $0x360] sm:$0xff]
  %v163 = vld [vmem:[%s0 + $0x368] sm:$0xff]
  %v164 = vld [vmem:[%s0 + $0x370] sm:$0xff]
  %v165 = vld [vmem:[%s0 + $0x378] sm:$0xff]
  %v166 = vld [vmem:[%s0 + $0x380] sm:$0xff]
  %v167 = vld [vmem:[%s0 + $0x388] sm:$0xff]
  %v168 = vld [vmem:[%s0 + $0x390] sm:$0xff]
  %v169 = vld [vmem:[%s0 + $0x398] sm:$0xff]
  %v170 = vld [vmem:[%s0 + $0x3a0] sm:$0xff]
  %v171 = vld [vmem:[%s0 + $0x3a8] sm:$0xff]
  %v172 = vld [vmem:[%s0 + $0x3b0] sm:$0xff]
  %v173 = vld [vmem:[%s0 + $0x3b8] sm:$0xff]
  %v174 = vld [vmem:[%s0 + $0x3c0] sm:$0xff]
  %v175 = vld [vmem:[%s0 + $0x3c8] sm:$0xff]
  %v176 = vld [vmem:[%s0 + $0x3d0] sm:$0xff]
  %v177 = vld [vmem:[%s0 + $0x3d8] sm:$0xff]
  %v178 = vld [vmem:[%s0 + $0x3e0] sm:$0xff]
  %v179 = vld [vmem:[%s0 + $0x3e8] sm:$0xff]
  %v180 = vld [vmem:[%s0 + $0x3f0] sm:$0xff]
  %v181 = vld [vmem:[%s0 + $0x3f8] sm:$0xff]
  %v182 = vld [vmem:[%s0 + $0x400] sm:$0xff]
  %v183 = vld [vmem:[%s0 + $0x408] sm:$0xff]
  %v184 = vld [vmem:[%s0 + $0x410] sm:$0xff]
  %v185 = vld [vmem:[%s0 + $0x418] sm:$0xff]
  %v186 = vld [vmem:[%s0 + $0x420] sm:$0xff]
  %v187 = vld [vmem:[%s0 + $0x428] sm:$0xff]
  %v188 = vld [vmem:[%s0 + $0x430] sm:$0xff]
  %v189 = vld [vmem:[%s0 + $0x438] sm:$0xff]
  %v190 = vld [vmem:[%s0 + $0x440] sm:$0xff]
  %v191 = vld [vmem:[%s0 + $0x448] sm:$0xff]
  %v192 = vld [vmem:[%s0 + $0x450] sm:$0xff]
  %v193 = vld [vmem:[%s0 + $0x458] sm:$0xff]
  %v194 = vld [vmem:[%s0 + $0x460] sm:$0xff]
  %v195 = vld [vmem:[%s0 + $0x468] sm:$0xff]
  %v196 = vld [vmem:[%s0 + $0x470] sm:$0xff]
  %v197 = vld [vmem:[%s0 + $0x478] sm:$0xff]
  %v198 = vld [vmem:[%s0 + $0x480] sm:$0xff]
  %v199 = vld [vmem:[%s0 + $0x488] sm:$0xff]
  %v200 = vld [vmem:[%s0 + $0x490] sm:$0xff]
  %v201 = vld [vmem:[%s0 + $0x498] sm:$0xff]
  %v202 = vld [vmem:[%s0 + $0x4a0] sm:$0xff]
  %v203 = vld [vmem:[%s0 + $0x4a8] sm:$0xff]
  %v204 = vld [vmem:[%s0 + $0x4b0] sm:$0xff]
  %v205 = vld [vmem:[%s0 + $0x4b8] sm:$0xff]
  %v206 = vld [vmem:[%s0 + $0x4c0] sm:$0xff]
  %v207 = vld [vmem:[%s0 + $0x4c8] sm:$0xff]
  %v208 = vld [vmem:[%s0 + $0x4d0] sm:$0xff]
  %v209 = vld [vmem:[%s0 + $0x4d8] sm:$0xff]
  %v210 = vld [vmem:[%s0 + $0x4e0] sm:$0xff]
  %v211 = vld [vmem:[%s0 + $0x4e8] sm:$0xff]
  %v212 = vld [vmem:[%s0 + $0x4f0] sm:$0xff]
  %v213 = vld [vmem:[%s0 + $0x4f8] sm:$0xff]
  %v214 = vld [vmem:[%s0 + $0x500] sm:$0xff]
  %v215 = vld [vmem:[%s0 + $0x508] sm:$0xff]
  %v216 = vld [vmem:[%s0 + $0x510] sm:$0xff]
  %v217 = vld [vmem:[%s0 + $0x518] sm:$0xff]
  %v218 = vld [vmem:[%s0 + $0x520] sm:$0xff]
  %v219 = vld [vmem:[%s0 + $0x528] sm:$0xff]
  %v220 = vld [vmem:[%s0 + $0x530] sm:$0xff]
  %v221 = vld [vmem:[%s0 + $0x538] sm:$0xff]
  %v222 = vld [vmem:[%s0 + $0x540] sm:$0xff]
  %v223 = vld [vmem:[%s0 + $0x548] sm:$0xff]
  %v224 = vld [vmem:[%s0 + $0x550] sm:$0xff]
  %v225 = vld [vmem:[%s0 + $0x558] sm:$0xff]
  %v226 = vld [vmem:[%s0 + $0x560] sm:$0xff]
  %v227 = vld [vmem:[%s0 + $0x568] sm:$0xff]
  %v228 = vld [vmem:[%s0 + $0x570] sm:$0xff]
  %v229 = vld [vmem:[%s0 + $0x578] sm:$0xff]
  %v230 = vld [vmem:[%s0 + $0x580] sm:$0xff]
  %v231 = vld [vmem:[%s0 + $0x588] sm:$0xff]
  %v232 = vld [vmem:[%s0 + $0x590] sm:$0xff]
  %v233 = vld [vmem:[%s0 + $0x598] sm:$0xff]
  %v234 = vld [vmem:[%s0 + $0x5a0] sm:$0xff]
  %v235 = vld [vmem:[%s0 + $0x5a8] sm:$0xff]
  %v236 = vld [vmem:[%s0 + $0x5b0] sm:$0xff]
  %v237 = vld [vmem:[%s0 + $0x5b8] sm:$0xff]
  %v238 = vld [vmem:[%s0 + $0x5c0] sm:$0xff]
  %v239 = vld [vmem:[%s0 + $0x5c8] sm:$0xff]
  %v240 = vld [vmem:[%s0 + $0x5d0] sm:$0xff]
  %v241 = vld [vmem:[%s0 + $0x5d8] sm:$0xff]
  %v242 = vld [vmem:[%s0 + $0x5e0] sm:$0xff]
  %v243 = vld [vmem:[%s0 + $0x5e8] sm:$0xff]
  %v244 = vld [vmem:[%s0 + $0x5f0] sm:$0xff]
  %v245 = vld [vmem:[%s0 + $0x5f8] sm:$0xff]
  %v246 = vld [vmem:[%s0 + $0x600] sm:$0xff]
  %v247 = vld [vmem:[%s0 + $0x608] sm:$0xff]
  %v248 = vld [vmem:[%s0 + $0x610] sm:$0xff]
  %v249 = vld [vmem:[%s0 + $0x618] sm:$0xff]
  %v250 = vld [vmem:[%s0 + $0x620] sm:$0xff]
  %v251 = vld [vmem:[%s0 + $0x628] sm:$0xff]
  %v252 = vld [vmem:[%s0 + $0x630] sm:$0xff]
  %v253 = vld [vmem:[%s0 + $0x638] sm:$0xff]
  %v254 = vld [vmem:[%s0 + $0x640] sm:$0xff]
  %v255 = vld [vmem:[%s0 + $0x648] sm:$0xff]
  %v256 = vld [vmem:[%s0 + $0x650] sm:$0xff]
  %v257 = vld [vmem:[%s0 + $0x658] sm:$0xff]
  %v258 = vld [vmem:[%s0 + $0x660] sm:$0xff]
  %v259 = vld [vmem:[%s0 + $0x668] sm:$0xff]
  %v260 = vld [vmem:[%s0 + $0x670] sm:$0xff]
  %v261 = vld [vmem:[%s0 + $0x678] sm:$0xff]
  %v262 = vld [vmem:[%s0 + $0x680] sm:$0xff]
  %v263 = vld [vmem:[%s0 + $0x688] sm:$0xff]
  %v264 = vld [vmem:[%s0 + $0x690] sm:$0xff]
  %v265 = vld [vmem:[%s0 + $0x698] sm:$0xff]
  %v266 = vld [vmem:[%s0 + $0x6a0] sm:$0xff]
  %v267 = vld [vmem:[%s0 + $0x6a8] sm:$0xff]
  %v268 = vld [vmem:[%s0 + $0x6b0] sm:$0xff]
  %v269 = vld [vmem:[%s0 + $0x6b8] sm:$0xff]
  %v270 = vld [vmem:[%s0 + $0x6c0] sm:$0xff]
  %v271 = vld [vmem:[%s0 + $0x6c8] sm:$0xff]
  %v272 = vld [vmem:[%s0 + $0x6d0] sm:$0xff]
  %v273 = vld [vmem:[%s0 + $0x6d8] sm:$0xff]
  %v274 = vld [vmem:[%s0 + $0x6e0] sm:$0xff]
  %v275 = vld [vmem:[%s0 + $0x6e8] sm:$0xff]
  %v276 = vld [vmem:[%s0 + $0x6f0] sm:$0xff]
  %v277 = vld [vmem:[%s0 + $0x6f8] sm:$0xff]
  %v278 = vld [vmem:[%s0 + $0x700] sm:$0xff]
  %v279 = vld [vmem:[%s0 + $0x708] sm:$0xff]
  %v280 = vld [vmem:[%s0 + $0x710] sm:$0xff]
  %v281 = vld [vmem:[%s0 + $0x718] sm:$0xff]
  %v282 = vld [vmem:[%s0 + $0x720] sm:$0xff]
  %v283 = vld [vmem:[%s0 + $0x728] sm:$0xff]
  %v284 = vld [vmem:[%s0 + $0x730] sm:$0xff]
  %v285 = vld [vmem:[%s0 + $0x738] sm:$0xff]
  %v286 = vld [vmem:[%s0 + $0x740] sm:$0xff]
  %v287 = vld [vmem:[%s0 + $0x748] sm:$0xff]
  %v288 = vld [vmem:[%s0 + $0x750] sm:$0xff]
  %v289 = vld [vmem:[%s0 + $0x758] sm:$0xff]
  %v290 = vld [vmem:[%s0 + $0x760] sm:$0xff]
  %v291 = vld [vmem:[%s0 + $0x768] sm:$0xff]
  %v292 = vld [vmem:[%s0 + $0x770] sm:$0xff]
  %v293 = vld [vmem:[%s0 + $0x778] sm:$0xff]
  %v294 = vld [vmem:[%s0 + $0x780] sm:$0xff]
  %v295 = vld [vmem:[%s0 + $0x788] sm:$0xff]
  %v296 = vld [vmem:[%s0 + $0x790] sm:$0xff]
  %v297 = vld [vmem:[%s0 + $0x798] sm:$0xff]
  %v298 = vld [vmem:[%s0 + $0x7a0] sm:$0xff]
  %v299 = vld [vmem:[%s0 + $0x7a8] sm:$0xff]
  %v300 = vld [vmem:[%s0 + $0x7b0] sm:$0xff]
  %v301 = vld [vmem:[%s0 + $0x7b8] sm:$0xff]
  %v302 = vld [vmem:[%s0 + $0x7c0] sm:$0xff]
  %v303 = vld [vmem:[%s0 + $0x7c8] sm:$0xff]
  %v304 = vld [vmem:[%s0 + $0x7d0] sm:$0xff]
  %v305 = vld [vmem:[%s0 + $0x7d8] sm:$0xff]
  %v306 = vld [vmem:[%s0 + $0x7e0] sm:$0xff]
  %v307 = vld [vmem:[%s0 + $0x7e8] sm:$0xff]
  %v308 = vld [vmem:[%s1] sm:$0x1]
  %310 = vset.pattern.permute.xlu0 0
  %311 = vperm.xlu0 %310, %v54
  %v312 = vpop.permute.xlu0 %311
  %315 = vset.pattern.permute.xlu0 0
  %316 = vperm.xlu0 %315, %v55
  %v317 = vpop.permute.xlu0 %316
  %320 = vset.pattern.permute.xlu0 0
  %321 = vperm.xlu0 %320, %v56
  %v322 = vpop.permute.xlu0 %321
  %325 = vset.pattern.permute.xlu0 0
  %326 = vperm.xlu0 %325, %v57
  %v327 = vpop.permute.xlu0 %326
  %330 = vset.pattern.permute.xlu0 0
  %331 = vperm.xlu0 %330, %v58
  %v332 = vpop.permute.xlu0 %331
  %335 = vset.pattern.permute.xlu0 0
  %336 = vperm.xlu0 %335, %v59
  %v337 = vpop.permute.xlu0 %336
  %340 = vset.pattern.permute.xlu0 0
  %341 = vperm.xlu0 %340, %v60
  %v342 = vpop.permute.xlu0 %341
  %345 = vset.pattern.permute.xlu0 0
  %346 = vperm.xlu0 %345, %v61
  %v347 = vpop.permute.xlu0 %346
  %350 = vset.pattern.permute.xlu0 0
  %351 = vperm.xlu0 %350, %v62
  %v352 = vpop.permute.xlu0 %351
  %355 = vset.pattern.permute.xlu0 0
  %356 = vperm.xlu0 %355, %v63
  %v357 = vpop.permute.xlu0 %356
  %360 = vset.pattern.permute.xlu0 0
  %361 = vperm.xlu0 %360, %v64
  %v362 = vpop.permute.xlu0 %361
  %365 = vset.pattern.permute.xlu0 0
  %366 = vperm.xlu0 %365, %v65
  %v367 = vpop.permute.xlu0 %366
  %370 = vset.pattern.permute.xlu0 0
  %371 = vperm.xlu0 %370, %v66
  %v372 = vpop.permute.xlu0 %371
  %375 = vset.pattern.permute.xlu0 0
  %376 = vperm.xlu0 %375, %v67
  %v377 = vpop.permute.xlu0 %376
  %380 = vset.pattern.permute.xlu0 0
  %381 = vperm.xlu0 %380, %v68
  %v382 = vpop.permute.xlu0 %381
  %385 = vset.pattern.permute.xlu0 0
  %386 = vperm.xlu0 %385, %v69
  %v387 = vpop.permute.xlu0 %386
  %390 = vset.pattern.permute.xlu0 0
  %391 = vperm.xlu0 %390, %v70
  %v392 = vpop.permute.xlu0 %391
  %395 = vset.pattern.permute.xlu0 0
  %396 = vperm.xlu0 %395, %v71
  %v397 = vpop.permute.xlu0 %396
  %400 = vset.pattern.permute.xlu0 0
  %401 = vperm.xlu0 %400, %v72
  %v402 = vpop.permute.xlu0 %401
  %405 = vset.pattern.permute.xlu0 0
  %406 = vperm.xlu0 %405, %v73
  %v407 = vpop.permute.xlu0 %406
  %410 = vset.pattern.permute.xlu0 0
  %411 = vperm.xlu0 %410, %v74
  %v412 = vpop.permute.xlu0 %411
  %415 = vset.pattern.permute.xlu0 0
  %416 = vperm.xlu0 %415, %v75
  %v417 = vpop.permute.xlu0 %416
  %420 = vset.pattern.permute.xlu0 0
  %421 = vperm.xlu0 %420, %v76
  %v422 = vpop.permute.xlu0 %421
  %425 = vset.pattern.permute.xlu0 0
  %426 = vperm.xlu0 %425, %v77
  %v427 = vpop.permute.xlu0 %426
  %430 = vset.pattern.permute.xlu0 0
  %431 = vperm.xlu0 %430, %v78
  %v432 = vpop.permute.xlu0 %431
  %435 = vset.pattern.permute.xlu0 0
  %436 = vperm.xlu0 %435, %v79
  %v437 = vpop.permute.xlu0 %436
  %440 = vset.pattern.permute.xlu0 0
  %441 = vperm.xlu0 %440, %v80
  %v442 = vpop.permute.xlu0 %441
  %445 = vset.pattern.permute.xlu0 0
  %446 = vperm.xlu0 %445, %v81
  %v447 = vpop.permute.xlu0 %446
  %450 = vset.pattern.permute.xlu0 0
  %451 = vperm.xlu0 %450, %v82
  %v452 = vpop.permute.xlu0 %451
  %455 = vset.pattern.permute.xlu0 0
  %456 = vperm.xlu0 %455, %v83
  %v457 = vpop.permute.xlu0 %456
  %460 = vset.pattern.permute.xlu0 0
  %461 = vperm.xlu0 %460, %v84
  %v462 = vpop.permute.xlu0 %461
  %465 = vset.pattern.permute.xlu0 0
  %466 = vperm.xlu0 %465, %v85
  %v467 = vpop.permute.xlu0 %466
  %470 = vset.pattern.permute.xlu0 0
  %471 = vperm.xlu0 %470, %v86
  %v472 = vpop.permute.xlu0 %471
  %475 = vset.pattern.permute.xlu0 0
  %476 = vperm.xlu0 %475, %v87
  %v477 = vpop.permute.xlu0 %476
  %480 = vset.pattern.permute.xlu0 0
  %481 = vperm.xlu0 %480, %v88
  %v482 = vpop.permute.xlu0 %481
  %485 = vset.pattern.permute.xlu0 0
  %486 = vperm.xlu0 %485, %v89
  %v487 = vpop.permute.xlu0 %486
  %490 = vset.pattern.permute.xlu0 0
  %491 = vperm.xlu0 %490, %v90
  %v492 = vpop.permute.xlu0 %491
  %495 = vset.pattern.permute.xlu0 0
  %496 = vperm.xlu0 %495, %v91
  %v497 = vpop.permute.xlu0 %496
  %500 = vset.pattern.permute.xlu0 0
  %501 = vperm.xlu0 %500, %v92
  %v502 = vpop.permute.xlu0 %501
  %505 = vset.pattern.permute.xlu0 0
  %506 = vperm.xlu0 %505, %v93
  %v507 = vpop.permute.xlu0 %506
  %510 = vset.pattern.permute.xlu0 0
  %511 = vperm.xlu0 %510, %v94
  %v512 = vpop.permute.xlu0 %511
  %515 = vset.pattern.permute.xlu0 0
  %516 = vperm.xlu0 %515, %v95
  %v517 = vpop.permute.xlu0 %516
  %520 = vset.pattern.permute.xlu0 0
  %521 = vperm.xlu0 %520, %v96
  %v522 = vpop.permute.xlu0 %521
  %525 = vset.pattern.permute.xlu0 0
  %526 = vperm.xlu0 %525, %v97
  %v527 = vpop.permute.xlu0 %526
  %530 = vset.pattern.permute.xlu0 0
  %531 = vperm.xlu0 %530, %v98
  %v532 = vpop.permute.xlu0 %531
  %535 = vset.pattern.permute.xlu0 0
  %536 = vperm.xlu0 %535, %v99
  %v537 = vpop.permute.xlu0 %536
  %540 = vset.pattern.permute.xlu0 0
  %541 = vperm.xlu0 %540, %v100
  %v542 = vpop.permute.xlu0 %541
  %545 = vset.pattern.permute.xlu0 0
  %546 = vperm.xlu0 %545, %v101
  %v547 = vpop.permute.xlu0 %546
  %550 = vset.pattern.permute.xlu0 0
  %551 = vperm.xlu0 %550, %v102
  %v552 = vpop.permute.xlu0 %551
  %555 = vset.pattern.permute.xlu0 0
  %556 = vperm.xlu0 %555, %v103
  %v557 = vpop.permute.xlu0 %556
  %560 = vset.pattern.permute.xlu0 0
  %561 = vperm.xlu0 %560, %v104
  %v562 = vpop.permute.xlu0 %561
  %565 = vset.pattern.permute.xlu0 0
  %566 = vperm.xlu0 %565, %v105
  %v567 = vpop.permute.xlu0 %566
  %570 = vset.pattern.permute.xlu0 0
  %571 = vperm.xlu0 %570, %v106
  %v572 = vpop.permute.xlu0 %571
  %575 = vset.pattern.permute.xlu0 0
  %576 = vperm.xlu0 %575, %v107
  %v577 = vpop.permute.xlu0 %576
  %580 = vset.pattern.permute.xlu0 0
  %581 = vperm.xlu0 %580, %v108
  %v582 = vpop.permute.xlu0 %581
  %585 = vset.pattern.permute.xlu0 0
  %586 = vperm.xlu0 %585, %v109
  %v587 = vpop.permute.xlu0 %586
  %590 = vset.pattern.permute.xlu0 0
  %591 = vperm.xlu0 %590, %v110
  %v592 = vpop.permute.xlu0 %591
  %595 = vset.pattern.permute.xlu0 0
  %596 = vperm.xlu0 %595, %v111
  %v597 = vpop.permute.xlu0 %596
  %600 = vset.pattern.permute.xlu0 0
  %601 = vperm.xlu0 %600, %v112
  %v602 = vpop.permute.xlu0 %601
  %605 = vset.pattern.permute.xlu0 0
  %606 = vperm.xlu0 %605, %v113
  %v607 = vpop.permute.xlu0 %606
  %610 = vset.pattern.permute.xlu0 0
  %611 = vperm.xlu0 %610, %v114
  %v612 = vpop.permute.xlu0 %611
  %615 = vset.pattern.permute.xlu0 0
  %616 = vperm.xlu0 %615, %v115
  %v617 = vpop.permute.xlu0 %616
  %620 = vset.pattern.permute.xlu0 0
  %621 = vperm.xlu0 %620, %v116
  %v622 = vpop.permute.xlu0 %621
  %625 = vset.pattern.permute.xlu0 0
  %626 = vperm.xlu0 %625, %v117
  %v627 = vpop.permute.xlu0 %626
  %630 = vset.pattern.permute.xlu0 0
  %631 = vperm.xlu0 %630, %v118
  %v632 = vpop.permute.xlu0 %631
  %635 = vset.pattern.permute.xlu0 0
  %636 = vperm.xlu0 %635, %v119
  %v637 = vpop.permute.xlu0 %636
  %640 = vset.pattern.permute.xlu0 0
  %641 = vperm.xlu0 %640, %v120
  %v642 = vpop.permute.xlu0 %641
  %645 = vset.pattern.permute.xlu0 0
  %646 = vperm.xlu0 %645, %v121
  %v647 = vpop.permute.xlu0 %646
  %650 = vset.pattern.permute.xlu0 0
  %651 = vperm.xlu0 %650, %v122
  %v652 = vpop.permute.xlu0 %651
  %655 = vset.pattern.permute.xlu0 0
  %656 = vperm.xlu0 %655, %v123
  %v657 = vpop.permute.xlu0 %656
  %660 = vset.pattern.permute.xlu0 0
  %661 = vperm.xlu0 %660, %v124
  %v662 = vpop.permute.xlu0 %661
  %665 = vset.pattern.permute.xlu0 0
  %666 = vperm.xlu0 %665, %v125
  %v667 = vpop.permute.xlu0 %666
  %670 = vset.pattern.permute.xlu0 0
  %671 = vperm.xlu0 %670, %v126
  %v672 = vpop.permute.xlu0 %671
  %675 = vset.pattern.permute.xlu0 0
  %676 = vperm.xlu0 %675, %v127
  %v677 = vpop.permute.xlu0 %676
  %680 = vset.pattern.permute.xlu0 0
  %681 = vperm.xlu0 %680, %v128
  %v682 = vpop.permute.xlu0 %681
  %685 = vset.pattern.permute.xlu0 0
  %686 = vperm.xlu0 %685, %v129
  %v687 = vpop.permute.xlu0 %686
  %690 = vset.pattern.permute.xlu0 0
  %691 = vperm.xlu0 %690, %v130
  %v692 = vpop.permute.xlu0 %691
  %695 = vset.pattern.permute.xlu0 0
  %696 = vperm.xlu0 %695, %v131
  %v697 = vpop.permute.xlu0 %696
  %700 = vset.pattern.permute.xlu0 0
  %701 = vperm.xlu0 %700, %v132
  %v702 = vpop.permute.xlu0 %701
  %705 = vset.pattern.permute.xlu0 0
  %706 = vperm.xlu0 %705, %v133
  %v707 = vpop.permute.xlu0 %706
  %710 = vset.pattern.permute.xlu0 0
  %711 = vperm.xlu0 %710, %v134
  %v712 = vpop.permute.xlu0 %711
  %715 = vset.pattern.permute.xlu0 0
  %716 = vperm.xlu0 %715, %v135
  %v717 = vpop.permute.xlu0 %716
  %720 = vset.pattern.permute.xlu0 0
  %721 = vperm.xlu0 %720, %v136
  %v722 = vpop.permute.xlu0 %721
  %725 = vset.pattern.permute.xlu0 0
  %726 = vperm.xlu0 %725, %v137
  %v727 = vpop.permute.xlu0 %726
  %730 = vset.pattern.permute.xlu0 0
  %731 = vperm.xlu0 %730, %v138
  %v732 = vpop.permute.xlu0 %731
  %735 = vset.pattern.permute.xlu0 0
  %736 = vperm.xlu0 %735, %v139
  %v737 = vpop.permute.xlu0 %736
  %740 = vset.pattern.permute.xlu0 0
  %741 = vperm.xlu0 %740, %v140
  %v742 = vpop.permute.xlu0 %741
  %745 = vset.pattern.permute.xlu0 0
  %746 = vperm.xlu0 %745, %v141
  %v747 = vpop.permute.xlu0 %746
  %750 = vset.pattern.permute.xlu0 0
  %751 = vperm.xlu0 %750, %v142
  %v752 = vpop.permute.xlu0 %751
  %755 = vset.pattern.permute.xlu0 0
  %756 = vperm.xlu0 %755, %v143
  %v757 = vpop.permute.xlu0 %756
  %760 = vset.pattern.permute.xlu0 0
  %761 = vperm.xlu0 %760, %v144
  %v762 = vpop.permute.xlu0 %761
  %765 = vset.pattern.permute.xlu0 0
  %766 = vperm.xlu0 %765, %v145
  %v767 = vpop.permute.xlu0 %766
  %770 = vset.pattern.permute.xlu0 0
  %771 = vperm.xlu0 %770, %v146
  %v772 = vpop.permute.xlu0 %771
  %775 = vset.pattern.permute.xlu0 0
  %776 = vperm.xlu0 %775, %v147
  %v777 = vpop.permute.xlu0 %776
  %780 = vset.pattern.permute.xlu0 0
  %781 = vperm.xlu0 %780, %v148
  %v782 = vpop.permute.xlu0 %781
  %785 = vset.pattern.permute.xlu0 0
  %786 = vperm.xlu0 %785, %v149
  %v787 = vpop.permute.xlu0 %786
  %790 = vset.pattern.permute.xlu0 0
  %791 = vperm.xlu0 %790, %v150
  %v792 = vpop.permute.xlu0 %791
  %795 = vset.pattern.permute.xlu0 0
  %796 = vperm.xlu0 %795, %v151
  %v797 = vpop.permute.xlu0 %796
  %800 = vset.pattern.permute.xlu0 0
  %801 = vperm.xlu0 %800, %v152
  %v802 = vpop.permute.xlu0 %801
  %805 = vset.pattern.permute.xlu0 0
  %806 = vperm.xlu0 %805, %v153
  %v807 = vpop.permute.xlu0 %806
  %810 = vset.pattern.permute.xlu0 0
  %811 = vperm.xlu0 %810, %v154
  %v812 = vpop.permute.xlu0 %811
  %815 = vset.pattern.permute.xlu0 0
  %816 = vperm.xlu0 %815, %v155
  %v817 = vpop.permute.xlu0 %816
  %820 = vset.pattern.permute.xlu0 0
  %821 = vperm.xlu0 %820, %v156
  %v822 = vpop.permute.xlu0 %821
  %825 = vset.pattern.permute.xlu0 0
  %826 = vperm.xlu0 %825, %v157
  %v827 = vpop.permute.xlu0 %826
  %830 = vset.pattern.permute.xlu0 0
  %831 = vperm.xlu0 %830, %v158
  %v832 = vpop.permute.xlu0 %831
  %835 = vset.pattern.permute.xlu0 0
  %836 = vperm.xlu0 %835, %v159
  %v837 = vpop.permute.xlu0 %836
  %840 = vset.pattern.permute.xlu0 0
  %841 = vperm.xlu0 %840, %v160
  %v842 = vpop.permute.xlu0 %841
  %845 = vset.pattern.permute.xlu0 0
  %846 = vperm.xlu0 %845, %v161
  %v847 = vpop.permute.xlu0 %846
  %850 = vset.pattern.permute.xlu0 0
  %851 = vperm.xlu0 %850, %v162
  %v852 = vpop.permute.xlu0 %851
  %855 = vset.pattern.permute.xlu0 0
  %856 = vperm.xlu0 %855, %v163
  %v857 = vpop.permute.xlu0 %856
  %860 = vset.pattern.permute.xlu0 0
  %861 = vperm.xlu0 %860, %v164
  %v862 = vpop.permute.xlu0 %861
  %865 = vset.pattern.permute.xlu0 0
  %866 = vperm.xlu0 %865, %v165
  %v867 = vpop.permute.xlu0 %866
  %870 = vset.pattern.permute.xlu0 0
  %871 = vperm.xlu0 %870, %v166
  %v872 = vpop.permute.xlu0 %871
  %875 = vset.pattern.permute.xlu0 0
  %876 = vperm.xlu0 %875, %v167
  %v877 = vpop.permute.xlu0 %876
  %880 = vset.pattern.permute.xlu0 0
  %881 = vperm.xlu0 %880, %v168
  %v882 = vpop.permute.xlu0 %881
  %885 = vset.pattern.permute.xlu0 0
  %886 = vperm.xlu0 %885, %v169
  %v887 = vpop.permute.xlu0 %886
  %890 = vset.pattern.permute.xlu0 0
  %891 = vperm.xlu0 %890, %v170
  %v892 = vpop.permute.xlu0 %891
  %895 = vset.pattern.permute.xlu0 0
  %896 = vperm.xlu0 %895, %v171
  %v897 = vpop.permute.xlu0 %896
  %900 = vset.pattern.permute.xlu0 0
  %901 = vperm.xlu0 %900, %v172
  %v902 = vpop.permute.xlu0 %901
  %905 = vset.pattern.permute.xlu0 0
  %906 = vperm.xlu0 %905, %v173
  %v907 = vpop.permute.xlu0 %906
  %910 = vset.pattern.permute.xlu0 0
  %911 = vperm.xlu0 %910, %v174
  %v912 = vpop.permute.xlu0 %911
  %915 = vset.pattern.permute.xlu0 0
  %916 = vperm.xlu0 %915, %v175
  %v917 = vpop.permute.xlu0 %916
  %920 = vset.pattern.permute.xlu0 0
  %921 = vperm.xlu0 %920, %v176
  %v922 = vpop.permute.xlu0 %921
  %925 = vset.pattern.permute.xlu0 0
  %926 = vperm.xlu0 %925, %v177
  %v927 = vpop.permute.xlu0 %926
  %930 = vset.pattern.permute.xlu0 0
  %931 = vperm.xlu0 %930, %v178
  %v932 = vpop.permute.xlu0 %931
  %935 = vset.pattern.permute.xlu0 0
  %936 = vperm.xlu0 %935, %v179
  %v937 = vpop.permute.xlu0 %936
  %940 = vset.pattern.permute.xlu0 0
  %941 = vperm.xlu0 %940, %v180
  %v942 = vpop.permute.xlu0 %941
  %945 = vset.pattern.permute.xlu0 0
  %946 = vperm.xlu0 %945, %v181
  %v947 = vpop.permute.xlu0 %946
  %950 = vset.pattern.permute.xlu0 0
  %951 = vperm.xlu0 %950, %v182
  %v952 = vpop.permute.xlu0 %951
  %955 = vset.pattern.permute.xlu0 0
  %956 = vperm.xlu0 %955, %v183
  %v957 = vpop.permute.xlu0 %956
  %960 = vset.pattern.permute.xlu0 0
  %961 = vperm.xlu0 %960, %v184
  %v962 = vpop.permute.xlu0 %961
  %965 = vset.pattern.permute.xlu0 0
  %966 = vperm.xlu0 %965, %v185
  %v967 = vpop.permute.xlu0 %966
  %970 = vset.pattern.permute.xlu0 0
  %971 = vperm.xlu0 %970, %v186
  %v972 = vpop.permute.xlu0 %971
  %975 = vset.pattern.permute.xlu0 0
  %976 = vperm.xlu0 %975, %v187
  %v977 = vpop.permute.xlu0 %976
  %980 = vset.pattern.permute.xlu0 0
  %981 = vperm.xlu0 %980, %v188
  %v982 = vpop.permute.xlu0 %981
  %985 = vset.pattern.permute.xlu0 0
  %986 = vperm.xlu0 %985, %v189
  %v987 = vpop.permute.xlu0 %986
  %990 = vset.pattern.permute.xlu0 0
  %991 = vperm.xlu0 %990, %v190
  %v992 = vpop.permute.xlu0 %991
  %995 = vset.pattern.permute.xlu0 0
  %996 = vperm.xlu0 %995, %v191
  %v997 = vpop.permute.xlu0 %996
  %1000 = vset.pattern.permute.xlu0 0
  %1001 = vperm.xlu0 %1000, %v192
  %v1002 = vpop.permute.xlu0 %1001
  %1005 = vset.pattern.permute.xlu0 0
  %1006 = vperm.xlu0 %1005, %v193
  %v1007 = vpop.permute.xlu0 %1006
  %1010 = vset.pattern.permute.xlu0 0
  %1011 = vperm.xlu0 %1010, %v194
  %v1012 = vpop.permute.xlu0 %1011
  %1015 = vset.pattern.permute.xlu0 0
  %1016 = vperm.xlu0 %1015, %v195
  %v1017 = vpop.permute.xlu0 %1016
  %1020 = vset.pattern.permute.xlu0 0
  %1021 = vperm.xlu0 %1020, %v196
  %v1022 = vpop.permute.xlu0 %1021
  %1025 = vset.pattern.permute.xlu0 0
  %1026 = vperm.xlu0 %1025, %v197
  %v1027 = vpop.permute.xlu0 %1026
  %1030 = vset.pattern.permute.xlu0 0
  %1031 = vperm.xlu0 %1030, %v198
  %v1032 = vpop.permute.xlu0 %1031
  %1035 = vset.pattern.permute.xlu0 0
  %1036 = vperm.xlu0 %1035, %v199
  %v1037 = vpop.permute.xlu0 %1036
  %1040 = vset.pattern.permute.xlu0 0
  %1041 = vperm.xlu0 %1040, %v200
  %v1042 = vpop.permute.xlu0 %1041
  %1045 = vset.pattern.permute.xlu0 0
  %1046 = vperm.xlu0 %1045, %v201
  %v1047 = vpop.permute.xlu0 %1046
  %1050 = vset.pattern.permute.xlu0 0
  %1051 = vperm.xlu0 %1050, %v202
  %v1052 = vpop.permute.xlu0 %1051
  %1055 = vset.pattern.permute.xlu0 0
  %1056 = vperm.xlu0 %1055, %v203
  %v1057 = vpop.permute.xlu0 %1056
  %1060 = vset.pattern.permute.xlu0 0
  %1061 = vperm.xlu0 %1060, %v204
  %v1062 = vpop.permute.xlu0 %1061
  %1065 = vset.pattern.permute.xlu0 0
  %1066 = vperm.xlu0 %1065, %v205
  %v1067 = vpop.permute.xlu0 %1066
  %1070 = vset.pattern.permute.xlu0 0
  %1071 = vperm.xlu0 %1070, %v206
  %v1072 = vpop.permute.xlu0 %1071
  %1075 = vset.pattern.permute.xlu0 0
  %1076 = vperm.xlu0 %1075, %v207
  %v1077 = vpop.permute.xlu0 %1076
  %1080 = vset.pattern.permute.xlu0 0
  %1081 = vperm.xlu0 %1080, %v208
  %v1082 = vpop.permute.xlu0 %1081
  %1085 = vset.pattern.permute.xlu0 0
  %1086 = vperm.xlu0 %1085, %v209
  %v1087 = vpop.permute.xlu0 %1086
  %1090 = vset.pattern.permute.xlu0 0
  %1091 = vperm.xlu0 %1090, %v210
  %v1092 = vpop.permute.xlu0 %1091
  %1095 = vset.pattern.permute.xlu0 0
  %1096 = vperm.xlu0 %1095, %v211
  %v1097 = vpop.permute.xlu0 %1096
  %1100 = vset.pattern.permute.xlu0 0
  %1101 = vperm.xlu0 %1100, %v212
  %v1102 = vpop.permute.xlu0 %1101
  %1105 = vset.pattern.permute.xlu0 0
  %1106 = vperm.xlu0 %1105, %v213
  %v1107 = vpop.permute.xlu0 %1106
  %1110 = vset.pattern.permute.xlu0 0
  %1111 = vperm.xlu0 %1110, %v214
  %v1112 = vpop.permute.xlu0 %1111
  %1115 = vset.pattern.permute.xlu0 0
  %1116 = vperm.xlu0 %1115, %v215
  %v1117 = vpop.permute.xlu0 %1116
  %1120 = vset.pattern.permute.xlu0 0
  %1121 = vperm.xlu0 %1120, %v216
  %v1122 = vpop.permute.xlu0 %1121
  %1125 = vset.pattern.permute.xlu0 0
  %1126 = vperm.xlu0 %1125, %v217
  %v1127 = vpop.permute.xlu0 %1126
  %1130 = vset.pattern.permute.xlu0 0
  %1131 = vperm.xlu0 %1130, %v218
  %v1132 = vpop.permute.xlu0 %1131
  %1135 = vset.pattern.permute.xlu0 0
  %1136 = vperm.xlu0 %1135, %v219
  %v1137 = vpop.permute.xlu0 %1136
  %1140 = vset.pattern.permute.xlu0 0
  %1141 = vperm.xlu0 %1140, %v220
  %v1142 = vpop.permute.xlu0 %1141
  %1145 = vset.pattern.permute.xlu0 0
  %1146 = vperm.xlu0 %1145, %v221
  %v1147 = vpop.permute.xlu0 %1146
  %1150 = vset.pattern.permute.xlu0 0
  %1151 = vperm.xlu0 %1150, %v222
  %v1152 = vpop.permute.xlu0 %1151
  %1155 = vset.pattern.permute.xlu0 0
  %1156 = vperm.xlu0 %1155, %v223
  %v1157 = vpop.permute.xlu0 %1156
  %1160 = vset.pattern.permute.xlu0 0
  %1161 = vperm.xlu0 %1160, %v224
  %v1162 = vpop.permute.xlu0 %1161
  %1165 = vset.pattern.permute.xlu0 0
  %1166 = vperm.xlu0 %1165, %v225
  %v1167 = vpop.permute.xlu0 %1166
  %1170 = vset.pattern.permute.xlu0 0
  %1171 = vperm.xlu0 %1170, %v226
  %v1172 = vpop.permute.xlu0 %1171
  %1175 = vset.pattern.permute.xlu0 0
  %1176 = vperm.xlu0 %1175, %v227
  %v1177 = vpop.permute.xlu0 %1176
  %1180 = vset.pattern.permute.xlu0 0
  %1181 = vperm.xlu0 %1180, %v228
  %v1182 = vpop.permute.xlu0 %1181
  %1185 = vset.pattern.permute.xlu0 0
  %1186 = vperm.xlu0 %1185, %v229
  %v1187 = vpop.permute.xlu0 %1186
  %1190 = vset.pattern.permute.xlu0 0
  %1191 = vperm.xlu0 %1190, %v230
  %v1192 = vpop.permute.xlu0 %1191
  %1195 = vset.pattern.permute.xlu0 0
  %1196 = vperm.xlu0 %1195, %v231
  %v1197 = vpop.permute.xlu0 %1196
  %1200 = vset.pattern.permute.xlu0 0
  %1201 = vperm.xlu0 %1200, %v232
  %v1202 = vpop.permute.xlu0 %1201
  %1205 = vset.pattern.permute.xlu0 0
  %1206 = vperm.xlu0 %1205, %v233
  %v1207 = vpop.permute.xlu0 %1206
  %1210 = vset.pattern.permute.xlu0 0
  %1211 = vperm.xlu0 %1210, %v234
  %v1212 = vpop.permute.xlu0 %1211
  %1215 = vset.pattern.permute.xlu0 0
  %1216 = vperm.xlu0 %1215, %v235
  %v1217 = vpop.permute.xlu0 %1216
  %1220 = vset.pattern.permute.xlu0 0
  %1221 = vperm.xlu0 %1220, %v236
  %v1222 = vpop.permute.xlu0 %1221
  %1225 = vset.pattern.permute.xlu0 0
  %1226 = vperm.xlu0 %1225, %v237
  %v1227 = vpop.permute.xlu0 %1226
  %1230 = vset.pattern.permute.xlu0 0
  %1231 = vperm.xlu0 %1230, %v238
  %v1232 = vpop.permute.xlu0 %1231
  %1235 = vset.pattern.permute.xlu0 0
  %1236 = vperm.xlu0 %1235, %v239
  %v1237 = vpop.permute.xlu0 %1236
  %1240 = vset.pattern.permute.xlu0 0
  %1241 = vperm.xlu0 %1240, %v240
  %v1242 = vpop.permute.xlu0 %1241
  %1245 = vset.pattern.permute.xlu0 0
  %1246 = vperm.xlu0 %1245, %v241
  %v1247 = vpop.permute.xlu0 %1246
  %1250 = vset.pattern.permute.xlu0 0
  %1251 = vperm.xlu0 %1250, %v242
  %v1252 = vpop.permute.xlu0 %1251
  %1255 = vset.pattern.permute.xlu0 0
  %1256 = vperm.xlu0 %1255, %v243
  %v1257 = vpop.permute.xlu0 %1256
  %1260 = vset.pattern.permute.xlu0 0
  %1261 = vperm.xlu0 %1260, %v244
  %v1262 = vpop.permute.xlu0 %1261
  %1265 = vset.pattern.permute.xlu0 0
  %1266 = vperm.xlu0 %1265, %v245
  %v1267 = vpop.permute.xlu0 %1266
  %1270 = vset.pattern.permute.xlu0 0
  %1271 = vperm.xlu0 %1270, %v246
  %v1272 = vpop.permute.xlu0 %1271
  %1275 = vset.pattern.permute.xlu0 0
  %1276 = vperm.xlu0 %1275, %v247
  %v1277 = vpop.permute.xlu0 %1276
  %1280 = vset.pattern.permute.xlu0 0
  %1281 = vperm.xlu0 %1280, %v248
  %v1282 = vpop.permute.xlu0 %1281
  %1285 = vset.pattern.permute.xlu0 0
  %1286 = vperm.xlu0 %1285, %v249
  %v1287 = vpop.permute.xlu0 %1286
  %1290 = vset.pattern.permute.xlu0 0
  %1291 = vperm.xlu0 %1290, %v250
  %v1292 = vpop.permute.xlu0 %1291
  %1295 = vset.pattern.permute.xlu0 0
  %1296 = vperm.xlu0 %1295, %v251
  %v1297 = vpop.permute.xlu0 %1296
  %1300 = vset.pattern.permute.xlu0 0
  %1301 = vperm.xlu0 %1300, %v252
  %v1302 = vpop.permute.xlu0 %1301
  %1305 = vset.pattern.permute.xlu0 0
  %1306 = vperm.xlu0 %1305, %v253
  %v1307 = vpop.permute.xlu0 %1306
  %1310 = vset.pattern.permute.xlu0 0
  %1311 = vperm.xlu0 %1310, %v254
  %v1312 = vpop.permute.xlu0 %1311
  %1315 = vset.pattern.permute.xlu0 0
  %1316 = vperm.xlu0 %1315, %v255
  %v1317 = vpop.permute.xlu0 %1316
  %1320 = vset.pattern.permute.xlu0 0
  %1321 = vperm.xlu0 %1320, %v256
  %v1322 = vpop.permute.xlu0 %1321
  %1325 = vset.pattern.permute.xlu0 0
  %1326 = vperm.xlu0 %1325, %v257
  %v1327 = vpop.permute.xlu0 %1326
  %1330 = vset.pattern.permute.xlu0 0
  %1331 = vperm.xlu0 %1330, %v258
  %v1332 = vpop.permute.xlu0 %1331
  %1335 = vset.pattern.permute.xlu0 0
  %1336 = vperm.xlu0 %1335, %v259
  %v1337 = vpop.permute.xlu0 %1336
  %1340 = vset.pattern.permute.xlu0 0
  %1341 = vperm.xlu0 %1340, %v260
  %v1342 = vpop.permute.xlu0 %1341
  %1345 = vset.pattern.permute.xlu0 0
  %1346 = vperm.xlu0 %1345, %v261
  %v1347 = vpop.permute.xlu0 %1346
  %1350 = vset.pattern.permute.xlu0 0
  %1351 = vperm.xlu0 %1350, %v262
  %v1352 = vpop.permute.xlu0 %1351
  %1355 = vset.pattern.permute.xlu0 0
  %1356 = vperm.xlu0 %1355, %v263
  %v1357 = vpop.permute.xlu0 %1356
  %1360 = vset.pattern.permute.xlu0 0
  %1361 = vperm.xlu0 %1360, %v264
  %v1362 = vpop.permute.xlu0 %1361
  %1365 = vset.pattern.permute.xlu0 0
  %1366 = vperm.xlu0 %1365, %v265
  %v1367 = vpop.permute.xlu0 %1366
  %1370 = vset.pattern.permute.xlu0 0
  %1371 = vperm.xlu0 %1370, %v266
  %v1372 = vpop.permute.xlu0 %1371
  %1375 = vset.pattern.permute.xlu0 0
  %1376 = vperm.xlu0 %1375, %v267
  %v1377 = vpop.permute.xlu0 %1376
  %1380 = vset.pattern.permute.xlu0 0
  %1381 = vperm.xlu0 %1380, %v268
  %v1382 = vpop.permute.xlu0 %1381
  %1385 = vset.pattern.permute.xlu0 0
  %1386 = vperm.xlu0 %1385, %v269
  %v1387 = vpop.permute.xlu0 %1386
  %1390 = vset.pattern.permute.xlu0 0
  %1391 = vperm.xlu0 %1390, %v270
  %v1392 = vpop.permute.xlu0 %1391
  %1395 = vset.pattern.permute.xlu0 0
  %1396 = vperm.xlu0 %1395, %v271
  %v1397 = vpop.permute.xlu0 %1396
  %1400 = vset.pattern.permute.xlu0 0
  %1401 = vperm.xlu0 %1400, %v272
  %v1402 = vpop.permute.xlu0 %1401
  %1405 = vset.pattern.permute.xlu0 0
  %1406 = vperm.xlu0 %1405, %v273
  %v1407 = vpop.permute.xlu0 %1406
  %1410 = vset.pattern.permute.xlu0 0
  %1411 = vperm.xlu0 %1410, %v274
  %v1412 = vpop.permute.xlu0 %1411
  %1415 = vset.pattern.permute.xlu0 0
  %1416 = vperm.xlu0 %1415, %v275
  %v1417 = vpop.permute.xlu0 %1416
  %1420 = vset.pattern.permute.xlu0 0
  %1421 = vperm.xlu0 %1420, %v276
  %v1422 = vpop.permute.xlu0 %1421
  %1425 = vset.pattern.permute.xlu0 0
  %1426 = vperm.xlu0 %1425, %v277
  %v1427 = vpop.permute.xlu0 %1426
  %1430 = vset.pattern.permute.xlu0 0
  %1431 = vperm.xlu0 %1430, %v278
  %v1432 = vpop.permute.xlu0 %1431
  %1435 = vset.pattern.permute.xlu0 0
  %1436 = vperm.xlu0 %1435, %v279
  %v1437 = vpop.permute.xlu0 %1436
  %1440 = vset.pattern.permute.xlu0 0
  %1441 = vperm.xlu0 %1440, %v280
  %v1442 = vpop.permute.xlu0 %1441
  %1445 = vset.pattern.permute.xlu0 0
  %1446 = vperm.xlu0 %1445, %v281
  %v1447 = vpop.permute.xlu0 %1446
  %1450 = vset.pattern.permute.xlu0 0
  %1451 = vperm.xlu0 %1450, %v282
  %v1452 = vpop.permute.xlu0 %1451
  %1455 = vset.pattern.permute.xlu0 0
  %1456 = vperm.xlu0 %1455, %v283
  %v1457 = vpop.permute.xlu0 %1456
  %1460 = vset.pattern.permute.xlu0 0
  %1461 = vperm.xlu0 %1460, %v284
  %v1462 = vpop.permute.xlu0 %1461
  %1465 = vset.pattern.permute.xlu0 0
  %1466 = vperm.xlu0 %1465, %v285
  %v1467 = vpop.permute.xlu0 %1466
  %1470 = vset.pattern.permute.xlu0 0
  %1471 = vperm.xlu0 %1470, %v286
  %v1472 = vpop.permute.xlu0 %1471
  %1475 = vset.pattern.permute.xlu0 0
  %1476 = vperm.xlu0 %1475, %v287
  %v1477 = vpop.permute.xlu0 %1476
  %1480 = vset.pattern.permute.xlu0 0
  %1481 = vperm.xlu0 %1480, %v288
  %v1482 = vpop.permute.xlu0 %1481
  %1485 = vset.pattern.permute.xlu0 0
  %1486 = vperm.xlu0 %1485, %v289
  %v1487 = vpop.permute.xlu0 %1486
  %1490 = vset.pattern.permute.xlu0 0
  %1491 = vperm.xlu0 %1490, %v290
  %v1492 = vpop.permute.xlu0 %1491
  %1495 = vset.pattern.permute.xlu0 0
  %1496 = vperm.xlu0 %1495, %v291
  %v1497 = vpop.permute.xlu0 %1496
  %1500 = vset.pattern.permute.xlu0 0
  %1501 = vperm.xlu0 %1500, %v292
  %v1502 = vpop.permute.xlu0 %1501
  %1505 = vset.pattern.permute.xlu0 0
  %1506 = vperm.xlu0 %1505, %v293
  %v1507 = vpop.permute.xlu0 %1506
  %1510 = vset.pattern.permute.xlu0 0
  %1511 = vperm.xlu0 %1510, %v294
  %v1512 = vpop.permute.xlu0 %1511
  %1515 = vset.pattern.permute.xlu0 0
  %1516 = vperm.xlu0 %1515, %v295
  %v1517 = vpop.permute.xlu0 %1516
  %1520 = vset.pattern.permute.xlu0 0
  %1521 = vperm.xlu0 %1520, %v296
  %v1522 = vpop.permute.xlu0 %1521
  %1525 = vset.pattern.permute.xlu0 0
  %1526 = vperm.xlu0 %1525, %v297
  %v1527 = vpop.permute.xlu0 %1526
  %v1530 = vlaneseq
  %v1531 = vshrl.u32 %v1530, 7
  %v1532 = vsub.s32 0, %v1531
  %v1533 = vrot.slane %v308, %v1532
  %v1535 = vmul.f32 %v312, %v1533
  %v1536 = vmul.f32 %v317, %v1533
  %v1537 = vmul.f32 %v322, %v1533
  %v1538 = vmul.f32 %v327, %v1533
  %v1539 = vmul.f32 %v332, %v1533
  %v1540 = vmul.f32 %v337, %v1533
  %v1541 = vmul.f32 %v342, %v1533
  %v1542 = vmul.f32 %v347, %v1533
  %v1543 = vmul.f32 %v352, %v1533
  %v1544 = vmul.f32 %v357, %v1533
  %v1545 = vmul.f32 %v362, %v1533
  %v1546 = vmul.f32 %v367, %v1533
  %v1547 = vmul.f32 %v372, %v1533
  %v1548 = vmul.f32 %v377, %v1533
  %v1549 = vmul.f32 %v382, %v1533
  %v1550 = vmul.f32 %v387, %v1533
  %v1551 = vmul.f32 %v392, %v1533
  %v1552 = vmul.f32 %v397, %v1533
  %v1553 = vmul.f32 %v402, %v1533
  %v1554 = vmul.f32 %v407, %v1533
  %v1555 = vmul.f32 %v412, %v1533
  %v1556 = vmul.f32 %v417, %v1533
  %v1557 = vmul.f32 %v422, %v1533
  %v1558 = vmul.f32 %v427, %v1533
  %v1559 = vmul.f32 %v432, %v1533
  %v1560 = vmul.f32 %v437, %v1533
  %v1561 = vmul.f32 %v442, %v1533
  %v1562 = vmul.f32 %v447, %v1533
  %v1563 = vmul.f32 %v452, %v1533
  %v1564 = vmul.f32 %v457, %v1533
  %v1565 = vmul.f32 %v462, %v1533
  %v1566 = vmul.f32 %v467, %v1533
  %v1567 = vmul.f32 %v472, %v1533
  %v1568 = vmul.f32 %v477, %v1533
  %v1569 = vmul.f32 %v482, %v1533
  %v1570 = vmul.f32 %v487, %v1533
  %v1571 = vmul.f32 %v492, %v1533
  %v1572 = vmul.f32 %v497, %v1533
  %v1573 = vmul.f32 %v502, %v1533
  %v1574 = vmul.f32 %v507, %v1533
  %v1575 = vmul.f32 %v512, %v1533
  %v1576 = vmul.f32 %v517, %v1533
  %v1577 = vmul.f32 %v522, %v1533
  %v1578 = vmul.f32 %v527, %v1533
  %v1579 = vmul.f32 %v532, %v1533
  %v1580 = vmul.f32 %v537, %v1533
  %v1581 = vmul.f32 %v542, %v1533
  %v1582 = vmul.f32 %v547, %v1533
  %v1583 = vmul.f32 %v552, %v1533
  %v1584 = vmul.f32 %v557, %v1533
  %v1585 = vmul.f32 %v562, %v1533
  %v1586 = vmul.f32 %v567, %v1533
  %v1587 = vmul.f32 %v572, %v1533
  %v1588 = vmul.f32 %v577, %v1533
  %v1589 = vmul.f32 %v582, %v1533
  %v1590 = vmul.f32 %v587, %v1533
  %v1591 = vmul.f32 %v592, %v1533
  %v1592 = vmul.f32 %v597, %v1533
  %v1593 = vmul.f32 %v602, %v1533
  %v1594 = vmul.f32 %v607, %v1533
  %v1595 = vmul.f32 %v612, %v1533
  %v1596 = vmul.f32 %v617, %v1533
  %v1597 = vmul.f32 %v622, %v1533
  %v1598 = vmul.f32 %v627, %v1533
  %v1599 = vmul.f32 %v632, %v1533
  %v1600 = vmul.f32 %v637, %v1533
  %v1601 = vmul.f32 %v642, %v1533
  %v1602 = vmul.f32 %v647, %v1533
  %v1603 = vmul.f32 %v652, %v1533
  %v1604 = vmul.f32 %v657, %v1533
  %v1605 = vmul.f32 %v662, %v1533
  %v1606 = vmul.f32 %v667, %v1533
  %v1607 = vmul.f32 %v672, %v1533
  %v1608 = vmul.f32 %v677, %v1533
  %v1609 = vmul.f32 %v682, %v1533
  %v1610 = vmul.f32 %v687, %v1533
  %v1611 = vmul.f32 %v692, %v1533
  %v1612 = vmul.f32 %v697, %v1533
  %v1613 = vmul.f32 %v702, %v1533
  %v1614 = vmul.f32 %v707, %v1533
  %v1615 = vmul.f32 %v712, %v1533
  %v1616 = vmul.f32 %v717, %v1533
  %v1617 = vmul.f32 %v722, %v1533
  %v1618 = vmul.f32 %v727, %v1533
  %v1619 = vmul.f32 %v732, %v1533
  %v1620 = vmul.f32 %v737, %v1533
  %v1621 = vmul.f32 %v742, %v1533
  %v1622 = vmul.f32 %v747, %v1533
  %v1623 = vmul.f32 %v752, %v1533
  %v1624 = vmul.f32 %v757, %v1533
  %v1625 = vmul.f32 %v762, %v1533
  %v1626 = vmul.f32 %v767, %v1533
  %v1627 = vmul.f32 %v772, %v1533
  %v1628 = vmul.f32 %v777, %v1533
  %v1629 = vmul.f32 %v782, %v1533
  %v1630 = vmul.f32 %v787, %v1533
  %v1631 = vmul.f32 %v792, %v1533
  %v1632 = vmul.f32 %v797, %v1533
  %v1633 = vmul.f32 %v802, %v1533
  %v1634 = vmul.f32 %v807, %v1533
  %v1635 = vmul.f32 %v812, %v1533
  %v1636 = vmul.f32 %v817, %v1533
  %v1637 = vmul.f32 %v822, %v1533
  %v1638 = vmul.f32 %v827, %v1533
  %v1639 = vmul.f32 %v832, %v1533
  %v1640 = vmul.f32 %v837, %v1533
  %v1641 = vmul.f32 %v842, %v1533
  %v1642 = vmul.f32 %v847, %v1533
  %v1643 = vmul.f32 %v852, %v1533
  %v1644 = vmul.f32 %v857, %v1533
  %v1645 = vmul.f32 %v862, %v1533
  %v1646 = vmul.f32 %v867, %v1533
  %v1647 = vmul.f32 %v872, %v1533
  %v1648 = vmul.f32 %v877, %v1533
  %v1649 = vmul.f32 %v882, %v1533
  %v1650 = vmul.f32 %v887, %v1533
  %v1651 = vmul.f32 %v892, %v1533
  %v1652 = vmul.f32 %v897, %v1533
  %v1653 = vmul.f32 %v902, %v1533
  %v1654 = vmul.f32 %v907, %v1533
  %v1655 = vmul.f32 %v912, %v1533
  %v1656 = vmul.f32 %v917, %v1533
  %v1657 = vmul.f32 %v922, %v1533
  %v1658 = vmul.f32 %v927, %v1533
  %v1659 = vmul.f32 %v932, %v1533
  %v1660 = vmul.f32 %v937, %v1533
  %v1661 = vmul.f32 %v942, %v1533
  %v1662 = vmul.f32 %v947, %v1533
  %v1663 = vmul.f32 %v952, %v1533
  %v1664 = vmul.f32 %v957, %v1533
  %v1665 = vmul.f32 %v962, %v1533
  %v1666 = vmul.f32 %v967, %v1533
  %v1667 = vmul.f32 %v972, %v1533
  %v1668 = vmul.f32 %v977, %v1533
  %v1669 = vmul.f32 %v982, %v1533
  %v1670 = vmul.f32 %v987, %v1533
  %v1671 = vmul.f32 %v992, %v1533
  %v1672 = vmul.f32 %v997, %v1533
  %v1673 = vmul.f32 %v1002, %v1533
  %v1674 = vmul.f32 %v1007, %v1533
  %v1675 = vmul.f32 %v1012, %v1533
  %v1676 = vmul.f32 %v1017, %v1533
  %v1677 = vmul.f32 %v1022, %v1533
  %v1678 = vmul.f32 %v1027, %v1533
  %v1679 = vmul.f32 %v1032, %v1533
  %v1680 = vmul.f32 %v1037, %v1533
  %v1681 = vmul.f32 %v1042, %v1533
  %v1682 = vmul.f32 %v1047, %v1533
  %v1683 = vmul.f32 %v1052, %v1533
  %v1684 = vmul.f32 %v1057, %v1533
  %v1685 = vmul.f32 %v1062, %v1533
  %v1686 = vmul.f32 %v1067, %v1533
  %v1687 = vmul.f32 %v1072, %v1533
  %v1688 = vmul.f32 %v1077, %v1533
  %v1689 = vmul.f32 %v1082, %v1533
  %v1690 = vmul.f32 %v1087, %v1533
  %v1691 = vmul.f32 %v1092, %v1533
  %v1692 = vmul.f32 %v1097, %v1533
  %v1693 = vmul.f32 %v1102, %v1533
  %v1694 = vmul.f32 %v1107, %v1533
  %v1695 = vmul.f32 %v1112, %v1533
  %v1696 = vmul.f32 %v1117, %v1533
  %v1697 = vmul.f32 %v1122, %v1533
  %v1698 = vmul.f32 %v1127, %v1533
  %v1699 = vmul.f32 %v1132, %v1533
  %v1700 = vmul.f32 %v1137, %v1533
  %v1701 = vmul.f32 %v1142, %v1533
  %v1702 = vmul.f32 %v1147, %v1533
  %v1703 = vmul.f32 %v1152, %v1533
  %v1704 = vmul.f32 %v1157, %v1533
  %v1705 = vmul.f32 %v1162, %v1533
  %v1706 = vmul.f32 %v1167, %v1533
  %v1707 = vmul.f32 %v1172, %v1533
  %v1708 = vmul.f32 %v1177, %v1533
  %v1709 = vmul.f32 %v1182, %v1533
  %v1710 = vmul.f32 %v1187, %v1533
  %v1711 = vmul.f32 %v1192, %v1533
  %v1712 = vmul.f32 %v1197, %v1533
  %v1713 = vmul.f32 %v1202, %v1533
  %v1714 = vmul.f32 %v1207, %v1533
  %v1715 = vmul.f32 %v1212, %v1533
  %v1716 = vmul.f32 %v1217, %v1533
  %v1717 = vmul.f32 %v1222, %v1533
  %v1718 = vmul.f32 %v1227, %v1533
  %v1719 = vmul.f32 %v1232, %v1533
  %v1720 = vmul.f32 %v1237, %v1533
  %v1721 = vmul.f32 %v1242, %v1533
  %v1722 = vmul.f32 %v1247, %v1533
  %v1723 = vmul.f32 %v1252, %v1533
  %v1724 = vmul.f32 %v1257, %v1533
  %v1725 = vmul.f32 %v1262, %v1533
  %v1726 = vmul.f32 %v1267, %v1533
  %v1727 = vmul.f32 %v1272, %v1533
  %v1728 = vmul.f32 %v1277, %v1533
  %v1729 = vmul.f32 %v1282, %v1533
  %v1730 = vmul.f32 %v1287, %v1533
  %v1731 = vmul.f32 %v1292, %v1533
  %v1732 = vmul.f32 %v1297, %v1533
  %v1733 = vmul.f32 %v1302, %v1533
  %v1734 = vmul.f32 %v1307, %v1533
  %v1735 = vmul.f32 %v1312, %v1533
  %v1736 = vmul.f32 %v1317, %v1533
  %v1737 = vmul.f32 %v1322, %v1533
  %v1738 = vmul.f32 %v1327, %v1533
  %v1739 = vmul.f32 %v1332, %v1533
  %v1740 = vmul.f32 %v1337, %v1533
  %v1741 = vmul.f32 %v1342, %v1533
  %v1742 = vmul.f32 %v1347, %v1533
  %v1743 = vmul.f32 %v1352, %v1533
  %v1744 = vmul.f32 %v1357, %v1533
  %v1745 = vmul.f32 %v1362, %v1533
  %v1746 = vmul.f32 %v1367, %v1533
  %v1747 = vmul.f32 %v1372, %v1533
  %v1748 = vmul.f32 %v1377, %v1533
  %v1749 = vmul.f32 %v1382, %v1533
  %v1750 = vmul.f32 %v1387, %v1533
  %v1751 = vmul.f32 %v1392, %v1533
  %v1752 = vmul.f32 %v1397, %v1533
  %v1753 = vmul.f32 %v1402, %v1533
  %v1754 = vmul.f32 %v1407, %v1533
  %v1755 = vmul.f32 %v1412, %v1533
  %v1756 = vmul.f32 %v1417, %v1533
  %v1757 = vmul.f32 %v1422, %v1533
  %v1758 = vmul.f32 %v1427, %v1533
  %v1759 = vmul.f32 %v1432, %v1533
  %v1760 = vmul.f32 %v1437, %v1533
  %v1761 = vmul.f32 %v1442, %v1533
  %v1762 = vmul.f32 %v1447, %v1533
  %v1763 = vmul.f32 %v1452, %v1533
  %v1764 = vmul.f32 %v1457, %v1533
  %v1765 = vmul.f32 %v1462, %v1533
  %v1766 = vmul.f32 %v1467, %v1533
  %v1767 = vmul.f32 %v1472, %v1533
  %v1768 = vmul.f32 %v1477, %v1533
  %v1769 = vmul.f32 %v1482, %v1533
  %v1770 = vmul.f32 %v1487, %v1533
  %v1771 = vmul.f32 %v1492, %v1533
  %v1772 = vmul.f32 %v1497, %v1533
  %v1773 = vmul.f32 %v1502, %v1533
  %v1774 = vmul.f32 %v1507, %v1533
  %v1775 = vmul.f32 %v1512, %v1533
  %v1776 = vmul.f32 %v1517, %v1533
  %v1777 = vmul.f32 %v1522, %v1533
  %v1778 = vmul.f32 %v1527, %v1533
  %v1779 = vadd.f32 %v1535, 0.0
  %v1780 = vadd.f32 %v1536, 0.0
  %v1781 = vadd.f32 %v1537, 0.0
  %v1782 = vadd.f32 %v1538, 0.0
  %v1783 = vadd.f32 %v1539, 0.0
  %v1784 = vadd.f32 %v1540, 0.0
  %v1785 = vadd.f32 %v1541, 0.0
  %v1786 = vadd.f32 %v1542, 0.0
  %v1787 = vadd.f32 %v1543, 0.0
  %v1788 = vadd.f32 %v1544, 0.0
  %v1789 = vadd.f32 %v1545, 0.0
  %v1790 = vadd.f32 %v1546, 0.0
  %v1791 = vadd.f32 %v1547, 0.0
  %v1792 = vadd.f32 %v1548, 0.0
  %v1793 = vadd.f32 %v1549, 0.0
  %v1794 = vadd.f32 %v1550, 0.0
  %v1795 = vadd.f32 %v1551, 0.0
  %v1796 = vadd.f32 %v1552, 0.0
  %v1797 = vadd.f32 %v1553, 0.0
  %v1798 = vadd.f32 %v1554, 0.0
  %v1799 = vadd.f32 %v1555, 0.0
  %v1800 = vadd.f32 %v1556, 0.0
  %v1801 = vadd.f32 %v1557, 0.0
  %v1802 = vadd.f32 %v1558, 0.0
  %v1803 = vadd.f32 %v1559, 0.0
  %v1804 = vadd.f32 %v1560, 0.0
  %v1805 = vadd.f32 %v1561, 0.0
  %v1806 = vadd.f32 %v1562, 0.0
  %v1807 = vadd.f32 %v1563, 0.0
  %v1808 = vadd.f32 %v1564, 0.0
  %v1809 = vadd.f32 %v1565, 0.0
  %v1810 = vadd.f32 %v1566, 0.0
  %v1811 = vadd.f32 %v1567, 0.0
  %v1812 = vadd.f32 %v1568, 0.0
  %v1813 = vadd.f32 %v1569, 0.0
  %v1814 = vadd.f32 %v1570, 0.0
  %v1815 = vadd.f32 %v1571, 0.0
  %v1816 = vadd.f32 %v1572, 0.0
  %v1817 = vadd.f32 %v1573, 0.0
  %v1818 = vadd.f32 %v1574, 0.0
  %v1819 = vadd.f32 %v1575, 0.0
  %v1820 = vadd.f32 %v1576, 0.0
  %v1821 = vadd.f32 %v1577, 0.0
  %v1822 = vadd.f32 %v1578, 0.0
  %v1823 = vadd.f32 %v1579, 0.0
  %v1824 = vadd.f32 %v1580, 0.0
  %v1825 = vadd.f32 %v1581, 0.0
  %v1826 = vadd.f32 %v1582, 0.0
  %v1827 = vadd.f32 %v1583, 0.0
  %v1828 = vadd.f32 %v1584, 0.0
  %v1829 = vadd.f32 %v1585, 0.0
  %v1830 = vadd.f32 %v1586, 0.0
  %v1831 = vadd.f32 %v1587, 0.0
  %v1832 = vadd.f32 %v1588, 0.0
  %v1833 = vadd.f32 %v1589, 0.0
  %v1834 = vadd.f32 %v1590, 0.0
  %v1835 = vadd.f32 %v1591, 0.0
  %v1836 = vadd.f32 %v1592, 0.0
  %v1837 = vadd.f32 %v1593, 0.0
  %v1838 = vadd.f32 %v1594, 0.0
  %v1839 = vadd.f32 %v1595, 0.0
  %v1840 = vadd.f32 %v1596, 0.0
  %v1841 = vadd.f32 %v1597, 0.0
  %v1842 = vadd.f32 %v1598, 0.0
  %v1843 = vadd.f32 %v1599, 0.0
  %v1844 = vadd.f32 %v1600, 0.0
  %v1845 = vadd.f32 %v1601, 0.0
  %v1846 = vadd.f32 %v1602, 0.0
  %v1847 = vadd.f32 %v1603, 0.0
  %v1848 = vadd.f32 %v1604, 0.0
  %v1849 = vadd.f32 %v1605, 0.0
  %v1850 = vadd.f32 %v1606, 0.0
  %v1851 = vadd.f32 %v1607, 0.0
  %v1852 = vadd.f32 %v1608, 0.0
  %v1853 = vadd.f32 %v1609, 0.0
  %v1854 = vadd.f32 %v1610, 0.0
  %v1855 = vadd.f32 %v1611, 0.0
  %v1856 = vadd.f32 %v1612, 0.0
  %v1857 = vadd.f32 %v1613, 0.0
  %v1858 = vadd.f32 %v1614, 0.0
  %v1859 = vadd.f32 %v1615, 0.0
  %v1860 = vadd.f32 %v1616, 0.0
  %v1861 = vadd.f32 %v1617, 0.0
  %v1862 = vadd.f32 %v1618, 0.0
  %v1863 = vadd.f32 %v1619, 0.0
  %v1864 = vadd.f32 %v1620, 0.0
  %v1865 = vadd.f32 %v1621, 0.0
  %v1866 = vadd.f32 %v1622, 0.0
  %v1867 = vadd.f32 %v1623, 0.0
  %v1868 = vadd.f32 %v1624, 0.0
  %v1869 = vadd.f32 %v1625, 0.0
  %v1870 = vadd.f32 %v1626, 0.0
  %v1871 = vadd.f32 %v1627, 0.0
  %v1872 = vadd.f32 %v1628, 0.0
  %v1873 = vadd.f32 %v1629, 0.0
  %v1874 = vadd.f32 %v1630, 0.0
  %v1875 = vadd.f32 %v1631, 0.0
  %v1876 = vadd.f32 %v1632, 0.0
  %v1877 = vadd.f32 %v1633, 0.0
  %v1878 = vadd.f32 %v1634, 0.0
  %v1879 = vadd.f32 %v1635, 0.0
  %v1880 = vadd.f32 %v1636, 0.0
  %v1881 = vadd.f32 %v1637, 0.0
  %v1882 = vadd.f32 %v1638, 0.0
  %v1883 = vadd.f32 %v1639, 0.0
  %v1884 = vadd.f32 %v1640, 0.0
  %v1885 = vadd.f32 %v1641, 0.0
  %v1886 = vadd.f32 %v1642, 0.0
  %v1887 = vadd.f32 %v1643, 0.0
  %v1888 = vadd.f32 %v1644, 0.0
  %v1889 = vadd.f32 %v1645, 0.0
  %v1890 = vadd.f32 %v1646, 0.0
  %v1891 = vadd.f32 %v1647, 0.0
  %v1892 = vadd.f32 %v1648, 0.0
  %v1893 = vadd.f32 %v1649, 0.0
  %v1894 = vadd.f32 %v1650, 0.0
  %v1895 = vadd.f32 %v1651, 0.0
  %v1896 = vadd.f32 %v1652, 0.0
  %v1897 = vadd.f32 %v1653, 0.0
  %v1898 = vadd.f32 %v1654, 0.0
  %v1899 = vadd.f32 %v1655, 0.0
  %v1900 = vadd.f32 %v1656, 0.0
  %v1901 = vadd.f32 %v1657, 0.0
  %v1902 = vadd.f32 %v1658, 0.0
  %v1903 = vadd.f32 %v1659, 0.0
  %v1904 = vadd.f32 %v1660, 0.0
  %v1905 = vadd.f32 %v1661, 0.0
  %v1906 = vadd.f32 %v1662, 0.0
  %v1907 = vadd.f32 %v1663, 0.0
  %v1908 = vadd.f32 %v1664, 0.0
  %v1909 = vadd.f32 %v1665, 0.0
  %v1910 = vadd.f32 %v1666, 0.0
  %v1911 = vadd.f32 %v1667, 0.0
  %v1912 = vadd.f32 %v1668, 0.0
  %v1913 = vadd.f32 %v1669, 0.0
  %v1914 = vadd.f32 %v1670, 0.0
  %v1915 = vadd.f32 %v1671, 0.0
  %v1916 = vadd.f32 %v1672, 0.0
  %v1917 = vadd.f32 %v1673, 0.0
  %v1918 = vadd.f32 %v1674, 0.0
  %v1919 = vadd.f32 %v1675, 0.0
  %v1920 = vadd.f32 %v1676, 0.0
  %v1921 = vadd.f32 %v1677, 0.0
  %v1922 = vadd.f32 %v1678, 0.0
  %v1923 = vadd.f32 %v1679, 0.0
  %v1924 = vadd.f32 %v1680, 0.0
  %v1925 = vadd.f32 %v1681, 0.0
  %v1926 = vadd.f32 %v1682, 0.0
  %v1927 = vadd.f32 %v1683, 0.0
  %v1928 = vadd.f32 %v1684, 0.0
  %v1929 = vadd.f32 %v1685, 0.0
  %v1930 = vadd.f32 %v1686, 0.0
  %v1931 = vadd.f32 %v1687, 0.0
  %v1932 = vadd.f32 %v1688, 0.0
  %v1933 = vadd.f32 %v1689, 0.0
  %v1934 = vadd.f32 %v1690, 0.0
  %v1935 = vadd.f32 %v1691, 0.0
  %v1936 = vadd.f32 %v1692, 0.0
  %v1937 = vadd.f32 %v1693, 0.0
  %v1938 = vadd.f32 %v1694, 0.0
  %v1939 = vadd.f32 %v1695, 0.0
  %v1940 = vadd.f32 %v1696, 0.0
  %v1941 = vadd.f32 %v1697, 0.0
  %v1942 = vadd.f32 %v1698, 0.0
  %v1943 = vadd.f32 %v1699, 0.0
  %v1944 = vadd.f32 %v1700, 0.0
  %v1945 = vadd.f32 %v1701, 0.0
  %v1946 = vadd.f32 %v1702, 0.0
  %v1947 = vadd.f32 %v1703, 0.0
  %v1948 = vadd.f32 %v1704, 0.0
  %v1949 = vadd.f32 %v1705, 0.0
  %v1950 = vadd.f32 %v1706, 0.0
  %v1951 = vadd.f32 %v1707, 0.0
  %v1952 = vadd.f32 %v1708, 0.0
  %v1953 = vadd.f32 %v1709, 0.0
  %v1954 = vadd.f32 %v1710, 0.0
  %v1955 = vadd.f32 %v1711, 0.0
  %v1956 = vadd.f32 %v1712, 0.0
  %v1957 = vadd.f32 %v1713, 0.0
  %v1958 = vadd.f32 %v1714, 0.0
  %v1959 = vadd.f32 %v1715, 0.0
  %v1960 = vadd.f32 %v1716, 0.0
  %v1961 = vadd.f32 %v1717, 0.0
  %v1962 = vadd.f32 %v1718, 0.0
  %v1963 = vadd.f32 %v1719, 0.0
  %v1964 = vadd.f32 %v1720, 0.0
  %v1965 = vadd.f32 %v1721, 0.0
  %v1966 = vadd.f32 %v1722, 0.0
  %v1967 = vadd.f32 %v1723, 0.0
  %v1968 = vadd.f32 %v1724, 0.0
  %v1969 = vadd.f32 %v1725, 0.0
  %v1970 = vadd.f32 %v1726, 0.0
  %v1971 = vadd.f32 %v1727, 0.0
  %v1972 = vadd.f32 %v1728, 0.0
  %v1973 = vadd.f32 %v1729, 0.0
  %v1974 = vadd.f32 %v1730, 0.0
  %v1975 = vadd.f32 %v1731, 0.0
  %v1976 = vadd.f32 %v1732, 0.0
  %v1977 = vadd.f32 %v1733, 0.0
  %v1978 = vadd.f32 %v1734, 0.0
  %v1979 = vadd.f32 %v1735, 0.0
  %v1980 = vadd.f32 %v1736, 0.0
  %v1981 = vadd.f32 %v1737, 0.0
  %v1982 = vadd.f32 %v1738, 0.0
  %v1983 = vadd.f32 %v1739, 0.0
  %v1984 = vadd.f32 %v1740, 0.0
  %v1985 = vadd.f32 %v1741, 0.0
  %v1986 = vadd.f32 %v1742, 0.0
  %v1987 = vadd.f32 %v1743, 0.0
  %v1988 = vadd.f32 %v1744, 0.0
  %v1989 = vadd.f32 %v1745, 0.0
  %v1990 = vadd.f32 %v1746, 0.0
  %v1991 = vadd.f32 %v1747, 0.0
  %v1992 = vadd.f32 %v1748, 0.0
  %v1993 = vadd.f32 %v1749, 0.0
  %v1994 = vadd.f32 %v1750, 0.0
  %v1995 = vadd.f32 %v1751, 0.0
  %v1996 = vadd.f32 %v1752, 0.0
  %v1997 = vadd.f32 %v1753, 0.0
  %v1998 = vadd.f32 %v1754, 0.0
  %v1999 = vadd.f32 %v1755, 0.0
  %v2000 = vadd.f32 %v1756, 0.0
  %v2001 = vadd.f32 %v1757, 0.0
  %v2002 = vadd.f32 %v1758, 0.0
  %v2003 = vadd.f32 %v1759, 0.0
  %v2004 = vadd.f32 %v1760, 0.0
  %v2005 = vadd.f32 %v1761, 0.0
  %v2006 = vadd.f32 %v1762, 0.0
  %v2007 = vadd.f32 %v1763, 0.0
  %v2008 = vadd.f32 %v1764, 0.0
  %v2009 = vadd.f32 %v1765, 0.0
  %v2010 = vadd.f32 %v1766, 0.0
  %v2011 = vadd.f32 %v1767, 0.0
  %v2012 = vadd.f32 %v1768, 0.0
  %v2013 = vadd.f32 %v1769, 0.0
  %v2014 = vadd.f32 %v1770, 0.0
  %v2015 = vadd.f32 %v1771, 0.0
  %v2016 = vadd.f32 %v1772, 0.0
  %v2017 = vadd.f32 %v1773, 0.0
  %v2018 = vadd.f32 %v1774, 0.0
  %v2019 = vadd.f32 %v1775, 0.0
  %v2020 = vadd.f32 %v1776, 0.0
  %v2021 = vadd.f32 %v1777, 0.0
  %v2022 = vadd.f32 %v1778, 0.0
  %s2023 = scalar_lea.vmem %s1, 1
  %v2024 = vld [vmem:[%s2023] sm:$0x1]
  %2026 = vset.pattern.permute.xlu0 0
  %2027 = vperm.xlu0 %2026, %v298
  %v2028 = vpop.permute.xlu0 %2027
  %2031 = vset.pattern.permute.xlu0 0
  %2032 = vperm.xlu0 %2031, %v299
  %v2033 = vpop.permute.xlu0 %2032
  %v2036 = vlaneseq
  %v2037 = vshrl.u32 %v2036, 7
  %v2038 = vsub.s32 0, %v2037
  %v2039 = vrot.slane %v2024, %v2038
  %v2041 = vmul.f32 %v322, %v2039
  %v2042 = vmul.f32 %v327, %v2039
  %v2043 = vmul.f32 %v332, %v2039
  %v2044 = vmul.f32 %v337, %v2039
  %v2045 = vmul.f32 %v342, %v2039
  %v2046 = vmul.f32 %v347, %v2039
  %v2047 = vmul.f32 %v352, %v2039
  %v2048 = vmul.f32 %v357, %v2039
  %v2049 = vmul.f32 %v362, %v2039
  %v2050 = vmul.f32 %v367, %v2039
  %v2051 = vmul.f32 %v372, %v2039
  %v2052 = vmul.f32 %v377, %v2039
  %v2053 = vmul.f32 %v382, %v2039
  %v2054 = vmul.f32 %v387, %v2039
  %v2055 = vmul.f32 %v392, %v2039
  %v2056 = vmul.f32 %v397, %v2039
  %v2057 = vmul.f32 %v402, %v2039
  %v2058 = vmul.f32 %v407, %v2039
  %v2059 = vmul.f32 %v412, %v2039
  %v2060 = vmul.f32 %v417, %v2039
  %v2061 = vmul.f32 %v422, %v2039
  %v2062 = vmul.f32 %v427, %v2039
  %v2063 = vmul.f32 %v432, %v2039
  %v2064 = vmul.f32 %v437, %v2039
  %v2065 = vmul.f32 %v442, %v2039
  %v2066 = vmul.f32 %v447, %v2039
  %v2067 = vmul.f32 %v452, %v2039
  %v2068 = vmul.f32 %v457, %v2039
  %v2069 = vmul.f32 %v462, %v2039
  %v2070 = vmul.f32 %v467, %v2039
  %v2071 = vmul.f32 %v472, %v2039
  %v2072 = vmul.f32 %v477, %v2039
  %v2073 = vmul.f32 %v482, %v2039
  %v2074 = vmul.f32 %v487, %v2039
  %v2075 = vmul.f32 %v492, %v2039
  %v2076 = vmul.f32 %v497, %v2039
  %v2077 = vmul.f32 %v502, %v2039
  %v2078 = vmul.f32 %v507, %v2039
  %v2079 = vmul.f32 %v512, %v2039
  %v2080 = vmul.f32 %v517, %v2039
  %v2081 = vmul.f32 %v522, %v2039
  %v2082 = vmul.f32 %v527, %v2039
  %v2083 = vmul.f32 %v532, %v2039
  %v2084 = vmul.f32 %v537, %v2039
  %v2085 = vmul.f32 %v542, %v2039
  %v2086 = vmul.f32 %v547, %v2039
  %v2087 = vmul.f32 %v552, %v2039
  %v2088 = vmul.f32 %v557, %v2039
  %v2089 = vmul.f32 %v562, %v2039
  %v2090 = vmul.f32 %v567, %v2039
  %v2091 = vmul.f32 %v572, %v2039
  %v2092 = vmul.f32 %v577, %v2039
  %v2093 = vmul.f32 %v582, %v2039
  %v2094 = vmul.f32 %v587, %v2039
  %v2095 = vmul.f32 %v592, %v2039
  %v2096 = vmul.f32 %v597, %v2039
  %v2097 = vmul.f32 %v602, %v2039
  %v2098 = vmul.f32 %v607, %v2039
  %v2099 = vmul.f32 %v612, %v2039
  %v2100 = vmul.f32 %v617, %v2039
  %v2101 = vmul.f32 %v622, %v2039
  %v2102 = vmul.f32 %v627, %v2039
  %v2103 = vmul.f32 %v632, %v2039
  %v2104 = vmul.f32 %v637, %v2039
  %v2105 = vmul.f32 %v642, %v2039
  %v2106 = vmul.f32 %v647, %v2039
  %v2107 = vmul.f32 %v652, %v2039
  %v2108 = vmul.f32 %v657, %v2039
  %v2109 = vmul.f32 %v662, %v2039
  %v2110 = vmul.f32 %v667, %v2039
  %v2111 = vmul.f32 %v672, %v2039
  %v2112 = vmul.f32 %v677, %v2039
  %v2113 = vmul.f32 %v682, %v2039
  %v2114 = vmul.f32 %v687, %v2039
  %v2115 = vmul.f32 %v692, %v2039
  %v2116 = vmul.f32 %v697, %v2039
  %v2117 = vmul.f32 %v702, %v2039
  %v2118 = vmul.f32 %v707, %v2039
  %v2119 = vmul.f32 %v712, %v2039
  %v2120 = vmul.f32 %v717, %v2039
  %v2121 = vmul.f32 %v722, %v2039
  %v2122 = vmul.f32 %v727, %v2039
  %v2123 = vmul.f32 %v732, %v2039
  %v2124 = vmul.f32 %v737, %v2039
  %v2125 = vmul.f32 %v742, %v2039
  %v2126 = vmul.f32 %v747, %v2039
  %v2127 = vmul.f32 %v752, %v2039
  %v2128 = vmul.f32 %v757, %v2039
  %v2129 = vmul.f32 %v762, %v2039
  %v2130 = vmul.f32 %v767, %v2039
  %v2131 = vmul.f32 %v772, %v2039
  %v2132 = vmul.f32 %v777, %v2039
  %v2133 = vmul.f32 %v782, %v2039
  %v2134 = vmul.f32 %v787, %v2039
  %v2135 = vmul.f32 %v792, %v2039
  %v2136 = vmul.f32 %v797, %v2039
  %v2137 = vmul.f32 %v802, %v2039
  %v2138 = vmul.f32 %v807, %v2039
  %v2139 = vmul.f32 %v812, %v2039
  %v2140 = vmul.f32 %v817, %v2039
  %v2141 = vmul.f32 %v822, %v2039
  %v2142 = vmul.f32 %v827, %v2039
  %v2143 = vmul.f32 %v832, %v2039
  %v2144 = vmul.f32 %v837, %v2039
  %v2145 = vmul.f32 %v842, %v2039
  %v2146 = vmul.f32 %v847, %v2039
  %v2147 = vmul.f32 %v852, %v2039
  %v2148 = vmul.f32 %v857, %v2039
  %v2149 = vmul.f32 %v862, %v2039
  %v2150 = vmul.f32 %v867, %v2039
  %v2151 = vmul.f32 %v872, %v2039
  %v2152 = vmul.f32 %v877, %v2039
  %v2153 = vmul.f32 %v882, %v2039
  %v2154 = vmul.f32 %v887, %v2039
  %v2155 = vmul.f32 %v892, %v2039
  %v2156 = vmul.f32 %v897, %v2039
  %v2157 = vmul.f32 %v902, %v2039
  %v2158 = vmul.f32 %v907, %v2039
  %v2159 = vmul.f32 %v912, %v2039
  %v2160 = vmul.f32 %v917, %v2039
  %v2161 = vmul.f32 %v922, %v2039
  %v2162 = vmul.f32 %v927, %v2039
  %v2163 = vmul.f32 %v932, %v2039
  %v2164 = vmul.f32 %v937, %v2039
  %v2165 = vmul.f32 %v942, %v2039
  %v2166 = vmul.f32 %v947, %v2039
  %v2167 = vmul.f32 %v952, %v2039
  %v2168 = vmul.f32 %v957, %v2039
  %v2169 = vmul.f32 %v962, %v2039
  %v2170 = vmul.f32 %v967, %v2039
  %v2171 = vmul.f32 %v972, %v2039
  %v2172 = vmul.f32 %v977, %v2039
  %v2173 = vmul.f32 %v982, %v2039
  %v2174 = vmul.f32 %v987, %v2039
  %v2175 = vmul.f32 %v992, %v2039
  %v2176 = vmul.f32 %v997, %v2039
  %v2177 = vmul.f32 %v1002, %v2039
  %v2178 = vmul.f32 %v1007, %v2039
  %v2179 = vmul.f32 %v1012, %v2039
  %v2180 = vmul.f32 %v1017, %v2039
  %v2181 = vmul.f32 %v1022, %v2039
  %v2182 = vmul.f32 %v1027, %v2039
  %v2183 = vmul.f32 %v1032, %v2039
  %v2184 = vmul.f32 %v1037, %v2039
  %v2185 = vmul.f32 %v1042, %v2039
  %v2186 = vmul.f32 %v1047, %v2039
  %v2187 = vmul.f32 %v1052, %v2039
  %v2188 = vmul.f32 %v1057, %v2039
  %v2189 = vmul.f32 %v1062, %v2039
  %v2190 = vmul.f32 %v1067, %v2039
  %v2191 = vmul.f32 %v1072, %v2039
  %v2192 = vmul.f32 %v1077, %v2039
  %v2193 = vmul.f32 %v1082, %v2039
  %v2194 = vmul.f32 %v1087, %v2039
  %v2195 = vmul.f32 %v1092, %v2039
  %v2196 = vmul.f32 %v1097, %v2039
  %v2197 = vmul.f32 %v1102, %v2039
  %v2198 = vmul.f32 %v1107, %v2039
  %v2199 = vmul.f32 %v1112, %v2039
  %v2200 = vmul.f32 %v1117, %v2039
  %v2201 = vmul.f32 %v1122, %v2039
  %v2202 = vmul.f32 %v1127, %v2039
  %v2203 = vmul.f32 %v1132, %v2039
  %v2204 = vmul.f32 %v1137, %v2039
  %v2205 = vmul.f32 %v1142, %v2039
  %v2206 = vmul.f32 %v1147, %v2039
  %v2207 = vmul.f32 %v1152, %v2039
  %v2208 = vmul.f32 %v1157, %v2039
  %v2209 = vmul.f32 %v1162, %v2039
  %v2210 = vmul.f32 %v1167, %v2039
  %v2211 = vmul.f32 %v1172, %v2039
  %v2212 = vmul.f32 %v1177, %v2039
  %v2213 = vmul.f32 %v1182, %v2039
  %v2214 = vmul.f32 %v1187, %v2039
  %v2215 = vmul.f32 %v1192, %v2039
  %v2216 = vmul.f32 %v1197, %v2039
  %v2217 = vmul.f32 %v1202, %v2039
  %v2218 = vmul.f32 %v1207, %v2039
  %v2219 = vmul.f32 %v1212, %v2039
  %v2220 = vmul.f32 %v1217, %v2039
  %v2221 = vmul.f32 %v1222, %v2039
  %v2222 = vmul.f32 %v1227, %v2039
  %v2223 = vmul.f32 %v1232, %v2039
  %v2224 = vmul.f32 %v1237, %v2039
  %v2225 = vmul.f32 %v1242, %v2039
  %v2226 = vmul.f32 %v1247, %v2039
  %v2227 = vmul.f32 %v1252, %v2039
  %v2228 = vmul.f32 %v1257, %v2039
  %v2229 = vmul.f32 %v1262, %v2039
  %v2230 = vmul.f32 %v1267, %v2039
  %v2231 = vmul.f32 %v1272, %v2039
  %v2232 = vmul.f32 %v1277, %v2039
  %v2233 = vmul.f32 %v1282, %v2039
  %v2234 = vmul.f32 %v1287, %v2039
  %v2235 = vmul.f32 %v1292, %v2039
  %v2236 = vmul.f32 %v1297, %v2039
  %v2237 = vmul.f32 %v1302, %v2039
  %v2238 = vmul.f32 %v1307, %v2039
  %v2239 = vmul.f32 %v1312, %v2039
  %v2240 = vmul.f32 %v1317, %v2039
  %v2241 = vmul.f32 %v1322, %v2039
  %v2242 = vmul.f32 %v1327, %v2039
  %v2243 = vmul.f32 %v1332, %v2039
  %v2244 = vmul.f32 %v1337, %v2039
  %v2245 = vmul.f32 %v1342, %v2039
  %v2246 = vmul.f32 %v1347, %v2039
  %v2247 = vmul.f32 %v1352, %v2039
  %v2248 = vmul.f32 %v1357, %v2039
  %v2249 = vmul.f32 %v1362, %v2039
  %v2250 = vmul.f32 %v1367, %v2039
  %v2251 = vmul.f32 %v1372, %v2039
  %v2252 = vmul.f32 %v1377, %v2039
  %v2253 = vmul.f32 %v1382, %v2039
  %v2254 = vmul.f32 %v1387, %v2039
  %v2255 = vmul.f32 %v1392, %v2039
  %v2256 = vmul.f32 %v1397, %v2039
  %v2257 = vmul.f32 %v1402, %v2039
  %v2258 = vmul.f32 %v1407, %v2039
  %v2259 = vmul.f32 %v1412, %v2039
  %v2260 = vmul.f32 %v1417, %v2039
  %v2261 = vmul.f32 %v1422, %v2039
  %v2262 = vmul.f32 %v1427, %v2039
  %v2263 = vmul.f32 %v1432, %v2039
  %v2264 = vmul.f32 %v1437, %v2039
  %v2265 = vmul.f32 %v1442, %v2039
  %v2266 = vmul.f32 %v1447, %v2039
  %v2267 = vmul.f32 %v1452, %v2039
  %v2268 = vmul.f32 %v1457, %v2039
  %v2269 = vmul.f32 %v1462, %v2039
  %v2270 = vmul.f32 %v1467, %v2039
  %v2271 = vmul.f32 %v1472, %v2039
  %v2272 = vmul.f32 %v1477, %v2039
  %v2273 = vmul.f32 %v1482, %v2039
  %v2274 = vmul.f32 %v1487, %v2039
  %v2275 = vmul.f32 %v1492, %v2039
  %v2276 = vmul.f32 %v1497, %v2039
  %v2277 = vmul.f32 %v1502, %v2039
  %v2278 = vmul.f32 %v1507, %v2039
  %v2279 = vmul.f32 %v1512, %v2039
  %v2280 = vmul.f32 %v1517, %v2039
  %v2281 = vmul.f32 %v1522, %v2039
  %v2282 = vmul.f32 %v1527, %v2039
  %v2283 = vmul.f32 %v2028, %v2039
  %v2284 = vmul.f32 %v2033, %v2039
  %v2285 = vadd.f32 %v1779, %v2041
  %v2286 = vadd.f32 %v1780, %v2042
  %v2287 = vadd.f32 %v1781, %v2043
  %v2288 = vadd.f32 %v1782, %v2044
  %v2289 = vadd.f32 %v1783, %v2045
  %v2290 = vadd.f32 %v1784, %v2046
  %v2291 = vadd.f32 %v1785, %v2047
  %v2292 = vadd.f32 %v1786, %v2048
  %v2293 = vadd.f32 %v1787, %v2049
  %v2294 = vadd.f32 %v1788, %v2050
  %v2295 = vadd.f32 %v1789, %v2051
  %v2296 = vadd.f32 %v1790, %v2052
  %v2297 = vadd.f32 %v1791, %v2053
  %v2298 = vadd.f32 %v1792, %v2054
  %v2299 = vadd.f32 %v1793, %v2055
  %v2300 = vadd.f32 %v1794, %v2056
  %v2301 = vadd.f32 %v1795, %v2057
  %v2302 = vadd.f32 %v1796, %v2058
  %v2303 = vadd.f32 %v1797, %v2059
  %v2304 = vadd.f32 %v1798, %v2060
  %v2305 = vadd.f32 %v1799, %v2061
  %v2306 = vadd.f32 %v1800, %v2062
  %v2307 = vadd.f32 %v1801, %v2063
  %v2308 = vadd.f32 %v1802, %v2064
  %v2309 = vadd.f32 %v1803, %v2065
  %v2310 = vadd.f32 %v1804, %v2066
  %v2311 = vadd.f32 %v1805, %v2067
  %v2312 = vadd.f32 %v1806, %v2068
  %v2313 = vadd.f32 %v1807, %v2069
  %v2314 = vadd.f32 %v1808, %v2070
  %v2315 = vadd.f32 %v1809, %v2071
  %v2316 = vadd.f32 %v1810, %v2072
  %v2317 = vadd.f32 %v1811, %v2073
  %v2318 = vadd.f32 %v1812, %v2074
  %v2319 = vadd.f32 %v1813, %v2075
  %v2320 = vadd.f32 %v1814, %v2076
  %v2321 = vadd.f32 %v1815, %v2077
  %v2322 = vadd.f32 %v1816, %v2078
  %v2323 = vadd.f32 %v1817, %v2079
  %v2324 = vadd.f32 %v1818, %v2080
  %v2325 = vadd.f32 %v1819, %v2081
  %v2326 = vadd.f32 %v1820, %v2082
  %v2327 = vadd.f32 %v1821, %v2083
  %v2328 = vadd.f32 %v1822, %v2084
  %v2329 = vadd.f32 %v1823, %v2085
  %v2330 = vadd.f32 %v1824, %v2086
  %v2331 = vadd.f32 %v1825, %v2087
  %v2332 = vadd.f32 %v1826, %v2088
  %v2333 = vadd.f32 %v1827, %v2089
  %v2334 = vadd.f32 %v1828, %v2090
  %v2335 = vadd.f32 %v1829, %v2091
  %v2336 = vadd.f32 %v1830, %v2092
  %v2337 = vadd.f32 %v1831, %v2093
  %v2338 = vadd.f32 %v1832, %v2094
  %v2339 = vadd.f32 %v1833, %v2095
  %v2340 = vadd.f32 %v1834, %v2096
  %v2341 = vadd.f32 %v1835, %v2097
  %v2342 = vadd.f32 %v1836, %v2098
  %v2343 = vadd.f32 %v1837, %v2099
  %v2344 = vadd.f32 %v1838, %v2100
  %v2345 = vadd.f32 %v1839, %v2101
  %v2346 = vadd.f32 %v1840, %v2102
  %v2347 = vadd.f32 %v1841, %v2103
  %v2348 = vadd.f32 %v1842, %v2104
  %v2349 = vadd.f32 %v1843, %v2105
  %v2350 = vadd.f32 %v1844, %v2106
  %v2351 = vadd.f32 %v1845, %v2107
  %v2352 = vadd.f32 %v1846, %v2108
  %v2353 = vadd.f32 %v1847, %v2109
  %v2354 = vadd.f32 %v1848, %v2110
  %v2355 = vadd.f32 %v1849, %v2111
  %v2356 = vadd.f32 %v1850, %v2112
  %v2357 = vadd.f32 %v1851, %v2113
  %v2358 = vadd.f32 %v1852, %v2114
  %v2359 = vadd.f32 %v1853, %v2115
  %v2360 = vadd.f32 %v1854, %v2116
  %v2361 = vadd.f32 %v1855, %v2117
  %v2362 = vadd.f32 %v1856, %v2118
  %v2363 = vadd.f32 %v1857, %v2119
  %v2364 = vadd.f32 %v1858, %v2120
  %v2365 = vadd.f32 %v1859, %v2121
  %v2366 = vadd.f32 %v1860, %v2122
  %v2367 = vadd.f32 %v1861, %v2123
  %v2368 = vadd.f32 %v1862, %v2124
  %v2369 = vadd.f32 %v1863, %v2125
  %v2370 = vadd.f32 %v1864, %v2126
  %v2371 = vadd.f32 %v1865, %v2127
  %v2372 = vadd.f32 %v1866, %v2128
  %v2373 = vadd.f32 %v1867, %v2129
  %v2374 = vadd.f32 %v1868, %v2130
  %v2375 = vadd.f32 %v1869, %v2131
  %v2376 = vadd.f32 %v1870, %v2132
  %v2377 = vadd.f32 %v1871, %v2133
  %v2378 = vadd.f32 %v1872, %v2134
  %v2379 = vadd.f32 %v1873, %v2135
  %v2380 = vadd.f32 %v1874, %v2136
  %v2381 = vadd.f32 %v1875, %v2137
  %v2382 = vadd.f32 %v1876, %v2138
  %v2383 = vadd.f32 %v1877, %v2139
  %v2384 = vadd.f32 %v1878, %v2140
  %v2385 = vadd.f32 %v1879, %v2141
  %v2386 = vadd.f32 %v1880, %v2142
  %v2387 = vadd.f32 %v1881, %v2143
  %v2388 = vadd.f32 %v1882, %v2144
  %v2389 = vadd.f32 %v1883, %v2145
  %v2390 = vadd.f32 %v1884, %v2146
  %v2391 = vadd.f32 %v1885, %v2147
  %v2392 = vadd.f32 %v1886, %v2148
  %v2393 = vadd.f32 %v1887, %v2149
  %v2394 = vadd.f32 %v1888, %v2150
  %v2395 = vadd.f32 %v1889, %v2151
  %v2396 = vadd.f32 %v1890, %v2152
  %v2397 = vadd.f32 %v1891, %v2153
  %v2398 = vadd.f32 %v1892, %v2154
  %v2399 = vadd.f32 %v1893, %v2155
  %v2400 = vadd.f32 %v1894, %v2156
  %v2401 = vadd.f32 %v1895, %v2157
  %v2402 = vadd.f32 %v1896, %v2158
  %v2403 = vadd.f32 %v1897, %v2159
  %v2404 = vadd.f32 %v1898, %v2160
  %v2405 = vadd.f32 %v1899, %v2161
  %v2406 = vadd.f32 %v1900, %v2162
  %v2407 = vadd.f32 %v1901, %v2163
  %v2408 = vadd.f32 %v1902, %v2164
  %v2409 = vadd.f32 %v1903, %v2165
  %v2410 = vadd.f32 %v1904, %v2166
  %v2411 = vadd.f32 %v1905, %v2167
  %v2412 = vadd.f32 %v1906, %v2168
  %v2413 = vadd.f32 %v1907, %v2169
  %v2414 = vadd.f32 %v1908, %v2170
  %v2415 = vadd.f32 %v1909, %v2171
  %v2416 = vadd.f32 %v1910, %v2172
  %v2417 = vadd.f32 %v1911, %v2173
  %v2418 = vadd.f32 %v1912, %v2174
  %v2419 = vadd.f32 %v1913, %v2175
  %v2420 = vadd.f32 %v1914, %v2176
  %v2421 = vadd.f32 %v1915, %v2177
  %v2422 = vadd.f32 %v1916, %v2178
  %v2423 = vadd.f32 %v1917, %v2179
  %v2424 = vadd.f32 %v1918, %v2180
  %v2425 = vadd.f32 %v1919, %v2181
  %v2426 = vadd.f32 %v1920, %v2182
  %v2427 = vadd.f32 %v1921, %v2183
  %v2428 = vadd.f32 %v1922, %v2184
  %v2429 = vadd.f32 %v1923, %v2185
  %v2430 = vadd.f32 %v1924, %v2186
  %v2431 = vadd.f32 %v1925, %v2187
  %v2432 = vadd.f32 %v1926, %v2188
  %v2433 = vadd.f32 %v1927, %v2189
  %v2434 = vadd.f32 %v1928, %v2190
  %v2435 = vadd.f32 %v1929, %v2191
  %v2436 = vadd.f32 %v1930, %v2192
  %v2437 = vadd.f32 %v1931, %v2193
  %v2438 = vadd.f32 %v1932, %v2194
  %v2439 = vadd.f32 %v1933, %v2195
  %v2440 = vadd.f32 %v1934, %v2196
  %v2441 = vadd.f32 %v1935, %v2197
  %v2442 = vadd.f32 %v1936, %v2198
  %v2443 = vadd.f32 %v1937, %v2199
  %v2444 = vadd.f32 %v1938, %v2200
  %v2445 = vadd.f32 %v1939, %v2201
  %v2446 = vadd.f32 %v1940, %v2202
  %v2447 = vadd.f32 %v1941, %v2203
  %v2448 = vadd.f32 %v1942, %v2204
  %v2449 = vadd.f32 %v1943, %v2205
  %v2450 = vadd.f32 %v1944, %v2206
  %v2451 = vadd.f32 %v1945, %v2207
  %v2452 = vadd.f32 %v1946, %v2208
  %v2453 = vadd.f32 %v1947, %v2209
  %v2454 = vadd.f32 %v1948, %v2210
  %v2455 = vadd.f32 %v1949, %v2211
  %v2456 = vadd.f32 %v1950, %v2212
  %v2457 = vadd.f32 %v1951, %v2213
  %v2458 = vadd.f32 %v1952, %v2214
  %v2459 = vadd.f32 %v1953, %v2215
  %v2460 = vadd.f32 %v1954, %v2216
  %v2461 = vadd.f32 %v1955, %v2217
  %v2462 = vadd.f32 %v1956, %v2218
  %v2463 = vadd.f32 %v1957, %v2219
  %v2464 = vadd.f32 %v1958, %v2220
  %v2465 = vadd.f32 %v1959, %v2221
  %v2466 = vadd.f32 %v1960, %v2222
  %v2467 = vadd.f32 %v1961, %v2223
  %v2468 = vadd.f32 %v1962, %v2224
  %v2469 = vadd.f32 %v1963, %v2225
  %v2470 = vadd.f32 %v1964, %v2226
  %v2471 = vadd.f32 %v1965, %v2227
  %v2472 = vadd.f32 %v1966, %v2228
  %v2473 = vadd.f32 %v1967, %v2229
  %v2474 = vadd.f32 %v1968, %v2230
  %v2475 = vadd.f32 %v1969, %v2231
  %v2476 = vadd.f32 %v1970, %v2232
  %v2477 = vadd.f32 %v1971, %v2233
  %v2478 = vadd.f32 %v1972, %v2234
  %v2479 = vadd.f32 %v1973, %v2235
  %v2480 = vadd.f32 %v1974, %v2236
  %v2481 = vadd.f32 %v1975, %v2237
  %v2482 = vadd.f32 %v1976, %v2238
  %v2483 = vadd.f32 %v1977, %v2239
  %v2484 = vadd.f32 %v1978, %v2240
  %v2485 = vadd.f32 %v1979, %v2241
  %v2486 = vadd.f32 %v1980, %v2242
  %v2487 = vadd.f32 %v1981, %v2243
  %v2488 = vadd.f32 %v1982, %v2244
  %v2489 = vadd.f32 %v1983, %v2245
  %v2490 = vadd.f32 %v1984, %v2246
  %v2491 = vadd.f32 %v1985, %v2247
  %v2492 = vadd.f32 %v1986, %v2248
  %v2493 = vadd.f32 %v1987, %v2249
  %v2494 = vadd.f32 %v1988, %v2250
  %v2495 = vadd.f32 %v1989, %v2251
  %v2496 = vadd.f32 %v1990, %v2252
  %v2497 = vadd.f32 %v1991, %v2253
  %v2498 = vadd.f32 %v1992, %v2254
  %v2499 = vadd.f32 %v1993, %v2255
  %v2500 = vadd.f32 %v1994, %v2256
  %v2501 = vadd.f32 %v1995, %v2257
  %v2502 = vadd.f32 %v1996, %v2258
  %v2503 = vadd.f32 %v1997, %v2259
  %v2504 = vadd.f32 %v1998, %v2260
  %v2505 = vadd.f32 %v1999, %v2261
  %v2506 = vadd.f32 %v2000, %v2262
  %v2507 = vadd.f32 %v2001, %v2263
  %v2508 = vadd.f32 %v2002, %v2264
  %v2509 = vadd.f32 %v2003, %v2265
  %v2510 = vadd.f32 %v2004, %v2266
  %v2511 = vadd.f32 %v2005, %v2267
  %v2512 = vadd.f32 %v2006, %v2268
  %v2513 = vadd.f32 %v2007, %v2269
  %v2514 = vadd.f32 %v2008, %v2270
  %v2515 = vadd.f32 %v2009, %v2271
  %v2516 = vadd.f32 %v2010, %v2272
  %v2517 = vadd.f32 %v2011, %v2273
  %v2518 = vadd.f32 %v2012, %v2274
  %v2519 = vadd.f32 %v2013, %v2275
  %v2520 = vadd.f32 %v2014, %v2276
  %v2521 = vadd.f32 %v2015, %v2277
  %v2522 = vadd.f32 %v2016, %v2278
  %v2523 = vadd.f32 %v2017, %v2279
  %v2524 = vadd.f32 %v2018, %v2280
  %v2525 = vadd.f32 %v2019, %v2281
  %v2526 = vadd.f32 %v2020, %v2282
  %v2527 = vadd.f32 %v2021, %v2283
  %v2528 = vadd.f32 %v2022, %v2284
  %s2529 = scalar_lea.vmem %s1, 2
  %v2530 = vld [vmem:[%s2529] sm:$0x1]
  %2532 = vset.pattern.permute.xlu0 0
  %2533 = vperm.xlu0 %2532, %v300
  %v2534 = vpop.permute.xlu0 %2533
  %2537 = vset.pattern.permute.xlu0 0
  %2538 = vperm.xlu0 %2537, %v301
  %v2539 = vpop.permute.xlu0 %2538
  %v2542 = vlaneseq
  %v2543 = vshrl.u32 %v2542, 7
  %v2544 = vsub.s32 0, %v2543
  %v2545 = vrot.slane %v2530, %v2544
  %v2547 = vmul.f32 %v332, %v2545
  %v2548 = vmul.f32 %v337, %v2545
  %v2549 = vmul.f32 %v342, %v2545
  %v2550 = vmul.f32 %v347, %v2545
  %v2551 = vmul.f32 %v352, %v2545
  %v2552 = vmul.f32 %v357, %v2545
  %v2553 = vmul.f32 %v362, %v2545
  %v2554 = vmul.f32 %v367, %v2545
  %v2555 = vmul.f32 %v372, %v2545
  %v2556 = vmul.f32 %v377, %v2545
  %v2557 = vmul.f32 %v382, %v2545
  %v2558 = vmul.f32 %v387, %v2545
  %v2559 = vmul.f32 %v392, %v2545
  %v2560 = vmul.f32 %v397, %v2545
  %v2561 = vmul.f32 %v402, %v2545
  %v2562 = vmul.f32 %v407, %v2545
  %v2563 = vmul.f32 %v412, %v2545
  %v2564 = vmul.f32 %v417, %v2545
  %v2565 = vmul.f32 %v422, %v2545
  %v2566 = vmul.f32 %v427, %v2545
  %v2567 = vmul.f32 %v432, %v2545
  %v2568 = vmul.f32 %v437, %v2545
  %v2569 = vmul.f32 %v442, %v2545
  %v2570 = vmul.f32 %v447, %v2545
  %v2571 = vmul.f32 %v452, %v2545
  %v2572 = vmul.f32 %v457, %v2545
  %v2573 = vmul.f32 %v462, %v2545
  %v2574 = vmul.f32 %v467, %v2545
  %v2575 = vmul.f32 %v472, %v2545
  %v2576 = vmul.f32 %v477, %v2545
  %v2577 = vmul.f32 %v482, %v2545
  %v2578 = vmul.f32 %v487, %v2545
  %v2579 = vmul.f32 %v492, %v2545
  %v2580 = vmul.f32 %v497, %v2545
  %v2581 = vmul.f32 %v502, %v2545
  %v2582 = vmul.f32 %v507, %v2545
  %v2583 = vmul.f32 %v512, %v2545
  %v2584 = vmul.f32 %v517, %v2545
  %v2585 = vmul.f32 %v522, %v2545
  %v2586 = vmul.f32 %v527, %v2545
  %v2587 = vmul.f32 %v532, %v2545
  %v2588 = vmul.f32 %v537, %v2545
  %v2589 = vmul.f32 %v542, %v2545
  %v2590 = vmul.f32 %v547, %v2545
  %v2591 = vmul.f32 %v552, %v2545
  %v2592 = vmul.f32 %v557, %v2545
  %v2593 = vmul.f32 %v562, %v2545
  %v2594 = vmul.f32 %v567, %v2545
  %v2595 = vmul.f32 %v572, %v2545
  %v2596 = vmul.f32 %v577, %v2545
  %v2597 = vmul.f32 %v582, %v2545
  %v2598 = vmul.f32 %v587, %v2545
  %v2599 = vmul.f32 %v592, %v2545
  %v2600 = vmul.f32 %v597, %v2545
  %v2601 = vmul.f32 %v602, %v2545
  %v2602 = vmul.f32 %v607, %v2545
  %v2603 = vmul.f32 %v612, %v2545
  %v2604 = vmul.f32 %v617, %v2545
  %v2605 = vmul.f32 %v622, %v2545
  %v2606 = vmul.f32 %v627, %v2545
  %v2607 = vmul.f32 %v632, %v2545
  %v2608 = vmul.f32 %v637, %v2545
  %v2609 = vmul.f32 %v642, %v2545
  %v2610 = vmul.f32 %v647, %v2545
  %v2611 = vmul.f32 %v652, %v2545
  %v2612 = vmul.f32 %v657, %v2545
  %v2613 = vmul.f32 %v662, %v2545
  %v2614 = vmul.f32 %v667, %v2545
  %v2615 = vmul.f32 %v672, %v2545
  %v2616 = vmul.f32 %v677, %v2545
  %v2617 = vmul.f32 %v682, %v2545
  %v2618 = vmul.f32 %v687, %v2545
  %v2619 = vmul.f32 %v692, %v2545
  %v2620 = vmul.f32 %v697, %v2545
  %v2621 = vmul.f32 %v702, %v2545
  %v2622 = vmul.f32 %v707, %v2545
  %v2623 = vmul.f32 %v712, %v2545
  %v2624 = vmul.f32 %v717, %v2545
  %v2625 = vmul.f32 %v722, %v2545
  %v2626 = vmul.f32 %v727, %v2545
  %v2627 = vmul.f32 %v732, %v2545
  %v2628 = vmul.f32 %v737, %v2545
  %v2629 = vmul.f32 %v742, %v2545
  %v2630 = vmul.f32 %v747, %v2545
  %v2631 = vmul.f32 %v752, %v2545
  %v2632 = vmul.f32 %v757, %v2545
  %v2633 = vmul.f32 %v762, %v2545
  %v2634 = vmul.f32 %v767, %v2545
  %v2635 = vmul.f32 %v772, %v2545
  %v2636 = vmul.f32 %v777, %v2545
  %v2637 = vmul.f32 %v782, %v2545
  %v2638 = vmul.f32 %v787, %v2545
  %v2639 = vmul.f32 %v792, %v2545
  %v2640 = vmul.f32 %v797, %v2545
  %v2641 = vmul.f32 %v802, %v2545
  %v2642 = vmul.f32 %v807, %v2545
  %v2643 = vmul.f32 %v812, %v2545
  %v2644 = vmul.f32 %v817, %v2545
  %v2645 = vmul.f32 %v822, %v2545
  %v2646 = vmul.f32 %v827, %v2545
  %v2647 = vmul.f32 %v832, %v2545
  %v2648 = vmul.f32 %v837, %v2545
  %v2649 = vmul.f32 %v842, %v2545
  %v2650 = vmul.f32 %v847, %v2545
  %v2651 = vmul.f32 %v852, %v2545
  %v2652 = vmul.f32 %v857, %v2545
  %v2653 = vmul.f32 %v862, %v2545
  %v2654 = vmul.f32 %v867, %v2545
  %v2655 = vmul.f32 %v872, %v2545
  %v2656 = vmul.f32 %v877, %v2545
  %v2657 = vmul.f32 %v882, %v2545
  %v2658 = vmul.f32 %v887, %v2545
  %v2659 = vmul.f32 %v892, %v2545
  %v2660 = vmul.f32 %v897, %v2545
  %v2661 = vmul.f32 %v902, %v2545
  %v2662 = vmul.f32 %v907, %v2545
  %v2663 = vmul.f32 %v912, %v2545
  %v2664 = vmul.f32 %v917, %v2545
  %v2665 = vmul.f32 %v922, %v2545
  %v2666 = vmul.f32 %v927, %v2545
  %v2667 = vmul.f32 %v932, %v2545
  %v2668 = vmul.f32 %v937, %v2545
  %v2669 = vmul.f32 %v942, %v2545
  %v2670 = vmul.f32 %v947, %v2545
  %v2671 = vmul.f32 %v952, %v2545
  %v2672 = vmul.f32 %v957, %v2545
  %v2673 = vmul.f32 %v962, %v2545
  %v2674 = vmul.f32 %v967, %v2545
  %v2675 = vmul.f32 %v972, %v2545
  %v2676 = vmul.f32 %v977, %v2545
  %v2677 = vmul.f32 %v982, %v2545
  %v2678 = vmul.f32 %v987, %v2545
  %v2679 = vmul.f32 %v992, %v2545
  %v2680 = vmul.f32 %v997, %v2545
  %v2681 = vmul.f32 %v1002, %v2545
  %v2682 = vmul.f32 %v1007, %v2545
  %v2683 = vmul.f32 %v1012, %v2545
  %v2684 = vmul.f32 %v1017, %v2545
  %v2685 = vmul.f32 %v1022, %v2545
  %v2686 = vmul.f32 %v1027, %v2545
  %v2687 = vmul.f32 %v1032, %v2545
  %v2688 = vmul.f32 %v1037, %v2545
  %v2689 = vmul.f32 %v1042, %v2545
  %v2690 = vmul.f32 %v1047, %v2545
  %v2691 = vmul.f32 %v1052, %v2545
  %v2692 = vmul.f32 %v1057, %v2545
  %v2693 = vmul.f32 %v1062, %v2545
  %v2694 = vmul.f32 %v1067, %v2545
  %v2695 = vmul.f32 %v1072, %v2545
  %v2696 = vmul.f32 %v1077, %v2545
  %v2697 = vmul.f32 %v1082, %v2545
  %v2698 = vmul.f32 %v1087, %v2545
  %v2699 = vmul.f32 %v1092, %v2545
  %v2700 = vmul.f32 %v1097, %v2545
  %v2701 = vmul.f32 %v1102, %v2545
  %v2702 = vmul.f32 %v1107, %v2545
  %v2703 = vmul.f32 %v1112, %v2545
  %v2704 = vmul.f32 %v1117, %v2545
  %v2705 = vmul.f32 %v1122, %v2545
  %v2706 = vmul.f32 %v1127, %v2545
  %v2707 = vmul.f32 %v1132, %v2545
  %v2708 = vmul.f32 %v1137, %v2545
  %v2709 = vmul.f32 %v1142, %v2545
  %v2710 = vmul.f32 %v1147, %v2545
  %v2711 = vmul.f32 %v1152, %v2545
  %v2712 = vmul.f32 %v1157, %v2545
  %v2713 = vmul.f32 %v1162, %v2545
  %v2714 = vmul.f32 %v1167, %v2545
  %v2715 = vmul.f32 %v1172, %v2545
  %v2716 = vmul.f32 %v1177, %v2545
  %v2717 = vmul.f32 %v1182, %v2545
  %v2718 = vmul.f32 %v1187, %v2545
  %v2719 = vmul.f32 %v1192, %v2545
  %v2720 = vmul.f32 %v1197, %v2545
  %v2721 = vmul.f32 %v1202, %v2545
  %v2722 = vmul.f32 %v1207, %v2545
  %v2723 = vmul.f32 %v1212, %v2545
  %v2724 = vmul.f32 %v1217, %v2545
  %v2725 = vmul.f32 %v1222, %v2545
  %v2726 = vmul.f32 %v1227, %v2545
  %v2727 = vmul.f32 %v1232, %v2545
  %v2728 = vmul.f32 %v1237, %v2545
  %v2729 = vmul.f32 %v1242, %v2545
  %v2730 = vmul.f32 %v1247, %v2545
  %v2731 = vmul.f32 %v1252, %v2545
  %v2732 = vmul.f32 %v1257, %v2545
  %v2733 = vmul.f32 %v1262, %v2545
  %v2734 = vmul.f32 %v1267, %v2545
  %v2735 = vmul.f32 %v1272, %v2545
  %v2736 = vmul.f32 %v1277, %v2545
  %v2737 = vmul.f32 %v1282, %v2545
  %v2738 = vmul.f32 %v1287, %v2545
  %v2739 = vmul.f32 %v1292, %v2545
  %v2740 = vmul.f32 %v1297, %v2545
  %v2741 = vmul.f32 %v1302, %v2545
  %v2742 = vmul.f32 %v1307, %v2545
  %v2743 = vmul.f32 %v1312, %v2545
  %v2744 = vmul.f32 %v1317, %v2545
  %v2745 = vmul.f32 %v1322, %v2545
  %v2746 = vmul.f32 %v1327, %v2545
  %v2747 = vmul.f32 %v1332, %v2545
  %v2748 = vmul.f32 %v1337, %v2545
  %v2749 = vmul.f32 %v1342, %v2545
  %v2750 = vmul.f32 %v1347, %v2545
  %v2751 = vmul.f32 %v1352, %v2545
  %v2752 = vmul.f32 %v1357, %v2545
  %v2753 = vmul.f32 %v1362, %v2545
  %v2754 = vmul.f32 %v1367, %v2545
  %v2755 = vmul.f32 %v1372, %v2545
  %v2756 = vmul.f32 %v1377, %v2545
  %v2757 = vmul.f32 %v1382, %v2545
  %v2758 = vmul.f32 %v1387, %v2545
  %v2759 = vmul.f32 %v1392, %v2545
  %v2760 = vmul.f32 %v1397, %v2545
  %v2761 = vmul.f32 %v1402, %v2545
  %v2762 = vmul.f32 %v1407, %v2545
  %v2763 = vmul.f32 %v1412, %v2545
  %v2764 = vmul.f32 %v1417, %v2545
  %v2765 = vmul.f32 %v1422, %v2545
  %v2766 = vmul.f32 %v1427, %v2545
  %v2767 = vmul.f32 %v1432, %v2545
  %v2768 = vmul.f32 %v1437, %v2545
  %v2769 = vmul.f32 %v1442, %v2545
  %v2770 = vmul.f32 %v1447, %v2545
  %v2771 = vmul.f32 %v1452, %v2545
  %v2772 = vmul.f32 %v1457, %v2545
  %v2773 = vmul.f32 %v1462, %v2545
  %v2774 = vmul.f32 %v1467, %v2545
  %v2775 = vmul.f32 %v1472, %v2545
  %v2776 = vmul.f32 %v1477, %v2545
  %v2777 = vmul.f32 %v1482, %v2545
  %v2778 = vmul.f32 %v1487, %v2545
  %v2779 = vmul.f32 %v1492, %v2545
  %v2780 = vmul.f32 %v1497, %v2545
  %v2781 = vmul.f32 %v1502, %v2545
  %v2782 = vmul.f32 %v1507, %v2545
  %v2783 = vmul.f32 %v1512, %v2545
  %v2784 = vmul.f32 %v1517, %v2545
  %v2785 = vmul.f32 %v1522, %v2545
  %v2786 = vmul.f32 %v1527, %v2545
  %v2787 = vmul.f32 %v2028, %v2545
  %v2788 = vmul.f32 %v2033, %v2545
  %v2789 = vmul.f32 %v2534, %v2545
  %v2790 = vmul.f32 %v2539, %v2545
  %v2791 = vadd.f32 %v2285, %v2547
  %v2792 = vadd.f32 %v2286, %v2548
  %v2793 = vadd.f32 %v2287, %v2549
  %v2794 = vadd.f32 %v2288, %v2550
  %v2795 = vadd.f32 %v2289, %v2551
  %v2796 = vadd.f32 %v2290, %v2552
  %v2797 = vadd.f32 %v2291, %v2553
  %v2798 = vadd.f32 %v2292, %v2554
  %v2799 = vadd.f32 %v2293, %v2555
  %v2800 = vadd.f32 %v2294, %v2556
  %v2801 = vadd.f32 %v2295, %v2557
  %v2802 = vadd.f32 %v2296, %v2558
  %v2803 = vadd.f32 %v2297, %v2559
  %v2804 = vadd.f32 %v2298, %v2560
  %v2805 = vadd.f32 %v2299, %v2561
  %v2806 = vadd.f32 %v2300, %v2562
  %v2807 = vadd.f32 %v2301, %v2563
  %v2808 = vadd.f32 %v2302, %v2564
  %v2809 = vadd.f32 %v2303, %v2565
  %v2810 = vadd.f32 %v2304, %v2566
  %v2811 = vadd.f32 %v2305, %v2567
  %v2812 = vadd.f32 %v2306, %v2568
  %v2813 = vadd.f32 %v2307, %v2569
  %v2814 = vadd.f32 %v2308, %v2570
  %v2815 = vadd.f32 %v2309, %v2571
  %v2816 = vadd.f32 %v2310, %v2572
  %v2817 = vadd.f32 %v2311, %v2573
  %v2818 = vadd.f32 %v2312, %v2574
  %v2819 = vadd.f32 %v2313, %v2575
  %v2820 = vadd.f32 %v2314, %v2576
  %v2821 = vadd.f32 %v2315, %v2577
  %v2822 = vadd.f32 %v2316, %v2578
  %v2823 = vadd.f32 %v2317, %v2579
  %v2824 = vadd.f32 %v2318, %v2580
  %v2825 = vadd.f32 %v2319, %v2581
  %v2826 = vadd.f32 %v2320, %v2582
  %v2827 = vadd.f32 %v2321, %v2583
  %v2828 = vadd.f32 %v2322, %v2584
  %v2829 = vadd.f32 %v2323, %v2585
  %v2830 = vadd.f32 %v2324, %v2586
  %v2831 = vadd.f32 %v2325, %v2587
  %v2832 = vadd.f32 %v2326, %v2588
  %v2833 = vadd.f32 %v2327, %v2589
  %v2834 = vadd.f32 %v2328, %v2590
  %v2835 = vadd.f32 %v2329, %v2591
  %v2836 = vadd.f32 %v2330, %v2592
  %v2837 = vadd.f32 %v2331, %v2593
  %v2838 = vadd.f32 %v2332, %v2594
  %v2839 = vadd.f32 %v2333, %v2595
  %v2840 = vadd.f32 %v2334, %v2596
  %v2841 = vadd.f32 %v2335, %v2597
  %v2842 = vadd.f32 %v2336, %v2598
  %v2843 = vadd.f32 %v2337, %v2599
  %v2844 = vadd.f32 %v2338, %v2600
  %v2845 = vadd.f32 %v2339, %v2601
  %v2846 = vadd.f32 %v2340, %v2602
  %v2847 = vadd.f32 %v2341, %v2603
  %v2848 = vadd.f32 %v2342, %v2604
  %v2849 = vadd.f32 %v2343, %v2605
  %v2850 = vadd.f32 %v2344, %v2606
  %v2851 = vadd.f32 %v2345, %v2607
  %v2852 = vadd.f32 %v2346, %v2608
  %v2853 = vadd.f32 %v2347, %v2609
  %v2854 = vadd.f32 %v2348, %v2610
  %v2855 = vadd.f32 %v2349, %v2611
  %v2856 = vadd.f32 %v2350, %v2612
  %v2857 = vadd.f32 %v2351, %v2613
  %v2858 = vadd.f32 %v2352, %v2614
  %v2859 = vadd.f32 %v2353, %v2615
  %v2860 = vadd.f32 %v2354, %v2616
  %v2861 = vadd.f32 %v2355, %v2617
  %v2862 = vadd.f32 %v2356, %v2618
  %v2863 = vadd.f32 %v2357, %v2619
  %v2864 = vadd.f32 %v2358, %v2620
  %v2865 = vadd.f32 %v2359, %v2621
  %v2866 = vadd.f32 %v2360, %v2622
  %v2867 = vadd.f32 %v2361, %v2623
  %v2868 = vadd.f32 %v2362, %v2624
  %v2869 = vadd.f32 %v2363, %v2625
  %v2870 = vadd.f32 %v2364, %v2626
  %v2871 = vadd.f32 %v2365, %v2627
  %v2872 = vadd.f32 %v2366, %v2628
  %v2873 = vadd.f32 %v2367, %v2629
  %v2874 = vadd.f32 %v2368, %v2630
  %v2875 = vadd.f32 %v2369, %v2631
  %v2876 = vadd.f32 %v2370, %v2632
  %v2877 = vadd.f32 %v2371, %v2633
  %v2878 = vadd.f32 %v2372, %v2634
  %v2879 = vadd.f32 %v2373, %v2635
  %v2880 = vadd.f32 %v2374, %v2636
  %v2881 = vadd.f32 %v2375, %v2637
  %v2882 = vadd.f32 %v2376, %v2638
  %v2883 = vadd.f32 %v2377, %v2639
  %v2884 = vadd.f32 %v2378, %v2640
  %v2885 = vadd.f32 %v2379, %v2641
  %v2886 = vadd.f32 %v2380, %v2642
  %v2887 = vadd.f32 %v2381, %v2643
  %v2888 = vadd.f32 %v2382, %v2644
  %v2889 = vadd.f32 %v2383, %v2645
  %v2890 = vadd.f32 %v2384, %v2646
  %v2891 = vadd.f32 %v2385, %v2647
  %v2892 = vadd.f32 %v2386, %v2648
  %v2893 = vadd.f32 %v2387, %v2649
  %v2894 = vadd.f32 %v2388, %v2650
  %v2895 = vadd.f32 %v2389, %v2651
  %v2896 = vadd.f32 %v2390, %v2652
  %v2897 = vadd.f32 %v2391, %v2653
  %v2898 = vadd.f32 %v2392, %v2654
  %v2899 = vadd.f32 %v2393, %v2655
  %v2900 = vadd.f32 %v2394, %v2656
  %v2901 = vadd.f32 %v2395, %v2657
  %v2902 = vadd.f32 %v2396, %v2658
  %v2903 = vadd.f32 %v2397, %v2659
  %v2904 = vadd.f32 %v2398, %v2660
  %v2905 = vadd.f32 %v2399, %v2661
  %v2906 = vadd.f32 %v2400, %v2662
  %v2907 = vadd.f32 %v2401, %v2663
  %v2908 = vadd.f32 %v2402, %v2664
  %v2909 = vadd.f32 %v2403, %v2665
  %v2910 = vadd.f32 %v2404, %v2666
  %v2911 = vadd.f32 %v2405, %v2667
  %v2912 = vadd.f32 %v2406, %v2668
  %v2913 = vadd.f32 %v2407, %v2669
  %v2914 = vadd.f32 %v2408, %v2670
  %v2915 = vadd.f32 %v2409, %v2671
  %v2916 = vadd.f32 %v2410, %v2672
  %v2917 = vadd.f32 %v2411, %v2673
  %v2918 = vadd.f32 %v2412, %v2674
  %v2919 = vadd.f32 %v2413, %v2675
  %v2920 = vadd.f32 %v2414, %v2676
  %v2921 = vadd.f32 %v2415, %v2677
  %v2922 = vadd.f32 %v2416, %v2678
  %v2923 = vadd.f32 %v2417, %v2679
  %v2924 = vadd.f32 %v2418, %v2680
  %v2925 = vadd.f32 %v2419, %v2681
  %v2926 = vadd.f32 %v2420, %v2682
  %v2927 = vadd.f32 %v2421, %v2683
  %v2928 = vadd.f32 %v2422, %v2684
  %v2929 = vadd.f32 %v2423, %v2685
  %v2930 = vadd.f32 %v2424, %v2686
  %v2931 = vadd.f32 %v2425, %v2687
  %v2932 = vadd.f32 %v2426, %v2688
  %v2933 = vadd.f32 %v2427, %v2689
  %v2934 = vadd.f32 %v2428, %v2690
  %v2935 = vadd.f32 %v2429, %v2691
  %v2936 = vadd.f32 %v2430, %v2692
  %v2937 = vadd.f32 %v2431, %v2693
  %v2938 = vadd.f32 %v2432, %v2694
  %v2939 = vadd.f32 %v2433, %v2695
  %v2940 = vadd.f32 %v2434, %v2696
  %v2941 = vadd.f32 %v2435, %v2697
  %v2942 = vadd.f32 %v2436, %v2698
  %v2943 = vadd.f32 %v2437, %v2699
  %v2944 = vadd.f32 %v2438, %v2700
  %v2945 = vadd.f32 %v2439, %v2701
  %v2946 = vadd.f32 %v2440, %v2702
  %v2947 = vadd.f32 %v2441, %v2703
  %v2948 = vadd.f32 %v2442, %v2704
  %v2949 = vadd.f32 %v2443, %v2705
  %v2950 = vadd.f32 %v2444, %v2706
  %v2951 = vadd.f32 %v2445, %v2707
  %v2952 = vadd.f32 %v2446, %v2708
  %v2953 = vadd.f32 %v2447, %v2709
  %v2954 = vadd.f32 %v2448, %v2710
  %v2955 = vadd.f32 %v2449, %v2711
  %v2956 = vadd.f32 %v2450, %v2712
  %v2957 = vadd.f32 %v2451, %v2713
  %v2958 = vadd.f32 %v2452, %v2714
  %v2959 = vadd.f32 %v2453, %v2715
  %v2960 = vadd.f32 %v2454, %v2716
  %v2961 = vadd.f32 %v2455, %v2717
  %v2962 = vadd.f32 %v2456, %v2718
  %v2963 = vadd.f32 %v2457, %v2719
  %v2964 = vadd.f32 %v2458, %v2720
  %v2965 = vadd.f32 %v2459, %v2721
  %v2966 = vadd.f32 %v2460, %v2722
  %v2967 = vadd.f32 %v2461, %v2723
  %v2968 = vadd.f32 %v2462, %v2724
  %v2969 = vadd.f32 %v2463, %v2725
  %v2970 = vadd.f32 %v2464, %v2726
  %v2971 = vadd.f32 %v2465, %v2727
  %v2972 = vadd.f32 %v2466, %v2728
  %v2973 = vadd.f32 %v2467, %v2729
  %v2974 = vadd.f32 %v2468, %v2730
  %v2975 = vadd.f32 %v2469, %v2731
  %v2976 = vadd.f32 %v2470, %v2732
  %v2977 = vadd.f32 %v2471, %v2733
  %v2978 = vadd.f32 %v2472, %v2734
  %v2979 = vadd.f32 %v2473, %v2735
  %v2980 = vadd.f32 %v2474, %v2736
  %v2981 = vadd.f32 %v2475, %v2737
  %v2982 = vadd.f32 %v2476, %v2738
  %v2983 = vadd.f32 %v2477, %v2739
  %v2984 = vadd.f32 %v2478, %v2740
  %v2985 = vadd.f32 %v2479, %v2741
  %v2986 = vadd.f32 %v2480, %v2742
  %v2987 = vadd.f32 %v2481, %v2743
  %v2988 = vadd.f32 %v2482, %v2744
  %v2989 = vadd.f32 %v2483, %v2745
  %v2990 = vadd.f32 %v2484, %v2746
  %v2991 = vadd.f32 %v2485, %v2747
  %v2992 = vadd.f32 %v2486, %v2748
  %v2993 = vadd.f32 %v2487, %v2749
  %v2994 = vadd.f32 %v2488, %v2750
  %v2995 = vadd.f32 %v2489, %v2751
  %v2996 = vadd.f32 %v2490, %v2752
  %v2997 = vadd.f32 %v2491, %v2753
  %v2998 = vadd.f32 %v2492, %v2754
  %v2999 = vadd.f32 %v2493, %v2755
  %v3000 = vadd.f32 %v2494, %v2756
  %v3001 = vadd.f32 %v2495, %v2757
  %v3002 = vadd.f32 %v2496, %v2758
  %v3003 = vadd.f32 %v2497, %v2759
  %v3004 = vadd.f32 %v2498, %v2760
  %v3005 = vadd.f32 %v2499, %v2761
  %v3006 = vadd.f32 %v2500, %v2762
  %v3007 = vadd.f32 %v2501, %v2763
  %v3008 = vadd.f32 %v2502, %v2764
  %v3009 = vadd.f32 %v2503, %v2765
  %v3010 = vadd.f32 %v2504, %v2766
  %v3011 = vadd.f32 %v2505, %v2767
  %v3012 = vadd.f32 %v2506, %v2768
  %v3013 = vadd.f32 %v2507, %v2769
  %v3014 = vadd.f32 %v2508, %v2770
  %v3015 = vadd.f32 %v2509, %v2771
  %v3016 = vadd.f32 %v2510, %v2772
  %v3017 = vadd.f32 %v2511, %v2773
  %v3018 = vadd.f32 %v2512, %v2774
  %v3019 = vadd.f32 %v2513, %v2775
  %v3020 = vadd.f32 %v2514, %v2776
  %v3021 = vadd.f32 %v2515, %v2777
  %v3022 = vadd.f32 %v2516, %v2778
  %v3023 = vadd.f32 %v2517, %v2779
  %v3024 = vadd.f32 %v2518, %v2780
  %v3025 = vadd.f32 %v2519, %v2781
  %v3026 = vadd.f32 %v2520, %v2782
  %v3027 = vadd.f32 %v2521, %v2783
  %v3028 = vadd.f32 %v2522, %v2784
  %v3029 = vadd.f32 %v2523, %v2785
  %v3030 = vadd.f32 %v2524, %v2786
  %v3031 = vadd.f32 %v2525, %v2787
  %v3032 = vadd.f32 %v2526, %v2788
  %v3033 = vadd.f32 %v2527, %v2789
  %v3034 = vadd.f32 %v2528, %v2790
  %s3035 = scalar_lea.vmem %s1, 3
  %v3036 = vld [vmem:[%s3035] sm:$0x1]
  %3038 = vset.pattern.permute.xlu0 0
  %3039 = vperm.xlu0 %3038, %v302
  %v3040 = vpop.permute.xlu0 %3039
  %3043 = vset.pattern.permute.xlu0 0
  %3044 = vperm.xlu0 %3043, %v303
  %v3045 = vpop.permute.xlu0 %3044
  %v3048 = vlaneseq
  %v3049 = vshrl.u32 %v3048, 7
  %v3050 = vsub.s32 0, %v3049
  %v3051 = vrot.slane %v3036, %v3050
  %v3053 = vmul.f32 %v342, %v3051
  %v3054 = vmul.f32 %v347, %v3051
  %v3055 = vmul.f32 %v352, %v3051
  %v3056 = vmul.f32 %v357, %v3051
  %v3057 = vmul.f32 %v362, %v3051
  %v3058 = vmul.f32 %v367, %v3051
  %v3059 = vmul.f32 %v372, %v3051
  %v3060 = vmul.f32 %v377, %v3051
  %v3061 = vmul.f32 %v382, %v3051
  %v3062 = vmul.f32 %v387, %v3051
  %v3063 = vmul.f32 %v392, %v3051
  %v3064 = vmul.f32 %v397, %v3051
  %v3065 = vmul.f32 %v402, %v3051
  %v3066 = vmul.f32 %v407, %v3051
  %v3067 = vmul.f32 %v412, %v3051
  %v3068 = vmul.f32 %v417, %v3051
  %v3069 = vmul.f32 %v422, %v3051
  %v3070 = vmul.f32 %v427, %v3051
  %v3071 = vmul.f32 %v432, %v3051
  %v3072 = vmul.f32 %v437, %v3051
  %v3073 = vmul.f32 %v442, %v3051
  %v3074 = vmul.f32 %v447, %v3051
  %v3075 = vmul.f32 %v452, %v3051
  %v3076 = vmul.f32 %v457, %v3051
  %v3077 = vmul.f32 %v462, %v3051
  %v3078 = vmul.f32 %v467, %v3051
  %v3079 = vmul.f32 %v472, %v3051
  %v3080 = vmul.f32 %v477, %v3051
  %v3081 = vmul.f32 %v482, %v3051
  %v3082 = vmul.f32 %v487, %v3051
  %v3083 = vmul.f32 %v492, %v3051
  %v3084 = vmul.f32 %v497, %v3051
  %v3085 = vmul.f32 %v502, %v3051
  %v3086 = vmul.f32 %v507, %v3051
  %v3087 = vmul.f32 %v512, %v3051
  %v3088 = vmul.f32 %v517, %v3051
  %v3089 = vmul.f32 %v522, %v3051
  %v3090 = vmul.f32 %v527, %v3051
  %v3091 = vmul.f32 %v532, %v3051
  %v3092 = vmul.f32 %v537, %v3051
  %v3093 = vmul.f32 %v542, %v3051
  %v3094 = vmul.f32 %v547, %v3051
  %v3095 = vmul.f32 %v552, %v3051
  %v3096 = vmul.f32 %v557, %v3051
  %v3097 = vmul.f32 %v562, %v3051
  %v3098 = vmul.f32 %v567, %v3051
  %v3099 = vmul.f32 %v572, %v3051
  %v3100 = vmul.f32 %v577, %v3051
  %v3101 = vmul.f32 %v582, %v3051
  %v3102 = vmul.f32 %v587, %v3051
  %v3103 = vmul.f32 %v592, %v3051
  %v3104 = vmul.f32 %v597, %v3051
  %v3105 = vmul.f32 %v602, %v3051
  %v3106 = vmul.f32 %v607, %v3051
  %v3107 = vmul.f32 %v612, %v3051
  %v3108 = vmul.f32 %v617, %v3051
  %v3109 = vmul.f32 %v622, %v3051
  %v3110 = vmul.f32 %v627, %v3051
  %v3111 = vmul.f32 %v632, %v3051
  %v3112 = vmul.f32 %v637, %v3051
  %v3113 = vmul.f32 %v642, %v3051
  %v3114 = vmul.f32 %v647, %v3051
  %v3115 = vmul.f32 %v652, %v3051
  %v3116 = vmul.f32 %v657, %v3051
  %v3117 = vmul.f32 %v662, %v3051
  %v3118 = vmul.f32 %v667, %v3051
  %v3119 = vmul.f32 %v672, %v3051
  %v3120 = vmul.f32 %v677, %v3051
  %v3121 = vmul.f32 %v682, %v3051
  %v3122 = vmul.f32 %v687, %v3051
  %v3123 = vmul.f32 %v692, %v3051
  %v3124 = vmul.f32 %v697, %v3051
  %v3125 = vmul.f32 %v702, %v3051
  %v3126 = vmul.f32 %v707, %v3051
  %v3127 = vmul.f32 %v712, %v3051
  %v3128 = vmul.f32 %v717, %v3051
  %v3129 = vmul.f32 %v722, %v3051
  %v3130 = vmul.f32 %v727, %v3051
  %v3131 = vmul.f32 %v732, %v3051
  %v3132 = vmul.f32 %v737, %v3051
  %v3133 = vmul.f32 %v742, %v3051
  %v3134 = vmul.f32 %v747, %v3051
  %v3135 = vmul.f32 %v752, %v3051
  %v3136 = vmul.f32 %v757, %v3051
  %v3137 = vmul.f32 %v762, %v3051
  %v3138 = vmul.f32 %v767, %v3051
  %v3139 = vmul.f32 %v772, %v3051
  %v3140 = vmul.f32 %v777, %v3051
  %v3141 = vmul.f32 %v782, %v3051
  %v3142 = vmul.f32 %v787, %v3051
  %v3143 = vmul.f32 %v792, %v3051
  %v3144 = vmul.f32 %v797, %v3051
  %v3145 = vmul.f32 %v802, %v3051
  %v3146 = vmul.f32 %v807, %v3051
  %v3147 = vmul.f32 %v812, %v3051
  %v3148 = vmul.f32 %v817, %v3051
  %v3149 = vmul.f32 %v822, %v3051
  %v3150 = vmul.f32 %v827, %v3051
  %v3151 = vmul.f32 %v832, %v3051
  %v3152 = vmul.f32 %v837, %v3051
  %v3153 = vmul.f32 %v842, %v3051
  %v3154 = vmul.f32 %v847, %v3051
  %v3155 = vmul.f32 %v852, %v3051
  %v3156 = vmul.f32 %v857, %v3051
  %v3157 = vmul.f32 %v862, %v3051
  %v3158 = vmul.f32 %v867, %v3051
  %v3159 = vmul.f32 %v872, %v3051
  %v3160 = vmul.f32 %v877, %v3051
  %v3161 = vmul.f32 %v882, %v3051
  %v3162 = vmul.f32 %v887, %v3051
  %v3163 = vmul.f32 %v892, %v3051
  %v3164 = vmul.f32 %v897, %v3051
  %v3165 = vmul.f32 %v902, %v3051
  %v3166 = vmul.f32 %v907, %v3051
  %v3167 = vmul.f32 %v912, %v3051
  %v3168 = vmul.f32 %v917, %v3051
  %v3169 = vmul.f32 %v922, %v3051
  %v3170 = vmul.f32 %v927, %v3051
  %v3171 = vmul.f32 %v932, %v3051
  %v3172 = vmul.f32 %v937, %v3051
  %v3173 = vmul.f32 %v942, %v3051
  %v3174 = vmul.f32 %v947, %v3051
  %v3175 = vmul.f32 %v952, %v3051
  %v3176 = vmul.f32 %v957, %v3051
  %v3177 = vmul.f32 %v962, %v3051
  %v3178 = vmul.f32 %v967, %v3051
  %v3179 = vmul.f32 %v972, %v3051
  %v3180 = vmul.f32 %v977, %v3051
  %v3181 = vmul.f32 %v982, %v3051
  %v3182 = vmul.f32 %v987, %v3051
  %v3183 = vmul.f32 %v992, %v3051
  %v3184 = vmul.f32 %v997, %v3051
  %v3185 = vmul.f32 %v1002, %v3051
  %v3186 = vmul.f32 %v1007, %v3051
  %v3187 = vmul.f32 %v1012, %v3051
  %v3188 = vmul.f32 %v1017, %v3051
  %v3189 = vmul.f32 %v1022, %v3051
  %v3190 = vmul.f32 %v1027, %v3051
  %v3191 = vmul.f32 %v1032, %v3051
  %v3192 = vmul.f32 %v1037, %v3051
  %v3193 = vmul.f32 %v1042, %v3051
  %v3194 = vmul.f32 %v1047, %v3051
  %v3195 = vmul.f32 %v1052, %v3051
  %v3196 = vmul.f32 %v1057, %v3051
  %v3197 = vmul.f32 %v1062, %v3051
  %v3198 = vmul.f32 %v1067, %v3051
  %v3199 = vmul.f32 %v1072, %v3051
  %v3200 = vmul.f32 %v1077, %v3051
  %v3201 = vmul.f32 %v1082, %v3051
  %v3202 = vmul.f32 %v1087, %v3051
  %v3203 = vmul.f32 %v1092, %v3051
  %v3204 = vmul.f32 %v1097, %v3051
  %v3205 = vmul.f32 %v1102, %v3051
  %v3206 = vmul.f32 %v1107, %v3051
  %v3207 = vmul.f32 %v1112, %v3051
  %v3208 = vmul.f32 %v1117, %v3051
  %v3209 = vmul.f32 %v1122, %v3051
  %v3210 = vmul.f32 %v1127, %v3051
  %v3211 = vmul.f32 %v1132, %v3051
  %v3212 = vmul.f32 %v1137, %v3051
  %v3213 = vmul.f32 %v1142, %v3051
  %v3214 = vmul.f32 %v1147, %v3051
  %v3215 = vmul.f32 %v1152, %v3051
  %v3216 = vmul.f32 %v1157, %v3051
  %v3217 = vmul.f32 %v1162, %v3051
  %v3218 = vmul.f32 %v1167, %v3051
  %v3219 = vmul.f32 %v1172, %v3051
  %v3220 = vmul.f32 %v1177, %v3051
  %v3221 = vmul.f32 %v1182, %v3051
  %v3222 = vmul.f32 %v1187, %v3051
  %v3223 = vmul.f32 %v1192, %v3051
  %v3224 = vmul.f32 %v1197, %v3051
  %v3225 = vmul.f32 %v1202, %v3051
  %v3226 = vmul.f32 %v1207, %v3051
  %v3227 = vmul.f32 %v1212, %v3051
  %v3228 = vmul.f32 %v1217, %v3051
  %v3229 = vmul.f32 %v1222, %v3051
  %v3230 = vmul.f32 %v1227, %v3051
  %v3231 = vmul.f32 %v1232, %v3051
  %v3232 = vmul.f32 %v1237, %v3051
  %v3233 = vmul.f32 %v1242, %v3051
  %v3234 = vmul.f32 %v1247, %v3051
  %v3235 = vmul.f32 %v1252, %v3051
  %v3236 = vmul.f32 %v1257, %v3051
  %v3237 = vmul.f32 %v1262, %v3051
  %v3238 = vmul.f32 %v1267, %v3051
  %v3239 = vmul.f32 %v1272, %v3051
  %v3240 = vmul.f32 %v1277, %v3051
  %v3241 = vmul.f32 %v1282, %v3051
  %v3242 = vmul.f32 %v1287, %v3051
  %v3243 = vmul.f32 %v1292, %v3051
  %v3244 = vmul.f32 %v1297, %v3051
  %v3245 = vmul.f32 %v1302, %v3051
  %v3246 = vmul.f32 %v1307, %v3051
  %v3247 = vmul.f32 %v1312, %v3051
  %v3248 = vmul.f32 %v1317, %v3051
  %v3249 = vmul.f32 %v1322, %v3051
  %v3250 = vmul.f32 %v1327, %v3051
  %v3251 = vmul.f32 %v1332, %v3051
  %v3252 = vmul.f32 %v1337, %v3051
  %v3253 = vmul.f32 %v1342, %v3051
  %v3254 = vmul.f32 %v1347, %v3051
  %v3255 = vmul.f32 %v1352, %v3051
  %v3256 = vmul.f32 %v1357, %v3051
  %v3257 = vmul.f32 %v1362, %v3051
  %v3258 = vmul.f32 %v1367, %v3051
  %v3259 = vmul.f32 %v1372, %v3051
  %v3260 = vmul.f32 %v1377, %v3051
  %v3261 = vmul.f32 %v1382, %v3051
  %v3262 = vmul.f32 %v1387, %v3051
  %v3263 = vmul.f32 %v1392, %v3051
  %v3264 = vmul.f32 %v1397, %v3051
  %v3265 = vmul.f32 %v1402, %v3051
  %v3266 = vmul.f32 %v1407, %v3051
  %v3267 = vmul.f32 %v1412, %v3051
  %v3268 = vmul.f32 %v1417, %v3051
  %v3269 = vmul.f32 %v1422, %v3051
  %v3270 = vmul.f32 %v1427, %v3051
  %v3271 = vmul.f32 %v1432, %v3051
  %v3272 = vmul.f32 %v1437, %v3051
  %v3273 = vmul.f32 %v1442, %v3051
  %v3274 = vmul.f32 %v1447, %v3051
  %v3275 = vmul.f32 %v1452, %v3051
  %v3276 = vmul.f32 %v1457, %v3051
  %v3277 = vmul.f32 %v1462, %v3051
  %v3278 = vmul.f32 %v1467, %v3051
  %v3279 = vmul.f32 %v1472, %v3051
  %v3280 = vmul.f32 %v1477, %v3051
  %v3281 = vmul.f32 %v1482, %v3051
  %v3282 = vmul.f32 %v1487, %v3051
  %v3283 = vmul.f32 %v1492, %v3051
  %v3284 = vmul.f32 %v1497, %v3051
  %v3285 = vmul.f32 %v1502, %v3051
  %v3286 = vmul.f32 %v1507, %v3051
  %v3287 = vmul.f32 %v1512, %v3051
  %v3288 = vmul.f32 %v1517, %v3051
  %v3289 = vmul.f32 %v1522, %v3051
  %v3290 = vmul.f32 %v1527, %v3051
  %v3291 = vmul.f32 %v2028, %v3051
  %v3292 = vmul.f32 %v2033, %v3051
  %v3293 = vmul.f32 %v2534, %v3051
  %v3294 = vmul.f32 %v2539, %v3051
  %v3295 = vmul.f32 %v3040, %v3051
  %v3296 = vmul.f32 %v3045, %v3051
  %v3297 = vadd.f32 %v2791, %v3053
  %v3298 = vadd.f32 %v2792, %v3054
  %v3299 = vadd.f32 %v2793, %v3055
  %v3300 = vadd.f32 %v2794, %v3056
  %v3301 = vadd.f32 %v2795, %v3057
  %v3302 = vadd.f32 %v2796, %v3058
  %v3303 = vadd.f32 %v2797, %v3059
  %v3304 = vadd.f32 %v2798, %v3060
  %v3305 = vadd.f32 %v2799, %v3061
  %v3306 = vadd.f32 %v2800, %v3062
  %v3307 = vadd.f32 %v2801, %v3063
  %v3308 = vadd.f32 %v2802, %v3064
  %v3309 = vadd.f32 %v2803, %v3065
  %v3310 = vadd.f32 %v2804, %v3066
  %v3311 = vadd.f32 %v2805, %v3067
  %v3312 = vadd.f32 %v2806, %v3068
  %v3313 = vadd.f32 %v2807, %v3069
  %v3314 = vadd.f32 %v2808, %v3070
  %v3315 = vadd.f32 %v2809, %v3071
  %v3316 = vadd.f32 %v2810, %v3072
  %v3317 = vadd.f32 %v2811, %v3073
  %v3318 = vadd.f32 %v2812, %v3074
  %v3319 = vadd.f32 %v2813, %v3075
  %v3320 = vadd.f32 %v2814, %v3076
  %v3321 = vadd.f32 %v2815, %v3077
  %v3322 = vadd.f32 %v2816, %v3078
  %v3323 = vadd.f32 %v2817, %v3079
  %v3324 = vadd.f32 %v2818, %v3080
  %v3325 = vadd.f32 %v2819, %v3081
  %v3326 = vadd.f32 %v2820, %v3082
  %v3327 = vadd.f32 %v2821, %v3083
  %v3328 = vadd.f32 %v2822, %v3084
  %v3329 = vadd.f32 %v2823, %v3085
  %v3330 = vadd.f32 %v2824, %v3086
  %v3331 = vadd.f32 %v2825, %v3087
  %v3332 = vadd.f32 %v2826, %v3088
  %v3333 = vadd.f32 %v2827, %v3089
  %v3334 = vadd.f32 %v2828, %v3090
  %v3335 = vadd.f32 %v2829, %v3091
  %v3336 = vadd.f32 %v2830, %v3092
  %v3337 = vadd.f32 %v2831, %v3093
  %v3338 = vadd.f32 %v2832, %v3094
  %v3339 = vadd.f32 %v2833, %v3095
  %v3340 = vadd.f32 %v2834, %v3096
  %v3341 = vadd.f32 %v2835, %v3097
  %v3342 = vadd.f32 %v2836, %v3098
  %v3343 = vadd.f32 %v2837, %v3099
  %v3344 = vadd.f32 %v2838, %v3100
  %v3345 = vadd.f32 %v2839, %v3101
  %v3346 = vadd.f32 %v2840, %v3102
  %v3347 = vadd.f32 %v2841, %v3103
  %v3348 = vadd.f32 %v2842, %v3104
  %v3349 = vadd.f32 %v2843, %v3105
  %v3350 = vadd.f32 %v2844, %v3106
  %v3351 = vadd.f32 %v2845, %v3107
  %v3352 = vadd.f32 %v2846, %v3108
  %v3353 = vadd.f32 %v2847, %v3109
  %v3354 = vadd.f32 %v2848, %v3110
  %v3355 = vadd.f32 %v2849, %v3111
  %v3356 = vadd.f32 %v2850, %v3112
  %v3357 = vadd.f32 %v2851, %v3113
  %v3358 = vadd.f32 %v2852, %v3114
  %v3359 = vadd.f32 %v2853, %v3115
  %v3360 = vadd.f32 %v2854, %v3116
  %v3361 = vadd.f32 %v2855, %v3117
  %v3362 = vadd.f32 %v2856, %v3118
  %v3363 = vadd.f32 %v2857, %v3119
  %v3364 = vadd.f32 %v2858, %v3120
  %v3365 = vadd.f32 %v2859, %v3121
  %v3366 = vadd.f32 %v2860, %v3122
  %v3367 = vadd.f32 %v2861, %v3123
  %v3368 = vadd.f32 %v2862, %v3124
  %v3369 = vadd.f32 %v2863, %v3125
  %v3370 = vadd.f32 %v2864, %v3126
  %v3371 = vadd.f32 %v2865, %v3127
  %v3372 = vadd.f32 %v2866, %v3128
  %v3373 = vadd.f32 %v2867, %v3129
  %v3374 = vadd.f32 %v2868, %v3130
  %v3375 = vadd.f32 %v2869, %v3131
  %v3376 = vadd.f32 %v2870, %v3132
  %v3377 = vadd.f32 %v2871, %v3133
  %v3378 = vadd.f32 %v2872, %v3134
  %v3379 = vadd.f32 %v2873, %v3135
  %v3380 = vadd.f32 %v2874, %v3136
  %v3381 = vadd.f32 %v2875, %v3137
  %v3382 = vadd.f32 %v2876, %v3138
  %v3383 = vadd.f32 %v2877, %v3139
  %v3384 = vadd.f32 %v2878, %v3140
  %v3385 = vadd.f32 %v2879, %v3141
  %v3386 = vadd.f32 %v2880, %v3142
  %v3387 = vadd.f32 %v2881, %v3143
  %v3388 = vadd.f32 %v2882, %v3144
  %v3389 = vadd.f32 %v2883, %v3145
  %v3390 = vadd.f32 %v2884, %v3146
  %v3391 = vadd.f32 %v2885, %v3147
  %v3392 = vadd.f32 %v2886, %v3148
  %v3393 = vadd.f32 %v2887, %v3149
  %v3394 = vadd.f32 %v2888, %v3150
  %v3395 = vadd.f32 %v2889, %v3151
  %v3396 = vadd.f32 %v2890, %v3152
  %v3397 = vadd.f32 %v2891, %v3153
  %v3398 = vadd.f32 %v2892, %v3154
  %v3399 = vadd.f32 %v2893, %v3155
  %v3400 = vadd.f32 %v2894, %v3156
  %v3401 = vadd.f32 %v2895, %v3157
  %v3402 = vadd.f32 %v2896, %v3158
  %v3403 = vadd.f32 %v2897, %v3159
  %v3404 = vadd.f32 %v2898, %v3160
  %v3405 = vadd.f32 %v2899, %v3161
  %v3406 = vadd.f32 %v2900, %v3162
  %v3407 = vadd.f32 %v2901, %v3163
  %v3408 = vadd.f32 %v2902, %v3164
  %v3409 = vadd.f32 %v2903, %v3165
  %v3410 = vadd.f32 %v2904, %v3166
  %v3411 = vadd.f32 %v2905, %v3167
  %v3412 = vadd.f32 %v2906, %v3168
  %v3413 = vadd.f32 %v2907, %v3169
  %v3414 = vadd.f32 %v2908, %v3170
  %v3415 = vadd.f32 %v2909, %v3171
  %v3416 = vadd.f32 %v2910, %v3172
  %v3417 = vadd.f32 %v2911, %v3173
  %v3418 = vadd.f32 %v2912, %v3174
  %v3419 = vadd.f32 %v2913, %v3175
  %v3420 = vadd.f32 %v2914, %v3176
  %v3421 = vadd.f32 %v2915, %v3177
  %v3422 = vadd.f32 %v2916, %v3178
  %v3423 = vadd.f32 %v2917, %v3179
  %v3424 = vadd.f32 %v2918, %v3180
  %v3425 = vadd.f32 %v2919, %v3181
  %v3426 = vadd.f32 %v2920, %v3182
  %v3427 = vadd.f32 %v2921, %v3183
  %v3428 = vadd.f32 %v2922, %v3184
  %v3429 = vadd.f32 %v2923, %v3185
  %v3430 = vadd.f32 %v2924, %v3186
  %v3431 = vadd.f32 %v2925, %v3187
  %v3432 = vadd.f32 %v2926, %v3188
  %v3433 = vadd.f32 %v2927, %v3189
  %v3434 = vadd.f32 %v2928, %v3190
  %v3435 = vadd.f32 %v2929, %v3191
  %v3436 = vadd.f32 %v2930, %v3192
  %v3437 = vadd.f32 %v2931, %v3193
  %v3438 = vadd.f32 %v2932, %v3194
  %v3439 = vadd.f32 %v2933, %v3195
  %v3440 = vadd.f32 %v2934, %v3196
  %v3441 = vadd.f32 %v2935, %v3197
  %v3442 = vadd.f32 %v2936, %v3198
  %v3443 = vadd.f32 %v2937, %v3199
  %v3444 = vadd.f32 %v2938, %v3200
  %v3445 = vadd.f32 %v2939, %v3201
  %v3446 = vadd.f32 %v2940, %v3202
  %v3447 = vadd.f32 %v2941, %v3203
  %v3448 = vadd.f32 %v2942, %v3204
  %v3449 = vadd.f32 %v2943, %v3205
  %v3450 = vadd.f32 %v2944, %v3206
  %v3451 = vadd.f32 %v2945, %v3207
  %v3452 = vadd.f32 %v2946, %v3208
  %v3453 = vadd.f32 %v2947, %v3209
  %v3454 = vadd.f32 %v2948, %v3210
  %v3455 = vadd.f32 %v2949, %v3211
  %v3456 = vadd.f32 %v2950, %v3212
  %v3457 = vadd.f32 %v2951, %v3213
  %v3458 = vadd.f32 %v2952, %v3214
  %v3459 = vadd.f32 %v2953, %v3215
  %v3460 = vadd.f32 %v2954, %v3216
  %v3461 = vadd.f32 %v2955, %v3217
  %v3462 = vadd.f32 %v2956, %v3218
  %v3463 = vadd.f32 %v2957, %v3219
  %v3464 = vadd.f32 %v2958, %v3220
  %v3465 = vadd.f32 %v2959, %v3221
  %v3466 = vadd.f32 %v2960, %v3222
  %v3467 = vadd.f32 %v2961, %v3223
  %v3468 = vadd.f32 %v2962, %v3224
  %v3469 = vadd.f32 %v2963, %v3225
  %v3470 = vadd.f32 %v2964, %v3226
  %v3471 = vadd.f32 %v2965, %v3227
  %v3472 = vadd.f32 %v2966, %v3228
  %v3473 = vadd.f32 %v2967, %v3229
  %v3474 = vadd.f32 %v2968, %v3230
  %v3475 = vadd.f32 %v2969, %v3231
  %v3476 = vadd.f32 %v2970, %v3232
  %v3477 = vadd.f32 %v2971, %v3233
  %v3478 = vadd.f32 %v2972, %v3234
  %v3479 = vadd.f32 %v2973, %v3235
  %v3480 = vadd.f32 %v2974, %v3236
  %v3481 = vadd.f32 %v2975, %v3237
  %v3482 = vadd.f32 %v2976, %v3238
  %v3483 = vadd.f32 %v2977, %v3239
  %v3484 = vadd.f32 %v2978, %v3240
  %v3485 = vadd.f32 %v2979, %v3241
  %v3486 = vadd.f32 %v2980, %v3242
  %v3487 = vadd.f32 %v2981, %v3243
  %v3488 = vadd.f32 %v2982, %v3244
  %v3489 = vadd.f32 %v2983, %v3245
  %v3490 = vadd.f32 %v2984, %v3246
  %v3491 = vadd.f32 %v2985, %v3247
  %v3492 = vadd.f32 %v2986, %v3248
  %v3493 = vadd.f32 %v2987, %v3249
  %v3494 = vadd.f32 %v2988, %v3250
  %v3495 = vadd.f32 %v2989, %v3251
  %v3496 = vadd.f32 %v2990, %v3252
  %v3497 = vadd.f32 %v2991, %v3253
  %v3498 = vadd.f32 %v2992, %v3254
  %v3499 = vadd.f32 %v2993, %v3255
  %v3500 = vadd.f32 %v2994, %v3256
  %v3501 = vadd.f32 %v2995, %v3257
  %v3502 = vadd.f32 %v2996, %v3258
  %v3503 = vadd.f32 %v2997, %v3259
  %v3504 = vadd.f32 %v2998, %v3260
  %v3505 = vadd.f32 %v2999, %v3261
  %v3506 = vadd.f32 %v3000, %v3262
  %v3507 = vadd.f32 %v3001, %v3263
  %v3508 = vadd.f32 %v3002, %v3264
  %v3509 = vadd.f32 %v3003, %v3265
  %v3510 = vadd.f32 %v3004, %v3266
  %v3511 = vadd.f32 %v3005, %v3267
  %v3512 = vadd.f32 %v3006, %v3268
  %v3513 = vadd.f32 %v3007, %v3269
  %v3514 = vadd.f32 %v3008, %v3270
  %v3515 = vadd.f32 %v3009, %v3271
  %v3516 = vadd.f32 %v3010, %v3272
  %v3517 = vadd.f32 %v3011, %v3273
  %v3518 = vadd.f32 %v3012, %v3274
  %v3519 = vadd.f32 %v3013, %v3275
  %v3520 = vadd.f32 %v3014, %v3276
  %v3521 = vadd.f32 %v3015, %v3277
  %v3522 = vadd.f32 %v3016, %v3278
  %v3523 = vadd.f32 %v3017, %v3279
  %v3524 = vadd.f32 %v3018, %v3280
  %v3525 = vadd.f32 %v3019, %v3281
  %v3526 = vadd.f32 %v3020, %v3282
  %v3527 = vadd.f32 %v3021, %v3283
  %v3528 = vadd.f32 %v3022, %v3284
  %v3529 = vadd.f32 %v3023, %v3285
  %v3530 = vadd.f32 %v3024, %v3286
  %v3531 = vadd.f32 %v3025, %v3287
  %v3532 = vadd.f32 %v3026, %v3288
  %v3533 = vadd.f32 %v3027, %v3289
  %v3534 = vadd.f32 %v3028, %v3290
  %v3535 = vadd.f32 %v3029, %v3291
  %v3536 = vadd.f32 %v3030, %v3292
  %v3537 = vadd.f32 %v3031, %v3293
  %v3538 = vadd.f32 %v3032, %v3294
  %v3539 = vadd.f32 %v3033, %v3295
  %v3540 = vadd.f32 %v3034, %v3296
  %s3541 = scalar_lea.vmem %s1, 4
  %v3542 = vld [vmem:[%s3541] sm:$0x1]
  %3544 = vset.pattern.permute.xlu0 0
  %3545 = vperm.xlu0 %3544, %v304
  %v3546 = vpop.permute.xlu0 %3545
  %3549 = vset.pattern.permute.xlu0 0
  %3550 = vperm.xlu0 %3549, %v305
  %v3551 = vpop.permute.xlu0 %3550
  %v3554 = vlaneseq
  %v3555 = vshrl.u32 %v3554, 7
  %v3556 = vsub.s32 0, %v3555
  %v3557 = vrot.slane %v3542, %v3556
  %v3559 = vmul.f32 %v352, %v3557
  %v3560 = vmul.f32 %v357, %v3557
  %v3561 = vmul.f32 %v362, %v3557
  %v3562 = vmul.f32 %v367, %v3557
  %v3563 = vmul.f32 %v372, %v3557
  %v3564 = vmul.f32 %v377, %v3557
  %v3565 = vmul.f32 %v382, %v3557
  %v3566 = vmul.f32 %v387, %v3557
  %v3567 = vmul.f32 %v392, %v3557
  %v3568 = vmul.f32 %v397, %v3557
  %v3569 = vmul.f32 %v402, %v3557
  %v3570 = vmul.f32 %v407, %v3557
  %v3571 = vmul.f32 %v412, %v3557
  %v3572 = vmul.f32 %v417, %v3557
  %v3573 = vmul.f32 %v422, %v3557
  %v3574 = vmul.f32 %v427, %v3557
  %v3575 = vmul.f32 %v432, %v3557
  %v3576 = vmul.f32 %v437, %v3557
  %v3577 = vmul.f32 %v442, %v3557
  %v3578 = vmul.f32 %v447, %v3557
  %v3579 = vmul.f32 %v452, %v3557
  %v3580 = vmul.f32 %v457, %v3557
  %v3581 = vmul.f32 %v462, %v3557
  %v3582 = vmul.f32 %v467, %v3557
  %v3583 = vmul.f32 %v472, %v3557
  %v3584 = vmul.f32 %v477, %v3557
  %v3585 = vmul.f32 %v482, %v3557
  %v3586 = vmul.f32 %v487, %v3557
  %v3587 = vmul.f32 %v492, %v3557
  %v3588 = vmul.f32 %v497, %v3557
  %v3589 = vmul.f32 %v502, %v3557
  %v3590 = vmul.f32 %v507, %v3557
  %v3591 = vmul.f32 %v512, %v3557
  %v3592 = vmul.f32 %v517, %v3557
  %v3593 = vmul.f32 %v522, %v3557
  %v3594 = vmul.f32 %v527, %v3557
  %v3595 = vmul.f32 %v532, %v3557
  %v3596 = vmul.f32 %v537, %v3557
  %v3597 = vmul.f32 %v542, %v3557
  %v3598 = vmul.f32 %v547, %v3557
  %v3599 = vmul.f32 %v552, %v3557
  %v3600 = vmul.f32 %v557, %v3557
  %v3601 = vmul.f32 %v562, %v3557
  %v3602 = vmul.f32 %v567, %v3557
  %v3603 = vmul.f32 %v572, %v3557
  %v3604 = vmul.f32 %v577, %v3557
  %v3605 = vmul.f32 %v582, %v3557
  %v3606 = vmul.f32 %v587, %v3557
  %v3607 = vmul.f32 %v592, %v3557
  %v3608 = vmul.f32 %v597, %v3557
  %v3609 = vmul.f32 %v602, %v3557
  %v3610 = vmul.f32 %v607, %v3557
  %v3611 = vmul.f32 %v612, %v3557
  %v3612 = vmul.f32 %v617, %v3557
  %v3613 = vmul.f32 %v622, %v3557
  %v3614 = vmul.f32 %v627, %v3557
  %v3615 = vmul.f32 %v632, %v3557
  %v3616 = vmul.f32 %v637, %v3557
  %v3617 = vmul.f32 %v642, %v3557
  %v3618 = vmul.f32 %v647, %v3557
  %v3619 = vmul.f32 %v652, %v3557
  %v3620 = vmul.f32 %v657, %v3557
  %v3621 = vmul.f32 %v662, %v3557
  %v3622 = vmul.f32 %v667, %v3557
  %v3623 = vmul.f32 %v672, %v3557
  %v3624 = vmul.f32 %v677, %v3557
  %v3625 = vmul.f32 %v682, %v3557
  %v3626 = vmul.f32 %v687, %v3557
  %v3627 = vmul.f32 %v692, %v3557
  %v3628 = vmul.f32 %v697, %v3557
  %v3629 = vmul.f32 %v702, %v3557
  %v3630 = vmul.f32 %v707, %v3557
  %v3631 = vmul.f32 %v712, %v3557
  %v3632 = vmul.f32 %v717, %v3557
  %v3633 = vmul.f32 %v722, %v3557
  %v3634 = vmul.f32 %v727, %v3557
  %v3635 = vmul.f32 %v732, %v3557
  %v3636 = vmul.f32 %v737, %v3557
  %v3637 = vmul.f32 %v742, %v3557
  %v3638 = vmul.f32 %v747, %v3557
  %v3639 = vmul.f32 %v752, %v3557
  %v3640 = vmul.f32 %v757, %v3557
  %v3641 = vmul.f32 %v762, %v3557
  %v3642 = vmul.f32 %v767, %v3557
  %v3643 = vmul.f32 %v772, %v3557
  %v3644 = vmul.f32 %v777, %v3557
  %v3645 = vmul.f32 %v782, %v3557
  %v3646 = vmul.f32 %v787, %v3557
  %v3647 = vmul.f32 %v792, %v3557
  %v3648 = vmul.f32 %v797, %v3557
  %v3649 = vmul.f32 %v802, %v3557
  %v3650 = vmul.f32 %v807, %v3557
  %v3651 = vmul.f32 %v812, %v3557
  %v3652 = vmul.f32 %v817, %v3557
  %v3653 = vmul.f32 %v822, %v3557
  %v3654 = vmul.f32 %v827, %v3557
  %v3655 = vmul.f32 %v832, %v3557
  %v3656 = vmul.f32 %v837, %v3557
  %v3657 = vmul.f32 %v842, %v3557
  %v3658 = vmul.f32 %v847, %v3557
  %v3659 = vmul.f32 %v852, %v3557
  %v3660 = vmul.f32 %v857, %v3557
  %v3661 = vmul.f32 %v862, %v3557
  %v3662 = vmul.f32 %v867, %v3557
  %v3663 = vmul.f32 %v872, %v3557
  %v3664 = vmul.f32 %v877, %v3557
  %v3665 = vmul.f32 %v882, %v3557
  %v3666 = vmul.f32 %v887, %v3557
  %v3667 = vmul.f32 %v892, %v3557
  %v3668 = vmul.f32 %v897, %v3557
  %v3669 = vmul.f32 %v902, %v3557
  %v3670 = vmul.f32 %v907, %v3557
  %v3671 = vmul.f32 %v912, %v3557
  %v3672 = vmul.f32 %v917, %v3557
  %v3673 = vmul.f32 %v922, %v3557
  %v3674 = vmul.f32 %v927, %v3557
  %v3675 = vmul.f32 %v932, %v3557
  %v3676 = vmul.f32 %v937, %v3557
  %v3677 = vmul.f32 %v942, %v3557
  %v3678 = vmul.f32 %v947, %v3557
  %v3679 = vmul.f32 %v952, %v3557
  %v3680 = vmul.f32 %v957, %v3557
  %v3681 = vmul.f32 %v962, %v3557
  %v3682 = vmul.f32 %v967, %v3557
  %v3683 = vmul.f32 %v972, %v3557
  %v3684 = vmul.f32 %v977, %v3557
  %v3685 = vmul.f32 %v982, %v3557
  %v3686 = vmul.f32 %v987, %v3557
  %v3687 = vmul.f32 %v992, %v3557
  %v3688 = vmul.f32 %v997, %v3557
  %v3689 = vmul.f32 %v1002, %v3557
  %v3690 = vmul.f32 %v1007, %v3557
  %v3691 = vmul.f32 %v1012, %v3557
  %v3692 = vmul.f32 %v1017, %v3557
  %v3693 = vmul.f32 %v1022, %v3557
  %v3694 = vmul.f32 %v1027, %v3557
  %v3695 = vmul.f32 %v1032, %v3557
  %v3696 = vmul.f32 %v1037, %v3557
  %v3697 = vmul.f32 %v1042, %v3557
  %v3698 = vmul.f32 %v1047, %v3557
  %v3699 = vmul.f32 %v1052, %v3557
  %v3700 = vmul.f32 %v1057, %v3557
  %v3701 = vmul.f32 %v1062, %v3557
  %v3702 = vmul.f32 %v1067, %v3557
  %v3703 = vmul.f32 %v1072, %v3557
  %v3704 = vmul.f32 %v1077, %v3557
  %v3705 = vmul.f32 %v1082, %v3557
  %v3706 = vmul.f32 %v1087, %v3557
  %v3707 = vmul.f32 %v1092, %v3557
  %v3708 = vmul.f32 %v1097, %v3557
  %v3709 = vmul.f32 %v1102, %v3557
  %v3710 = vmul.f32 %v1107, %v3557
  %v3711 = vmul.f32 %v1112, %v3557
  %v3712 = vmul.f32 %v1117, %v3557
  %v3713 = vmul.f32 %v1122, %v3557
  %v3714 = vmul.f32 %v1127, %v3557
  %v3715 = vmul.f32 %v1132, %v3557
  %v3716 = vmul.f32 %v1137, %v3557
  %v3717 = vmul.f32 %v1142, %v3557
  %v3718 = vmul.f32 %v1147, %v3557
  %v3719 = vmul.f32 %v1152, %v3557
  %v3720 = vmul.f32 %v1157, %v3557
  %v3721 = vmul.f32 %v1162, %v3557
  %v3722 = vmul.f32 %v1167, %v3557
  %v3723 = vmul.f32 %v1172, %v3557
  %v3724 = vmul.f32 %v1177, %v3557
  %v3725 = vmul.f32 %v1182, %v3557
  %v3726 = vmul.f32 %v1187, %v3557
  %v3727 = vmul.f32 %v1192, %v3557
  %v3728 = vmul.f32 %v1197, %v3557
  %v3729 = vmul.f32 %v1202, %v3557
  %v3730 = vmul.f32 %v1207, %v3557
  %v3731 = vmul.f32 %v1212, %v3557
  %v3732 = vmul.f32 %v1217, %v3557
  %v3733 = vmul.f32 %v1222, %v3557
  %v3734 = vmul.f32 %v1227, %v3557
  %v3735 = vmul.f32 %v1232, %v3557
  %v3736 = vmul.f32 %v1237, %v3557
  %v3737 = vmul.f32 %v1242, %v3557
  %v3738 = vmul.f32 %v1247, %v3557
  %v3739 = vmul.f32 %v1252, %v3557
  %v3740 = vmul.f32 %v1257, %v3557
  %v3741 = vmul.f32 %v1262, %v3557
  %v3742 = vmul.f32 %v1267, %v3557
  %v3743 = vmul.f32 %v1272, %v3557
  %v3744 = vmul.f32 %v1277, %v3557
  %v3745 = vmul.f32 %v1282, %v3557
  %v3746 = vmul.f32 %v1287, %v3557
  %v3747 = vmul.f32 %v1292, %v3557
  %v3748 = vmul.f32 %v1297, %v3557
  %v3749 = vmul.f32 %v1302, %v3557
  %v3750 = vmul.f32 %v1307, %v3557
  %v3751 = vmul.f32 %v1312, %v3557
  %v3752 = vmul.f32 %v1317, %v3557
  %v3753 = vmul.f32 %v1322, %v3557
  %v3754 = vmul.f32 %v1327, %v3557
  %v3755 = vmul.f32 %v1332, %v3557
  %v3756 = vmul.f32 %v1337, %v3557
  %v3757 = vmul.f32 %v1342, %v3557
  %v3758 = vmul.f32 %v1347, %v3557
  %v3759 = vmul.f32 %v1352, %v3557
  %v3760 = vmul.f32 %v1357, %v3557
  %v3761 = vmul.f32 %v1362, %v3557
  %v3762 = vmul.f32 %v1367, %v3557
  %v3763 = vmul.f32 %v1372, %v3557
  %v3764 = vmul.f32 %v1377, %v3557
  %v3765 = vmul.f32 %v1382, %v3557
  %v3766 = vmul.f32 %v1387, %v3557
  %v3767 = vmul.f32 %v1392, %v3557
  %v3768 = vmul.f32 %v1397, %v3557
  %v3769 = vmul.f32 %v1402, %v3557
  %v3770 = vmul.f32 %v1407, %v3557
  %v3771 = vmul.f32 %v1412, %v3557
  %v3772 = vmul.f32 %v1417, %v3557
  %v3773 = vmul.f32 %v1422, %v3557
  %v3774 = vmul.f32 %v1427, %v3557
  %v3775 = vmul.f32 %v1432, %v3557
  %v3776 = vmul.f32 %v1437, %v3557
  %v3777 = vmul.f32 %v1442, %v3557
  %v3778 = vmul.f32 %v1447, %v3557
  %v3779 = vmul.f32 %v1452, %v3557
  %v3780 = vmul.f32 %v1457, %v3557
  %v3781 = vmul.f32 %v1462, %v3557
  %v3782 = vmul.f32 %v1467, %v3557
  %v3783 = vmul.f32 %v1472, %v3557
  %v3784 = vmul.f32 %v1477, %v3557
  %v3785 = vmul.f32 %v1482, %v3557
  %v3786 = vmul.f32 %v1487, %v3557
  %v3787 = vmul.f32 %v1492, %v3557
  %v3788 = vmul.f32 %v1497, %v3557
  %v3789 = vmul.f32 %v1502, %v3557
  %v3790 = vmul.f32 %v1507, %v3557
  %v3791 = vmul.f32 %v1512, %v3557
  %v3792 = vmul.f32 %v1517, %v3557
  %v3793 = vmul.f32 %v1522, %v3557
  %v3794 = vmul.f32 %v1527, %v3557
  %v3795 = vmul.f32 %v2028, %v3557
  %v3796 = vmul.f32 %v2033, %v3557
  %v3797 = vmul.f32 %v2534, %v3557
  %v3798 = vmul.f32 %v2539, %v3557
  %v3799 = vmul.f32 %v3040, %v3557
  %v3800 = vmul.f32 %v3045, %v3557
  %v3801 = vmul.f32 %v3546, %v3557
  %v3802 = vmul.f32 %v3551, %v3557
  %v3803 = vadd.f32 %v3297, %v3559
  %v3804 = vadd.f32 %v3298, %v3560
  %v3805 = vadd.f32 %v3299, %v3561
  %v3806 = vadd.f32 %v3300, %v3562
  %v3807 = vadd.f32 %v3301, %v3563
  %v3808 = vadd.f32 %v3302, %v3564
  %v3809 = vadd.f32 %v3303, %v3565
  %v3810 = vadd.f32 %v3304, %v3566
  %v3811 = vadd.f32 %v3305, %v3567
  %v3812 = vadd.f32 %v3306, %v3568
  %v3813 = vadd.f32 %v3307, %v3569
  %v3814 = vadd.f32 %v3308, %v3570
  %v3815 = vadd.f32 %v3309, %v3571
  %v3816 = vadd.f32 %v3310, %v3572
  %v3817 = vadd.f32 %v3311, %v3573
  %v3818 = vadd.f32 %v3312, %v3574
  %v3819 = vadd.f32 %v3313, %v3575
  %v3820 = vadd.f32 %v3314, %v3576
  %v3821 = vadd.f32 %v3315, %v3577
  %v3822 = vadd.f32 %v3316, %v3578
  %v3823 = vadd.f32 %v3317, %v3579
  %v3824 = vadd.f32 %v3318, %v3580
  %v3825 = vadd.f32 %v3319, %v3581
  %v3826 = vadd.f32 %v3320, %v3582
  %v3827 = vadd.f32 %v3321, %v3583
  %v3828 = vadd.f32 %v3322, %v3584
  %v3829 = vadd.f32 %v3323, %v3585
  %v3830 = vadd.f32 %v3324, %v3586
  %v3831 = vadd.f32 %v3325, %v3587
  %v3832 = vadd.f32 %v3326, %v3588
  %v3833 = vadd.f32 %v3327, %v3589
  %v3834 = vadd.f32 %v3328, %v3590
  %v3835 = vadd.f32 %v3329, %v3591
  %v3836 = vadd.f32 %v3330, %v3592
  %v3837 = vadd.f32 %v3331, %v3593
  %v3838 = vadd.f32 %v3332, %v3594
  %v3839 = vadd.f32 %v3333, %v3595
  %v3840 = vadd.f32 %v3334, %v3596
  %v3841 = vadd.f32 %v3335, %v3597
  %v3842 = vadd.f32 %v3336, %v3598
  %v3843 = vadd.f32 %v3337, %v3599
  %v3844 = vadd.f32 %v3338, %v3600
  %v3845 = vadd.f32 %v3339, %v3601
  %v3846 = vadd.f32 %v3340, %v3602
  %v3847 = vadd.f32 %v3341, %v3603
  %v3848 = vadd.f32 %v3342, %v3604
  %v3849 = vadd.f32 %v3343, %v3605
  %v3850 = vadd.f32 %v3344, %v3606
  %v3851 = vadd.f32 %v3345, %v3607
  %v3852 = vadd.f32 %v3346, %v3608
  %v3853 = vadd.f32 %v3347, %v3609
  %v3854 = vadd.f32 %v3348, %v3610
  %v3855 = vadd.f32 %v3349, %v3611
  %v3856 = vadd.f32 %v3350, %v3612
  %v3857 = vadd.f32 %v3351, %v3613
  %v3858 = vadd.f32 %v3352, %v3614
  %v3859 = vadd.f32 %v3353, %v3615
  %v3860 = vadd.f32 %v3354, %v3616
  %v3861 = vadd.f32 %v3355, %v3617
  %v3862 = vadd.f32 %v3356, %v3618
  %v3863 = vadd.f32 %v3357, %v3619
  %v3864 = vadd.f32 %v3358, %v3620
  %v3865 = vadd.f32 %v3359, %v3621
  %v3866 = vadd.f32 %v3360, %v3622
  %v3867 = vadd.f32 %v3361, %v3623
  %v3868 = vadd.f32 %v3362, %v3624
  %v3869 = vadd.f32 %v3363, %v3625
  %v3870 = vadd.f32 %v3364, %v3626
  %v3871 = vadd.f32 %v3365, %v3627
  %v3872 = vadd.f32 %v3366, %v3628
  %v3873 = vadd.f32 %v3367, %v3629
  %v3874 = vadd.f32 %v3368, %v3630
  %v3875 = vadd.f32 %v3369, %v3631
  %v3876 = vadd.f32 %v3370, %v3632
  %v3877 = vadd.f32 %v3371, %v3633
  %v3878 = vadd.f32 %v3372, %v3634
  %v3879 = vadd.f32 %v3373, %v3635
  %v3880 = vadd.f32 %v3374, %v3636
  %v3881 = vadd.f32 %v3375, %v3637
  %v3882 = vadd.f32 %v3376, %v3638
  %v3883 = vadd.f32 %v3377, %v3639
  %v3884 = vadd.f32 %v3378, %v3640
  %v3885 = vadd.f32 %v3379, %v3641
  %v3886 = vadd.f32 %v3380, %v3642
  %v3887 = vadd.f32 %v3381, %v3643
  %v3888 = vadd.f32 %v3382, %v3644
  %v3889 = vadd.f32 %v3383, %v3645
  %v3890 = vadd.f32 %v3384, %v3646
  %v3891 = vadd.f32 %v3385, %v3647
  %v3892 = vadd.f32 %v3386, %v3648
  %v3893 = vadd.f32 %v3387, %v3649
  %v3894 = vadd.f32 %v3388, %v3650
  %v3895 = vadd.f32 %v3389, %v3651
  %v3896 = vadd.f32 %v3390, %v3652
  %v3897 = vadd.f32 %v3391, %v3653
  %v3898 = vadd.f32 %v3392, %v3654
  %v3899 = vadd.f32 %v3393, %v3655
  %v3900 = vadd.f32 %v3394, %v3656
  %v3901 = vadd.f32 %v3395, %v3657
  %v3902 = vadd.f32 %v3396, %v3658
  %v3903 = vadd.f32 %v3397, %v3659
  %v3904 = vadd.f32 %v3398, %v3660
  %v3905 = vadd.f32 %v3399, %v3661
  %v3906 = vadd.f32 %v3400, %v3662
  %v3907 = vadd.f32 %v3401, %v3663
  %v3908 = vadd.f32 %v3402, %v3664
  %v3909 = vadd.f32 %v3403, %v3665
  %v3910 = vadd.f32 %v3404, %v3666
  %v3911 = vadd.f32 %v3405, %v3667
  %v3912 = vadd.f32 %v3406, %v3668
  %v3913 = vadd.f32 %v3407, %v3669
  %v3914 = vadd.f32 %v3408, %v3670
  %v3915 = vadd.f32 %v3409, %v3671
  %v3916 = vadd.f32 %v3410, %v3672
  %v3917 = vadd.f32 %v3411, %v3673
  %v3918 = vadd.f32 %v3412, %v3674
  %v3919 = vadd.f32 %v3413, %v3675
  %v3920 = vadd.f32 %v3414, %v3676
  %v3921 = vadd.f32 %v3415, %v3677
  %v3922 = vadd.f32 %v3416, %v3678
  %v3923 = vadd.f32 %v3417, %v3679
  %v3924 = vadd.f32 %v3418, %v3680
  %v3925 = vadd.f32 %v3419, %v3681
  %v3926 = vadd.f32 %v3420, %v3682
  %v3927 = vadd.f32 %v3421, %v3683
  %v3928 = vadd.f32 %v3422, %v3684
  %v3929 = vadd.f32 %v3423, %v3685
  %v3930 = vadd.f32 %v3424, %v3686
  %v3931 = vadd.f32 %v3425, %v3687
  %v3932 = vadd.f32 %v3426, %v3688
  %v3933 = vadd.f32 %v3427, %v3689
  %v3934 = vadd.f32 %v3428, %v3690
  %v3935 = vadd.f32 %v3429, %v3691
  %v3936 = vadd.f32 %v3430, %v3692
  %v3937 = vadd.f32 %v3431, %v3693
  %v3938 = vadd.f32 %v3432, %v3694
  %v3939 = vadd.f32 %v3433, %v3695
  %v3940 = vadd.f32 %v3434, %v3696
  %v3941 = vadd.f32 %v3435, %v3697
  %v3942 = vadd.f32 %v3436, %v3698
  %v3943 = vadd.f32 %v3437, %v3699
  %v3944 = vadd.f32 %v3438, %v3700
  %v3945 = vadd.f32 %v3439, %v3701
  %v3946 = vadd.f32 %v3440, %v3702
  %v3947 = vadd.f32 %v3441, %v3703
  %v3948 = vadd.f32 %v3442, %v3704
  %v3949 = vadd.f32 %v3443, %v3705
  %v3950 = vadd.f32 %v3444, %v3706
  %v3951 = vadd.f32 %v3445, %v3707
  %v3952 = vadd.f32 %v3446, %v3708
  %v3953 = vadd.f32 %v3447, %v3709
  %v3954 = vadd.f32 %v3448, %v3710
  %v3955 = vadd.f32 %v3449, %v3711
  %v3956 = vadd.f32 %v3450, %v3712
  %v3957 = vadd.f32 %v3451, %v3713
  %v3958 = vadd.f32 %v3452, %v3714
  %v3959 = vadd.f32 %v3453, %v3715
  %v3960 = vadd.f32 %v3454, %v3716
  %v3961 = vadd.f32 %v3455, %v3717
  %v3962 = vadd.f32 %v3456, %v3718
  %v3963 = vadd.f32 %v3457, %v3719
  %v3964 = vadd.f32 %v3458, %v3720
  %v3965 = vadd.f32 %v3459, %v3721
  %v3966 = vadd.f32 %v3460, %v3722
  %v3967 = vadd.f32 %v3461, %v3723
  %v3968 = vadd.f32 %v3462, %v3724
  %v3969 = vadd.f32 %v3463, %v3725
  %v3970 = vadd.f32 %v3464, %v3726
  %v3971 = vadd.f32 %v3465, %v3727
  %v3972 = vadd.f32 %v3466, %v3728
  %v3973 = vadd.f32 %v3467, %v3729
  %v3974 = vadd.f32 %v3468, %v3730
  %v3975 = vadd.f32 %v3469, %v3731
  %v3976 = vadd.f32 %v3470, %v3732
  %v3977 = vadd.f32 %v3471, %v3733
  %v3978 = vadd.f32 %v3472, %v3734
  %v3979 = vadd.f32 %v3473, %v3735
  %v3980 = vadd.f32 %v3474, %v3736
  %v3981 = vadd.f32 %v3475, %v3737
  %v3982 = vadd.f32 %v3476, %v3738
  %v3983 = vadd.f32 %v3477, %v3739
  %v3984 = vadd.f32 %v3478, %v3740
  %v3985 = vadd.f32 %v3479, %v3741
  %v3986 = vadd.f32 %v3480, %v3742
  %v3987 = vadd.f32 %v3481, %v3743
  %v3988 = vadd.f32 %v3482, %v3744
  %v3989 = vadd.f32 %v3483, %v3745
  %v3990 = vadd.f32 %v3484, %v3746
  %v3991 = vadd.f32 %v3485, %v3747
  %v3992 = vadd.f32 %v3486, %v3748
  %v3993 = vadd.f32 %v3487, %v3749
  %v3994 = vadd.f32 %v3488, %v3750
  %v3995 = vadd.f32 %v3489, %v3751
  %v3996 = vadd.f32 %v3490, %v3752
  %v3997 = vadd.f32 %v3491, %v3753
  %v3998 = vadd.f32 %v3492, %v3754
  %v3999 = vadd.f32 %v3493, %v3755
  %v4000 = vadd.f32 %v3494, %v3756
  %v4001 = vadd.f32 %v3495, %v3757
  %v4002 = vadd.f32 %v3496, %v3758
  %v4003 = vadd.f32 %v3497, %v3759
  %v4004 = vadd.f32 %v3498, %v3760
  %v4005 = vadd.f32 %v3499, %v3761
  %v4006 = vadd.f32 %v3500, %v3762
  %v4007 = vadd.f32 %v3501, %v3763
  %v4008 = vadd.f32 %v3502, %v3764
  %v4009 = vadd.f32 %v3503, %v3765
  %v4010 = vadd.f32 %v3504, %v3766
  %v4011 = vadd.f32 %v3505, %v3767
  %v4012 = vadd.f32 %v3506, %v3768
  %v4013 = vadd.f32 %v3507, %v3769
  %v4014 = vadd.f32 %v3508, %v3770
  %v4015 = vadd.f32 %v3509, %v3771
  %v4016 = vadd.f32 %v3510, %v3772
  %v4017 = vadd.f32 %v3511, %v3773
  %v4018 = vadd.f32 %v3512, %v3774
  %v4019 = vadd.f32 %v3513, %v3775
  %v4020 = vadd.f32 %v3514, %v3776
  %v4021 = vadd.f32 %v3515, %v3777
  %v4022 = vadd.f32 %v3516, %v3778
  %v4023 = vadd.f32 %v3517, %v3779
  %v4024 = vadd.f32 %v3518, %v3780
  %v4025 = vadd.f32 %v3519, %v3781
  %v4026 = vadd.f32 %v3520, %v3782
  %v4027 = vadd.f32 %v3521, %v3783
  %v4028 = vadd.f32 %v3522, %v3784
  %v4029 = vadd.f32 %v3523, %v3785
  %v4030 = vadd.f32 %v3524, %v3786
  %v4031 = vadd.f32 %v3525, %v3787
  %v4032 = vadd.f32 %v3526, %v3788
  %v4033 = vadd.f32 %v3527, %v3789
  %v4034 = vadd.f32 %v3528, %v3790
  %v4035 = vadd.f32 %v3529, %v3791
  %v4036 = vadd.f32 %v3530, %v3792
  %v4037 = vadd.f32 %v3531, %v3793
  %v4038 = vadd.f32 %v3532, %v3794
  %v4039 = vadd.f32 %v3533, %v3795
  %v4040 = vadd.f32 %v3534, %v3796
  %v4041 = vadd.f32 %v3535, %v3797
  %v4042 = vadd.f32 %v3536, %v3798
  %v4043 = vadd.f32 %v3537, %v3799
  %v4044 = vadd.f32 %v3538, %v3800
  %v4045 = vadd.f32 %v3539, %v3801
  %v4046 = vadd.f32 %v3540, %v3802
  %s4047 = scalar_lea.vmem %s1, 5
  %v4048 = vld [vmem:[%s4047] sm:$0x1]
  %4050 = vset.pattern.permute.xlu0 0
  %4051 = vperm.xlu0 %4050, %v306
  %v4052 = vpop.permute.xlu0 %4051
  %4055 = vset.pattern.permute.xlu0 0
  %4056 = vperm.xlu0 %4055, %v307
  %v4057 = vpop.permute.xlu0 %4056
  %v4060 = vlaneseq
  %v4061 = vshrl.u32 %v4060, 7
  %v4062 = vsub.s32 0, %v4061
  %v4063 = vrot.slane %v4048, %v4062
  %v4065 = vmul.f32 %v362, %v4063
  %v4066 = vmul.f32 %v367, %v4063
  %v4067 = vmul.f32 %v372, %v4063
  %v4068 = vmul.f32 %v377, %v4063
  %v4069 = vmul.f32 %v382, %v4063
  %v4070 = vmul.f32 %v387, %v4063
  %v4071 = vmul.f32 %v392, %v4063
  %v4072 = vmul.f32 %v397, %v4063
  %v4073 = vmul.f32 %v402, %v4063
  %v4074 = vmul.f32 %v407, %v4063
  %v4075 = vmul.f32 %v412, %v4063
  %v4076 = vmul.f32 %v417, %v4063
  %v4077 = vmul.f32 %v422, %v4063
  %v4078 = vmul.f32 %v427, %v4063
  %v4079 = vmul.f32 %v432, %v4063
  %v4080 = vmul.f32 %v437, %v4063
  %v4081 = vmul.f32 %v442, %v4063
  %v4082 = vmul.f32 %v447, %v4063
  %v4083 = vmul.f32 %v452, %v4063
  %v4084 = vmul.f32 %v457, %v4063
  %v4085 = vmul.f32 %v462, %v4063
  %v4086 = vmul.f32 %v467, %v4063
  %v4087 = vmul.f32 %v472, %v4063
  %v4088 = vmul.f32 %v477, %v4063
  %v4089 = vmul.f32 %v482, %v4063
  %v4090 = vmul.f32 %v487, %v4063
  %v4091 = vmul.f32 %v492, %v4063
  %v4092 = vmul.f32 %v497, %v4063
  %v4093 = vmul.f32 %v502, %v4063
  %v4094 = vmul.f32 %v507, %v4063
  %v4095 = vmul.f32 %v512, %v4063
  %v4096 = vmul.f32 %v517, %v4063
  %v4097 = vmul.f32 %v522, %v4063
  %v4098 = vmul.f32 %v527, %v4063
  %v4099 = vmul.f32 %v532, %v4063
  %v4100 = vmul.f32 %v537, %v4063
  %v4101 = vmul.f32 %v542, %v4063
  %v4102 = vmul.f32 %v547, %v4063
  %v4103 = vmul.f32 %v552, %v4063
  %v4104 = vmul.f32 %v557, %v4063
  %v4105 = vmul.f32 %v562, %v4063
  %v4106 = vmul.f32 %v567, %v4063
  %v4107 = vmul.f32 %v572, %v4063
  %v4108 = vmul.f32 %v577, %v4063
  %v4109 = vmul.f32 %v582, %v4063
  %v4110 = vmul.f32 %v587, %v4063
  %v4111 = vmul.f32 %v592, %v4063
  %v4112 = vmul.f32 %v597, %v4063
  %v4113 = vmul.f32 %v602, %v4063
  %v4114 = vmul.f32 %v607, %v4063
  %v4115 = vmul.f32 %v612, %v4063
  %v4116 = vmul.f32 %v617, %v4063
  %v4117 = vmul.f32 %v622, %v4063
  %v4118 = vmul.f32 %v627, %v4063
  %v4119 = vmul.f32 %v632, %v4063
  %v4120 = vmul.f32 %v637, %v4063
  %v4121 = vmul.f32 %v642, %v4063
  %v4122 = vmul.f32 %v647, %v4063
  %v4123 = vmul.f32 %v652, %v4063
  %v4124 = vmul.f32 %v657, %v4063
  %v4125 = vmul.f32 %v662, %v4063
  %v4126 = vmul.f32 %v667, %v4063
  %v4127 = vmul.f32 %v672, %v4063
  %v4128 = vmul.f32 %v677, %v4063
  %v4129 = vmul.f32 %v682, %v4063
  %v4130 = vmul.f32 %v687, %v4063
  %v4131 = vmul.f32 %v692, %v4063
  %v4132 = vmul.f32 %v697, %v4063
  %v4133 = vmul.f32 %v702, %v4063
  %v4134 = vmul.f32 %v707, %v4063
  %v4135 = vmul.f32 %v712, %v4063
  %v4136 = vmul.f32 %v717, %v4063
  %v4137 = vmul.f32 %v722, %v4063
  %v4138 = vmul.f32 %v727, %v4063
  %v4139 = vmul.f32 %v732, %v4063
  %v4140 = vmul.f32 %v737, %v4063
  %v4141 = vmul.f32 %v742, %v4063
  %v4142 = vmul.f32 %v747, %v4063
  %v4143 = vmul.f32 %v752, %v4063
  %v4144 = vmul.f32 %v757, %v4063
  %v4145 = vmul.f32 %v762, %v4063
  %v4146 = vmul.f32 %v767, %v4063
  %v4147 = vmul.f32 %v772, %v4063
  %v4148 = vmul.f32 %v777, %v4063
  %v4149 = vmul.f32 %v782, %v4063
  %v4150 = vmul.f32 %v787, %v4063
  %v4151 = vmul.f32 %v792, %v4063
  %v4152 = vmul.f32 %v797, %v4063
  %v4153 = vmul.f32 %v802, %v4063
  %v4154 = vmul.f32 %v807, %v4063
  %v4155 = vmul.f32 %v812, %v4063
  %v4156 = vmul.f32 %v817, %v4063
  %v4157 = vmul.f32 %v822, %v4063
  %v4158 = vmul.f32 %v827, %v4063
  %v4159 = vmul.f32 %v832, %v4063
  %v4160 = vmul.f32 %v837, %v4063
  %v4161 = vmul.f32 %v842, %v4063
  %v4162 = vmul.f32 %v847, %v4063
  %v4163 = vmul.f32 %v852, %v4063
  %v4164 = vmul.f32 %v857, %v4063
  %v4165 = vmul.f32 %v862, %v4063
  %v4166 = vmul.f32 %v867, %v4063
  %v4167 = vmul.f32 %v872, %v4063
  %v4168 = vmul.f32 %v877, %v4063
  %v4169 = vmul.f32 %v882, %v4063
  %v4170 = vmul.f32 %v887, %v4063
  %v4171 = vmul.f32 %v892, %v4063
  %v4172 = vmul.f32 %v897, %v4063
  %v4173 = vmul.f32 %v902, %v4063
  %v4174 = vmul.f32 %v907, %v4063
  %v4175 = vmul.f32 %v912, %v4063
  %v4176 = vmul.f32 %v917, %v4063
  %v4177 = vmul.f32 %v922, %v4063
  %v4178 = vmul.f32 %v927, %v4063
  %v4179 = vmul.f32 %v932, %v4063
  %v4180 = vmul.f32 %v937, %v4063
  %v4181 = vmul.f32 %v942, %v4063
  %v4182 = vmul.f32 %v947, %v4063
  %v4183 = vmul.f32 %v952, %v4063
  %v4184 = vmul.f32 %v957, %v4063
  %v4185 = vmul.f32 %v962, %v4063
  %v4186 = vmul.f32 %v967, %v4063
  %v4187 = vmul.f32 %v972, %v4063
  %v4188 = vmul.f32 %v977, %v4063
  %v4189 = vmul.f32 %v982, %v4063
  %v4190 = vmul.f32 %v987, %v4063
  %v4191 = vmul.f32 %v992, %v4063
  %v4192 = vmul.f32 %v997, %v4063
  %v4193 = vmul.f32 %v1002, %v4063
  %v4194 = vmul.f32 %v1007, %v4063
  %v4195 = vmul.f32 %v1012, %v4063
  %v4196 = vmul.f32 %v1017, %v4063
  %v4197 = vmul.f32 %v1022, %v4063
  %v4198 = vmul.f32 %v1027, %v4063
  %v4199 = vmul.f32 %v1032, %v4063
  %v4200 = vmul.f32 %v1037, %v4063
  %v4201 = vmul.f32 %v1042, %v4063
  %v4202 = vmul.f32 %v1047, %v4063
  %v4203 = vmul.f32 %v1052, %v4063
  %v4204 = vmul.f32 %v1057, %v4063
  %v4205 = vmul.f32 %v1062, %v4063
  %v4206 = vmul.f32 %v1067, %v4063
  %v4207 = vmul.f32 %v1072, %v4063
  %v4208 = vmul.f32 %v1077, %v4063
  %v4209 = vmul.f32 %v1082, %v4063
  %v4210 = vmul.f32 %v1087, %v4063
  %v4211 = vmul.f32 %v1092, %v4063
  %v4212 = vmul.f32 %v1097, %v4063
  %v4213 = vmul.f32 %v1102, %v4063
  %v4214 = vmul.f32 %v1107, %v4063
  %v4215 = vmul.f32 %v1112, %v4063
  %v4216 = vmul.f32 %v1117, %v4063
  %v4217 = vmul.f32 %v1122, %v4063
  %v4218 = vmul.f32 %v1127, %v4063
  %v4219 = vmul.f32 %v1132, %v4063
  %v4220 = vmul.f32 %v1137, %v4063
  %v4221 = vmul.f32 %v1142, %v4063
  %v4222 = vmul.f32 %v1147, %v4063
  %v4223 = vmul.f32 %v1152, %v4063
  %v4224 = vmul.f32 %v1157, %v4063
  %v4225 = vmul.f32 %v1162, %v4063
  %v4226 = vmul.f32 %v1167, %v4063
  %v4227 = vmul.f32 %v1172, %v4063
  %v4228 = vmul.f32 %v1177, %v4063
  %v4229 = vmul.f32 %v1182, %v4063
  %v4230 = vmul.f32 %v1187, %v4063
  %v4231 = vmul.f32 %v1192, %v4063
  %v4232 = vmul.f32 %v1197, %v4063
  %v4233 = vmul.f32 %v1202, %v4063
  %v4234 = vmul.f32 %v1207, %v4063
  %v4235 = vmul.f32 %v1212, %v4063
  %v4236 = vmul.f32 %v1217, %v4063
  %v4237 = vmul.f32 %v1222, %v4063
  %v4238 = vmul.f32 %v1227, %v4063
  %v4239 = vmul.f32 %v1232, %v4063
  %v4240 = vmul.f32 %v1237, %v4063
  %v4241 = vmul.f32 %v1242, %v4063
  %v4242 = vmul.f32 %v1247, %v4063
  %v4243 = vmul.f32 %v1252, %v4063
  %v4244 = vmul.f32 %v1257, %v4063
  %v4245 = vmul.f32 %v1262, %v4063
  %v4246 = vmul.f32 %v1267, %v4063
  %v4247 = vmul.f32 %v1272, %v4063
  %v4248 = vmul.f32 %v1277, %v4063
  %v4249 = vmul.f32 %v1282, %v4063
  %v4250 = vmul.f32 %v1287, %v4063
  %v4251 = vmul.f32 %v1292, %v4063
  %v4252 = vmul.f32 %v1297, %v4063
  %v4253 = vmul.f32 %v1302, %v4063
  %v4254 = vmul.f32 %v1307, %v4063
  %v4255 = vmul.f32 %v1312, %v4063
  %v4256 = vmul.f32 %v1317, %v4063
  %v4257 = vmul.f32 %v1322, %v4063
  %v4258 = vmul.f32 %v1327, %v4063
  %v4259 = vmul.f32 %v1332, %v4063
  %v4260 = vmul.f32 %v1337, %v4063
  %v4261 = vmul.f32 %v1342, %v4063
  %v4262 = vmul.f32 %v1347, %v4063
  %v4263 = vmul.f32 %v1352, %v4063
  %v4264 = vmul.f32 %v1357, %v4063
  %v4265 = vmul.f32 %v1362, %v4063
  %v4266 = vmul.f32 %v1367, %v4063
  %v4267 = vmul.f32 %v1372, %v4063
  %v4268 = vmul.f32 %v1377, %v4063
  %v4269 = vmul.f32 %v1382, %v4063
  %v4270 = vmul.f32 %v1387, %v4063
  %v4271 = vmul.f32 %v1392, %v4063
  %v4272 = vmul.f32 %v1397, %v4063
  %v4273 = vmul.f32 %v1402, %v4063
  %v4274 = vmul.f32 %v1407, %v4063
  %v4275 = vmul.f32 %v1412, %v4063
  %v4276 = vmul.f32 %v1417, %v4063
  %v4277 = vmul.f32 %v1422, %v4063
  %v4278 = vmul.f32 %v1427, %v4063
  %v4279 = vmul.f32 %v1432, %v4063
  %v4280 = vmul.f32 %v1437, %v4063
  %v4281 = vmul.f32 %v1442, %v4063
  %v4282 = vmul.f32 %v1447, %v4063
  %v4283 = vmul.f32 %v1452, %v4063
  %v4284 = vmul.f32 %v1457, %v4063
  %v4285 = vmul.f32 %v1462, %v4063
  %v4286 = vmul.f32 %v1467, %v4063
  %v4287 = vmul.f32 %v1472, %v4063
  %v4288 = vmul.f32 %v1477, %v4063
  %v4289 = vmul.f32 %v1482, %v4063
  %v4290 = vmul.f32 %v1487, %v4063
  %v4291 = vmul.f32 %v1492, %v4063
  %v4292 = vmul.f32 %v1497, %v4063
  %v4293 = vmul.f32 %v1502, %v4063
  %v4294 = vmul.f32 %v1507, %v4063
  %v4295 = vmul.f32 %v1512, %v4063
  %v4296 = vmul.f32 %v1517, %v4063
  %v4297 = vmul.f32 %v1522, %v4063
  %v4298 = vmul.f32 %v1527, %v4063
  %v4299 = vmul.f32 %v2028, %v4063
  %v4300 = vmul.f32 %v2033, %v4063
  %v4301 = vmul.f32 %v2534, %v4063
  %v4302 = vmul.f32 %v2539, %v4063
  %v4303 = vmul.f32 %v3040, %v4063
  %v4304 = vmul.f32 %v3045, %v4063
  %v4305 = vmul.f32 %v3546, %v4063
  %v4306 = vmul.f32 %v3551, %v4063
  %v4307 = vmul.f32 %v4052, %v4063
  %v4308 = vmul.f32 %v4057, %v4063
  %v4309 = vadd.f32 %v3803, %v4065
  %v4310 = vadd.f32 %v3804, %v4066
  %v4311 = vadd.f32 %v3805, %v4067
  %v4312 = vadd.f32 %v3806, %v4068
  %v4313 = vadd.f32 %v3807, %v4069
  %v4314 = vadd.f32 %v3808, %v4070
  %v4315 = vadd.f32 %v3809, %v4071
  %v4316 = vadd.f32 %v3810, %v4072
  %v4317 = vadd.f32 %v3811, %v4073
  %v4318 = vadd.f32 %v3812, %v4074
  %v4319 = vadd.f32 %v3813, %v4075
  %v4320 = vadd.f32 %v3814, %v4076
  %v4321 = vadd.f32 %v3815, %v4077
  %v4322 = vadd.f32 %v3816, %v4078
  %v4323 = vadd.f32 %v3817, %v4079
  %v4324 = vadd.f32 %v3818, %v4080
  %v4325 = vadd.f32 %v3819, %v4081
  %v4326 = vadd.f32 %v3820, %v4082
  %v4327 = vadd.f32 %v3821, %v4083
  %v4328 = vadd.f32 %v3822, %v4084
  %v4329 = vadd.f32 %v3823, %v4085
  %v4330 = vadd.f32 %v3824, %v4086
  %v4331 = vadd.f32 %v3825, %v4087
  %v4332 = vadd.f32 %v3826, %v4088
  %v4333 = vadd.f32 %v3827, %v4089
  %v4334 = vadd.f32 %v3828, %v4090
  %v4335 = vadd.f32 %v3829, %v4091
  %v4336 = vadd.f32 %v3830, %v4092
  %v4337 = vadd.f32 %v3831, %v4093
  %v4338 = vadd.f32 %v3832, %v4094
  %v4339 = vadd.f32 %v3833, %v4095
  %v4340 = vadd.f32 %v3834, %v4096
  %v4341 = vadd.f32 %v3835, %v4097
  %v4342 = vadd.f32 %v3836, %v4098
  %v4343 = vadd.f32 %v3837, %v4099
  %v4344 = vadd.f32 %v3838, %v4100
  %v4345 = vadd.f32 %v3839, %v4101
  %v4346 = vadd.f32 %v3840, %v4102
  %v4347 = vadd.f32 %v3841, %v4103
  %v4348 = vadd.f32 %v3842, %v4104
  %v4349 = vadd.f32 %v3843, %v4105
  %v4350 = vadd.f32 %v3844, %v4106
  %v4351 = vadd.f32 %v3845, %v4107
  %v4352 = vadd.f32 %v3846, %v4108
  %v4353 = vadd.f32 %v3847, %v4109
  %v4354 = vadd.f32 %v3848, %v4110
  %v4355 = vadd.f32 %v3849, %v4111
  %v4356 = vadd.f32 %v3850, %v4112
  %v4357 = vadd.f32 %v3851, %v4113
  %v4358 = vadd.f32 %v3852, %v4114
  %v4359 = vadd.f32 %v3853, %v4115
  %v4360 = vadd.f32 %v3854, %v4116
  %v4361 = vadd.f32 %v3855, %v4117
  %v4362 = vadd.f32 %v3856, %v4118
  %v4363 = vadd.f32 %v3857, %v4119
  %v4364 = vadd.f32 %v3858, %v4120
  %v4365 = vadd.f32 %v3859, %v4121
  %v4366 = vadd.f32 %v3860, %v4122
  %v4367 = vadd.f32 %v3861, %v4123
  %v4368 = vadd.f32 %v3862, %v4124
  %v4369 = vadd.f32 %v3863, %v4125
  %v4370 = vadd.f32 %v3864, %v4126
  %v4371 = vadd.f32 %v3865, %v4127
  %v4372 = vadd.f32 %v3866, %v4128
  %v4373 = vadd.f32 %v3867, %v4129
  %v4374 = vadd.f32 %v3868, %v4130
  %v4375 = vadd.f32 %v3869, %v4131
  %v4376 = vadd.f32 %v3870, %v4132
  %v4377 = vadd.f32 %v3871, %v4133
  %v4378 = vadd.f32 %v3872, %v4134
  %v4379 = vadd.f32 %v3873, %v4135
  %v4380 = vadd.f32 %v3874, %v4136
  %v4381 = vadd.f32 %v3875, %v4137
  %v4382 = vadd.f32 %v3876, %v4138
  %v4383 = vadd.f32 %v3877, %v4139
  %v4384 = vadd.f32 %v3878, %v4140
  %v4385 = vadd.f32 %v3879, %v4141
  %v4386 = vadd.f32 %v3880, %v4142
  %v4387 = vadd.f32 %v3881, %v4143
  %v4388 = vadd.f32 %v3882, %v4144
  %v4389 = vadd.f32 %v3883, %v4145
  %v4390 = vadd.f32 %v3884, %v4146
  %v4391 = vadd.f32 %v3885, %v4147
  %v4392 = vadd.f32 %v3886, %v4148
  %v4393 = vadd.f32 %v3887, %v4149
  %v4394 = vadd.f32 %v3888, %v4150
  %v4395 = vadd.f32 %v3889, %v4151
  %v4396 = vadd.f32 %v3890, %v4152
  %v4397 = vadd.f32 %v3891, %v4153
  %v4398 = vadd.f32 %v3892, %v4154
  %v4399 = vadd.f32 %v3893, %v4155
  %v4400 = vadd.f32 %v3894, %v4156
  %v4401 = vadd.f32 %v3895, %v4157
  %v4402 = vadd.f32 %v3896, %v4158
  %v4403 = vadd.f32 %v3897, %v4159
  %v4404 = vadd.f32 %v3898, %v4160
  %v4405 = vadd.f32 %v3899, %v4161
  %v4406 = vadd.f32 %v3900, %v4162
  %v4407 = vadd.f32 %v3901, %v4163
  %v4408 = vadd.f32 %v3902, %v4164
  %v4409 = vadd.f32 %v3903, %v4165
  %v4410 = vadd.f32 %v3904, %v4166
  %v4411 = vadd.f32 %v3905, %v4167
  %v4412 = vadd.f32 %v3906, %v4168
  %v4413 = vadd.f32 %v3907, %v4169
  %v4414 = vadd.f32 %v3908, %v4170
  %v4415 = vadd.f32 %v3909, %v4171
  %v4416 = vadd.f32 %v3910, %v4172
  %v4417 = vadd.f32 %v3911, %v4173
  %v4418 = vadd.f32 %v3912, %v4174
  %v4419 = vadd.f32 %v3913, %v4175
  %v4420 = vadd.f32 %v3914, %v4176
  %v4421 = vadd.f32 %v3915, %v4177
  %v4422 = vadd.f32 %v3916, %v4178
  %v4423 = vadd.f32 %v3917, %v4179
  %v4424 = vadd.f32 %v3918, %v4180
  %v4425 = vadd.f32 %v3919, %v4181
  %v4426 = vadd.f32 %v3920, %v4182
  %v4427 = vadd.f32 %v3921, %v4183
  %v4428 = vadd.f32 %v3922, %v4184
  %v4429 = vadd.f32 %v3923, %v4185
  %v4430 = vadd.f32 %v3924, %v4186
  %v4431 = vadd.f32 %v3925, %v4187
  %v4432 = vadd.f32 %v3926, %v4188
  %v4433 = vadd.f32 %v3927, %v4189
  %v4434 = vadd.f32 %v3928, %v4190
  %v4435 = vadd.f32 %v3929, %v4191
  %v4436 = vadd.f32 %v3930, %v4192
  %v4437 = vadd.f32 %v3931, %v4193
  %v4438 = vadd.f32 %v3932, %v4194
  %v4439 = vadd.f32 %v3933, %v4195
  %v4440 = vadd.f32 %v3934, %v4196
  %v4441 = vadd.f32 %v3935, %v4197
  %v4442 = vadd.f32 %v3936, %v4198
  %v4443 = vadd.f32 %v3937, %v4199
  %v4444 = vadd.f32 %v3938, %v4200
  %v4445 = vadd.f32 %v3939, %v4201
  %v4446 = vadd.f32 %v3940, %v4202
  %v4447 = vadd.f32 %v3941, %v4203
  %v4448 = vadd.f32 %v3942, %v4204
  %v4449 = vadd.f32 %v3943, %v4205
  %v4450 = vadd.f32 %v3944, %v4206
  %v4451 = vadd.f32 %v3945, %v4207
  %v4452 = vadd.f32 %v3946, %v4208
  %v4453 = vadd.f32 %v3947, %v4209
  %v4454 = vadd.f32 %v3948, %v4210
  %v4455 = vadd.f32 %v3949, %v4211
  %v4456 = vadd.f32 %v3950, %v4212
  %v4457 = vadd.f32 %v3951, %v4213
  %v4458 = vadd.f32 %v3952, %v4214
  %v4459 = vadd.f32 %v3953, %v4215
  %v4460 = vadd.f32 %v3954, %v4216
  %v4461 = vadd.f32 %v3955, %v4217
  %v4462 = vadd.f32 %v3956, %v4218
  %v4463 = vadd.f32 %v3957, %v4219
  %v4464 = vadd.f32 %v3958, %v4220
  %v4465 = vadd.f32 %v3959, %v4221
  %v4466 = vadd.f32 %v3960, %v4222
  %v4467 = vadd.f32 %v3961, %v4223
  %v4468 = vadd.f32 %v3962, %v4224
  %v4469 = vadd.f32 %v3963, %v4225
  %v4470 = vadd.f32 %v3964, %v4226
  %v4471 = vadd.f32 %v3965, %v4227
  %v4472 = vadd.f32 %v3966, %v4228
  %v4473 = vadd.f32 %v3967, %v4229
  %v4474 = vadd.f32 %v3968, %v4230
  %v4475 = vadd.f32 %v3969, %v4231
  %v4476 = vadd.f32 %v3970, %v4232
  %v4477 = vadd.f32 %v3971, %v4233
  %v4478 = vadd.f32 %v3972, %v4234
  %v4479 = vadd.f32 %v3973, %v4235
  %v4480 = vadd.f32 %v3974, %v4236
  %v4481 = vadd.f32 %v3975, %v4237
  %v4482 = vadd.f32 %v3976, %v4238
  %v4483 = vadd.f32 %v3977, %v4239
  %v4484 = vadd.f32 %v3978, %v4240
  %v4485 = vadd.f32 %v3979, %v4241
  %v4486 = vadd.f32 %v3980, %v4242
  %v4487 = vadd.f32 %v3981, %v4243
  %v4488 = vadd.f32 %v3982, %v4244
  %v4489 = vadd.f32 %v3983, %v4245
  %v4490 = vadd.f32 %v3984, %v4246
  %v4491 = vadd.f32 %v3985, %v4247
  %v4492 = vadd.f32 %v3986, %v4248
  %v4493 = vadd.f32 %v3987, %v4249
  %v4494 = vadd.f32 %v3988, %v4250
  %v4495 = vadd.f32 %v3989, %v4251
  %v4496 = vadd.f32 %v3990, %v4252
  %v4497 = vadd.f32 %v3991, %v4253
  %v4498 = vadd.f32 %v3992, %v4254
  %v4499 = vadd.f32 %v3993, %v4255
  %v4500 = vadd.f32 %v3994, %v4256
  %v4501 = vadd.f32 %v3995, %v4257
  %v4502 = vadd.f32 %v3996, %v4258
  %v4503 = vadd.f32 %v3997, %v4259
  %v4504 = vadd.f32 %v3998, %v4260
  %v4505 = vadd.f32 %v3999, %v4261
  %v4506 = vadd.f32 %v4000, %v4262
  %v4507 = vadd.f32 %v4001, %v4263
  %v4508 = vadd.f32 %v4002, %v4264
  %v4509 = vadd.f32 %v4003, %v4265
  %v4510 = vadd.f32 %v4004, %v4266
  %v4511 = vadd.f32 %v4005, %v4267
  %v4512 = vadd.f32 %v4006, %v4268
  %v4513 = vadd.f32 %v4007, %v4269
  %v4514 = vadd.f32 %v4008, %v4270
  %v4515 = vadd.f32 %v4009, %v4271
  %v4516 = vadd.f32 %v4010, %v4272
  %v4517 = vadd.f32 %v4011, %v4273
  %v4518 = vadd.f32 %v4012, %v4274
  %v4519 = vadd.f32 %v4013, %v4275
  %v4520 = vadd.f32 %v4014, %v4276
  %v4521 = vadd.f32 %v4015, %v4277
  %v4522 = vadd.f32 %v4016, %v4278
  %v4523 = vadd.f32 %v4017, %v4279
  %v4524 = vadd.f32 %v4018, %v4280
  %v4525 = vadd.f32 %v4019, %v4281
  %v4526 = vadd.f32 %v4020, %v4282
  %v4527 = vadd.f32 %v4021, %v4283
  %v4528 = vadd.f32 %v4022, %v4284
  %v4529 = vadd.f32 %v4023, %v4285
  %v4530 = vadd.f32 %v4024, %v4286
  %v4531 = vadd.f32 %v4025, %v4287
  %v4532 = vadd.f32 %v4026, %v4288
  %v4533 = vadd.f32 %v4027, %v4289
  %v4534 = vadd.f32 %v4028, %v4290
  %v4535 = vadd.f32 %v4029, %v4291
  %v4536 = vadd.f32 %v4030, %v4292
  %v4537 = vadd.f32 %v4031, %v4293
  %v4538 = vadd.f32 %v4032, %v4294
  %v4539 = vadd.f32 %v4033, %v4295
  %v4540 = vadd.f32 %v4034, %v4296
  %v4541 = vadd.f32 %v4035, %v4297
  %v4542 = vadd.f32 %v4036, %v4298
  %v4543 = vadd.f32 %v4037, %v4299
  %v4544 = vadd.f32 %v4038, %v4300
  %v4545 = vadd.f32 %v4039, %v4301
  %v4546 = vadd.f32 %v4040, %v4302
  %v4547 = vadd.f32 %v4041, %v4303
  %v4548 = vadd.f32 %v4042, %v4304
  %v4549 = vadd.f32 %v4043, %v4305
  %v4550 = vadd.f32 %v4044, %v4306
  %v4551 = vadd.f32 %v4045, %v4307
  %v4552 = vadd.f32 %v4046, %v4308
  %v4553 = vld [vmem:[%s2] sm:$0x1]
  %v4555 = vlaneseq
  %v4556 = vshrl.u32 %v4555, 7
  %v4557 = vsub.s32 0, %v4556
  %v4558 = vrot.slane %v4553, %v4557
  %v4560 = vmul.f32 %v4309, %v4558
  %v4561 = vmul.f32 %v4310, %v4558
  %v4562 = vmul.f32 %v4311, %v4558
  %v4563 = vmul.f32 %v4312, %v4558
  %v4564 = vmul.f32 %v4313, %v4558
  %v4565 = vmul.f32 %v4314, %v4558
  %v4566 = vmul.f32 %v4315, %v4558
  %v4567 = vmul.f32 %v4316, %v4558
  %v4568 = vmul.f32 %v4317, %v4558
  %v4569 = vmul.f32 %v4318, %v4558
  %v4570 = vmul.f32 %v4319, %v4558
  %v4571 = vmul.f32 %v4320, %v4558
  %v4572 = vmul.f32 %v4321, %v4558
  %v4573 = vmul.f32 %v4322, %v4558
  %v4574 = vmul.f32 %v4323, %v4558
  %v4575 = vmul.f32 %v4324, %v4558
  %v4576 = vmul.f32 %v4325, %v4558
  %v4577 = vmul.f32 %v4326, %v4558
  %v4578 = vmul.f32 %v4327, %v4558
  %v4579 = vmul.f32 %v4328, %v4558
  %v4580 = vmul.f32 %v4329, %v4558
  %v4581 = vmul.f32 %v4330, %v4558
  %v4582 = vmul.f32 %v4331, %v4558
  %v4583 = vmul.f32 %v4332, %v4558
  %v4584 = vmul.f32 %v4333, %v4558
  %v4585 = vmul.f32 %v4334, %v4558
  %v4586 = vmul.f32 %v4335, %v4558
  %v4587 = vmul.f32 %v4336, %v4558
  %v4588 = vmul.f32 %v4337, %v4558
  %v4589 = vmul.f32 %v4338, %v4558
  %v4590 = vmul.f32 %v4339, %v4558
  %v4591 = vmul.f32 %v4340, %v4558
  %v4592 = vmul.f32 %v4341, %v4558
  %v4593 = vmul.f32 %v4342, %v4558
  %v4594 = vmul.f32 %v4343, %v4558
  %v4595 = vmul.f32 %v4344, %v4558
  %v4596 = vmul.f32 %v4345, %v4558
  %v4597 = vmul.f32 %v4346, %v4558
  %v4598 = vmul.f32 %v4347, %v4558
  %v4599 = vmul.f32 %v4348, %v4558
  %v4600 = vmul.f32 %v4349, %v4558
  %v4601 = vmul.f32 %v4350, %v4558
  %v4602 = vmul.f32 %v4351, %v4558
  %v4603 = vmul.f32 %v4352, %v4558
  %v4604 = vmul.f32 %v4353, %v4558
  %v4605 = vmul.f32 %v4354, %v4558
  %v4606 = vmul.f32 %v4355, %v4558
  %v4607 = vmul.f32 %v4356, %v4558
  %v4608 = vmul.f32 %v4357, %v4558
  %v4609 = vmul.f32 %v4358, %v4558
  %v4610 = vmul.f32 %v4359, %v4558
  %v4611 = vmul.f32 %v4360, %v4558
  %v4612 = vmul.f32 %v4361, %v4558
  %v4613 = vmul.f32 %v4362, %v4558
  %v4614 = vmul.f32 %v4363, %v4558
  %v4615 = vmul.f32 %v4364, %v4558
  %v4616 = vmul.f32 %v4365, %v4558
  %v4617 = vmul.f32 %v4366, %v4558
  %v4618 = vmul.f32 %v4367, %v4558
  %v4619 = vmul.f32 %v4368, %v4558
  %v4620 = vmul.f32 %v4369, %v4558
  %v4621 = vmul.f32 %v4370, %v4558
  %v4622 = vmul.f32 %v4371, %v4558
  %v4623 = vmul.f32 %v4372, %v4558
  %v4624 = vmul.f32 %v4373, %v4558
  %v4625 = vmul.f32 %v4374, %v4558
  %v4626 = vmul.f32 %v4375, %v4558
  %v4627 = vmul.f32 %v4376, %v4558
  %v4628 = vmul.f32 %v4377, %v4558
  %v4629 = vmul.f32 %v4378, %v4558
  %v4630 = vmul.f32 %v4379, %v4558
  %v4631 = vmul.f32 %v4380, %v4558
  %v4632 = vmul.f32 %v4381, %v4558
  %v4633 = vmul.f32 %v4382, %v4558
  %v4634 = vmul.f32 %v4383, %v4558
  %v4635 = vmul.f32 %v4384, %v4558
  %v4636 = vmul.f32 %v4385, %v4558
  %v4637 = vmul.f32 %v4386, %v4558
  %v4638 = vmul.f32 %v4387, %v4558
  %v4639 = vmul.f32 %v4388, %v4558
  %v4640 = vmul.f32 %v4389, %v4558
  %v4641 = vmul.f32 %v4390, %v4558
  %v4642 = vmul.f32 %v4391, %v4558
  %v4643 = vmul.f32 %v4392, %v4558
  %v4644 = vmul.f32 %v4393, %v4558
  %v4645 = vmul.f32 %v4394, %v4558
  %v4646 = vmul.f32 %v4395, %v4558
  %v4647 = vmul.f32 %v4396, %v4558
  %v4648 = vmul.f32 %v4397, %v4558
  %v4649 = vmul.f32 %v4398, %v4558
  %v4650 = vmul.f32 %v4399, %v4558
  %v4651 = vmul.f32 %v4400, %v4558
  %v4652 = vmul.f32 %v4401, %v4558
  %v4653 = vmul.f32 %v4402, %v4558
  %v4654 = vmul.f32 %v4403, %v4558
  %v4655 = vmul.f32 %v4404, %v4558
  %v4656 = vmul.f32 %v4405, %v4558
  %v4657 = vmul.f32 %v4406, %v4558
  %v4658 = vmul.f32 %v4407, %v4558
  %v4659 = vmul.f32 %v4408, %v4558
  %v4660 = vmul.f32 %v4409, %v4558
  %v4661 = vmul.f32 %v4410, %v4558
  %v4662 = vmul.f32 %v4411, %v4558
  %v4663 = vmul.f32 %v4412, %v4558
  %v4664 = vmul.f32 %v4413, %v4558
  %v4665 = vmul.f32 %v4414, %v4558
  %v4666 = vmul.f32 %v4415, %v4558
  %v4667 = vmul.f32 %v4416, %v4558
  %v4668 = vmul.f32 %v4417, %v4558
  %v4669 = vmul.f32 %v4418, %v4558
  %v4670 = vmul.f32 %v4419, %v4558
  %v4671 = vmul.f32 %v4420, %v4558
  %v4672 = vmul.f32 %v4421, %v4558
  %v4673 = vmul.f32 %v4422, %v4558
  %v4674 = vmul.f32 %v4423, %v4558
  %v4675 = vmul.f32 %v4424, %v4558
  %v4676 = vmul.f32 %v4425, %v4558
  %v4677 = vmul.f32 %v4426, %v4558
  %v4678 = vmul.f32 %v4427, %v4558
  %v4679 = vmul.f32 %v4428, %v4558
  %v4680 = vmul.f32 %v4429, %v4558
  %v4681 = vmul.f32 %v4430, %v4558
  %v4682 = vmul.f32 %v4431, %v4558
  %v4683 = vmul.f32 %v4432, %v4558
  %v4684 = vmul.f32 %v4433, %v4558
  %v4685 = vmul.f32 %v4434, %v4558
  %v4686 = vmul.f32 %v4435, %v4558
  %v4687 = vmul.f32 %v4436, %v4558
  %v4688 = vmul.f32 %v4437, %v4558
  %v4689 = vmul.f32 %v4438, %v4558
  %v4690 = vmul.f32 %v4439, %v4558
  %v4691 = vmul.f32 %v4440, %v4558
  %v4692 = vmul.f32 %v4441, %v4558
  %v4693 = vmul.f32 %v4442, %v4558
  %v4694 = vmul.f32 %v4443, %v4558
  %v4695 = vmul.f32 %v4444, %v4558
  %v4696 = vmul.f32 %v4445, %v4558
  %v4697 = vmul.f32 %v4446, %v4558
  %v4698 = vmul.f32 %v4447, %v4558
  %v4699 = vmul.f32 %v4448, %v4558
  %v4700 = vmul.f32 %v4449, %v4558
  %v4701 = vmul.f32 %v4450, %v4558
  %v4702 = vmul.f32 %v4451, %v4558
  %v4703 = vmul.f32 %v4452, %v4558
  %v4704 = vmul.f32 %v4453, %v4558
  %v4705 = vmul.f32 %v4454, %v4558
  %v4706 = vmul.f32 %v4455, %v4558
  %v4707 = vmul.f32 %v4456, %v4558
  %v4708 = vmul.f32 %v4457, %v4558
  %v4709 = vmul.f32 %v4458, %v4558
  %v4710 = vmul.f32 %v4459, %v4558
  %v4711 = vmul.f32 %v4460, %v4558
  %v4712 = vmul.f32 %v4461, %v4558
  %v4713 = vmul.f32 %v4462, %v4558
  %v4714 = vmul.f32 %v4463, %v4558
  %v4715 = vmul.f32 %v4464, %v4558
  %v4716 = vmul.f32 %v4465, %v4558
  %v4717 = vmul.f32 %v4466, %v4558
  %v4718 = vmul.f32 %v4467, %v4558
  %v4719 = vmul.f32 %v4468, %v4558
  %v4720 = vmul.f32 %v4469, %v4558
  %v4721 = vmul.f32 %v4470, %v4558
  %v4722 = vmul.f32 %v4471, %v4558
  %v4723 = vmul.f32 %v4472, %v4558
  %v4724 = vmul.f32 %v4473, %v4558
  %v4725 = vmul.f32 %v4474, %v4558
  %v4726 = vmul.f32 %v4475, %v4558
  %v4727 = vmul.f32 %v4476, %v4558
  %v4728 = vmul.f32 %v4477, %v4558
  %v4729 = vmul.f32 %v4478, %v4558
  %v4730 = vmul.f32 %v4479, %v4558
  %v4731 = vmul.f32 %v4480, %v4558
  %v4732 = vmul.f32 %v4481, %v4558
  %v4733 = vmul.f32 %v4482, %v4558
  %v4734 = vmul.f32 %v4483, %v4558
  %v4735 = vmul.f32 %v4484, %v4558
  %v4736 = vmul.f32 %v4485, %v4558
  %v4737 = vmul.f32 %v4486, %v4558
  %v4738 = vmul.f32 %v4487, %v4558
  %v4739 = vmul.f32 %v4488, %v4558
  %v4740 = vmul.f32 %v4489, %v4558
  %v4741 = vmul.f32 %v4490, %v4558
  %v4742 = vmul.f32 %v4491, %v4558
  %v4743 = vmul.f32 %v4492, %v4558
  %v4744 = vmul.f32 %v4493, %v4558
  %v4745 = vmul.f32 %v4494, %v4558
  %v4746 = vmul.f32 %v4495, %v4558
  %v4747 = vmul.f32 %v4496, %v4558
  %v4748 = vmul.f32 %v4497, %v4558
  %v4749 = vmul.f32 %v4498, %v4558
  %v4750 = vmul.f32 %v4499, %v4558
  %v4751 = vmul.f32 %v4500, %v4558
  %v4752 = vmul.f32 %v4501, %v4558
  %v4753 = vmul.f32 %v4502, %v4558
  %v4754 = vmul.f32 %v4503, %v4558
  %v4755 = vmul.f32 %v4504, %v4558
  %v4756 = vmul.f32 %v4505, %v4558
  %v4757 = vmul.f32 %v4506, %v4558
  %v4758 = vmul.f32 %v4507, %v4558
  %v4759 = vmul.f32 %v4508, %v4558
  %v4760 = vmul.f32 %v4509, %v4558
  %v4761 = vmul.f32 %v4510, %v4558
  %v4762 = vmul.f32 %v4511, %v4558
  %v4763 = vmul.f32 %v4512, %v4558
  %v4764 = vmul.f32 %v4513, %v4558
  %v4765 = vmul.f32 %v4514, %v4558
  %v4766 = vmul.f32 %v4515, %v4558
  %v4767 = vmul.f32 %v4516, %v4558
  %v4768 = vmul.f32 %v4517, %v4558
  %v4769 = vmul.f32 %v4518, %v4558
  %v4770 = vmul.f32 %v4519, %v4558
  %v4771 = vmul.f32 %v4520, %v4558
  %v4772 = vmul.f32 %v4521, %v4558
  %v4773 = vmul.f32 %v4522, %v4558
  %v4774 = vmul.f32 %v4523, %v4558
  %v4775 = vmul.f32 %v4524, %v4558
  %v4776 = vmul.f32 %v4525, %v4558
  %v4777 = vmul.f32 %v4526, %v4558
  %v4778 = vmul.f32 %v4527, %v4558
  %v4779 = vmul.f32 %v4528, %v4558
  %v4780 = vmul.f32 %v4529, %v4558
  %v4781 = vmul.f32 %v4530, %v4558
  %v4782 = vmul.f32 %v4531, %v4558
  %v4783 = vmul.f32 %v4532, %v4558
  %v4784 = vmul.f32 %v4533, %v4558
  %v4785 = vmul.f32 %v4534, %v4558
  %v4786 = vmul.f32 %v4535, %v4558
  %v4787 = vmul.f32 %v4536, %v4558
  %v4788 = vmul.f32 %v4537, %v4558
  %v4789 = vmul.f32 %v4538, %v4558
  %v4790 = vmul.f32 %v4539, %v4558
  %v4791 = vmul.f32 %v4540, %v4558
  %v4792 = vmul.f32 %v4541, %v4558
  %v4793 = vmul.f32 %v4542, %v4558
  %v4794 = vmul.f32 %v4543, %v4558
  %v4795 = vmul.f32 %v4544, %v4558
  %v4796 = vmul.f32 %v4545, %v4558
  %v4797 = vmul.f32 %v4546, %v4558
  %v4798 = vmul.f32 %v4547, %v4558
  %v4799 = vmul.f32 %v4548, %v4558
  %v4800 = vmul.f32 %v4549, %v4558
  %v4801 = vmul.f32 %v4550, %v4558
  %v4802 = vmul.f32 %v4551, %v4558
  %v4803 = vmul.f32 %v4552, %v4558
  %v4804 = vld [vmem:[%s3] sm:$0x1]
  %v4806 = vlaneseq
  %v4807 = vshrl.u32 %v4806, 7
  %v4808 = vsub.s32 0, %v4807
  %v4809 = vrot.slane %v4804, %v4808
  %v4811 = vadd.f32 %v4560, %v4809
  %v4812 = vadd.f32 %v4561, %v4809
  %v4813 = vadd.f32 %v4562, %v4809
  %v4814 = vadd.f32 %v4563, %v4809
  %v4815 = vadd.f32 %v4564, %v4809
  %v4816 = vadd.f32 %v4565, %v4809
  %v4817 = vadd.f32 %v4566, %v4809
  %v4818 = vadd.f32 %v4567, %v4809
  %v4819 = vadd.f32 %v4568, %v4809
  %v4820 = vadd.f32 %v4569, %v4809
  %v4821 = vadd.f32 %v4570, %v4809
  %v4822 = vadd.f32 %v4571, %v4809
  %v4823 = vadd.f32 %v4572, %v4809
  %v4824 = vadd.f32 %v4573, %v4809
  %v4825 = vadd.f32 %v4574, %v4809
  %v4826 = vadd.f32 %v4575, %v4809
  %v4827 = vadd.f32 %v4576, %v4809
  %v4828 = vadd.f32 %v4577, %v4809
  %v4829 = vadd.f32 %v4578, %v4809
  %v4830 = vadd.f32 %v4579, %v4809
  %v4831 = vadd.f32 %v4580, %v4809
  %v4832 = vadd.f32 %v4581, %v4809
  %v4833 = vadd.f32 %v4582, %v4809
  %v4834 = vadd.f32 %v4583, %v4809
  %v4835 = vadd.f32 %v4584, %v4809
  %v4836 = vadd.f32 %v4585, %v4809
  %v4837 = vadd.f32 %v4586, %v4809
  %v4838 = vadd.f32 %v4587, %v4809
  %v4839 = vadd.f32 %v4588, %v4809
  %v4840 = vadd.f32 %v4589, %v4809
  %v4841 = vadd.f32 %v4590, %v4809
  %v4842 = vadd.f32 %v4591, %v4809
  %v4843 = vadd.f32 %v4592, %v4809
  %v4844 = vadd.f32 %v4593, %v4809
  %v4845 = vadd.f32 %v4594, %v4809
  %v4846 = vadd.f32 %v4595, %v4809
  %v4847 = vadd.f32 %v4596, %v4809
  %v4848 = vadd.f32 %v4597, %v4809
  %v4849 = vadd.f32 %v4598, %v4809
  %v4850 = vadd.f32 %v4599, %v4809
  %v4851 = vadd.f32 %v4600, %v4809
  %v4852 = vadd.f32 %v4601, %v4809
  %v4853 = vadd.f32 %v4602, %v4809
  %v4854 = vadd.f32 %v4603, %v4809
  %v4855 = vadd.f32 %v4604, %v4809
  %v4856 = vadd.f32 %v4605, %v4809
  %v4857 = vadd.f32 %v4606, %v4809
  %v4858 = vadd.f32 %v4607, %v4809
  %v4859 = vadd.f32 %v4608, %v4809
  %v4860 = vadd.f32 %v4609, %v4809
  %v4861 = vadd.f32 %v4610, %v4809
  %v4862 = vadd.f32 %v4611, %v4809
  %v4863 = vadd.f32 %v4612, %v4809
  %v4864 = vadd.f32 %v4613, %v4809
  %v4865 = vadd.f32 %v4614, %v4809
  %v4866 = vadd.f32 %v4615, %v4809
  %v4867 = vadd.f32 %v4616, %v4809
  %v4868 = vadd.f32 %v4617, %v4809
  %v4869 = vadd.f32 %v4618, %v4809
  %v4870 = vadd.f32 %v4619, %v4809
  %v4871 = vadd.f32 %v4620, %v4809
  %v4872 = vadd.f32 %v4621, %v4809
  %v4873 = vadd.f32 %v4622, %v4809
  %v4874 = vadd.f32 %v4623, %v4809
  %v4875 = vadd.f32 %v4624, %v4809
  %v4876 = vadd.f32 %v4625, %v4809
  %v4877 = vadd.f32 %v4626, %v4809
  %v4878 = vadd.f32 %v4627, %v4809
  %v4879 = vadd.f32 %v4628, %v4809
  %v4880 = vadd.f32 %v4629, %v4809
  %v4881 = vadd.f32 %v4630, %v4809
  %v4882 = vadd.f32 %v4631, %v4809
  %v4883 = vadd.f32 %v4632, %v4809
  %v4884 = vadd.f32 %v4633, %v4809
  %v4885 = vadd.f32 %v4634, %v4809
  %v4886 = vadd.f32 %v4635, %v4809
  %v4887 = vadd.f32 %v4636, %v4809
  %v4888 = vadd.f32 %v4637, %v4809
  %v4889 = vadd.f32 %v4638, %v4809
  %v4890 = vadd.f32 %v4639, %v4809
  %v4891 = vadd.f32 %v4640, %v4809
  %v4892 = vadd.f32 %v4641, %v4809
  %v4893 = vadd.f32 %v4642, %v4809
  %v4894 = vadd.f32 %v4643, %v4809
  %v4895 = vadd.f32 %v4644, %v4809
  %v4896 = vadd.f32 %v4645, %v4809
  %v4897 = vadd.f32 %v4646, %v4809
  %v4898 = vadd.f32 %v4647, %v4809
  %v4899 = vadd.f32 %v4648, %v4809
  %v4900 = vadd.f32 %v4649, %v4809
  %v4901 = vadd.f32 %v4650, %v4809
  %v4902 = vadd.f32 %v4651, %v4809
  %v4903 = vadd.f32 %v4652, %v4809
  %v4904 = vadd.f32 %v4653, %v4809
  %v4905 = vadd.f32 %v4654, %v4809
  %v4906 = vadd.f32 %v4655, %v4809
  %v4907 = vadd.f32 %v4656, %v4809
  %v4908 = vadd.f32 %v4657, %v4809
  %v4909 = vadd.f32 %v4658, %v4809
  %v4910 = vadd.f32 %v4659, %v4809
  %v4911 = vadd.f32 %v4660, %v4809
  %v4912 = vadd.f32 %v4661, %v4809
  %v4913 = vadd.f32 %v4662, %v4809
  %v4914 = vadd.f32 %v4663, %v4809
  %v4915 = vadd.f32 %v4664, %v4809
  %v4916 = vadd.f32 %v4665, %v4809
  %v4917 = vadd.f32 %v4666, %v4809
  %v4918 = vadd.f32 %v4667, %v4809
  %v4919 = vadd.f32 %v4668, %v4809
  %v4920 = vadd.f32 %v4669, %v4809
  %v4921 = vadd.f32 %v4670, %v4809
  %v4922 = vadd.f32 %v4671, %v4809
  %v4923 = vadd.f32 %v4672, %v4809
  %v4924 = vadd.f32 %v4673, %v4809
  %v4925 = vadd.f32 %v4674, %v4809
  %v4926 = vadd.f32 %v4675, %v4809
  %v4927 = vadd.f32 %v4676, %v4809
  %v4928 = vadd.f32 %v4677, %v4809
  %v4929 = vadd.f32 %v4678, %v4809
  %v4930 = vadd.f32 %v4679, %v4809
  %v4931 = vadd.f32 %v4680, %v4809
  %v4932 = vadd.f32 %v4681, %v4809
  %v4933 = vadd.f32 %v4682, %v4809
  %v4934 = vadd.f32 %v4683, %v4809
  %v4935 = vadd.f32 %v4684, %v4809
  %v4936 = vadd.f32 %v4685, %v4809
  %v4937 = vadd.f32 %v4686, %v4809
  %v4938 = vadd.f32 %v4687, %v4809
  %v4939 = vadd.f32 %v4688, %v4809
  %v4940 = vadd.f32 %v4689, %v4809
  %v4941 = vadd.f32 %v4690, %v4809
  %v4942 = vadd.f32 %v4691, %v4809
  %v4943 = vadd.f32 %v4692, %v4809
  %v4944 = vadd.f32 %v4693, %v4809
  %v4945 = vadd.f32 %v4694, %v4809
  %v4946 = vadd.f32 %v4695, %v4809
  %v4947 = vadd.f32 %v4696, %v4809
  %v4948 = vadd.f32 %v4697, %v4809
  %v4949 = vadd.f32 %v4698, %v4809
  %v4950 = vadd.f32 %v4699, %v4809
  %v4951 = vadd.f32 %v4700, %v4809
  %v4952 = vadd.f32 %v4701, %v4809
  %v4953 = vadd.f32 %v4702, %v4809
  %v4954 = vadd.f32 %v4703, %v4809
  %v4955 = vadd.f32 %v4704, %v4809
  %v4956 = vadd.f32 %v4705, %v4809
  %v4957 = vadd.f32 %v4706, %v4809
  %v4958 = vadd.f32 %v4707, %v4809
  %v4959 = vadd.f32 %v4708, %v4809
  %v4960 = vadd.f32 %v4709, %v4809
  %v4961 = vadd.f32 %v4710, %v4809
  %v4962 = vadd.f32 %v4711, %v4809
  %v4963 = vadd.f32 %v4712, %v4809
  %v4964 = vadd.f32 %v4713, %v4809
  %v4965 = vadd.f32 %v4714, %v4809
  %v4966 = vadd.f32 %v4715, %v4809
  %v4967 = vadd.f32 %v4716, %v4809
  %v4968 = vadd.f32 %v4717, %v4809
  %v4969 = vadd.f32 %v4718, %v4809
  %v4970 = vadd.f32 %v4719, %v4809
  %v4971 = vadd.f32 %v4720, %v4809
  %v4972 = vadd.f32 %v4721, %v4809
  %v4973 = vadd.f32 %v4722, %v4809
  %v4974 = vadd.f32 %v4723, %v4809
  %v4975 = vadd.f32 %v4724, %v4809
  %v4976 = vadd.f32 %v4725, %v4809
  %v4977 = vadd.f32 %v4726, %v4809
  %v4978 = vadd.f32 %v4727, %v4809
  %v4979 = vadd.f32 %v4728, %v4809
  %v4980 = vadd.f32 %v4729, %v4809
  %v4981 = vadd.f32 %v4730, %v4809
  %v4982 = vadd.f32 %v4731, %v4809
  %v4983 = vadd.f32 %v4732, %v4809
  %v4984 = vadd.f32 %v4733, %v4809
  %v4985 = vadd.f32 %v4734, %v4809
  %v4986 = vadd.f32 %v4735, %v4809
  %v4987 = vadd.f32 %v4736, %v4809
  %v4988 = vadd.f32 %v4737, %v4809
  %v4989 = vadd.f32 %v4738, %v4809
  %v4990 = vadd.f32 %v4739, %v4809
  %v4991 = vadd.f32 %v4740, %v4809
  %v4992 = vadd.f32 %v4741, %v4809
  %v4993 = vadd.f32 %v4742, %v4809
  %v4994 = vadd.f32 %v4743, %v4809
  %v4995 = vadd.f32 %v4744, %v4809
  %v4996 = vadd.f32 %v4745, %v4809
  %v4997 = vadd.f32 %v4746, %v4809
  %v4998 = vadd.f32 %v4747, %v4809
  %v4999 = vadd.f32 %v4748, %v4809
  %v5000 = vadd.f32 %v4749, %v4809
  %v5001 = vadd.f32 %v4750, %v4809
  %v5002 = vadd.f32 %v4751, %v4809
  %v5003 = vadd.f32 %v4752, %v4809
  %v5004 = vadd.f32 %v4753, %v4809
  %v5005 = vadd.f32 %v4754, %v4809
  %v5006 = vadd.f32 %v4755, %v4809
  %v5007 = vadd.f32 %v4756, %v4809
  %v5008 = vadd.f32 %v4757, %v4809
  %v5009 = vadd.f32 %v4758, %v4809
  %v5010 = vadd.f32 %v4759, %v4809
  %v5011 = vadd.f32 %v4760, %v4809
  %v5012 = vadd.f32 %v4761, %v4809
  %v5013 = vadd.f32 %v4762, %v4809
  %v5014 = vadd.f32 %v4763, %v4809
  %v5015 = vadd.f32 %v4764, %v4809
  %v5016 = vadd.f32 %v4765, %v4809
  %v5017 = vadd.f32 %v4766, %v4809
  %v5018 = vadd.f32 %v4767, %v4809
  %v5019 = vadd.f32 %v4768, %v4809
  %v5020 = vadd.f32 %v4769, %v4809
  %v5021 = vadd.f32 %v4770, %v4809
  %v5022 = vadd.f32 %v4771, %v4809
  %v5023 = vadd.f32 %v4772, %v4809
  %v5024 = vadd.f32 %v4773, %v4809
  %v5025 = vadd.f32 %v4774, %v4809
  %v5026 = vadd.f32 %v4775, %v4809
  %v5027 = vadd.f32 %v4776, %v4809
  %v5028 = vadd.f32 %v4777, %v4809
  %v5029 = vadd.f32 %v4778, %v4809
  %v5030 = vadd.f32 %v4779, %v4809
  %v5031 = vadd.f32 %v4780, %v4809
  %v5032 = vadd.f32 %v4781, %v4809
  %v5033 = vadd.f32 %v4782, %v4809
  %v5034 = vadd.f32 %v4783, %v4809
  %v5035 = vadd.f32 %v4784, %v4809
  %v5036 = vadd.f32 %v4785, %v4809
  %v5037 = vadd.f32 %v4786, %v4809
  %v5038 = vadd.f32 %v4787, %v4809
  %v5039 = vadd.f32 %v4788, %v4809
  %v5040 = vadd.f32 %v4789, %v4809
  %v5041 = vadd.f32 %v4790, %v4809
  %v5042 = vadd.f32 %v4791, %v4809
  %v5043 = vadd.f32 %v4792, %v4809
  %v5044 = vadd.f32 %v4793, %v4809
  %v5045 = vadd.f32 %v4794, %v4809
  %v5046 = vadd.f32 %v4795, %v4809
  %v5047 = vadd.f32 %v4796, %v4809
  %v5048 = vadd.f32 %v4797, %v4809
  %v5049 = vadd.f32 %v4798, %v4809
  %v5050 = vadd.f32 %v4799, %v4809
  %v5051 = vadd.f32 %v4800, %v4809
  %v5052 = vadd.f32 %v4801, %v4809
  %v5053 = vadd.f32 %v4802, %v4809
  %v5054 = vadd.f32 %v4803, %v4809
  %v5055 = vmax.f32 %v4811, 0.0
  %v5056 = vmax.f32 %v4812, 0.0
  %v5057 = vmax.f32 %v4813, 0.0
  %v5058 = vmax.f32 %v4814, 0.0
  %v5059 = vmax.f32 %v4815, 0.0
  %v5060 = vmax.f32 %v4816, 0.0
  %v5061 = vmax.f32 %v4817, 0.0
  %v5062 = vmax.f32 %v4818, 0.0
  %v5063 = vmax.f32 %v4819, 0.0
  %v5064 = vmax.f32 %v4820, 0.0
  %v5065 = vmax.f32 %v4821, 0.0
  %v5066 = vmax.f32 %v4822, 0.0
  %v5067 = vmax.f32 %v4823, 0.0
  %v5068 = vmax.f32 %v4824, 0.0
  %v5069 = vmax.f32 %v4825, 0.0
  %v5070 = vmax.f32 %v4826, 0.0
  %v5071 = vmax.f32 %v4827, 0.0
  %v5072 = vmax.f32 %v4828, 0.0
  %v5073 = vmax.f32 %v4829, 0.0
  %v5074 = vmax.f32 %v4830, 0.0
  %v5075 = vmax.f32 %v4831, 0.0
  %v5076 = vmax.f32 %v4832, 0.0
  %v5077 = vmax.f32 %v4833, 0.0
  %v5078 = vmax.f32 %v4834, 0.0
  %v5079 = vmax.f32 %v4835, 0.0
  %v5080 = vmax.f32 %v4836, 0.0
  %v5081 = vmax.f32 %v4837, 0.0
  %v5082 = vmax.f32 %v4838, 0.0
  %v5083 = vmax.f32 %v4839, 0.0
  %v5084 = vmax.f32 %v4840, 0.0
  %v5085 = vmax.f32 %v4841, 0.0
  %v5086 = vmax.f32 %v4842, 0.0
  %v5087 = vmax.f32 %v4843, 0.0
  %v5088 = vmax.f32 %v4844, 0.0
  %v5089 = vmax.f32 %v4845, 0.0
  %v5090 = vmax.f32 %v4846, 0.0
  %v5091 = vmax.f32 %v4847, 0.0
  %v5092 = vmax.f32 %v4848, 0.0
  %v5093 = vmax.f32 %v4849, 0.0
  %v5094 = vmax.f32 %v4850, 0.0
  %v5095 = vmax.f32 %v4851, 0.0
  %v5096 = vmax.f32 %v4852, 0.0
  %v5097 = vmax.f32 %v4853, 0.0
  %v5098 = vmax.f32 %v4854, 0.0
  %v5099 = vmax.f32 %v4855, 0.0
  %v5100 = vmax.f32 %v4856, 0.0
  %v5101 = vmax.f32 %v4857, 0.0
  %v5102 = vmax.f32 %v4858, 0.0
  %v5103 = vmax.f32 %v4859, 0.0
  %v5104 = vmax.f32 %v4860, 0.0
  %v5105 = vmax.f32 %v4861, 0.0
  %v5106 = vmax.f32 %v4862, 0.0
  %v5107 = vmax.f32 %v4863, 0.0
  %v5108 = vmax.f32 %v4864, 0.0
  %v5109 = vmax.f32 %v4865, 0.0
  %v5110 = vmax.f32 %v4866, 0.0
  %v5111 = vmax.f32 %v4867, 0.0
  %v5112 = vmax.f32 %v4868, 0.0
  %v5113 = vmax.f32 %v4869, 0.0
  %v5114 = vmax.f32 %v4870, 0.0
  %v5115 = vmax.f32 %v4871, 0.0
  %v5116 = vmax.f32 %v4872, 0.0
  %v5117 = vmax.f32 %v4873, 0.0
  %v5118 = vmax.f32 %v4874, 0.0
  %v5119 = vmax.f32 %v4875, 0.0
  %v5120 = vmax.f32 %v4876, 0.0
  %v5121 = vmax.f32 %v4877, 0.0
  %v5122 = vmax.f32 %v4878, 0.0
  %v5123 = vmax.f32 %v4879, 0.0
  %v5124 = vmax.f32 %v4880, 0.0
  %v5125 = vmax.f32 %v4881, 0.0
  %v5126 = vmax.f32 %v4882, 0.0
  %v5127 = vmax.f32 %v4883, 0.0
  %v5128 = vmax.f32 %v4884, 0.0
  %v5129 = vmax.f32 %v4885, 0.0
  %v5130 = vmax.f32 %v4886, 0.0
  %v5131 = vmax.f32 %v4887, 0.0
  %v5132 = vmax.f32 %v4888, 0.0
  %v5133 = vmax.f32 %v4889, 0.0
  %v5134 = vmax.f32 %v4890, 0.0
  %v5135 = vmax.f32 %v4891, 0.0
  %v5136 = vmax.f32 %v4892, 0.0
  %v5137 = vmax.f32 %v4893, 0.0
  %v5138 = vmax.f32 %v4894, 0.0
  %v5139 = vmax.f32 %v4895, 0.0
  %v5140 = vmax.f32 %v4896, 0.0
  %v5141 = vmax.f32 %v4897, 0.0
  %v5142 = vmax.f32 %v4898, 0.0
  %v5143 = vmax.f32 %v4899, 0.0
  %v5144 = vmax.f32 %v4900, 0.0
  %v5145 = vmax.f32 %v4901, 0.0
  %v5146 = vmax.f32 %v4902, 0.0
  %v5147 = vmax.f32 %v4903, 0.0
  %v5148 = vmax.f32 %v4904, 0.0
  %v5149 = vmax.f32 %v4905, 0.0
  %v5150 = vmax.f32 %v4906, 0.0
  %v5151 = vmax.f32 %v4907, 0.0
  %v5152 = vmax.f32 %v4908, 0.0
  %v5153 = vmax.f32 %v4909, 0.0
  %v5154 = vmax.f32 %v4910, 0.0
  %v5155 = vmax.f32 %v4911, 0.0
  %v5156 = vmax.f32 %v4912, 0.0
  %v5157 = vmax.f32 %v4913, 0.0
  %v5158 = vmax.f32 %v4914, 0.0
  %v5159 = vmax.f32 %v4915, 0.0
  %v5160 = vmax.f32 %v4916, 0.0
  %v5161 = vmax.f32 %v4917, 0.0
  %v5162 = vmax.f32 %v4918, 0.0
  %v5163 = vmax.f32 %v4919, 0.0
  %v5164 = vmax.f32 %v4920, 0.0
  %v5165 = vmax.f32 %v4921, 0.0
  %v5166 = vmax.f32 %v4922, 0.0
  %v5167 = vmax.f32 %v4923, 0.0
  %v5168 = vmax.f32 %v4924, 0.0
  %v5169 = vmax.f32 %v4925, 0.0
  %v5170 = vmax.f32 %v4926, 0.0
  %v5171 = vmax.f32 %v4927, 0.0
  %v5172 = vmax.f32 %v4928, 0.0
  %v5173 = vmax.f32 %v4929, 0.0
  %v5174 = vmax.f32 %v4930, 0.0
  %v5175 = vmax.f32 %v4931, 0.0
  %v5176 = vmax.f32 %v4932, 0.0
  %v5177 = vmax.f32 %v4933, 0.0
  %v5178 = vmax.f32 %v4934, 0.0
  %v5179 = vmax.f32 %v4935, 0.0
  %v5180 = vmax.f32 %v4936, 0.0
  %v5181 = vmax.f32 %v4937, 0.0
  %v5182 = vmax.f32 %v4938, 0.0
  %v5183 = vmax.f32 %v4939, 0.0
  %v5184 = vmax.f32 %v4940, 0.0
  %v5185 = vmax.f32 %v4941, 0.0
  %v5186 = vmax.f32 %v4942, 0.0
  %v5187 = vmax.f32 %v4943, 0.0
  %v5188 = vmax.f32 %v4944, 0.0
  %v5189 = vmax.f32 %v4945, 0.0
  %v5190 = vmax.f32 %v4946, 0.0
  %v5191 = vmax.f32 %v4947, 0.0
  %v5192 = vmax.f32 %v4948, 0.0
  %v5193 = vmax.f32 %v4949, 0.0
  %v5194 = vmax.f32 %v4950, 0.0
  %v5195 = vmax.f32 %v4951, 0.0
  %v5196 = vmax.f32 %v4952, 0.0
  %v5197 = vmax.f32 %v4953, 0.0
  %v5198 = vmax.f32 %v4954, 0.0
  %v5199 = vmax.f32 %v4955, 0.0
  %v5200 = vmax.f32 %v4956, 0.0
  %v5201 = vmax.f32 %v4957, 0.0
  %v5202 = vmax.f32 %v4958, 0.0
  %v5203 = vmax.f32 %v4959, 0.0
  %v5204 = vmax.f32 %v4960, 0.0
  %v5205 = vmax.f32 %v4961, 0.0
  %v5206 = vmax.f32 %v4962, 0.0
  %v5207 = vmax.f32 %v4963, 0.0
  %v5208 = vmax.f32 %v4964, 0.0
  %v5209 = vmax.f32 %v4965, 0.0
  %v5210 = vmax.f32 %v4966, 0.0
  %v5211 = vmax.f32 %v4967, 0.0
  %v5212 = vmax.f32 %v4968, 0.0
  %v5213 = vmax.f32 %v4969, 0.0
  %v5214 = vmax.f32 %v4970, 0.0
  %v5215 = vmax.f32 %v4971, 0.0
  %v5216 = vmax.f32 %v4972, 0.0
  %v5217 = vmax.f32 %v4973, 0.0
  %v5218 = vmax.f32 %v4974, 0.0
  %v5219 = vmax.f32 %v4975, 0.0
  %v5220 = vmax.f32 %v4976, 0.0
  %v5221 = vmax.f32 %v4977, 0.0
  %v5222 = vmax.f32 %v4978, 0.0
  %v5223 = vmax.f32 %v4979, 0.0
  %v5224 = vmax.f32 %v4980, 0.0
  %v5225 = vmax.f32 %v4981, 0.0
  %v5226 = vmax.f32 %v4982, 0.0
  %v5227 = vmax.f32 %v4983, 0.0
  %v5228 = vmax.f32 %v4984, 0.0
  %v5229 = vmax.f32 %v4985, 0.0
  %v5230 = vmax.f32 %v4986, 0.0
  %v5231 = vmax.f32 %v4987, 0.0
  %v5232 = vmax.f32 %v4988, 0.0
  %v5233 = vmax.f32 %v4989, 0.0
  %v5234 = vmax.f32 %v4990, 0.0
  %v5235 = vmax.f32 %v4991, 0.0
  %v5236 = vmax.f32 %v4992, 0.0
  %v5237 = vmax.f32 %v4993, 0.0
  %v5238 = vmax.f32 %v4994, 0.0
  %v5239 = vmax.f32 %v4995, 0.0
  %v5240 = vmax.f32 %v4996, 0.0
  %v5241 = vmax.f32 %v4997, 0.0
  %v5242 = vmax.f32 %v4998, 0.0
  %v5243 = vmax.f32 %v4999, 0.0
  %v5244 = vmax.f32 %v5000, 0.0
  %v5245 = vmax.f32 %v5001, 0.0
  %v5246 = vmax.f32 %v5002, 0.0
  %v5247 = vmax.f32 %v5003, 0.0
  %v5248 = vmax.f32 %v5004, 0.0
  %v5249 = vmax.f32 %v5005, 0.0
  %v5250 = vmax.f32 %v5006, 0.0
  %v5251 = vmax.f32 %v5007, 0.0
  %v5252 = vmax.f32 %v5008, 0.0
  %v5253 = vmax.f32 %v5009, 0.0
  %v5254 = vmax.f32 %v5010, 0.0
  %v5255 = vmax.f32 %v5011, 0.0
  %v5256 = vmax.f32 %v5012, 0.0
  %v5257 = vmax.f32 %v5013, 0.0
  %v5258 = vmax.f32 %v5014, 0.0
  %v5259 = vmax.f32 %v5015, 0.0
  %v5260 = vmax.f32 %v5016, 0.0
  %v5261 = vmax.f32 %v5017, 0.0
  %v5262 = vmax.f32 %v5018, 0.0
  %v5263 = vmax.f32 %v5019, 0.0
  %v5264 = vmax.f32 %v5020, 0.0
  %v5265 = vmax.f32 %v5021, 0.0
  %v5266 = vmax.f32 %v5022, 0.0
  %v5267 = vmax.f32 %v5023, 0.0
  %v5268 = vmax.f32 %v5024, 0.0
  %v5269 = vmax.f32 %v5025, 0.0
  %v5270 = vmax.f32 %v5026, 0.0
  %v5271 = vmax.f32 %v5027, 0.0
  %v5272 = vmax.f32 %v5028, 0.0
  %v5273 = vmax.f32 %v5029, 0.0
  %v5274 = vmax.f32 %v5030, 0.0
  %v5275 = vmax.f32 %v5031, 0.0
  %v5276 = vmax.f32 %v5032, 0.0
  %v5277 = vmax.f32 %v5033, 0.0
  %v5278 = vmax.f32 %v5034, 0.0
  %v5279 = vmax.f32 %v5035, 0.0
  %v5280 = vmax.f32 %v5036, 0.0
  %v5281 = vmax.f32 %v5037, 0.0
  %v5282 = vmax.f32 %v5038, 0.0
  %v5283 = vmax.f32 %v5039, 0.0
  %v5284 = vmax.f32 %v5040, 0.0
  %v5285 = vmax.f32 %v5041, 0.0
  %v5286 = vmax.f32 %v5042, 0.0
  %v5287 = vmax.f32 %v5043, 0.0
  %v5288 = vmax.f32 %v5044, 0.0
  %v5289 = vmax.f32 %v5045, 0.0
  %v5290 = vmax.f32 %v5046, 0.0
  %v5291 = vmax.f32 %v5047, 0.0
  %v5292 = vmax.f32 %v5048, 0.0
  %v5293 = vmax.f32 %v5049, 0.0
  %v5294 = vmax.f32 %v5050, 0.0
  %v5295 = vmax.f32 %v5051, 0.0
  %v5296 = vmax.f32 %v5052, 0.0
  %v5297 = vmax.f32 %v5053, 0.0
  %v5298 = vmax.f32 %v5054, 0.0
  %v5299 = vmax.f32 %v5055, %v5057
  %v5300 = vmax.f32 %v5056, %v5058
  %v5301 = vmax.f32 %v5059, %v5061
  %v5302 = vmax.f32 %v5060, %v5062
  %v5303 = vmax.f32 %v5063, %v5065
  %v5304 = vmax.f32 %v5064, %v5066
  %v5305 = vmax.f32 %v5067, %v5069
  %v5306 = vmax.f32 %v5068, %v5070
  %v5307 = vmax.f32 %v5071, %v5073
  %v5308 = vmax.f32 %v5072, %v5074
  %v5309 = vmax.f32 %v5075, %v5077
  %v5310 = vmax.f32 %v5076, %v5078
  %v5311 = vmax.f32 %v5079, %v5081
  %v5312 = vmax.f32 %v5080, %v5082
  %v5313 = vmax.f32 %v5083, %v5085
  %v5314 = vmax.f32 %v5084, %v5086
  %v5315 = vmax.f32 %v5087, %v5089
  %v5316 = vmax.f32 %v5088, %v5090
  %v5317 = vmax.f32 %v5091, %v5093
  %v5318 = vmax.f32 %v5092, %v5094
  %v5319 = vmax.f32 %v5095, %v5097
  %v5320 = vmax.f32 %v5096, %v5098
  %v5321 = vmax.f32 %v5099, %v5101
  %v5322 = vmax.f32 %v5100, %v5102
  %v5323 = vmax.f32 %v5103, %v5105
  %v5324 = vmax.f32 %v5104, %v5106
  %v5325 = vmax.f32 %v5107, %v5109
  %v5326 = vmax.f32 %v5108, %v5110
  %v5327 = vmax.f32 %v5111, %v5113
  %v5328 = vmax.f32 %v5112, %v5114
  %v5329 = vmax.f32 %v5115, %v5117
  %v5330 = vmax.f32 %v5116, %v5118
  %v5331 = vmax.f32 %v5119, %v5121
  %v5332 = vmax.f32 %v5120, %v5122
  %v5333 = vmax.f32 %v5123, %v5125
  %v5334 = vmax.f32 %v5124, %v5126
  %v5335 = vmax.f32 %v5127, %v5129
  %v5336 = vmax.f32 %v5128, %v5130
  %v5337 = vmax.f32 %v5131, %v5133
  %v5338 = vmax.f32 %v5132, %v5134
  %v5339 = vmax.f32 %v5135, %v5137
  %v5340 = vmax.f32 %v5136, %v5138
  %v5341 = vmax.f32 %v5139, %v5141
  %v5342 = vmax.f32 %v5140, %v5142
  %v5343 = vmax.f32 %v5143, %v5145
  %v5344 = vmax.f32 %v5144, %v5146
  %v5345 = vmax.f32 %v5147, %v5149
  %v5346 = vmax.f32 %v5148, %v5150
  %v5347 = vmax.f32 %v5151, %v5153
  %v5348 = vmax.f32 %v5152, %v5154
  %v5349 = vmax.f32 %v5155, %v5157
  %v5350 = vmax.f32 %v5156, %v5158
  %v5351 = vmax.f32 %v5159, %v5161
  %v5352 = vmax.f32 %v5160, %v5162
  %v5353 = vmax.f32 %v5163, %v5165
  %v5354 = vmax.f32 %v5164, %v5166
  %v5355 = vmax.f32 %v5167, %v5169
  %v5356 = vmax.f32 %v5168, %v5170
  %v5357 = vmax.f32 %v5171, %v5173
  %v5358 = vmax.f32 %v5172, %v5174
  %v5359 = vmax.f32 %v5175, %v5177
  %v5360 = vmax.f32 %v5176, %v5178
  %v5361 = vmax.f32 %v5179, %v5181
  %v5362 = vmax.f32 %v5180, %v5182
  %v5363 = vmax.f32 %v5183, %v5185
  %v5364 = vmax.f32 %v5184, %v5186
  %v5365 = vmax.f32 %v5187, %v5189
  %v5366 = vmax.f32 %v5188, %v5190
  %v5367 = vmax.f32 %v5191, %v5193
  %v5368 = vmax.f32 %v5192, %v5194
  %v5369 = vmax.f32 %v5195, %v5197
  %v5370 = vmax.f32 %v5196, %v5198
  %v5371 = vmax.f32 %v5199, %v5201
  %v5372 = vmax.f32 %v5200, %v5202
  %v5373 = vmax.f32 %v5203, %v5205
  %v5374 = vmax.f32 %v5204, %v5206
  %v5375 = vmax.f32 %v5207, %v5209
  %v5376 = vmax.f32 %v5208, %v5210
  %v5377 = vmax.f32 %v5211, %v5213
  %v5378 = vmax.f32 %v5212, %v5214
  %v5379 = vmax.f32 %v5215, %v5217
  %v5380 = vmax.f32 %v5216, %v5218
  %v5381 = vmax.f32 %v5219, %v5221
  %v5382 = vmax.f32 %v5220, %v5222
  %v5383 = vmax.f32 %v5223, %v5225
  %v5384 = vmax.f32 %v5224, %v5226
  %v5385 = vmax.f32 %v5227, %v5229
  %v5386 = vmax.f32 %v5228, %v5230
  %v5387 = vmax.f32 %v5231, %v5233
  %v5388 = vmax.f32 %v5232, %v5234
  %v5389 = vmax.f32 %v5235, %v5237
  %v5390 = vmax.f32 %v5236, %v5238
  %v5391 = vmax.f32 %v5239, %v5241
  %v5392 = vmax.f32 %v5240, %v5242
  %v5393 = vmax.f32 %v5243, %v5245
  %v5394 = vmax.f32 %v5244, %v5246
  %v5395 = vmax.f32 %v5247, %v5249
  %v5396 = vmax.f32 %v5248, %v5250
  %v5397 = vmax.f32 %v5251, %v5253
  %v5398 = vmax.f32 %v5252, %v5254
  %v5399 = vmax.f32 %v5255, %v5257
  %v5400 = vmax.f32 %v5256, %v5258
  %v5401 = vmax.f32 %v5259, %v5261
  %v5402 = vmax.f32 %v5260, %v5262
  %v5403 = vmax.f32 %v5263, %v5265
  %v5404 = vmax.f32 %v5264, %v5266
  %v5405 = vmax.f32 %v5267, %v5269
  %v5406 = vmax.f32 %v5268, %v5270
  %v5407 = vmax.f32 %v5271, %v5273
  %v5408 = vmax.f32 %v5272, %v5274
  %v5409 = vmax.f32 %v5275, %v5277
  %v5410 = vmax.f32 %v5276, %v5278
  %v5411 = vmax.f32 %v5279, %v5281
  %v5412 = vmax.f32 %v5280, %v5282
  %v5413 = vmax.f32 %v5283, %v5285
  %v5414 = vmax.f32 %v5284, %v5286
  %v5415 = vmax.f32 %v5287, %v5289
  %v5416 = vmax.f32 %v5288, %v5290
  %v5417 = vmax.f32 %v5291, %v5293
  %v5418 = vmax.f32 %v5292, %v5294
  %v5419 = vmax.f32 %v5295, %v5297
  %v5420 = vmax.f32 %v5296, %v5298
  %v5421 = vpack.c.bf16 %v5300, %v5299
  %v5422 = vpack.c.bf16 %v5302, %v5301
  %v5423 = vpack.c.bf16 %v5304, %v5303
  %v5424 = vpack.c.bf16 %v5306, %v5305
  %v5425 = vpack.c.bf16 %v5308, %v5307
  %v5426 = vpack.c.bf16 %v5310, %v5309
  %v5427 = vpack.c.bf16 %v5312, %v5311
  %v5428 = vpack.c.bf16 %v5314, %v5313
  %v5429 = vpack.c.bf16 %v5316, %v5315
  %v5430 = vpack.c.bf16 %v5318, %v5317
  %v5431 = vpack.c.bf16 %v5320, %v5319
  %v5432 = vpack.c.bf16 %v5322, %v5321
  %v5433 = vpack.c.bf16 %v5324, %v5323
  %v5434 = vpack.c.bf16 %v5326, %v5325
  %v5435 = vpack.c.bf16 %v5328, %v5327
  %v5436 = vpack.c.bf16 %v5330, %v5329
  %v5437 = vpack.c.bf16 %v5332, %v5331
  %v5438 = vpack.c.bf16 %v5334, %v5333
  %v5439 = vpack.c.bf16 %v5336, %v5335
  %v5440 = vpack.c.bf16 %v5338, %v5337
  %v5441 = vpack.c.bf16 %v5340, %v5339
  %v5442 = vpack.c.bf16 %v5342, %v5341
  %v5443 = vpack.c.bf16 %v5344, %v5343
  %v5444 = vpack.c.bf16 %v5346, %v5345
  %v5445 = vpack.c.bf16 %v5348, %v5347
  %v5446 = vpack.c.bf16 %v5350, %v5349
  %v5447 = vpack.c.bf16 %v5352, %v5351
  %v5448 = vpack.c.bf16 %v5354, %v5353
  %v5449 = vpack.c.bf16 %v5356, %v5355
  %v5450 = vpack.c.bf16 %v5358, %v5357
  %v5451 = vpack.c.bf16 %v5360, %v5359
  %v5452 = vpack.c.bf16 %v5362, %v5361
  %v5453 = vpack.c.bf16 %v5364, %v5363
  %v5454 = vpack.c.bf16 %v5366, %v5365
  %v5455 = vpack.c.bf16 %v5368, %v5367
  %v5456 = vpack.c.bf16 %v5370, %v5369
  %v5457 = vpack.c.bf16 %v5372, %v5371
  %v5458 = vpack.c.bf16 %v5374, %v5373
  %v5459 = vpack.c.bf16 %v5376, %v5375
  %v5460 = vpack.c.bf16 %v5378, %v5377
  %v5461 = vpack.c.bf16 %v5380, %v5379
  %v5462 = vpack.c.bf16 %v5382, %v5381
  %v5463 = vpack.c.bf16 %v5384, %v5383
  %v5464 = vpack.c.bf16 %v5386, %v5385
  %v5465 = vpack.c.bf16 %v5388, %v5387
  %v5466 = vpack.c.bf16 %v5390, %v5389
  %v5467 = vpack.c.bf16 %v5392, %v5391
  %v5468 = vpack.c.bf16 %v5394, %v5393
  %v5469 = vpack.c.bf16 %v5396, %v5395
  %v5470 = vpack.c.bf16 %v5398, %v5397
  %v5471 = vpack.c.bf16 %v5400, %v5399
  %v5472 = vpack.c.bf16 %v5402, %v5401
  %v5473 = vpack.c.bf16 %v5404, %v5403
  %v5474 = vpack.c.bf16 %v5406, %v5405
  %v5475 = vpack.c.bf16 %v5408, %v5407
  %v5476 = vpack.c.bf16 %v5410, %v5409
  %v5477 = vpack.c.bf16 %v5412, %v5411
  %v5478 = vpack.c.bf16 %v5414, %v5413
  %v5479 = vpack.c.bf16 %v5416, %v5415
  %v5480 = vpack.c.bf16 %v5418, %v5417
  %v5481 = vpack.c.bf16 %v5420, %v5419
  %v5482 = vld [vmem:[%s4] sm:$0xf]
  %v5483 = vld [vmem:[%s4 + $0x4] sm:$0xf]
  %s5484 = scalar_lea.vmem %s4, 8
  %v5485 = vld [vmem:[%s5484] sm:$0xf]
  %v5486 = vld [vmem:[%s5484 + $0x4] sm:$0xf]
  %v5489 = vunpack.c.l.b16 %v5485
  %v5490 = vunpack.c.l.b16 %v5486
  %v5491 = vpack.c.b16 %v5490, %v5489
  %vm5493 = vcmask 130048
  %v5495 = vsel %vm5493, %v5422, 0
  %v5498 = vsel %vm5493, %v5423, 0
  %v5501 = vsel %vm5493, %v5424, 0
  %v5504 = vsel %vm5493, %v5425, 0
  %v5507 = vsel %vm5493, %v5426, 0
  %v5510 = vsel %vm5493, %v5427, 0
  %v5513 = vsel %vm5493, %v5428, 0
  %v5516 = vsel %vm5493, %v5429, 0
  %v5519 = vsel %vm5493, %v5430, 0
  %v5522 = vsel %vm5493, %v5431, 0
  %v5525 = vsel %vm5493, %v5432, 0
  %v5528 = vsel %vm5493, %v5433, 0
  %v5531 = vsel %vm5493, %v5434, 0
  %v5534 = vsel %vm5493, %v5435, 0
  %v5537 = vsel %vm5493, %v5436, 0
  %v5540 = vsel %vm5493, %v5437, 0
  %v5543 = vsel %vm5493, %v5438, 0
  %v5546 = vsel %vm5493, %v5439, 0
  %v5549 = vsel %vm5493, %v5440, 0
  %v5552 = vsel %vm5493, %v5441, 0
  %v5555 = vsel %vm5493, %v5442, 0
  %v5558 = vsel %vm5493, %v5443, 0
  %v5561 = vsel %vm5493, %v5444, 0
  %v5564 = vsel %vm5493, %v5445, 0
  %v5567 = vsel %vm5493, %v5446, 0
  %v5570 = vsel %vm5493, %v5447, 0
  %v5573 = vsel %vm5493, %v5448, 0
  %v5576 = vsel %vm5493, %v5449, 0
  %v5579 = vsel %vm5493, %v5450, 0
  %v5582 = vsel %vm5493, %v5451, 0
  %v5585 = vsel %vm5493, %v5452, 0
  %v5588 = vsel %vm5493, %v5453, 0
  %v5591 = vsel %vm5493, %v5454, 0
  %v5594 = vsel %vm5493, %v5455, 0
  %v5597 = vsel %vm5493, %v5456, 0
  %v5600 = vsel %vm5493, %v5457, 0
  %v5603 = vsel %vm5493, %v5458, 0
  %v5606 = vsel %vm5493, %v5459, 0
  %v5609 = vsel %vm5493, %v5460, 0
  %v5612 = vsel %vm5493, %v5461, 0
  %v5615 = vsel %vm5493, %v5462, 0
  %v5618 = vsel %vm5493, %v5463, 0
  %v5621 = vsel %vm5493, %v5464, 0
  %v5624 = vsel %vm5493, %v5465, 0
  %v5627 = vsel %vm5493, %v5466, 0
  %v5630 = vsel %vm5493, %v5467, 0
  %v5633 = vsel %vm5493, %v5468, 0
  %v5636 = vsel %vm5493, %v5469, 0
  %v5639 = vsel %vm5493, %v5470, 0
  %v5642 = vsel %vm5493, %v5471, 0
  %v5645 = vsel %vm5493, %v5472, 0
  %v5648 = vsel %vm5493, %v5473, 0
  %v5651 = vsel %vm5493, %v5474, 0
  %v5654 = vsel %vm5493, %v5475, 0
  %v5657 = vsel %vm5493, %v5476, 0
  %v5660 = vsel %vm5493, %v5477, 0
  %v5663 = vsel %vm5493, %v5478, 0
  %v5666 = vsel %vm5493, %v5479, 0
  %v5669 = vsel %vm5493, %v5480, 0
  %5671 = vmatprep.subr.bf16.mxu0 0
  %5672 = vmatpush1.bf16.msra.mxu0 %v5491
  %5673 = vmatprep.subr.bf16.mxu0 0
  %5674 = vmatpush1.bf16.msra.mxu0 0
  %5675 = vmatprep.subr.bf16.mxu0 0
  %5676 = vmatpush1.bf16.msra.mxu0 0
  %5677 = vmatprep.subr.bf16.mxu0 0
  %5678 = vmatpush1.bf16.msra.mxu0 0
  %5679 = vmatprep.subr.bf16.mxu0 0
  %5680 = vmatpush1.bf16.msra.mxu0 0
  %5681 = vmatprep.subr.bf16.mxu0 0
  %5682 = vmatpush1.bf16.msra.mxu0 0
  %5683 = vmatprep.subr.bf16.mxu0 0
  %5684 = vmatpush1.bf16.msra.mxu0 0
  %5685 = vmatprep.subr.bf16.mxu0 0
  %5686 = vmatpush1.bf16.msra.mxu0 0
  %5687 = vmatprep.subr.bf16.mxu0 0
  %5688 = vmatpush1.bf16.msra.mxu0 0
  %5689 = vmatprep.subr.bf16.mxu0 0
  %5690 = vmatpush1.bf16.msra.mxu0 0
  %5691 = vmatprep.subr.bf16.mxu0 0
  %5692 = vmatpush1.bf16.msra.mxu0 0
  %5693 = vmatprep.subr.bf16.mxu0 0
  %5694 = vmatpush1.bf16.msra.mxu0 0
  %5695 = vmatprep.subr.bf16.mxu0 0
  %5696 = vmatpush1.bf16.msra.mxu0 0
  %5697 = vmatprep.subr.bf16.mxu0 0
  %5698 = vmatpush1.bf16.msra.mxu0 0
  %5699 = vmatprep.subr.bf16.mxu0 0
  %5700 = vmatpush1.bf16.msra.mxu0 0
  %5701 = vmatprep.subr.bf16.mxu0 0
  %5702 = vmatpush1.bf16.msra.mxu0 0
  %5703 = vmatprep.mubr.bf16.mxu0 0
  %5704 = vmatmul.mubr.bf16.gmra.mrb[0].mxu0 %v5495
  %v5705 = vpop.f32.mrb[0].mxu0
  %v5706 = vadd.f32 0.0, %v5705
  %v5707 = vpop.f32.mrb[0].mxu0
  %v5708 = vpop.f32.mrb[0].mxu0
  %v5709 = vadd.f32 0.0, %v5708
  %v5710 = vpop.f32.mrb[0].mxu0
  %5711 = vmatprep.mubr.bf16.mxu0 0
  %5712 = vmatmul.mubr.bf16.gmra.mrb[0].mxu0 %v5498
  %v5713 = vpop.f32.mrb[0].mxu0
  %v5714 = vadd.f32 0.0, %v5713
  %v5715 = vpop.f32.mrb[0].mxu0
  %v5716 = vpop.f32.mrb[0].mxu0
  %v5717 = vadd.f32 0.0, %v5716
  %v5718 = vpop.f32.mrb[0].mxu0
  %5719 = vmatprep.mubr.bf16.mxu0 0
  %5720 = vmatmul.mubr.bf16.gmra.mrb[0].mxu0 %v5501
  %v5721 = vpop.f32.mrb[0].mxu0
  %v5722 = vadd.f32 0.0, %v5721
  %v5723 = vpop.f32.mrb[0].mxu0
  %v5724 = vpop.f32.mrb[0].mxu0
  %v5725 = vadd.f32 0.0, %v5724
  %v5726 = vpop.f32.mrb[0].mxu0
  %5727 = vmatprep.mubr.bf16.mxu0 0
  %5728 = vmatmul.mubr.bf16.gmra.mrb[0].mxu0 %v5504
  %v5729 = vpop.f32.mrb[0].mxu0
  %v5730 = vadd.f32 0.0, %v5729
  %v5731 = vpop.f32.mrb[0].mxu0
  %v5732 = vpop.f32.mrb[0].mxu0
  %v5733 = vadd.f32 0.0, %v5732
  %v5734 = vpop.f32.mrb[0].mxu0
  %5735 = vmatprep.mubr.bf16.mxu0 0
  %5736 = vmatmul.mubr.bf16.gmra.mrb[0].mxu0 %v5507
  %v5737 = vpop.f32.mrb[0].mxu0
  %v5738 = vadd.f32 0.0, %v5737
  %v5739 = vpop.f32.mrb[0].mxu0
  %v5740 = vpop.f32.mrb[0].mxu0
  %v5741 = vadd.f32 0.0, %v5740
  %v5742 = vpop.f32.mrb[0].mxu0
  %5743 = vmatprep.mubr.bf16.mxu0 0
  %5744 = vmatmul.mubr.bf16.gmra.mrb[0].mxu0 %v5510
  %v5745 = vpop.f32.mrb[0].mxu0
  %v5746 = vadd.f32 0.0, %v5745
  %v5747 = vpop.f32.mrb[0].mxu0
  %v5748 = vpop.f32.mrb[0].mxu0
  %v5749 = vadd.f32 0.0, %v5748
  %v5750 = vpop.f32.mrb[0].mxu0
  %5751 = vmatprep.mubr.bf16.mxu0 0
  %5752 = vmatmul.mubr.bf16.gmra.mrb[0].mxu0 %v5513
  %v5753 = vpop.f32.mrb[0].mxu0
  %v5754 = vadd.f32 0.0, %v5753
  %v5755 = vpop.f32.mrb[0].mxu0
  %v5756 = vpop.f32.mrb[0].mxu0
  %v5757 = vadd.f32 0.0, %v5756
  %v5758 = vpop.f32.mrb[0].mxu0
  %5759 = vmatprep.mubr.bf16.mxu0 0
  %5760 = vmatmul.mubr.bf16.gmra.mrb[0].mxu0 %v5516
  %v5761 = vpop.f32.mrb[0].mxu0
  %v5762 = vadd.f32 0.0, %v5761
  %v5763 = vpop.f32.mrb[0].mxu0
  %v5764 = vpop.f32.mrb[0].mxu0
  %v5765 = vadd.f32 0.0, %v5764
  %v5766 = vpop.f32.mrb[0].mxu0
  %5767 = vmatprep.mubr.bf16.mxu0 0
  %5768 = vmatmul.mubr.bf16.gmra.mrb[0].mxu0 %v5519
  %v5769 = vpop.f32.mrb[0].mxu0
  %v5770 = vadd.f32 0.0, %v5769
  %v5771 = vpop.f32.mrb[0].mxu0
  %v5772 = vpop.f32.mrb[0].mxu0
  %v5773 = vadd.f32 0.0, %v5772
  %v5774 = vpop.f32.mrb[0].mxu0
  %5775 = vmatprep.mubr.bf16.mxu0 0
  %5776 = vmatmul.mubr.bf16.gmra.mrb[0].mxu0 %v5522
  %v5777 = vpop.f32.mrb[0].mxu0
  %v5778 = vadd.f32 0.0, %v5777
  %v5779 = vpop.f32.mrb[0].mxu0
  %v5780 = vpop.f32.mrb[0].mxu0
  %v5781 = vadd.f32 0.0, %v5780
  %v5782 = vpop.f32.mrb[0].mxu0
  %5783 = vmatprep.mubr.bf16.mxu0 0
  %5784 = vmatmul.mubr.bf16.gmra.mrb[0].mxu0 %v5525
  %v5785 = vpop.f32.mrb[0].mxu0
  %v5786 = vadd.f32 0.0, %v5785
  %v5787 = vpop.f32.mrb[0].mxu0
  %v5788 = vpop.f32.mrb[0].mxu0
  %v5789 = vadd.f32 0.0, %v5788
  %v5790 = vpop.f32.mrb[0].mxu0
  %5791 = vmatprep.mubr.bf16.mxu0 0
  %5792 = vmatmul.mubr.bf16.gmra.mrb[0].mxu0 %v5528
  %v5793 = vpop.f32.mrb[0].mxu0
  %v5794 = vadd.f32 0.0, %v5793
  %v5795 = vpop.f32.mrb[0].mxu0
  %v5796 = vpop.f32.mrb[0].mxu0
  %v5797 = vadd.f32 0.0, %v5796
  %v5798 = vpop.f32.mrb[0].mxu0
  %5799 = vmatprep.mubr.bf16.mxu0 0
  %5800 = vmatmul.mubr.bf16.gmra.mrb[0].mxu0 %v5531
  %v5801 = vpop.f32.mrb[0].mxu0
  %v5802 = vadd.f32 0.0, %v5801
  %v5803 = vpop.f32.mrb[0].mxu0
  %v5804 = vpop.f32.mrb[0].mxu0
  %v5805 = vadd.f32 0.0, %v5804
  %v5806 = vpop.f32.mrb[0].mxu0
  %5807 = vmatprep.mubr.bf16.mxu0 0
  %5808 = vmatmul.mubr.bf16.gmra.mrb[0].mxu0 %v5534
  %v5809 = vpop.f32.mrb[0].mxu0
  %v5810 = vadd.f32 0.0, %v5809
  %v5811 = vpop.f32.mrb[0].mxu0
  %v5812 = vpop.f32.mrb[0].mxu0
  %v5813 = vadd.f32 0.0, %v5812
  %v5814 = vpop.f32.mrb[0].mxu0
  %5815 = vmatprep.mubr.bf16.mxu0 0
  %5816 = vmatmul.mubr.bf16.gmra.mrb[0].mxu0 %v5537
  %v5817 = vpop.f32.mrb[0].mxu0
  %v5818 = vadd.f32 0.0, %v5817
  %v5819 = vpop.f32.mrb[0].mxu0
  %v5820 = vpop.f32.mrb[0].mxu0
  %v5821 = vadd.f32 0.0, %v5820
  %v5822 = vpop.f32.mrb[0].mxu0
  %5823 = vmatprep.mubr.bf16.mxu0 0
  %5824 = vmatmul.mubr.bf16.gmra.mrb[0].mxu0 %v5540
  %v5825 = vpop.f32.mrb[0].mxu0
  %v5826 = vadd.f32 0.0, %v5825
  %v5827 = vpop.f32.mrb[0].mxu0
  %v5828 = vpop.f32.mrb[0].mxu0
  %v5829 = vadd.f32 0.0, %v5828
  %v5830 = vpop.f32.mrb[0].mxu0
  %5831 = vmatprep.mubr.bf16.mxu0 0
  %5832 = vmatmul.mubr.bf16.gmra.mrb[0].mxu0 %v5543
  %v5833 = vpop.f32.mrb[0].mxu0
  %v5834 = vadd.f32 0.0, %v5833
  %v5835 = vpop.f32.mrb[0].mxu0
  %v5836 = vpop.f32.mrb[0].mxu0
  %v5837 = vadd.f32 0.0, %v5836
  %v5838 = vpop.f32.mrb[0].mxu0
  %5839 = vmatprep.mubr.bf16.mxu0 0
  %5840 = vmatmul.mubr.bf16.gmra.mrb[0].mxu0 %v5546
  %v5841 = vpop.f32.mrb[0].mxu0
  %v5842 = vadd.f32 0.0, %v5841
  %v5843 = vpop.f32.mrb[0].mxu0
  %v5844 = vpop.f32.mrb[0].mxu0
  %v5845 = vadd.f32 0.0, %v5844
  %v5846 = vpop.f32.mrb[0].mxu0
  %5847 = vmatprep.mubr.bf16.mxu0 0
  %5848 = vmatmul.mubr.bf16.gmra.mrb[0].mxu0 %v5549
  %v5849 = vpop.f32.mrb[0].mxu0
  %v5850 = vadd.f32 0.0, %v5849
  %v5851 = vpop.f32.mrb[0].mxu0
  %v5852 = vpop.f32.mrb[0].mxu0
  %v5853 = vadd.f32 0.0, %v5852
  %v5854 = vpop.f32.mrb[0].mxu0
  %5855 = vmatprep.mubr.bf16.mxu0 0
  %5856 = vmatmul.mubr.bf16.gmra.mrb[0].mxu0 %v5552
  %v5857 = vpop.f32.mrb[0].mxu0
  %v5858 = vadd.f32 0.0, %v5857
  %v5859 = vpop.f32.mrb[0].mxu0
  %v5860 = vpop.f32.mrb[0].mxu0
  %v5861 = vadd.f32 0.0, %v5860
  %v5862 = vpop.f32.mrb[0].mxu0
  %5863 = vmatprep.mubr.bf16.mxu0 0
  %5864 = vmatmul.mubr.bf16.gmra.mrb[0].mxu0 %v5555
  %v5865 = vpop.f32.mrb[0].mxu0
  %v5866 = vadd.f32 0.0, %v5865
  %v5867 = vpop.f32.mrb[0].mxu0
  %v5868 = vpop.f32.mrb[0].mxu0
  %v5869 = vadd.f32 0.0, %v5868
  %v5870 = vpop.f32.mrb[0].mxu0
  %5871 = vmatprep.mubr.bf16.mxu0 0
  %5872 = vmatmul.mubr.bf16.gmra.mrb[0].mxu0 %v5558
  %v5873 = vpop.f32.mrb[0].mxu0
  %v5874 = vadd.f32 0.0, %v5873
  %v5875 = vpop.f32.mrb[0].mxu0
  %v5876 = vpop.f32.mrb[0].mxu0
  %v5877 = vadd.f32 0.0, %v5876
  %v5878 = vpop.f32.mrb[0].mxu0
  %5879 = vmatprep.mubr.bf16.mxu0 0
  %5880 = vmatmul.mubr.bf16.gmra.mrb[0].mxu0 %v5561
  %v5881 = vpop.f32.mrb[0].mxu0
  %v5882 = vadd.f32 0.0, %v5881
  %v5883 = vpop.f32.mrb[0].mxu0
  %v5884 = vpop.f32.mrb[0].mxu0
  %v5885 = vadd.f32 0.0, %v5884
  %v5886 = vpop.f32.mrb[0].mxu0
  %5887 = vmatprep.mubr.bf16.mxu0 0
  %5888 = vmatmul.mubr.bf16.gmra.mrb[0].mxu0 %v5564
  %v5889 = vpop.f32.mrb[0].mxu0
  %v5890 = vadd.f32 0.0, %v5889
  %v5891 = vpop.f32.mrb[0].mxu0
  %v5892 = vpop.f32.mrb[0].mxu0
  %v5893 = vadd.f32 0.0, %v5892
  %v5894 = vpop.f32.mrb[0].mxu0
  %5895 = vmatprep.mubr.bf16.mxu0 0
  %5896 = vmatmul.mubr.bf16.gmra.mrb[0].mxu0 %v5567
  %v5897 = vpop.f32.mrb[0].mxu0
  %v5898 = vadd.f32 0.0, %v5897
  %v5899 = vpop.f32.mrb[0].mxu0
  %v5900 = vpop.f32.mrb[0].mxu0
  %v5901 = vadd.f32 0.0, %v5900
  %v5902 = vpop.f32.mrb[0].mxu0
  %5903 = vmatprep.mubr.bf16.mxu0 0
  %5904 = vmatmul.mubr.bf16.gmra.mrb[0].mxu0 %v5570
  %v5905 = vpop.f32.mrb[0].mxu0
  %v5906 = vadd.f32 0.0, %v5905
  %v5907 = vpop.f32.mrb[0].mxu0
  %v5908 = vpop.f32.mrb[0].mxu0
  %v5909 = vadd.f32 0.0, %v5908
  %v5910 = vpop.f32.mrb[0].mxu0
  %5911 = vmatprep.mubr.bf16.mxu0 0
  %5912 = vmatmul.mubr.bf16.gmra.mrb[0].mxu0 %v5573
  %v5913 = vpop.f32.mrb[0].mxu0
  %v5914 = vadd.f32 0.0, %v5913
  %v5915 = vpop.f32.mrb[0].mxu0
  %v5916 = vpop.f32.mrb[0].mxu0
  %v5917 = vadd.f32 0.0, %v5916
  %v5918 = vpop.f32.mrb[0].mxu0
  %5919 = vmatprep.mubr.bf16.mxu0 0
  %5920 = vmatmul.mubr.bf16.gmra.mrb[0].mxu0 %v5576
  %v5921 = vpop.f32.mrb[0].mxu0
  %v5922 = vadd.f32 0.0, %v5921
  %v5923 = vpop.f32.mrb[0].mxu0
  %v5924 = vpop.f32.mrb[0].mxu0
  %v5925 = vadd.f32 0.0, %v5924
  %v5926 = vpop.f32.mrb[0].mxu0
  %5927 = vmatprep.mubr.bf16.mxu0 0
  %5928 = vmatmul.mubr.bf16.gmra.mrb[0].mxu0 %v5579
  %v5929 = vpop.f32.mrb[0].mxu0
  %v5930 = vadd.f32 0.0, %v5929
  %v5931 = vpop.f32.mrb[0].mxu0
  %v5932 = vpop.f32.mrb[0].mxu0
  %v5933 = vadd.f32 0.0, %v5932
  %v5934 = vpop.f32.mrb[0].mxu0
  %5935 = vmatprep.mubr.bf16.mxu0 0
  %5936 = vmatmul.mubr.bf16.gmra.mrb[0].mxu0 %v5582
  %v5937 = vpop.f32.mrb[0].mxu0
  %v5938 = vadd.f32 0.0, %v5937
  %v5939 = vpop.f32.mrb[0].mxu0
  %v5940 = vpop.f32.mrb[0].mxu0
  %v5941 = vadd.f32 0.0, %v5940
  %v5942 = vpop.f32.mrb[0].mxu0
  %5943 = vmatprep.mubr.bf16.mxu0 0
  %5944 = vmatmul.mubr.bf16.gmra.mrb[0].mxu0 %v5585
  %v5945 = vpop.f32.mrb[0].mxu0
  %v5946 = vadd.f32 0.0, %v5945
  %v5947 = vpop.f32.mrb[0].mxu0
  %v5948 = vpop.f32.mrb[0].mxu0
  %v5949 = vadd.f32 0.0, %v5948
  %v5950 = vpop.f32.mrb[0].mxu0
  %5951 = vmatprep.mubr.bf16.mxu0 0
  %5952 = vmatmul.mubr.bf16.gmra.mrb[0].mxu0 %v5588
  %v5953 = vpop.f32.mrb[0].mxu0
  %v5954 = vadd.f32 0.0, %v5953
  %v5955 = vpop.f32.mrb[0].mxu0
  %v5956 = vpop.f32.mrb[0].mxu0
  %v5957 = vadd.f32 0.0, %v5956
  %v5958 = vpop.f32.mrb[0].mxu0
  %5959 = vmatprep.mubr.bf16.mxu0 0
  %5960 = vmatmul.mubr.bf16.gmra.mrb[0].mxu0 %v5591
  %v5961 = vpop.f32.mrb[0].mxu0
  %v5962 = vadd.f32 0.0, %v5961
  %v5963 = vpop.f32.mrb[0].mxu0
  %v5964 = vpop.f32.mrb[0].mxu0
  %v5965 = vadd.f32 0.0, %v5964
  %v5966 = vpop.f32.mrb[0].mxu0
  %5967 = vmatprep.mubr.bf16.mxu0 0
  %5968 = vmatmul.mubr.bf16.gmra.mrb[0].mxu0 %v5594
  %v5969 = vpop.f32.mrb[0].mxu0
  %v5970 = vadd.f32 0.0, %v5969
  %v5971 = vpop.f32.mrb[0].mxu0
  %v5972 = vpop.f32.mrb[0].mxu0
  %v5973 = vadd.f32 0.0, %v5972
  %v5974 = vpop.f32.mrb[0].mxu0
  %5975 = vmatprep.mubr.bf16.mxu0 0
  %5976 = vmatmul.mubr.bf16.gmra.mrb[0].mxu0 %v5597
  %v5977 = vpop.f32.mrb[0].mxu0
  %v5978 = vadd.f32 0.0, %v5977
  %v5979 = vpop.f32.mrb[0].mxu0
  %v5980 = vpop.f32.mrb[0].mxu0
  %v5981 = vadd.f32 0.0, %v5980
  %v5982 = vpop.f32.mrb[0].mxu0
  %5983 = vmatprep.mubr.bf16.mxu0 0
  %5984 = vmatmul.mubr.bf16.gmra.mrb[0].mxu0 %v5600
  %v5985 = vpop.f32.mrb[0].mxu0
  %v5986 = vadd.f32 0.0, %v5985
  %v5987 = vpop.f32.mrb[0].mxu0
  %v5988 = vpop.f32.mrb[0].mxu0
  %v5989 = vadd.f32 0.0, %v5988
  %v5990 = vpop.f32.mrb[0].mxu0
  %5991 = vmatprep.mubr.bf16.mxu0 0
  %5992 = vmatmul.mubr.bf16.gmra.mrb[0].mxu0 %v5603
  %v5993 = vpop.f32.mrb[0].mxu0
  %v5994 = vadd.f32 0.0, %v5993
  %v5995 = vpop.f32.mrb[0].mxu0
  %v5996 = vpop.f32.mrb[0].mxu0
  %v5997 = vadd.f32 0.0, %v5996
  %v5998 = vpop.f32.mrb[0].mxu0
  %5999 = vmatprep.mubr.bf16.mxu0 0
  %6000 = vmatmul.mubr.bf16.gmra.mrb[0].mxu0 %v5606
  %v6001 = vpop.f32.mrb[0].mxu0
  %v6002 = vadd.f32 0.0, %v6001
  %v6003 = vpop.f32.mrb[0].mxu0
  %v6004 = vpop.f32.mrb[0].mxu0
  %v6005 = vadd.f32 0.0, %v6004
  %v6006 = vpop.f32.mrb[0].mxu0
  %6007 = vmatprep.mubr.bf16.mxu0 0
  %6008 = vmatmul.mubr.bf16.gmra.mrb[0].mxu0 %v5609
  %v6009 = vpop.f32.mrb[0].mxu0
  %v6010 = vadd.f32 0.0, %v6009
  %v6011 = vpop.f32.mrb[0].mxu0
  %v6012 = vpop.f32.mrb[0].mxu0
  %v6013 = vadd.f32 0.0, %v6012
  %v6014 = vpop.f32.mrb[0].mxu0
  %6015 = vmatprep.mubr.bf16.mxu0 0
  %6016 = vmatmul.mubr.bf16.gmra.mrb[0].mxu0 %v5612
  %v6017 = vpop.f32.mrb[0].mxu0
  %v6018 = vadd.f32 0.0, %v6017
  %v6019 = vpop.f32.mrb[0].mxu0
  %v6020 = vpop.f32.mrb[0].mxu0
  %v6021 = vadd.f32 0.0, %v6020
  %v6022 = vpop.f32.mrb[0].mxu0
  %6023 = vmatprep.mubr.bf16.mxu0 0
  %6024 = vmatmul.mubr.bf16.gmra.mrb[0].mxu0 %v5615
  %v6025 = vpop.f32.mrb[0].mxu0
  %v6026 = vadd.f32 0.0, %v6025
  %v6027 = vpop.f32.mrb[0].mxu0
  %v6028 = vpop.f32.mrb[0].mxu0
  %v6029 = vadd.f32 0.0, %v6028
  %v6030 = vpop.f32.mrb[0].mxu0
  %6031 = vmatprep.mubr.bf16.mxu0 0
  %6032 = vmatmul.mubr.bf16.gmra.mrb[0].mxu0 %v5618
  %v6033 = vpop.f32.mrb[0].mxu0
  %v6034 = vadd.f32 0.0, %v6033
  %v6035 = vpop.f32.mrb[0].mxu0
  %v6036 = vpop.f32.mrb[0].mxu0
  %v6037 = vadd.f32 0.0, %v6036
  %v6038 = vpop.f32.mrb[0].mxu0
  %6039 = vmatprep.mubr.bf16.mxu0 0
  %6040 = vmatmul.mubr.bf16.gmra.mrb[0].mxu0 %v5621
  %v6041 = vpop.f32.mrb[0].mxu0
  %v6042 = vadd.f32 0.0, %v6041
  %v6043 = vpop.f32.mrb[0].mxu0
  %v6044 = vpop.f32.mrb[0].mxu0
  %v6045 = vadd.f32 0.0, %v6044
  %v6046 = vpop.f32.mrb[0].mxu0
  %6047 = vmatprep.mubr.bf16.mxu0 0
  %6048 = vmatmul.mubr.bf16.gmra.mrb[0].mxu0 %v5624
  %v6049 = vpop.f32.mrb[0].mxu0
  %v6050 = vadd.f32 0.0, %v6049
  %v6051 = vpop.f32.mrb[0].mxu0
  %v6052 = vpop.f32.mrb[0].mxu0
  %v6053 = vadd.f32 0.0, %v6052
  %v6054 = vpop.f32.mrb[0].mxu0
  %6055 = vmatprep.mubr.bf16.mxu0 0
  %6056 = vmatmul.mubr.bf16.gmra.mrb[0].mxu0 %v5627
  %v6057 = vpop.f32.mrb[0].mxu0
  %v6058 = vadd.f32 0.0, %v6057
  %v6059 = vpop.f32.mrb[0].mxu0
  %v6060 = vpop.f32.mrb[0].mxu0
  %v6061 = vadd.f32 0.0, %v6060
  %v6062 = vpop.f32.mrb[0].mxu0
  %6063 = vmatprep.mubr.bf16.mxu0 0
  %6064 = vmatmul.mubr.bf16.gmra.mrb[0].mxu0 %v5630
  %v6065 = vpop.f32.mrb[0].mxu0
  %v6066 = vadd.f32 0.0, %v6065
  %v6067 = vpop.f32.mrb[0].mxu0
  %v6068 = vpop.f32.mrb[0].mxu0
  %v6069 = vadd.f32 0.0, %v6068
  %v6070 = vpop.f32.mrb[0].mxu0
  %6071 = vmatprep.mubr.bf16.mxu0 0
  %6072 = vmatmul.mubr.bf16.gmra.mrb[0].mxu0 %v5633
  %v6073 = vpop.f32.mrb[0].mxu0
  %v6074 = vadd.f32 0.0, %v6073
  %v6075 = vpop.f32.mrb[0].mxu0
  %v6076 = vpop.f32.mrb[0].mxu0
  %v6077 = vadd.f32 0.0, %v6076
  %v6078 = vpop.f32.mrb[0].mxu0
  %6079 = vmatprep.mubr.bf16.mxu0 0
  %6080 = vmatmul.mubr.bf16.gmra.mrb[0].mxu0 %v5636
  %v6081 = vpop.f32.mrb[0].mxu0
  %v6082 = vadd.f32 0.0, %v6081
  %v6083 = vpop.f32.mrb[0].mxu0
  %v6084 = vpop.f32.mrb[0].mxu0
  %v6085 = vadd.f32 0.0, %v6084
  %v6086 = vpop.f32.mrb[0].mxu0
  %6087 = vmatprep.mubr.bf16.mxu0 0
  %6088 = vmatmul.mubr.bf16.gmra.mrb[0].mxu0 %v5639
  %v6089 = vpop.f32.mrb[0].mxu0
  %v6090 = vadd.f32 0.0, %v6089
  %v6091 = vpop.f32.mrb[0].mxu0
  %v6092 = vpop.f32.mrb[0].mxu0
  %v6093 = vadd.f32 0.0, %v6092
  %v6094 = vpop.f32.mrb[0].mxu0
  %6095 = vmatprep.mubr.bf16.mxu0 0
  %6096 = vmatmul.mubr.bf16.gmra.mrb[0].mxu0 %v5642
  %v6097 = vpop.f32.mrb[0].mxu0
  %v6098 = vadd.f32 0.0, %v6097
  %v6099 = vpop.f32.mrb[0].mxu0
  %v6100 = vpop.f32.mrb[0].mxu0
  %v6101 = vadd.f32 0.0, %v6100
  %v6102 = vpop.f32.mrb[0].mxu0
  %6103 = vmatprep.mubr.bf16.mxu0 0
  %6104 = vmatmul.mubr.bf16.gmra.mrb[0].mxu0 %v5645
  %v6105 = vpop.f32.mrb[0].mxu0
  %v6106 = vadd.f32 0.0, %v6105
  %v6107 = vpop.f32.mrb[0].mxu0
  %v6108 = vpop.f32.mrb[0].mxu0
  %v6109 = vadd.f32 0.0, %v6108
  %v6110 = vpop.f32.mrb[0].mxu0
  %6111 = vmatprep.mubr.bf16.mxu0 0
  %6112 = vmatmul.mubr.bf16.gmra.mrb[0].mxu0 %v5648
  %v6113 = vpop.f32.mrb[0].mxu0
  %v6114 = vadd.f32 0.0, %v6113
  %v6115 = vpop.f32.mrb[0].mxu0
  %v6116 = vpop.f32.mrb[0].mxu0
  %v6117 = vadd.f32 0.0, %v6116
  %v6118 = vpop.f32.mrb[0].mxu0
  %6119 = vmatprep.mubr.bf16.mxu0 0
  %6120 = vmatmul.mubr.bf16.gmra.mrb[0].mxu0 %v5651
  %v6121 = vpop.f32.mrb[0].mxu0
  %v6122 = vadd.f32 0.0, %v6121
  %v6123 = vpop.f32.mrb[0].mxu0
  %v6124 = vpop.f32.mrb[0].mxu0
  %v6125 = vadd.f32 0.0, %v6124
  %v6126 = vpop.f32.mrb[0].mxu0
  %6127 = vmatprep.mubr.bf16.mxu0 0
  %6128 = vmatmul.mubr.bf16.gmra.mrb[0].mxu0 %v5654
  %v6129 = vpop.f32.mrb[0].mxu0
  %v6130 = vadd.f32 0.0, %v6129
  %v6131 = vpop.f32.mrb[0].mxu0
  %v6132 = vpop.f32.mrb[0].mxu0
  %v6133 = vadd.f32 0.0, %v6132
  %v6134 = vpop.f32.mrb[0].mxu0
  %6135 = vmatprep.mubr.bf16.mxu0 0
  %6136 = vmatmul.mubr.bf16.gmra.mrb[0].mxu0 %v5657
  %v6137 = vpop.f32.mrb[0].mxu0
  %v6138 = vadd.f32 0.0, %v6137
  %v6139 = vpop.f32.mrb[0].mxu0
  %v6140 = vpop.f32.mrb[0].mxu0
  %v6141 = vadd.f32 0.0, %v6140
  %v6142 = vpop.f32.mrb[0].mxu0
  %6143 = vmatprep.mubr.bf16.mxu0 0
  %6144 = vmatmul.mubr.bf16.gmra.mrb[0].mxu0 %v5660
  %v6145 = vpop.f32.mrb[0].mxu0
  %v6146 = vadd.f32 0.0, %v6145
  %v6147 = vpop.f32.mrb[0].mxu0
  %v6148 = vpop.f32.mrb[0].mxu0
  %v6149 = vadd.f32 0.0, %v6148
  %v6150 = vpop.f32.mrb[0].mxu0
  %6151 = vmatprep.mubr.bf16.mxu0 0
  %6152 = vmatmul.mubr.bf16.gmra.mrb[0].mxu0 %v5663
  %v6153 = vpop.f32.mrb[0].mxu0
  %v6154 = vadd.f32 0.0, %v6153
  %v6155 = vpop.f32.mrb[0].mxu0
  %v6156 = vpop.f32.mrb[0].mxu0
  %v6157 = vadd.f32 0.0, %v6156
  %v6158 = vpop.f32.mrb[0].mxu0
  %6159 = vmatprep.mubr.bf16.mxu0 0
  %6160 = vmatmul.mubr.bf16.gmra.mrb[0].mxu0 %v5666
  %v6161 = vpop.f32.mrb[0].mxu0
  %v6162 = vadd.f32 0.0, %v6161
  %v6163 = vpop.f32.mrb[0].mxu0
  %v6164 = vpop.f32.mrb[0].mxu0
  %v6165 = vadd.f32 0.0, %v6164
  %v6166 = vpop.f32.mrb[0].mxu0
  %6167 = vmatprep.mubr.bf16.mxu0 0
  %6168 = vmatmul.mubr.bf16.gmra.mrb[0].mxu0 %v5669
  %v6169 = vpop.f32.mrb[0].mxu0
  %v6170 = vpop.f32.mrb[0].mxu0
  %v6171 = vpop.f32.mrb[0].mxu0
  %v6172 = vpop.f32.mrb[0].mxu0
  %6173 = vdwg.mxu0
  %v6176 = vunpack.c.l.b16 %v5482
  %v6177 = vunpack.c.l.b16 %v5483
  %v6178 = vpack.c.b16 %v6177, %v6176
  %v6181 = vsel %vm5493, %v5421, 0
  %6183 = vmatprep.subr.bf16.mxu0 0
  %6184 = vmatpush1.bf16.msra.mxu0 %v6178
  %6185 = vmatprep.subr.bf16.mxu0 0
  %6186 = vmatpush1.bf16.msra.mxu0 0
  %6187 = vmatprep.subr.bf16.mxu0 0
  %6188 = vmatpush1.bf16.msra.mxu0 0
  %6189 = vmatprep.subr.bf16.mxu0 0
  %6190 = vmatpush1.bf16.msra.mxu0 0
  %6191 = vmatprep.subr.bf16.mxu0 0
  %6192 = vmatpush1.bf16.msra.mxu0 0
  %6193 = vmatprep.subr.bf16.mxu0 0
  %6194 = vmatpush1.bf16.msra.mxu0 0
  %6195 = vmatprep.subr.bf16.mxu0 0
  %6196 = vmatpush1.bf16.msra.mxu0 0
  %6197 = vmatprep.subr.bf16.mxu0 0
  %6198 = vmatpush1.bf16.msra.mxu0 0
  %6199 = vmatprep.subr.bf16.mxu0 0
  %6200 = vmatpush1.bf16.msra.mxu0 0
  %6201 = vmatprep.subr.bf16.mxu0 0
  %6202 = vmatpush1.bf16.msra.mxu0 0
  %6203 = vmatprep.subr.bf16.mxu0 0
  %6204 = vmatpush1.bf16.msra.mxu0 0
  %6205 = vmatprep.subr.bf16.mxu0 0
  %6206 = vmatpush1.bf16.msra.mxu0 0
  %6207 = vmatprep.subr.bf16.mxu0 0
  %6208 = vmatpush1.bf16.msra.mxu0 0
  %6209 = vmatprep.subr.bf16.mxu0 0
  %6210 = vmatpush1.bf16.msra.mxu0 0
  %6211 = vmatprep.subr.bf16.mxu0 0
  %6212 = vmatpush1.bf16.msra.mxu0 0
  %6213 = vmatprep.subr.bf16.mxu0 0
  %6214 = vmatpush1.bf16.msra.mxu0 0
  %6215 = vmatprep.mubr.bf16.mxu0 0
  %6216 = vmatmul.mubr.bf16.gmra.mrb[0].mxu0 %v6181
  %v6217 = vpop.f32.mrb[0].mxu0
  %v6218 = vadd.f32 %v5706, %v6217
  %v6219 = vpop.f32.mrb[0].mxu0
  %v6220 = vpop.f32.mrb[0].mxu0
  %v6221 = vadd.f32 %v5709, %v6220
  %v6222 = vpop.f32.mrb[0].mxu0
  %6223 = vmatprep.mubr.bf16.mxu0 0
  %6224 = vmatmul.mubr.bf16.gmra.mrb[0].mxu0 %v5495
  %v6225 = vpop.f32.mrb[0].mxu0
  %v6226 = vadd.f32 %v5714, %v6225
  %v6227 = vpop.f32.mrb[0].mxu0
  %v6228 = vpop.f32.mrb[0].mxu0
  %v6229 = vadd.f32 %v5717, %v6228
  %v6230 = vpop.f32.mrb[0].mxu0
  %6231 = vmatprep.mubr.bf16.mxu0 0
  %6232 = vmatmul.mubr.bf16.gmra.mrb[0].mxu0 %v5498
  %v6233 = vpop.f32.mrb[0].mxu0
  %v6234 = vadd.f32 %v5722, %v6233
  %v6235 = vpop.f32.mrb[0].mxu0
  %v6236 = vpop.f32.mrb[0].mxu0
  %v6237 = vadd.f32 %v5725, %v6236
  %v6238 = vpop.f32.mrb[0].mxu0
  %6239 = vmatprep.mubr.bf16.mxu0 0
  %6240 = vmatmul.mubr.bf16.gmra.mrb[0].mxu0 %v5501
  %v6241 = vpop.f32.mrb[0].mxu0
  %v6242 = vadd.f32 %v5730, %v6241
  %v6243 = vpop.f32.mrb[0].mxu0
  %v6244 = vpop.f32.mrb[0].mxu0
  %v6245 = vadd.f32 %v5733, %v6244
  %v6246 = vpop.f32.mrb[0].mxu0
  %6247 = vmatprep.mubr.bf16.mxu0 0
  %6248 = vmatmul.mubr.bf16.gmra.mrb[0].mxu0 %v5504
  %v6249 = vpop.f32.mrb[0].mxu0
  %v6250 = vadd.f32 %v5738, %v6249
  %v6251 = vpop.f32.mrb[0].mxu0
  %v6252 = vpop.f32.mrb[0].mxu0
  %v6253 = vadd.f32 %v5741, %v6252
  %v6254 = vpop.f32.mrb[0].mxu0
  %6255 = vmatprep.mubr.bf16.mxu0 0
  %6256 = vmatmul.mubr.bf16.gmra.mrb[0].mxu0 %v5507
  %v6257 = vpop.f32.mrb[0].mxu0
  %v6258 = vadd.f32 %v5746, %v6257
  %v6259 = vpop.f32.mrb[0].mxu0
  %v6260 = vpop.f32.mrb[0].mxu0
  %v6261 = vadd.f32 %v5749, %v6260
  %v6262 = vpop.f32.mrb[0].mxu0
  %6263 = vmatprep.mubr.bf16.mxu0 0
  %6264 = vmatmul.mubr.bf16.gmra.mrb[0].mxu0 %v5510
  %v6265 = vpop.f32.mrb[0].mxu0
  %v6266 = vadd.f32 %v5754, %v6265
  %v6267 = vpop.f32.mrb[0].mxu0
  %v6268 = vpop.f32.mrb[0].mxu0
  %v6269 = vadd.f32 %v5757, %v6268
  %v6270 = vpop.f32.mrb[0].mxu0
  %6271 = vmatprep.mubr.bf16.mxu0 0
  %6272 = vmatmul.mubr.bf16.gmra.mrb[0].mxu0 %v5513
  %v6273 = vpop.f32.mrb[0].mxu0
  %v6274 = vadd.f32 %v5762, %v6273
  %v6275 = vpop.f32.mrb[0].mxu0
  %v6276 = vpop.f32.mrb[0].mxu0
  %v6277 = vadd.f32 %v5765, %v6276
  %v6278 = vpop.f32.mrb[0].mxu0
  %6279 = vmatprep.mubr.bf16.mxu0 0
  %6280 = vmatmul.mubr.bf16.gmra.mrb[0].mxu0 %v5516
  %v6281 = vpop.f32.mrb[0].mxu0
  %v6282 = vadd.f32 %v5770, %v6281
  %v6283 = vpop.f32.mrb[0].mxu0
  %v6284 = vpop.f32.mrb[0].mxu0
  %v6285 = vadd.f32 %v5773, %v6284
  %v6286 = vpop.f32.mrb[0].mxu0
  %6287 = vmatprep.mubr.bf16.mxu0 0
  %6288 = vmatmul.mubr.bf16.gmra.mrb[0].mxu0 %v5519
  %v6289 = vpop.f32.mrb[0].mxu0
  %v6290 = vadd.f32 %v5778, %v6289
  %v6291 = vpop.f32.mrb[0].mxu0
  %v6292 = vpop.f32.mrb[0].mxu0
  %v6293 = vadd.f32 %v5781, %v6292
  %v6294 = vpop.f32.mrb[0].mxu0
  %6295 = vmatprep.mubr.bf16.mxu0 0
  %6296 = vmatmul.mubr.bf16.gmra.mrb[0].mxu0 %v5522
  %v6297 = vpop.f32.mrb[0].mxu0
  %v6298 = vadd.f32 %v5786, %v6297
  %v6299 = vpop.f32.mrb[0].mxu0
  %v6300 = vpop.f32.mrb[0].mxu0
  %v6301 = vadd.f32 %v5789, %v6300
  %v6302 = vpop.f32.mrb[0].mxu0
  %6303 = vmatprep.mubr.bf16.mxu0 0
  %6304 = vmatmul.mubr.bf16.gmra.mrb[0].mxu0 %v5525
  %v6305 = vpop.f32.mrb[0].mxu0
  %v6306 = vadd.f32 %v5794, %v6305
  %v6307 = vpop.f32.mrb[0].mxu0
  %v6308 = vpop.f32.mrb[0].mxu0
  %v6309 = vadd.f32 %v5797, %v6308
  %v6310 = vpop.f32.mrb[0].mxu0
  %6311 = vmatprep.mubr.bf16.mxu0 0
  %6312 = vmatmul.mubr.bf16.gmra.mrb[0].mxu0 %v5528
  %v6313 = vpop.f32.mrb[0].mxu0
  %v6314 = vadd.f32 %v5802, %v6313
  %v6315 = vpop.f32.mrb[0].mxu0
  %v6316 = vpop.f32.mrb[0].mxu0
  %v6317 = vadd.f32 %v5805, %v6316
  %v6318 = vpop.f32.mrb[0].mxu0
  %6319 = vmatprep.mubr.bf16.mxu0 0
  %6320 = vmatmul.mubr.bf16.gmra.mrb[0].mxu0 %v5531
  %v6321 = vpop.f32.mrb[0].mxu0
  %v6322 = vadd.f32 %v5810, %v6321
  %v6323 = vpop.f32.mrb[0].mxu0
  %v6324 = vpop.f32.mrb[0].mxu0
  %v6325 = vadd.f32 %v5813, %v6324
  %v6326 = vpop.f32.mrb[0].mxu0
  %6327 = vmatprep.mubr.bf16.mxu0 0
  %6328 = vmatmul.mubr.bf16.gmra.mrb[0].mxu0 %v5534
  %v6329 = vpop.f32.mrb[0].mxu0
  %v6330 = vadd.f32 %v5818, %v6329
  %v6331 = vpop.f32.mrb[0].mxu0
  %v6332 = vpop.f32.mrb[0].mxu0
  %v6333 = vadd.f32 %v5821, %v6332
  %v6334 = vpop.f32.mrb[0].mxu0
  %6335 = vmatprep.mubr.bf16.mxu0 0
  %6336 = vmatmul.mubr.bf16.gmra.mrb[0].mxu0 %v5537
  %v6337 = vpop.f32.mrb[0].mxu0
  %v6338 = vadd.f32 %v5826, %v6337
  %v6339 = vpop.f32.mrb[0].mxu0
  %v6340 = vpop.f32.mrb[0].mxu0
  %v6341 = vadd.f32 %v5829, %v6340
  %v6342 = vpop.f32.mrb[0].mxu0
  %6343 = vmatprep.mubr.bf16.mxu0 0
  %6344 = vmatmul.mubr.bf16.gmra.mrb[0].mxu0 %v5540
  %v6345 = vpop.f32.mrb[0].mxu0
  %v6346 = vadd.f32 %v5834, %v6345
  %v6347 = vpop.f32.mrb[0].mxu0
  %v6348 = vpop.f32.mrb[0].mxu0
  %v6349 = vadd.f32 %v5837, %v6348
  %v6350 = vpop.f32.mrb[0].mxu0
  %6351 = vmatprep.mubr.bf16.mxu0 0
  %6352 = vmatmul.mubr.bf16.gmra.mrb[0].mxu0 %v5543
  %v6353 = vpop.f32.mrb[0].mxu0
  %v6354 = vadd.f32 %v5842, %v6353
  %v6355 = vpop.f32.mrb[0].mxu0
  %v6356 = vpop.f32.mrb[0].mxu0
  %v6357 = vadd.f32 %v5845, %v6356
  %v6358 = vpop.f32.mrb[0].mxu0
  %6359 = vmatprep.mubr.bf16.mxu0 0
  %6360 = vmatmul.mubr.bf16.gmra.mrb[0].mxu0 %v5546
  %v6361 = vpop.f32.mrb[0].mxu0
  %v6362 = vadd.f32 %v5850, %v6361
  %v6363 = vpop.f32.mrb[0].mxu0
  %v6364 = vpop.f32.mrb[0].mxu0
  %v6365 = vadd.f32 %v5853, %v6364
  %v6366 = vpop.f32.mrb[0].mxu0
  %6367 = vmatprep.mubr.bf16.mxu0 0
  %6368 = vmatmul.mubr.bf16.gmra.mrb[0].mxu0 %v5549
  %v6369 = vpop.f32.mrb[0].mxu0
  %v6370 = vadd.f32 %v5858, %v6369
  %v6371 = vpop.f32.mrb[0].mxu0
  %v6372 = vpop.f32.mrb[0].mxu0
  %v6373 = vadd.f32 %v5861, %v6372
  %v6374 = vpop.f32.mrb[0].mxu0
  %6375 = vmatprep.mubr.bf16.mxu0 0
  %6376 = vmatmul.mubr.bf16.gmra.mrb[0].mxu0 %v5552
  %v6377 = vpop.f32.mrb[0].mxu0
  %v6378 = vadd.f32 %v5866, %v6377
  %v6379 = vpop.f32.mrb[0].mxu0
  %v6380 = vpop.f32.mrb[0].mxu0
  %v6381 = vadd.f32 %v5869, %v6380
  %v6382 = vpop.f32.mrb[0].mxu0
  %6383 = vmatprep.mubr.bf16.mxu0 0
  %6384 = vmatmul.mubr.bf16.gmra.mrb[0].mxu0 %v5555
  %v6385 = vpop.f32.mrb[0].mxu0
  %v6386 = vadd.f32 %v5874, %v6385
  %v6387 = vpop.f32.mrb[0].mxu0
  %v6388 = vpop.f32.mrb[0].mxu0
  %v6389 = vadd.f32 %v5877, %v6388
  %v6390 = vpop.f32.mrb[0].mxu0
  %6391 = vmatprep.mubr.bf16.mxu0 0
  %6392 = vmatmul.mubr.bf16.gmra.mrb[0].mxu0 %v5558
  %v6393 = vpop.f32.mrb[0].mxu0
  %v6394 = vadd.f32 %v5882, %v6393
  %v6395 = vpop.f32.mrb[0].mxu0
  %v6396 = vpop.f32.mrb[0].mxu0
  %v6397 = vadd.f32 %v5885, %v6396
  %v6398 = vpop.f32.mrb[0].mxu0
  %6399 = vmatprep.mubr.bf16.mxu0 0
  %6400 = vmatmul.mubr.bf16.gmra.mrb[0].mxu0 %v5561
  %v6401 = vpop.f32.mrb[0].mxu0
  %v6402 = vadd.f32 %v5890, %v6401
  %v6403 = vpop.f32.mrb[0].mxu0
  %v6404 = vpop.f32.mrb[0].mxu0
  %v6405 = vadd.f32 %v5893, %v6404
  %v6406 = vpop.f32.mrb[0].mxu0
  %6407 = vmatprep.mubr.bf16.mxu0 0
  %6408 = vmatmul.mubr.bf16.gmra.mrb[0].mxu0 %v5564
  %v6409 = vpop.f32.mrb[0].mxu0
  %v6410 = vadd.f32 %v5898, %v6409
  %v6411 = vpop.f32.mrb[0].mxu0
  %v6412 = vpop.f32.mrb[0].mxu0
  %v6413 = vadd.f32 %v5901, %v6412
  %v6414 = vpop.f32.mrb[0].mxu0
  %6415 = vmatprep.mubr.bf16.mxu0 0
  %6416 = vmatmul.mubr.bf16.gmra.mrb[0].mxu0 %v5567
  %v6417 = vpop.f32.mrb[0].mxu0
  %v6418 = vadd.f32 %v5906, %v6417
  %v6419 = vpop.f32.mrb[0].mxu0
  %v6420 = vpop.f32.mrb[0].mxu0
  %v6421 = vadd.f32 %v5909, %v6420
  %v6422 = vpop.f32.mrb[0].mxu0
  %6423 = vmatprep.mubr.bf16.mxu0 0
  %6424 = vmatmul.mubr.bf16.gmra.mrb[0].mxu0 %v5570
  %v6425 = vpop.f32.mrb[0].mxu0
  %v6426 = vadd.f32 %v5914, %v6425
  %v6427 = vpop.f32.mrb[0].mxu0
  %v6428 = vpop.f32.mrb[0].mxu0
  %v6429 = vadd.f32 %v5917, %v6428
  %v6430 = vpop.f32.mrb[0].mxu0
  %6431 = vmatprep.mubr.bf16.mxu0 0
  %6432 = vmatmul.mubr.bf16.gmra.mrb[0].mxu0 %v5573
  %v6433 = vpop.f32.mrb[0].mxu0
  %v6434 = vadd.f32 %v5922, %v6433
  %v6435 = vpop.f32.mrb[0].mxu0
  %v6436 = vpop.f32.mrb[0].mxu0
  %v6437 = vadd.f32 %v5925, %v6436
  %v6438 = vpop.f32.mrb[0].mxu0
  %6439 = vmatprep.mubr.bf16.mxu0 0
  %6440 = vmatmul.mubr.bf16.gmra.mrb[0].mxu0 %v5576
  %v6441 = vpop.f32.mrb[0].mxu0
  %v6442 = vadd.f32 %v5930, %v6441
  %v6443 = vpop.f32.mrb[0].mxu0
  %v6444 = vpop.f32.mrb[0].mxu0
  %v6445 = vadd.f32 %v5933, %v6444
  %v6446 = vpop.f32.mrb[0].mxu0
  %6447 = vmatprep.mubr.bf16.mxu0 0
  %6448 = vmatmul.mubr.bf16.gmra.mrb[0].mxu0 %v5579
  %v6449 = vpop.f32.mrb[0].mxu0
  %v6450 = vadd.f32 %v5938, %v6449
  %v6451 = vpop.f32.mrb[0].mxu0
  %v6452 = vpop.f32.mrb[0].mxu0
  %v6453 = vadd.f32 %v5941, %v6452
  %v6454 = vpop.f32.mrb[0].mxu0
  %6455 = vmatprep.mubr.bf16.mxu0 0
  %6456 = vmatmul.mubr.bf16.gmra.mrb[0].mxu0 %v5582
  %v6457 = vpop.f32.mrb[0].mxu0
  %v6458 = vadd.f32 %v5946, %v6457
  %v6459 = vpop.f32.mrb[0].mxu0
  %v6460 = vpop.f32.mrb[0].mxu0
  %v6461 = vadd.f32 %v5949, %v6460
  %v6462 = vpop.f32.mrb[0].mxu0
  %6463 = vmatprep.mubr.bf16.mxu0 0
  %6464 = vmatmul.mubr.bf16.gmra.mrb[0].mxu0 %v5585
  %v6465 = vpop.f32.mrb[0].mxu0
  %v6466 = vadd.f32 %v5954, %v6465
  %v6467 = vpop.f32.mrb[0].mxu0
  %v6468 = vpop.f32.mrb[0].mxu0
  %v6469 = vadd.f32 %v5957, %v6468
  %v6470 = vpop.f32.mrb[0].mxu0
  %6471 = vmatprep.mubr.bf16.mxu0 0
  %6472 = vmatmul.mubr.bf16.gmra.mrb[0].mxu0 %v5588
  %v6473 = vpop.f32.mrb[0].mxu0
  %v6474 = vadd.f32 %v5962, %v6473
  %v6475 = vpop.f32.mrb[0].mxu0
  %v6476 = vpop.f32.mrb[0].mxu0
  %v6477 = vadd.f32 %v5965, %v6476
  %v6478 = vpop.f32.mrb[0].mxu0
  %6479 = vmatprep.mubr.bf16.mxu0 0
  %6480 = vmatmul.mubr.bf16.gmra.mrb[0].mxu0 %v5591
  %v6481 = vpop.f32.mrb[0].mxu0
  %v6482 = vadd.f32 %v5970, %v6481
  %v6483 = vpop.f32.mrb[0].mxu0
  %v6484 = vpop.f32.mrb[0].mxu0
  %v6485 = vadd.f32 %v5973, %v6484
  %v6486 = vpop.f32.mrb[0].mxu0
  %6487 = vmatprep.mubr.bf16.mxu0 0
  %6488 = vmatmul.mubr.bf16.gmra.mrb[0].mxu0 %v5594
  %v6489 = vpop.f32.mrb[0].mxu0
  %v6490 = vadd.f32 %v5978, %v6489
  %v6491 = vpop.f32.mrb[0].mxu0
  %v6492 = vpop.f32.mrb[0].mxu0
  %v6493 = vadd.f32 %v5981, %v6492
  %v6494 = vpop.f32.mrb[0].mxu0
  %6495 = vmatprep.mubr.bf16.mxu0 0
  %6496 = vmatmul.mubr.bf16.gmra.mrb[0].mxu0 %v5597
  %v6497 = vpop.f32.mrb[0].mxu0
  %v6498 = vadd.f32 %v5986, %v6497
  %v6499 = vpop.f32.mrb[0].mxu0
  %v6500 = vpop.f32.mrb[0].mxu0
  %v6501 = vadd.f32 %v5989, %v6500
  %v6502 = vpop.f32.mrb[0].mxu0
  %6503 = vmatprep.mubr.bf16.mxu0 0
  %6504 = vmatmul.mubr.bf16.gmra.mrb[0].mxu0 %v5600
  %v6505 = vpop.f32.mrb[0].mxu0
  %v6506 = vadd.f32 %v5994, %v6505
  %v6507 = vpop.f32.mrb[0].mxu0
  %v6508 = vpop.f32.mrb[0].mxu0
  %v6509 = vadd.f32 %v5997, %v6508
  %v6510 = vpop.f32.mrb[0].mxu0
  %6511 = vmatprep.mubr.bf16.mxu0 0
  %6512 = vmatmul.mubr.bf16.gmra.mrb[0].mxu0 %v5603
  %v6513 = vpop.f32.mrb[0].mxu0
  %v6514 = vadd.f32 %v6002, %v6513
  %v6515 = vpop.f32.mrb[0].mxu0
  %v6516 = vpop.f32.mrb[0].mxu0
  %v6517 = vadd.f32 %v6005, %v6516
  %v6518 = vpop.f32.mrb[0].mxu0
  %6519 = vmatprep.mubr.bf16.mxu0 0
  %6520 = vmatmul.mubr.bf16.gmra.mrb[0].mxu0 %v5606
  %v6521 = vpop.f32.mrb[0].mxu0
  %v6522 = vadd.f32 %v6010, %v6521
  %v6523 = vpop.f32.mrb[0].mxu0
  %v6524 = vpop.f32.mrb[0].mxu0
  %v6525 = vadd.f32 %v6013, %v6524
  %v6526 = vpop.f32.mrb[0].mxu0
  %6527 = vmatprep.mubr.bf16.mxu0 0
  %6528 = vmatmul.mubr.bf16.gmra.mrb[0].mxu0 %v5609
  %v6529 = vpop.f32.mrb[0].mxu0
  %v6530 = vadd.f32 %v6018, %v6529
  %v6531 = vpop.f32.mrb[0].mxu0
  %v6532 = vpop.f32.mrb[0].mxu0
  %v6533 = vadd.f32 %v6021, %v6532
  %v6534 = vpop.f32.mrb[0].mxu0
  %6535 = vmatprep.mubr.bf16.mxu0 0
  %6536 = vmatmul.mubr.bf16.gmra.mrb[0].mxu0 %v5612
  %v6537 = vpop.f32.mrb[0].mxu0
  %v6538 = vadd.f32 %v6026, %v6537
  %v6539 = vpop.f32.mrb[0].mxu0
  %v6540 = vpop.f32.mrb[0].mxu0
  %v6541 = vadd.f32 %v6029, %v6540
  %v6542 = vpop.f32.mrb[0].mxu0
  %6543 = vmatprep.mubr.bf16.mxu0 0
  %6544 = vmatmul.mubr.bf16.gmra.mrb[0].mxu0 %v5615
  %v6545 = vpop.f32.mrb[0].mxu0
  %v6546 = vadd.f32 %v6034, %v6545
  %v6547 = vpop.f32.mrb[0].mxu0
  %v6548 = vpop.f32.mrb[0].mxu0
  %v6549 = vadd.f32 %v6037, %v6548
  %v6550 = vpop.f32.mrb[0].mxu0
  %6551 = vmatprep.mubr.bf16.mxu0 0
  %6552 = vmatmul.mubr.bf16.gmra.mrb[0].mxu0 %v5618
  %v6553 = vpop.f32.mrb[0].mxu0
  %v6554 = vadd.f32 %v6042, %v6553
  %v6555 = vpop.f32.mrb[0].mxu0
  %v6556 = vpop.f32.mrb[0].mxu0
  %v6557 = vadd.f32 %v6045, %v6556
  %v6558 = vpop.f32.mrb[0].mxu0
  %6559 = vmatprep.mubr.bf16.mxu0 0
  %6560 = vmatmul.mubr.bf16.gmra.mrb[0].mxu0 %v5621
  %v6561 = vpop.f32.mrb[0].mxu0
  %v6562 = vadd.f32 %v6050, %v6561
  %v6563 = vpop.f32.mrb[0].mxu0
  %v6564 = vpop.f32.mrb[0].mxu0
  %v6565 = vadd.f32 %v6053, %v6564
  %v6566 = vpop.f32.mrb[0].mxu0
  %6567 = vmatprep.mubr.bf16.mxu0 0
  %6568 = vmatmul.mubr.bf16.gmra.mrb[0].mxu0 %v5624
  %v6569 = vpop.f32.mrb[0].mxu0
  %v6570 = vadd.f32 %v6058, %v6569
  %v6571 = vpop.f32.mrb[0].mxu0
  %v6572 = vpop.f32.mrb[0].mxu0
  %v6573 = vadd.f32 %v6061, %v6572
  %v6574 = vpop.f32.mrb[0].mxu0
  %6575 = vmatprep.mubr.bf16.mxu0 0
  %6576 = vmatmul.mubr.bf16.gmra.mrb[0].mxu0 %v5627
  %v6577 = vpop.f32.mrb[0].mxu0
  %v6578 = vadd.f32 %v6066, %v6577
  %v6579 = vpop.f32.mrb[0].mxu0
  %v6580 = vpop.f32.mrb[0].mxu0
  %v6581 = vadd.f32 %v6069, %v6580
  %v6582 = vpop.f32.mrb[0].mxu0
  %6583 = vmatprep.mubr.bf16.mxu0 0
  %6584 = vmatmul.mubr.bf16.gmra.mrb[0].mxu0 %v5630
  %v6585 = vpop.f32.mrb[0].mxu0
  %v6586 = vadd.f32 %v6074, %v6585
  %v6587 = vpop.f32.mrb[0].mxu0
  %v6588 = vpop.f32.mrb[0].mxu0
  %v6589 = vadd.f32 %v6077, %v6588
  %v6590 = vpop.f32.mrb[0].mxu0
  %6591 = vmatprep.mubr.bf16.mxu0 0
  %6592 = vmatmul.mubr.bf16.gmra.mrb[0].mxu0 %v5633
  %v6593 = vpop.f32.mrb[0].mxu0
  %v6594 = vadd.f32 %v6082, %v6593
  %v6595 = vpop.f32.mrb[0].mxu0
  %v6596 = vpop.f32.mrb[0].mxu0
  %v6597 = vadd.f32 %v6085, %v6596
  %v6598 = vpop.f32.mrb[0].mxu0
  %6599 = vmatprep.mubr.bf16.mxu0 0
  %6600 = vmatmul.mubr.bf16.gmra.mrb[0].mxu0 %v5636
  %v6601 = vpop.f32.mrb[0].mxu0
  %v6602 = vadd.f32 %v6090, %v6601
  %v6603 = vpop.f32.mrb[0].mxu0
  %v6604 = vpop.f32.mrb[0].mxu0
  %v6605 = vadd.f32 %v6093, %v6604
  %v6606 = vpop.f32.mrb[0].mxu0
  %6607 = vmatprep.mubr.bf16.mxu0 0
  %6608 = vmatmul.mubr.bf16.gmra.mrb[0].mxu0 %v5639
  %v6609 = vpop.f32.mrb[0].mxu0
  %v6610 = vadd.f32 %v6098, %v6609
  %v6611 = vpop.f32.mrb[0].mxu0
  %v6612 = vpop.f32.mrb[0].mxu0
  %v6613 = vadd.f32 %v6101, %v6612
  %v6614 = vpop.f32.mrb[0].mxu0
  %6615 = vmatprep.mubr.bf16.mxu0 0
  %6616 = vmatmul.mubr.bf16.gmra.mrb[0].mxu0 %v5642
  %v6617 = vpop.f32.mrb[0].mxu0
  %v6618 = vadd.f32 %v6106, %v6617
  %v6619 = vpop.f32.mrb[0].mxu0
  %v6620 = vpop.f32.mrb[0].mxu0
  %v6621 = vadd.f32 %v6109, %v6620
  %v6622 = vpop.f32.mrb[0].mxu0
  %6623 = vmatprep.mubr.bf16.mxu0 0
  %6624 = vmatmul.mubr.bf16.gmra.mrb[0].mxu0 %v5645
  %v6625 = vpop.f32.mrb[0].mxu0
  %v6626 = vadd.f32 %v6114, %v6625
  %v6627 = vpop.f32.mrb[0].mxu0
  %v6628 = vpop.f32.mrb[0].mxu0
  %v6629 = vadd.f32 %v6117, %v6628
  %v6630 = vpop.f32.mrb[0].mxu0
  %6631 = vmatprep.mubr.bf16.mxu0 0
  %6632 = vmatmul.mubr.bf16.gmra.mrb[0].mxu0 %v5648
  %v6633 = vpop.f32.mrb[0].mxu0
  %v6634 = vadd.f32 %v6122, %v6633
  %v6635 = vpop.f32.mrb[0].mxu0
  %v6636 = vpop.f32.mrb[0].mxu0
  %v6637 = vadd.f32 %v6125, %v6636
  %v6638 = vpop.f32.mrb[0].mxu0
  %6639 = vmatprep.mubr.bf16.mxu0 0
  %6640 = vmatmul.mubr.bf16.gmra.mrb[0].mxu0 %v5651
  %v6641 = vpop.f32.mrb[0].mxu0
  %v6642 = vadd.f32 %v6130, %v6641
  %v6643 = vpop.f32.mrb[0].mxu0
  %v6644 = vpop.f32.mrb[0].mxu0
  %v6645 = vadd.f32 %v6133, %v6644
  %v6646 = vpop.f32.mrb[0].mxu0
  %6647 = vmatprep.mubr.bf16.mxu0 0
  %6648 = vmatmul.mubr.bf16.gmra.mrb[0].mxu0 %v5654
  %v6649 = vpop.f32.mrb[0].mxu0
  %v6650 = vadd.f32 %v6138, %v6649
  %v6651 = vpop.f32.mrb[0].mxu0
  %v6652 = vpop.f32.mrb[0].mxu0
  %v6653 = vadd.f32 %v6141, %v6652
  %v6654 = vpop.f32.mrb[0].mxu0
  %6655 = vmatprep.mubr.bf16.mxu0 0
  %6656 = vmatmul.mubr.bf16.gmra.mrb[0].mxu0 %v5657
  %v6657 = vpop.f32.mrb[0].mxu0
  %v6658 = vadd.f32 %v6146, %v6657
  %v6659 = vpop.f32.mrb[0].mxu0
  %v6660 = vpop.f32.mrb[0].mxu0
  %v6661 = vadd.f32 %v6149, %v6660
  %v6662 = vpop.f32.mrb[0].mxu0
  %6663 = vmatprep.mubr.bf16.mxu0 0
  %6664 = vmatmul.mubr.bf16.gmra.mrb[0].mxu0 %v5660
  %v6665 = vpop.f32.mrb[0].mxu0
  %v6666 = vadd.f32 %v6154, %v6665
  %v6667 = vpop.f32.mrb[0].mxu0
  %v6668 = vpop.f32.mrb[0].mxu0
  %v6669 = vadd.f32 %v6157, %v6668
  %v6670 = vpop.f32.mrb[0].mxu0
  %6671 = vmatprep.mubr.bf16.mxu0 0
  %6672 = vmatmul.mubr.bf16.gmra.mrb[0].mxu0 %v5663
  %v6673 = vpop.f32.mrb[0].mxu0
  %v6674 = vadd.f32 %v6162, %v6673
  %v6675 = vpop.f32.mrb[0].mxu0
  %v6676 = vpop.f32.mrb[0].mxu0
  %v6677 = vadd.f32 %v6165, %v6676
  %v6678 = vpop.f32.mrb[0].mxu0
  %6679 = vmatprep.mubr.bf16.mxu0 0
  %6680 = vmatmul.mubr.bf16.gmra.mrb[0].mxu0 %v5666
  %v6681 = vpop.f32.mrb[0].mxu0
  %v6682 = vpop.f32.mrb[0].mxu0
  %v6683 = vpop.f32.mrb[0].mxu0
  %v6684 = vpop.f32.mrb[0].mxu0
  %6685 = vdwg.mxu0
  %s6686 = scalar_lea.vmem %s4, 16
  %v6687 = vld [vmem:[%s6686] sm:$0xf]
  %v6688 = vld [vmem:[%s6686 + $0x4] sm:$0xf]
  %v6691 = vunpack.c.l.b16 %v6687
  %v6692 = vunpack.c.l.b16 %v6688
  %v6693 = vpack.c.b16 %v6692, %v6691
  %v6696 = vsel %vm5493, %v5481, 0
  %6698 = vmatprep.subr.bf16.mxu0 0
  %6699 = vmatpush1.bf16.msra.mxu0 %v6693
  %6700 = vmatprep.subr.bf16.mxu0 0
  %6701 = vmatpush1.bf16.msra.mxu0 0
  %6702 = vmatprep.subr.bf16.mxu0 0
  %6703 = vmatpush1.bf16.msra.mxu0 0
  %6704 = vmatprep.subr.bf16.mxu0 0
  %6705 = vmatpush1.bf16.msra.mxu0 0
  %6706 = vmatprep.subr.bf16.mxu0 0
  %6707 = vmatpush1.bf16.msra.mxu0 0
  %6708 = vmatprep.subr.bf16.mxu0 0
  %6709 = vmatpush1.bf16.msra.mxu0 0
  %6710 = vmatprep.subr.bf16.mxu0 0
  %6711 = vmatpush1.bf16.msra.mxu0 0
  %6712 = vmatprep.subr.bf16.mxu0 0
  %6713 = vmatpush1.bf16.msra.mxu0 0
  %6714 = vmatprep.subr.bf16.mxu0 0
  %6715 = vmatpush1.bf16.msra.mxu0 0
  %6716 = vmatprep.subr.bf16.mxu0 0
  %6717 = vmatpush1.bf16.msra.mxu0 0
  %6718 = vmatprep.subr.bf16.mxu0 0
  %6719 = vmatpush1.bf16.msra.mxu0 0
  %6720 = vmatprep.subr.bf16.mxu0 0
  %6721 = vmatpush1.bf16.msra.mxu0 0
  %6722 = vmatprep.subr.bf16.mxu0 0
  %6723 = vmatpush1.bf16.msra.mxu0 0
  %6724 = vmatprep.subr.bf16.mxu0 0
  %6725 = vmatpush1.bf16.msra.mxu0 0
  %6726 = vmatprep.subr.bf16.mxu0 0
  %6727 = vmatpush1.bf16.msra.mxu0 0
  %6728 = vmatprep.subr.bf16.mxu0 0
  %6729 = vmatpush1.bf16.msra.mxu0 0
  %6730 = vmatprep.mubr.bf16.mxu0 0
  %6731 = vmatmul.mubr.bf16.gmra.mrb[0].mxu0 %v5498
  %v6732 = vpop.f32.mrb[0].mxu0
  %v6733 = vadd.f32 0.0, %v6732
  %v6734 = vpop.f32.mrb[0].mxu0
  %v6735 = vpop.f32.mrb[0].mxu0
  %v6736 = vadd.f32 0.0, %v6735
  %v6737 = vpop.f32.mrb[0].mxu0
  %6738 = vmatprep.mubr.bf16.mxu0 0
  %6739 = vmatmul.mubr.bf16.gmra.mrb[0].mxu0 %v5501
  %v6740 = vpop.f32.mrb[0].mxu0
  %v6741 = vadd.f32 0.0, %v6740
  %v6742 = vpop.f32.mrb[0].mxu0
  %v6743 = vpop.f32.mrb[0].mxu0
  %v6744 = vadd.f32 0.0, %v6743
  %v6745 = vpop.f32.mrb[0].mxu0
  %6746 = vmatprep.mubr.bf16.mxu0 0
  %6747 = vmatmul.mubr.bf16.gmra.mrb[0].mxu0 %v5504
  %v6748 = vpop.f32.mrb[0].mxu0
  %v6749 = vadd.f32 0.0, %v6748
  %v6750 = vpop.f32.mrb[0].mxu0
  %v6751 = vpop.f32.mrb[0].mxu0
  %v6752 = vadd.f32 0.0, %v6751
  %v6753 = vpop.f32.mrb[0].mxu0
  %6754 = vmatprep.mubr.bf16.mxu0 0
  %6755 = vmatmul.mubr.bf16.gmra.mrb[0].mxu0 %v5507
  %v6756 = vpop.f32.mrb[0].mxu0
  %v6757 = vadd.f32 0.0, %v6756
  %v6758 = vpop.f32.mrb[0].mxu0
  %v6759 = vpop.f32.mrb[0].mxu0
  %v6760 = vadd.f32 0.0, %v6759
  %v6761 = vpop.f32.mrb[0].mxu0
  %6762 = vmatprep.mubr.bf16.mxu0 0
  %6763 = vmatmul.mubr.bf16.gmra.mrb[0].mxu0 %v5510
  %v6764 = vpop.f32.mrb[0].mxu0
  %v6765 = vadd.f32 0.0, %v6764
  %v6766 = vpop.f32.mrb[0].mxu0
  %v6767 = vpop.f32.mrb[0].mxu0
  %v6768 = vadd.f32 0.0, %v6767
  %v6769 = vpop.f32.mrb[0].mxu0
  %6770 = vmatprep.mubr.bf16.mxu0 0
  %6771 = vmatmul.mubr.bf16.gmra.mrb[0].mxu0 %v5513
  %v6772 = vpop.f32.mrb[0].mxu0
  %v6773 = vadd.f32 0.0, %v6772
  %v6774 = vpop.f32.mrb[0].mxu0
  %v6775 = vpop.f32.mrb[0].mxu0
  %v6776 = vadd.f32 0.0, %v6775
  %v6777 = vpop.f32.mrb[0].mxu0
  %6778 = vmatprep.mubr.bf16.mxu0 0
  %6779 = vmatmul.mubr.bf16.gmra.mrb[0].mxu0 %v5516
  %v6780 = vpop.f32.mrb[0].mxu0
  %v6781 = vadd.f32 0.0, %v6780
  %v6782 = vpop.f32.mrb[0].mxu0
  %v6783 = vpop.f32.mrb[0].mxu0
  %v6784 = vadd.f32 0.0, %v6783
  %v6785 = vpop.f32.mrb[0].mxu0
  %6786 = vmatprep.mubr.bf16.mxu0 0
  %6787 = vmatmul.mubr.bf16.gmra.mrb[0].mxu0 %v5519
  %v6788 = vpop.f32.mrb[0].mxu0
  %v6789 = vadd.f32 0.0, %v6788
  %v6790 = vpop.f32.mrb[0].mxu0
  %v6791 = vpop.f32.mrb[0].mxu0
  %v6792 = vadd.f32 0.0, %v6791
  %v6793 = vpop.f32.mrb[0].mxu0
  %6794 = vmatprep.mubr.bf16.mxu0 0
  %6795 = vmatmul.mubr.bf16.gmra.mrb[0].mxu0 %v5522
  %v6796 = vpop.f32.mrb[0].mxu0
  %v6797 = vadd.f32 0.0, %v6796
  %v6798 = vpop.f32.mrb[0].mxu0
  %v6799 = vpop.f32.mrb[0].mxu0
  %v6800 = vadd.f32 0.0, %v6799
  %v6801 = vpop.f32.mrb[0].mxu0
  %6802 = vmatprep.mubr.bf16.mxu0 0
  %6803 = vmatmul.mubr.bf16.gmra.mrb[0].mxu0 %v5525
  %v6804 = vpop.f32.mrb[0].mxu0
  %v6805 = vadd.f32 0.0, %v6804
  %v6806 = vpop.f32.mrb[0].mxu0
  %v6807 = vpop.f32.mrb[0].mxu0
  %v6808 = vadd.f32 0.0, %v6807
  %v6809 = vpop.f32.mrb[0].mxu0
  %6810 = vmatprep.mubr.bf16.mxu0 0
  %6811 = vmatmul.mubr.bf16.gmra.mrb[0].mxu0 %v5528
  %v6812 = vpop.f32.mrb[0].mxu0
  %v6813 = vadd.f32 0.0, %v6812
  %v6814 = vpop.f32.mrb[0].mxu0
  %v6815 = vpop.f32.mrb[0].mxu0
  %v6816 = vadd.f32 0.0, %v6815
  %v6817 = vpop.f32.mrb[0].mxu0
  %6818 = vmatprep.mubr.bf16.mxu0 0
  %6819 = vmatmul.mubr.bf16.gmra.mrb[0].mxu0 %v5531
  %v6820 = vpop.f32.mrb[0].mxu0
  %v6821 = vadd.f32 0.0, %v6820
  %v6822 = vpop.f32.mrb[0].mxu0
  %v6823 = vpop.f32.mrb[0].mxu0
  %v6824 = vadd.f32 0.0, %v6823
  %v6825 = vpop.f32.mrb[0].mxu0
  %6826 = vmatprep.mubr.bf16.mxu0 0
  %6827 = vmatmul.mubr.bf16.gmra.mrb[0].mxu0 %v5534
  %v6828 = vpop.f32.mrb[0].mxu0
  %v6829 = vadd.f32 0.0, %v6828
  %v6830 = vpop.f32.mrb[0].mxu0
  %v6831 = vpop.f32.mrb[0].mxu0
  %v6832 = vadd.f32 0.0, %v6831
  %v6833 = vpop.f32.mrb[0].mxu0
  %6834 = vmatprep.mubr.bf16.mxu0 0
  %6835 = vmatmul.mubr.bf16.gmra.mrb[0].mxu0 %v5537
  %v6836 = vpop.f32.mrb[0].mxu0
  %v6837 = vadd.f32 0.0, %v6836
  %v6838 = vpop.f32.mrb[0].mxu0
  %v6839 = vpop.f32.mrb[0].mxu0
  %v6840 = vadd.f32 0.0, %v6839
  %v6841 = vpop.f32.mrb[0].mxu0
  %6842 = vmatprep.mubr.bf16.mxu0 0
  %6843 = vmatmul.mubr.bf16.gmra.mrb[0].mxu0 %v5540
  %v6844 = vpop.f32.mrb[0].mxu0
  %v6845 = vadd.f32 0.0, %v6844
  %v6846 = vpop.f32.mrb[0].mxu0
  %v6847 = vpop.f32.mrb[0].mxu0
  %v6848 = vadd.f32 0.0, %v6847
  %v6849 = vpop.f32.mrb[0].mxu0
  %6850 = vmatprep.mubr.bf16.mxu0 0
  %6851 = vmatmul.mubr.bf16.gmra.mrb[0].mxu0 %v5543
  %v6852 = vpop.f32.mrb[0].mxu0
  %v6853 = vadd.f32 0.0, %v6852
  %v6854 = vpop.f32.mrb[0].mxu0
  %v6855 = vpop.f32.mrb[0].mxu0
  %v6856 = vadd.f32 0.0, %v6855
  %v6857 = vpop.f32.mrb[0].mxu0
  %6858 = vmatprep.mubr.bf16.mxu0 0
  %6859 = vmatmul.mubr.bf16.gmra.mrb[0].mxu0 %v5546
  %v6860 = vpop.f32.mrb[0].mxu0
  %v6861 = vadd.f32 0.0, %v6860
  %v6862 = vpop.f32.mrb[0].mxu0
  %v6863 = vpop.f32.mrb[0].mxu0
  %v6864 = vadd.f32 0.0, %v6863
  %v6865 = vpop.f32.mrb[0].mxu0
  %6866 = vmatprep.mubr.bf16.mxu0 0
  %6867 = vmatmul.mubr.bf16.gmra.mrb[0].mxu0 %v5549
  %v6868 = vpop.f32.mrb[0].mxu0
  %v6869 = vadd.f32 0.0, %v6868
  %v6870 = vpop.f32.mrb[0].mxu0
  %v6871 = vpop.f32.mrb[0].mxu0
  %v6872 = vadd.f32 0.0, %v6871
  %v6873 = vpop.f32.mrb[0].mxu0
  %6874 = vmatprep.mubr.bf16.mxu0 0
  %6875 = vmatmul.mubr.bf16.gmra.mrb[0].mxu0 %v5552
  %v6876 = vpop.f32.mrb[0].mxu0
  %v6877 = vadd.f32 0.0, %v6876
  %v6878 = vpop.f32.mrb[0].mxu0
  %v6879 = vpop.f32.mrb[0].mxu0
  %v6880 = vadd.f32 0.0, %v6879
  %v6881 = vpop.f32.mrb[0].mxu0
  %6882 = vmatprep.mubr.bf16.mxu0 0
  %6883 = vmatmul.mubr.bf16.gmra.mrb[0].mxu0 %v5555
  %v6884 = vpop.f32.mrb[0].mxu0
  %v6885 = vadd.f32 0.0, %v6884
  %v6886 = vpop.f32.mrb[0].mxu0
  %v6887 = vpop.f32.mrb[0].mxu0
  %v6888 = vadd.f32 0.0, %v6887
  %v6889 = vpop.f32.mrb[0].mxu0
  %6890 = vmatprep.mubr.bf16.mxu0 0
  %6891 = vmatmul.mubr.bf16.gmra.mrb[0].mxu0 %v5558
  %v6892 = vpop.f32.mrb[0].mxu0
  %v6893 = vadd.f32 0.0, %v6892
  %v6894 = vpop.f32.mrb[0].mxu0
  %v6895 = vpop.f32.mrb[0].mxu0
  %v6896 = vadd.f32 0.0, %v6895
  %v6897 = vpop.f32.mrb[0].mxu0
  %6898 = vmatprep.mubr.bf16.mxu0 0
  %6899 = vmatmul.mubr.bf16.gmra.mrb[0].mxu0 %v5561
  %v6900 = vpop.f32.mrb[0].mxu0
  %v6901 = vadd.f32 0.0, %v6900
  %v6902 = vpop.f32.mrb[0].mxu0
  %v6903 = vpop.f32.mrb[0].mxu0
  %v6904 = vadd.f32 0.0, %v6903
  %v6905 = vpop.f32.mrb[0].mxu0
  %6906 = vmatprep.mubr.bf16.mxu0 0
  %6907 = vmatmul.mubr.bf16.gmra.mrb[0].mxu0 %v5564
  %v6908 = vpop.f32.mrb[0].mxu0
  %v6909 = vadd.f32 0.0, %v6908
  %v6910 = vpop.f32.mrb[0].mxu0
  %v6911 = vpop.f32.mrb[0].mxu0
  %v6912 = vadd.f32 0.0, %v6911
  %v6913 = vpop.f32.mrb[0].mxu0
  %6914 = vmatprep.mubr.bf16.mxu0 0
  %6915 = vmatmul.mubr.bf16.gmra.mrb[0].mxu0 %v5567
  %v6916 = vpop.f32.mrb[0].mxu0
  %v6917 = vadd.f32 0.0, %v6916
  %v6918 = vpop.f32.mrb[0].mxu0
  %v6919 = vpop.f32.mrb[0].mxu0
  %v6920 = vadd.f32 0.0, %v6919
  %v6921 = vpop.f32.mrb[0].mxu0
  %6922 = vmatprep.mubr.bf16.mxu0 0
  %6923 = vmatmul.mubr.bf16.gmra.mrb[0].mxu0 %v5570
  %v6924 = vpop.f32.mrb[0].mxu0
  %v6925 = vadd.f32 0.0, %v6924
  %v6926 = vpop.f32.mrb[0].mxu0
  %v6927 = vpop.f32.mrb[0].mxu0
  %v6928 = vadd.f32 0.0, %v6927
  %v6929 = vpop.f32.mrb[0].mxu0
  %6930 = vmatprep.mubr.bf16.mxu0 0
  %6931 = vmatmul.mubr.bf16.gmra.mrb[0].mxu0 %v5573
  %v6932 = vpop.f32.mrb[0].mxu0
  %v6933 = vadd.f32 0.0, %v6932
  %v6934 = vpop.f32.mrb[0].mxu0
  %v6935 = vpop.f32.mrb[0].mxu0
  %v6936 = vadd.f32 0.0, %v6935
  %v6937 = vpop.f32.mrb[0].mxu0
  %6938 = vmatprep.mubr.bf16.mxu0 0
  %6939 = vmatmul.mubr.bf16.gmra.mrb[0].mxu0 %v5576
  %v6940 = vpop.f32.mrb[0].mxu0
  %v6941 = vadd.f32 0.0, %v6940
  %v6942 = vpop.f32.mrb[0].mxu0
  %v6943 = vpop.f32.mrb[0].mxu0
  %v6944 = vadd.f32 0.0, %v6943
  %v6945 = vpop.f32.mrb[0].mxu0
  %6946 = vmatprep.mubr.bf16.mxu0 0
  %6947 = vmatmul.mubr.bf16.gmra.mrb[0].mxu0 %v5579
  %v6948 = vpop.f32.mrb[0].mxu0
  %v6949 = vadd.f32 0.0, %v6948
  %v6950 = vpop.f32.mrb[0].mxu0
  %v6951 = vpop.f32.mrb[0].mxu0
  %v6952 = vadd.f32 0.0, %v6951
  %v6953 = vpop.f32.mrb[0].mxu0
  %6954 = vmatprep.mubr.bf16.mxu0 0
  %6955 = vmatmul.mubr.bf16.gmra.mrb[0].mxu0 %v5582
  %v6956 = vpop.f32.mrb[0].mxu0
  %v6957 = vadd.f32 0.0, %v6956
  %v6958 = vpop.f32.mrb[0].mxu0
  %v6959 = vpop.f32.mrb[0].mxu0
  %v6960 = vadd.f32 0.0, %v6959
  %v6961 = vpop.f32.mrb[0].mxu0
  %6962 = vmatprep.mubr.bf16.mxu0 0
  %6963 = vmatmul.mubr.bf16.gmra.mrb[0].mxu0 %v5585
  %v6964 = vpop.f32.mrb[0].mxu0
  %v6965 = vadd.f32 0.0, %v6964
  %v6966 = vpop.f32.mrb[0].mxu0
  %v6967 = vpop.f32.mrb[0].mxu0
  %v6968 = vadd.f32 0.0, %v6967
  %v6969 = vpop.f32.mrb[0].mxu0
  %6970 = vmatprep.mubr.bf16.mxu0 0
  %6971 = vmatmul.mubr.bf16.gmra.mrb[0].mxu0 %v5588
  %v6972 = vpop.f32.mrb[0].mxu0
  %v6973 = vadd.f32 0.0, %v6972
  %v6974 = vpop.f32.mrb[0].mxu0
  %v6975 = vpop.f32.mrb[0].mxu0
  %v6976 = vadd.f32 0.0, %v6975
  %v6977 = vpop.f32.mrb[0].mxu0
  %6978 = vmatprep.mubr.bf16.mxu0 0
  %6979 = vmatmul.mubr.bf16.gmra.mrb[0].mxu0 %v5591
  %v6980 = vpop.f32.mrb[0].mxu0
  %v6981 = vadd.f32 0.0, %v6980
  %v6982 = vpop.f32.mrb[0].mxu0
  %v6983 = vpop.f32.mrb[0].mxu0
  %v6984 = vadd.f32 0.0, %v6983
  %v6985 = vpop.f32.mrb[0].mxu0
  %6986 = vmatprep.mubr.bf16.mxu0 0
  %6987 = vmatmul.mubr.bf16.gmra.mrb[0].mxu0 %v5594
  %v6988 = vpop.f32.mrb[0].mxu0
  %v6989 = vadd.f32 0.0, %v6988
  %v6990 = vpop.f32.mrb[0].mxu0
  %v6991 = vpop.f32.mrb[0].mxu0
  %v6992 = vadd.f32 0.0, %v6991
  %v6993 = vpop.f32.mrb[0].mxu0
  %6994 = vmatprep.mubr.bf16.mxu0 0
  %6995 = vmatmul.mubr.bf16.gmra.mrb[0].mxu0 %v5597
  %v6996 = vpop.f32.mrb[0].mxu0
  %v6997 = vadd.f32 0.0, %v6996
  %v6998 = vpop.f32.mrb[0].mxu0
  %v6999 = vpop.f32.mrb[0].mxu0
  %v7000 = vadd.f32 0.0, %v6999
  %v7001 = vpop.f32.mrb[0].mxu0
  %7002 = vmatprep.mubr.bf16.mxu0 0
  %7003 = vmatmul.mubr.bf16.gmra.mrb[0].mxu0 %v5600
  %v7004 = vpop.f32.mrb[0].mxu0
  %v7005 = vadd.f32 0.0, %v7004
  %v7006 = vpop.f32.mrb[0].mxu0
  %v7007 = vpop.f32.mrb[0].mxu0
  %v7008 = vadd.f32 0.0, %v7007
  %v7009 = vpop.f32.mrb[0].mxu0
  %7010 = vmatprep.mubr.bf16.mxu0 0
  %7011 = vmatmul.mubr.bf16.gmra.mrb[0].mxu0 %v5603
  %v7012 = vpop.f32.mrb[0].mxu0
  %v7013 = vadd.f32 0.0, %v7012
  %v7014 = vpop.f32.mrb[0].mxu0
  %v7015 = vpop.f32.mrb[0].mxu0
  %v7016 = vadd.f32 0.0, %v7015
  %v7017 = vpop.f32.mrb[0].mxu0
  %7018 = vmatprep.mubr.bf16.mxu0 0
  %7019 = vmatmul.mubr.bf16.gmra.mrb[0].mxu0 %v5606
  %v7020 = vpop.f32.mrb[0].mxu0
  %v7021 = vadd.f32 0.0, %v7020
  %v7022 = vpop.f32.mrb[0].mxu0
  %v7023 = vpop.f32.mrb[0].mxu0
  %v7024 = vadd.f32 0.0, %v7023
  %v7025 = vpop.f32.mrb[0].mxu0
  %7026 = vmatprep.mubr.bf16.mxu0 0
  %7027 = vmatmul.mubr.bf16.gmra.mrb[0].mxu0 %v5609
  %v7028 = vpop.f32.mrb[0].mxu0
  %v7029 = vadd.f32 0.0, %v7028
  %v7030 = vpop.f32.mrb[0].mxu0
  %v7031 = vpop.f32.mrb[0].mxu0
  %v7032 = vadd.f32 0.0, %v7031
  %v7033 = vpop.f32.mrb[0].mxu0
  %7034 = vmatprep.mubr.bf16.mxu0 0
  %7035 = vmatmul.mubr.bf16.gmra.mrb[0].mxu0 %v5612
  %v7036 = vpop.f32.mrb[0].mxu0
  %v7037 = vadd.f32 0.0, %v7036
  %v7038 = vpop.f32.mrb[0].mxu0
  %v7039 = vpop.f32.mrb[0].mxu0
  %v7040 = vadd.f32 0.0, %v7039
  %v7041 = vpop.f32.mrb[0].mxu0
  %7042 = vmatprep.mubr.bf16.mxu0 0
  %7043 = vmatmul.mubr.bf16.gmra.mrb[0].mxu0 %v5615
  %v7044 = vpop.f32.mrb[0].mxu0
  %v7045 = vadd.f32 0.0, %v7044
  %v7046 = vpop.f32.mrb[0].mxu0
  %v7047 = vpop.f32.mrb[0].mxu0
  %v7048 = vadd.f32 0.0, %v7047
  %v7049 = vpop.f32.mrb[0].mxu0
  %7050 = vmatprep.mubr.bf16.mxu0 0
  %7051 = vmatmul.mubr.bf16.gmra.mrb[0].mxu0 %v5618
  %v7052 = vpop.f32.mrb[0].mxu0
  %v7053 = vadd.f32 0.0, %v7052
  %v7054 = vpop.f32.mrb[0].mxu0
  %v7055 = vpop.f32.mrb[0].mxu0
  %v7056 = vadd.f32 0.0, %v7055
  %v7057 = vpop.f32.mrb[0].mxu0
  %7058 = vmatprep.mubr.bf16.mxu0 0
  %7059 = vmatmul.mubr.bf16.gmra.mrb[0].mxu0 %v5621
  %v7060 = vpop.f32.mrb[0].mxu0
  %v7061 = vadd.f32 0.0, %v7060
  %v7062 = vpop.f32.mrb[0].mxu0
  %v7063 = vpop.f32.mrb[0].mxu0
  %v7064 = vadd.f32 0.0, %v7063
  %v7065 = vpop.f32.mrb[0].mxu0
  %7066 = vmatprep.mubr.bf16.mxu0 0
  %7067 = vmatmul.mubr.bf16.gmra.mrb[0].mxu0 %v5624
  %v7068 = vpop.f32.mrb[0].mxu0
  %v7069 = vadd.f32 0.0, %v7068
  %v7070 = vpop.f32.mrb[0].mxu0
  %v7071 = vpop.f32.mrb[0].mxu0
  %v7072 = vadd.f32 0.0, %v7071
  %v7073 = vpop.f32.mrb[0].mxu0
  %7074 = vmatprep.mubr.bf16.mxu0 0
  %7075 = vmatmul.mubr.bf16.gmra.mrb[0].mxu0 %v5627
  %v7076 = vpop.f32.mrb[0].mxu0
  %v7077 = vadd.f32 0.0, %v7076
  %v7078 = vpop.f32.mrb[0].mxu0
  %v7079 = vpop.f32.mrb[0].mxu0
  %v7080 = vadd.f32 0.0, %v7079
  %v7081 = vpop.f32.mrb[0].mxu0
  %7082 = vmatprep.mubr.bf16.mxu0 0
  %7083 = vmatmul.mubr.bf16.gmra.mrb[0].mxu0 %v5630
  %v7084 = vpop.f32.mrb[0].mxu0
  %v7085 = vadd.f32 0.0, %v7084
  %v7086 = vpop.f32.mrb[0].mxu0
  %v7087 = vpop.f32.mrb[0].mxu0
  %v7088 = vadd.f32 0.0, %v7087
  %v7089 = vpop.f32.mrb[0].mxu0
  %7090 = vmatprep.mubr.bf16.mxu0 0
  %7091 = vmatmul.mubr.bf16.gmra.mrb[0].mxu0 %v5633
  %v7092 = vpop.f32.mrb[0].mxu0
  %v7093 = vadd.f32 0.0, %v7092
  %v7094 = vpop.f32.mrb[0].mxu0
  %v7095 = vpop.f32.mrb[0].mxu0
  %v7096 = vadd.f32 0.0, %v7095
  %v7097 = vpop.f32.mrb[0].mxu0
  %7098 = vmatprep.mubr.bf16.mxu0 0
  %7099 = vmatmul.mubr.bf16.gmra.mrb[0].mxu0 %v5636
  %v7100 = vpop.f32.mrb[0].mxu0
  %v7101 = vadd.f32 0.0, %v7100
  %v7102 = vpop.f32.mrb[0].mxu0
  %v7103 = vpop.f32.mrb[0].mxu0
  %v7104 = vadd.f32 0.0, %v7103
  %v7105 = vpop.f32.mrb[0].mxu0
  %7106 = vmatprep.mubr.bf16.mxu0 0
  %7107 = vmatmul.mubr.bf16.gmra.mrb[0].mxu0 %v5639
  %v7108 = vpop.f32.mrb[0].mxu0
  %v7109 = vadd.f32 0.0, %v7108
  %v7110 = vpop.f32.mrb[0].mxu0
  %v7111 = vpop.f32.mrb[0].mxu0
  %v7112 = vadd.f32 0.0, %v7111
  %v7113 = vpop.f32.mrb[0].mxu0
  %7114 = vmatprep.mubr.bf16.mxu0 0
  %7115 = vmatmul.mubr.bf16.gmra.mrb[0].mxu0 %v5642
  %v7116 = vpop.f32.mrb[0].mxu0
  %v7117 = vadd.f32 0.0, %v7116
  %v7118 = vpop.f32.mrb[0].mxu0
  %v7119 = vpop.f32.mrb[0].mxu0
  %v7120 = vadd.f32 0.0, %v7119
  %v7121 = vpop.f32.mrb[0].mxu0
  %7122 = vmatprep.mubr.bf16.mxu0 0
  %7123 = vmatmul.mubr.bf16.gmra.mrb[0].mxu0 %v5645
  %v7124 = vpop.f32.mrb[0].mxu0
  %v7125 = vadd.f32 0.0, %v7124
  %v7126 = vpop.f32.mrb[0].mxu0
  %v7127 = vpop.f32.mrb[0].mxu0
  %v7128 = vadd.f32 0.0, %v7127
  %v7129 = vpop.f32.mrb[0].mxu0
  %7130 = vmatprep.mubr.bf16.mxu0 0
  %7131 = vmatmul.mubr.bf16.gmra.mrb[0].mxu0 %v5648
  %v7132 = vpop.f32.mrb[0].mxu0
  %v7133 = vadd.f32 0.0, %v7132
  %v7134 = vpop.f32.mrb[0].mxu0
  %v7135 = vpop.f32.mrb[0].mxu0
  %v7136 = vadd.f32 0.0, %v7135
  %v7137 = vpop.f32.mrb[0].mxu0
  %7138 = vmatprep.mubr.bf16.mxu0 0
  %7139 = vmatmul.mubr.bf16.gmra.mrb[0].mxu0 %v5651
  %v7140 = vpop.f32.mrb[0].mxu0
  %v7141 = vadd.f32 0.0, %v7140
  %v7142 = vpop.f32.mrb[0].mxu0
  %v7143 = vpop.f32.mrb[0].mxu0
  %v7144 = vadd.f32 0.0, %v7143
  %v7145 = vpop.f32.mrb[0].mxu0
  %7146 = vmatprep.mubr.bf16.mxu0 0
  %7147 = vmatmul.mubr.bf16.gmra.mrb[0].mxu0 %v5654
  %v7148 = vpop.f32.mrb[0].mxu0
  %v7149 = vadd.f32 0.0, %v7148
  %v7150 = vpop.f32.mrb[0].mxu0
  %v7151 = vpop.f32.mrb[0].mxu0
  %v7152 = vadd.f32 0.0, %v7151
  %v7153 = vpop.f32.mrb[0].mxu0
  %7154 = vmatprep.mubr.bf16.mxu0 0
  %7155 = vmatmul.mubr.bf16.gmra.mrb[0].mxu0 %v5657
  %v7156 = vpop.f32.mrb[0].mxu0
  %v7157 = vadd.f32 0.0, %v7156
  %v7158 = vpop.f32.mrb[0].mxu0
  %v7159 = vpop.f32.mrb[0].mxu0
  %v7160 = vadd.f32 0.0, %v7159
  %v7161 = vpop.f32.mrb[0].mxu0
  %7162 = vmatprep.mubr.bf16.mxu0 0
  %7163 = vmatmul.mubr.bf16.gmra.mrb[0].mxu0 %v5660
  %v7164 = vpop.f32.mrb[0].mxu0
  %v7165 = vadd.f32 0.0, %v7164
  %v7166 = vpop.f32.mrb[0].mxu0
  %v7167 = vpop.f32.mrb[0].mxu0
  %v7168 = vadd.f32 0.0, %v7167
  %v7169 = vpop.f32.mrb[0].mxu0
  %7170 = vmatprep.mubr.bf16.mxu0 0
  %7171 = vmatmul.mubr.bf16.gmra.mrb[0].mxu0 %v5663
  %v7172 = vpop.f32.mrb[0].mxu0
  %v7173 = vadd.f32 0.0, %v7172
  %v7174 = vpop.f32.mrb[0].mxu0
  %v7175 = vpop.f32.mrb[0].mxu0
  %v7176 = vadd.f32 0.0, %v7175
  %v7177 = vpop.f32.mrb[0].mxu0
  %7178 = vmatprep.mubr.bf16.mxu0 0
  %7179 = vmatmul.mubr.bf16.gmra.mrb[0].mxu0 %v5666
  %v7180 = vpop.f32.mrb[0].mxu0
  %v7181 = vadd.f32 0.0, %v7180
  %v7182 = vpop.f32.mrb[0].mxu0
  %v7183 = vpop.f32.mrb[0].mxu0
  %v7184 = vadd.f32 0.0, %v7183
  %v7185 = vpop.f32.mrb[0].mxu0
  %7186 = vmatprep.mubr.bf16.mxu0 0
  %7187 = vmatmul.mubr.bf16.gmra.mrb[0].mxu0 %v5669
  %v7188 = vpop.f32.mrb[0].mxu0
  %v7189 = vadd.f32 0.0, %v7188
  %v7190 = vpop.f32.mrb[0].mxu0
  %v7191 = vpop.f32.mrb[0].mxu0
  %v7192 = vadd.f32 0.0, %v7191
  %v7193 = vpop.f32.mrb[0].mxu0
  %7194 = vmatprep.mubr.bf16.mxu0 0
  %7195 = vmatmul.mubr.bf16.gmra.mrb[0].mxu0 %v6696
  %v7196 = vpop.f32.mrb[0].mxu0
  %v7197 = vpop.f32.mrb[0].mxu0
  %v7198 = vpop.f32.mrb[0].mxu0
  %v7199 = vpop.f32.mrb[0].mxu0
  %7200 = vdwg.mxu0
  %v7201 = vadd.f32 %v6218, %v6733
  %v7202 = vadd.f32 %v6221, %v6736
  %v7203 = vadd.f32 %v6226, %v6741
  %v7204 = vadd.f32 %v6229, %v6744
  %v7205 = vadd.f32 %v6234, %v6749
  %v7206 = vadd.f32 %v6237, %v6752
  %v7207 = vadd.f32 %v6242, %v6757
  %v7208 = vadd.f32 %v6245, %v6760
  %v7209 = vadd.f32 %v6250, %v6765
  %v7210 = vadd.f32 %v6253, %v6768
  %v7211 = vadd.f32 %v6258, %v6773
  %v7212 = vadd.f32 %v6261, %v6776
  %v7213 = vadd.f32 %v6266, %v6781
  %v7214 = vadd.f32 %v6269, %v6784
  %v7215 = vadd.f32 %v6274, %v6789
  %v7216 = vadd.f32 %v6277, %v6792
  %v7217 = vadd.f32 %v6282, %v6797
  %v7218 = vadd.f32 %v6285, %v6800
  %v7219 = vadd.f32 %v6290, %v6805
  %v7220 = vadd.f32 %v6293, %v6808
  %v7221 = vadd.f32 %v6298, %v6813
  %v7222 = vadd.f32 %v6301, %v6816
  %v7223 = vadd.f32 %v6306, %v6821
  %v7224 = vadd.f32 %v6309, %v6824
  %v7225 = vadd.f32 %v6314, %v6829
  %v7226 = vadd.f32 %v6317, %v6832
  %v7227 = vadd.f32 %v6322, %v6837
  %v7228 = vadd.f32 %v6325, %v6840
  %v7229 = vadd.f32 %v6330, %v6845
  %v7230 = vadd.f32 %v6333, %v6848
  %v7231 = vadd.f32 %v6338, %v6853
  %v7232 = vadd.f32 %v6341, %v6856
  %v7233 = vadd.f32 %v6346, %v6861
  %v7234 = vadd.f32 %v6349, %v6864
  %v7235 = vadd.f32 %v6354, %v6869
  %v7236 = vadd.f32 %v6357, %v6872
  %v7237 = vadd.f32 %v6362, %v6877
  %v7238 = vadd.f32 %v6365, %v6880
  %v7239 = vadd.f32 %v6370, %v6885
  %v7240 = vadd.f32 %v6373, %v6888
  %v7241 = vadd.f32 %v6378, %v6893
  %v7242 = vadd.f32 %v6381, %v6896
  %v7243 = vadd.f32 %v6386, %v6901
  %v7244 = vadd.f32 %v6389, %v6904
  %v7245 = vadd.f32 %v6394, %v6909
  %v7246 = vadd.f32 %v6397, %v6912
  %v7247 = vadd.f32 %v6402, %v6917
  %v7248 = vadd.f32 %v6405, %v6920
  %v7249 = vadd.f32 %v6410, %v6925
  %v7250 = vadd.f32 %v6413, %v6928
  %v7251 = vadd.f32 %v6418, %v6933
  %v7252 = vadd.f32 %v6421, %v6936
  %v7253 = vadd.f32 %v6426, %v6941
  %v7254 = vadd.f32 %v6429, %v6944
  %v7255 = vadd.f32 %v6434, %v6949
  %v7256 = vadd.f32 %v6437, %v6952
  %v7257 = vadd.f32 %v6442, %v6957
  %v7258 = vadd.f32 %v6445, %v6960
  %v7259 = vadd.f32 %v6450, %v6965
  %v7260 = vadd.f32 %v6453, %v6968
  %v7261 = vadd.f32 %v6458, %v6973
  %v7262 = vadd.f32 %v6461, %v6976
  %v7263 = vadd.f32 %v6466, %v6981
  %v7264 = vadd.f32 %v6469, %v6984
  %v7265 = vadd.f32 %v6474, %v6989
  %v7266 = vadd.f32 %v6477, %v6992
  %v7267 = vadd.f32 %v6482, %v6997
  %v7268 = vadd.f32 %v6485, %v7000
  %v7269 = vadd.f32 %v6490, %v7005
  %v7270 = vadd.f32 %v6493, %v7008
  %v7271 = vadd.f32 %v6498, %v7013
  %v7272 = vadd.f32 %v6501, %v7016
  %v7273 = vadd.f32 %v6506, %v7021
  %v7274 = vadd.f32 %v6509, %v7024
  %v7275 = vadd.f32 %v6514, %v7029
  %v7276 = vadd.f32 %v6517, %v7032
  %v7277 = vadd.f32 %v6522, %v7037
  %v7278 = vadd.f32 %v6525, %v7040
  %v7279 = vadd.f32 %v6530, %v7045
  %v7280 = vadd.f32 %v6533, %v7048
  %v7281 = vadd.f32 %v6538, %v7053
  %v7282 = vadd.f32 %v6541, %v7056
  %v7283 = vadd.f32 %v6546, %v7061
  %v7284 = vadd.f32 %v6549, %v7064
  %v7285 = vadd.f32 %v6554, %v7069
  %v7286 = vadd.f32 %v6557, %v7072
  %v7287 = vadd.f32 %v6562, %v7077
  %v7288 = vadd.f32 %v6565, %v7080
  %v7289 = vadd.f32 %v6570, %v7085
  %v7290 = vadd.f32 %v6573, %v7088
  %v7291 = vadd.f32 %v6578, %v7093
  %v7292 = vadd.f32 %v6581, %v7096
  %v7293 = vadd.f32 %v6586, %v7101
  %v7294 = vadd.f32 %v6589, %v7104
  %v7295 = vadd.f32 %v6594, %v7109
  %v7296 = vadd.f32 %v6597, %v7112
  %v7297 = vadd.f32 %v6602, %v7117
  %v7298 = vadd.f32 %v6605, %v7120
  %v7299 = vadd.f32 %v6610, %v7125
  %v7300 = vadd.f32 %v6613, %v7128
  %v7301 = vadd.f32 %v6618, %v7133
  %v7302 = vadd.f32 %v6621, %v7136
  %v7303 = vadd.f32 %v6626, %v7141
  %v7304 = vadd.f32 %v6629, %v7144
  %v7305 = vadd.f32 %v6634, %v7149
  %v7306 = vadd.f32 %v6637, %v7152
  %v7307 = vadd.f32 %v6642, %v7157
  %v7308 = vadd.f32 %v6645, %v7160
  %v7309 = vadd.f32 %v6650, %v7165
  %v7310 = vadd.f32 %v6653, %v7168
  %v7311 = vadd.f32 %v6658, %v7173
  %v7312 = vadd.f32 %v6661, %v7176
  %v7313 = vadd.f32 %v6666, %v7181
  %v7314 = vadd.f32 %v6669, %v7184
  %v7315 = vadd.f32 %v6674, %v7189
  %v7316 = vadd.f32 %v6677, %v7192
  %v7317 = vld [vmem:[%s5] sm:$0x1]
  %v7319 = vlaneseq
  %v7320 = vshrl.u32 %v7319, 7
  %v7321 = vsub.s32 0, %v7320
  %v7322 = vrot.slane %v7317, %v7321
  %v7324 = vmul.f32 %v7201, %v7322
  %v7325 = vmul.f32 %v7202, %v7322
  %v7326 = vmul.f32 %v7203, %v7322
  %v7327 = vmul.f32 %v7204, %v7322
  %v7328 = vmul.f32 %v7205, %v7322
  %v7329 = vmul.f32 %v7206, %v7322
  %v7330 = vmul.f32 %v7207, %v7322
  %v7331 = vmul.f32 %v7208, %v7322
  %v7332 = vmul.f32 %v7209, %v7322
  %v7333 = vmul.f32 %v7210, %v7322
  %v7334 = vmul.f32 %v7211, %v7322
  %v7335 = vmul.f32 %v7212, %v7322
  %v7336 = vmul.f32 %v7213, %v7322
  %v7337 = vmul.f32 %v7214, %v7322
  %v7338 = vmul.f32 %v7215, %v7322
  %v7339 = vmul.f32 %v7216, %v7322
  %v7340 = vmul.f32 %v7217, %v7322
  %v7341 = vmul.f32 %v7218, %v7322
  %v7342 = vmul.f32 %v7219, %v7322
  %v7343 = vmul.f32 %v7220, %v7322
  %v7344 = vmul.f32 %v7221, %v7322
  %v7345 = vmul.f32 %v7222, %v7322
  %v7346 = vmul.f32 %v7223, %v7322
  %v7347 = vmul.f32 %v7224, %v7322
  %v7348 = vmul.f32 %v7225, %v7322
  %v7349 = vmul.f32 %v7226, %v7322
  %v7350 = vmul.f32 %v7227, %v7322
  %v7351 = vmul.f32 %v7228, %v7322
  %v7352 = vmul.f32 %v7229, %v7322
  %v7353 = vmul.f32 %v7230, %v7322
  %v7354 = vmul.f32 %v7231, %v7322
  %v7355 = vmul.f32 %v7232, %v7322
  %v7356 = vmul.f32 %v7233, %v7322
  %v7357 = vmul.f32 %v7234, %v7322
  %v7358 = vmul.f32 %v7235, %v7322
  %v7359 = vmul.f32 %v7236, %v7322
  %v7360 = vmul.f32 %v7237, %v7322
  %v7361 = vmul.f32 %v7238, %v7322
  %v7362 = vmul.f32 %v7239, %v7322
  %v7363 = vmul.f32 %v7240, %v7322
  %v7364 = vmul.f32 %v7241, %v7322
  %v7365 = vmul.f32 %v7242, %v7322
  %v7366 = vmul.f32 %v7243, %v7322
  %v7367 = vmul.f32 %v7244, %v7322
  %v7368 = vmul.f32 %v7245, %v7322
  %v7369 = vmul.f32 %v7246, %v7322
  %v7370 = vmul.f32 %v7247, %v7322
  %v7371 = vmul.f32 %v7248, %v7322
  %v7372 = vmul.f32 %v7249, %v7322
  %v7373 = vmul.f32 %v7250, %v7322
  %v7374 = vmul.f32 %v7251, %v7322
  %v7375 = vmul.f32 %v7252, %v7322
  %v7376 = vmul.f32 %v7253, %v7322
  %v7377 = vmul.f32 %v7254, %v7322
  %v7378 = vmul.f32 %v7255, %v7322
  %v7379 = vmul.f32 %v7256, %v7322
  %v7380 = vmul.f32 %v7257, %v7322
  %v7381 = vmul.f32 %v7258, %v7322
  %v7382 = vmul.f32 %v7259, %v7322
  %v7383 = vmul.f32 %v7260, %v7322
  %v7384 = vmul.f32 %v7261, %v7322
  %v7385 = vmul.f32 %v7262, %v7322
  %v7386 = vmul.f32 %v7263, %v7322
  %v7387 = vmul.f32 %v7264, %v7322
  %v7388 = vmul.f32 %v7265, %v7322
  %v7389 = vmul.f32 %v7266, %v7322
  %v7390 = vmul.f32 %v7267, %v7322
  %v7391 = vmul.f32 %v7268, %v7322
  %v7392 = vmul.f32 %v7269, %v7322
  %v7393 = vmul.f32 %v7270, %v7322
  %v7394 = vmul.f32 %v7271, %v7322
  %v7395 = vmul.f32 %v7272, %v7322
  %v7396 = vmul.f32 %v7273, %v7322
  %v7397 = vmul.f32 %v7274, %v7322
  %v7398 = vmul.f32 %v7275, %v7322
  %v7399 = vmul.f32 %v7276, %v7322
  %v7400 = vmul.f32 %v7277, %v7322
  %v7401 = vmul.f32 %v7278, %v7322
  %v7402 = vmul.f32 %v7279, %v7322
  %v7403 = vmul.f32 %v7280, %v7322
  %v7404 = vmul.f32 %v7281, %v7322
  %v7405 = vmul.f32 %v7282, %v7322
  %v7406 = vmul.f32 %v7283, %v7322
  %v7407 = vmul.f32 %v7284, %v7322
  %v7408 = vmul.f32 %v7285, %v7322
  %v7409 = vmul.f32 %v7286, %v7322
  %v7410 = vmul.f32 %v7287, %v7322
  %v7411 = vmul.f32 %v7288, %v7322
  %v7412 = vmul.f32 %v7289, %v7322
  %v7413 = vmul.f32 %v7290, %v7322
  %v7414 = vmul.f32 %v7291, %v7322
  %v7415 = vmul.f32 %v7292, %v7322
  %v7416 = vmul.f32 %v7293, %v7322
  %v7417 = vmul.f32 %v7294, %v7322
  %v7418 = vmul.f32 %v7295, %v7322
  %v7419 = vmul.f32 %v7296, %v7322
  %v7420 = vmul.f32 %v7297, %v7322
  %v7421 = vmul.f32 %v7298, %v7322
  %v7422 = vmul.f32 %v7299, %v7322
  %v7423 = vmul.f32 %v7300, %v7322
  %v7424 = vmul.f32 %v7301, %v7322
  %v7425 = vmul.f32 %v7302, %v7322
  %v7426 = vmul.f32 %v7303, %v7322
  %v7427 = vmul.f32 %v7304, %v7322
  %v7428 = vmul.f32 %v7305, %v7322
  %v7429 = vmul.f32 %v7306, %v7322
  %v7430 = vmul.f32 %v7307, %v7322
  %v7431 = vmul.f32 %v7308, %v7322
  %v7432 = vmul.f32 %v7309, %v7322
  %v7433 = vmul.f32 %v7310, %v7322
  %v7434 = vmul.f32 %v7311, %v7322
  %v7435 = vmul.f32 %v7312, %v7322
  %v7436 = vmul.f32 %v7313, %v7322
  %v7437 = vmul.f32 %v7314, %v7322
  %v7438 = vmul.f32 %v7315, %v7322
  %v7439 = vmul.f32 %v7316, %v7322
  %v7440 = vld [vmem:[%s6] sm:$0x1]
  %v7442 = vlaneseq
  %v7443 = vshrl.u32 %v7442, 7
  %v7444 = vsub.s32 0, %v7443
  %v7445 = vrot.slane %v7440, %v7444
  %v7447 = vadd.f32 %v7324, %v7445
  %v7448 = vadd.f32 %v7325, %v7445
  %v7449 = vadd.f32 %v7326, %v7445
  %v7450 = vadd.f32 %v7327, %v7445
  %v7451 = vadd.f32 %v7328, %v7445
  %v7452 = vadd.f32 %v7329, %v7445
  %v7453 = vadd.f32 %v7330, %v7445
  %v7454 = vadd.f32 %v7331, %v7445
  %v7455 = vadd.f32 %v7332, %v7445
  %v7456 = vadd.f32 %v7333, %v7445
  %v7457 = vadd.f32 %v7334, %v7445
  %v7458 = vadd.f32 %v7335, %v7445
  %v7459 = vadd.f32 %v7336, %v7445
  %v7460 = vadd.f32 %v7337, %v7445
  %v7461 = vadd.f32 %v7338, %v7445
  %v7462 = vadd.f32 %v7339, %v7445
  %v7463 = vadd.f32 %v7340, %v7445
  %v7464 = vadd.f32 %v7341, %v7445
  %v7465 = vadd.f32 %v7342, %v7445
  %v7466 = vadd.f32 %v7343, %v7445
  %v7467 = vadd.f32 %v7344, %v7445
  %v7468 = vadd.f32 %v7345, %v7445
  %v7469 = vadd.f32 %v7346, %v7445
  %v7470 = vadd.f32 %v7347, %v7445
  %v7471 = vadd.f32 %v7348, %v7445
  %v7472 = vadd.f32 %v7349, %v7445
  %v7473 = vadd.f32 %v7350, %v7445
  %v7474 = vadd.f32 %v7351, %v7445
  %v7475 = vadd.f32 %v7352, %v7445
  %v7476 = vadd.f32 %v7353, %v7445
  %v7477 = vadd.f32 %v7354, %v7445
  %v7478 = vadd.f32 %v7355, %v7445
  %v7479 = vadd.f32 %v7356, %v7445
  %v7480 = vadd.f32 %v7357, %v7445
  %v7481 = vadd.f32 %v7358, %v7445
  %v7482 = vadd.f32 %v7359, %v7445
  %v7483 = vadd.f32 %v7360, %v7445
  %v7484 = vadd.f32 %v7361, %v7445
  %v7485 = vadd.f32 %v7362, %v7445
  %v7486 = vadd.f32 %v7363, %v7445
  %v7487 = vadd.f32 %v7364, %v7445
  %v7488 = vadd.f32 %v7365, %v7445
  %v7489 = vadd.f32 %v7366, %v7445
  %v7490 = vadd.f32 %v7367, %v7445
  %v7491 = vadd.f32 %v7368, %v7445
  %v7492 = vadd.f32 %v7369, %v7445
  %v7493 = vadd.f32 %v7370, %v7445
  %v7494 = vadd.f32 %v7371, %v7445
  %v7495 = vadd.f32 %v7372, %v7445
  %v7496 = vadd.f32 %v7373, %v7445
  %v7497 = vadd.f32 %v7374, %v7445
  %v7498 = vadd.f32 %v7375, %v7445
  %v7499 = vadd.f32 %v7376, %v7445
  %v7500 = vadd.f32 %v7377, %v7445
  %v7501 = vadd.f32 %v7378, %v7445
  %v7502 = vadd.f32 %v7379, %v7445
  %v7503 = vadd.f32 %v7380, %v7445
  %v7504 = vadd.f32 %v7381, %v7445
  %v7505 = vadd.f32 %v7382, %v7445
  %v7506 = vadd.f32 %v7383, %v7445
  %v7507 = vadd.f32 %v7384, %v7445
  %v7508 = vadd.f32 %v7385, %v7445
  %v7509 = vadd.f32 %v7386, %v7445
  %v7510 = vadd.f32 %v7387, %v7445
  %v7511 = vadd.f32 %v7388, %v7445
  %v7512 = vadd.f32 %v7389, %v7445
  %v7513 = vadd.f32 %v7390, %v7445
  %v7514 = vadd.f32 %v7391, %v7445
  %v7515 = vadd.f32 %v7392, %v7445
  %v7516 = vadd.f32 %v7393, %v7445
  %v7517 = vadd.f32 %v7394, %v7445
  %v7518 = vadd.f32 %v7395, %v7445
  %v7519 = vadd.f32 %v7396, %v7445
  %v7520 = vadd.f32 %v7397, %v7445
  %v7521 = vadd.f32 %v7398, %v7445
  %v7522 = vadd.f32 %v7399, %v7445
  %v7523 = vadd.f32 %v7400, %v7445
  %v7524 = vadd.f32 %v7401, %v7445
  %v7525 = vadd.f32 %v7402, %v7445
  %v7526 = vadd.f32 %v7403, %v7445
  %v7527 = vadd.f32 %v7404, %v7445
  %v7528 = vadd.f32 %v7405, %v7445
  %v7529 = vadd.f32 %v7406, %v7445
  %v7530 = vadd.f32 %v7407, %v7445
  %v7531 = vadd.f32 %v7408, %v7445
  %v7532 = vadd.f32 %v7409, %v7445
  %v7533 = vadd.f32 %v7410, %v7445
  %v7534 = vadd.f32 %v7411, %v7445
  %v7535 = vadd.f32 %v7412, %v7445
  %v7536 = vadd.f32 %v7413, %v7445
  %v7537 = vadd.f32 %v7414, %v7445
  %v7538 = vadd.f32 %v7415, %v7445
  %v7539 = vadd.f32 %v7416, %v7445
  %v7540 = vadd.f32 %v7417, %v7445
  %v7541 = vadd.f32 %v7418, %v7445
  %v7542 = vadd.f32 %v7419, %v7445
  %v7543 = vadd.f32 %v7420, %v7445
  %v7544 = vadd.f32 %v7421, %v7445
  %v7545 = vadd.f32 %v7422, %v7445
  %v7546 = vadd.f32 %v7423, %v7445
  %v7547 = vadd.f32 %v7424, %v7445
  %v7548 = vadd.f32 %v7425, %v7445
  %v7549 = vadd.f32 %v7426, %v7445
  %v7550 = vadd.f32 %v7427, %v7445
  %v7551 = vadd.f32 %v7428, %v7445
  %v7552 = vadd.f32 %v7429, %v7445
  %v7553 = vadd.f32 %v7430, %v7445
  %v7554 = vadd.f32 %v7431, %v7445
  %v7555 = vadd.f32 %v7432, %v7445
  %v7556 = vadd.f32 %v7433, %v7445
  %v7557 = vadd.f32 %v7434, %v7445
  %v7558 = vadd.f32 %v7435, %v7445
  %v7559 = vadd.f32 %v7436, %v7445
  %v7560 = vadd.f32 %v7437, %v7445
  %v7561 = vadd.f32 %v7438, %v7445
  %v7562 = vadd.f32 %v7439, %v7445
  %v7563 = vmax.f32 %v7447, 0.0
  %v7564 = vmax.f32 %v7448, 0.0
  %v7565 = vmax.f32 %v7449, 0.0
  %v7566 = vmax.f32 %v7450, 0.0
  %v7567 = vmax.f32 %v7451, 0.0
  %v7568 = vmax.f32 %v7452, 0.0
  %v7569 = vmax.f32 %v7453, 0.0
  %v7570 = vmax.f32 %v7454, 0.0
  %v7571 = vmax.f32 %v7455, 0.0
  %v7572 = vmax.f32 %v7456, 0.0
  %v7573 = vmax.f32 %v7457, 0.0
  %v7574 = vmax.f32 %v7458, 0.0
  %v7575 = vmax.f32 %v7459, 0.0
  %v7576 = vmax.f32 %v7460, 0.0
  %v7577 = vmax.f32 %v7461, 0.0
  %v7578 = vmax.f32 %v7462, 0.0
  %v7579 = vmax.f32 %v7463, 0.0
  %v7580 = vmax.f32 %v7464, 0.0
  %v7581 = vmax.f32 %v7465, 0.0
  %v7582 = vmax.f32 %v7466, 0.0
  %v7583 = vmax.f32 %v7467, 0.0
  %v7584 = vmax.f32 %v7468, 0.0
  %v7585 = vmax.f32 %v7469, 0.0
  %v7586 = vmax.f32 %v7470, 0.0
  %v7587 = vmax.f32 %v7471, 0.0
  %v7588 = vmax.f32 %v7472, 0.0
  %v7589 = vmax.f32 %v7473, 0.0
  %v7590 = vmax.f32 %v7474, 0.0
  %v7591 = vmax.f32 %v7475, 0.0
  %v7592 = vmax.f32 %v7476, 0.0
  %v7593 = vmax.f32 %v7477, 0.0
  %v7594 = vmax.f32 %v7478, 0.0
  %v7595 = vmax.f32 %v7479, 0.0
  %v7596 = vmax.f32 %v7480, 0.0
  %v7597 = vmax.f32 %v7481, 0.0
  %v7598 = vmax.f32 %v7482, 0.0
  %v7599 = vmax.f32 %v7483, 0.0
  %v7600 = vmax.f32 %v7484, 0.0
  %v7601 = vmax.f32 %v7485, 0.0
  %v7602 = vmax.f32 %v7486, 0.0
  %v7603 = vmax.f32 %v7487, 0.0
  %v7604 = vmax.f32 %v7488, 0.0
  %v7605 = vmax.f32 %v7489, 0.0
  %v7606 = vmax.f32 %v7490, 0.0
  %v7607 = vmax.f32 %v7491, 0.0
  %v7608 = vmax.f32 %v7492, 0.0
  %v7609 = vmax.f32 %v7493, 0.0
  %v7610 = vmax.f32 %v7494, 0.0
  %v7611 = vmax.f32 %v7495, 0.0
  %v7612 = vmax.f32 %v7496, 0.0
  %v7613 = vmax.f32 %v7497, 0.0
  %v7614 = vmax.f32 %v7498, 0.0
  %v7615 = vmax.f32 %v7499, 0.0
  %v7616 = vmax.f32 %v7500, 0.0
  %v7617 = vmax.f32 %v7501, 0.0
  %v7618 = vmax.f32 %v7502, 0.0
  %v7619 = vmax.f32 %v7503, 0.0
  %v7620 = vmax.f32 %v7504, 0.0
  %v7621 = vmax.f32 %v7505, 0.0
  %v7622 = vmax.f32 %v7506, 0.0
  %v7623 = vmax.f32 %v7507, 0.0
  %v7624 = vmax.f32 %v7508, 0.0
  %v7625 = vmax.f32 %v7509, 0.0
  %v7626 = vmax.f32 %v7510, 0.0
  %v7627 = vmax.f32 %v7511, 0.0
  %v7628 = vmax.f32 %v7512, 0.0
  %v7629 = vmax.f32 %v7513, 0.0
  %v7630 = vmax.f32 %v7514, 0.0
  %v7631 = vmax.f32 %v7515, 0.0
  %v7632 = vmax.f32 %v7516, 0.0
  %v7633 = vmax.f32 %v7517, 0.0
  %v7634 = vmax.f32 %v7518, 0.0
  %v7635 = vmax.f32 %v7519, 0.0
  %v7636 = vmax.f32 %v7520, 0.0
  %v7637 = vmax.f32 %v7521, 0.0
  %v7638 = vmax.f32 %v7522, 0.0
  %v7639 = vmax.f32 %v7523, 0.0
  %v7640 = vmax.f32 %v7524, 0.0
  %v7641 = vmax.f32 %v7525, 0.0
  %v7642 = vmax.f32 %v7526, 0.0
  %v7643 = vmax.f32 %v7527, 0.0
  %v7644 = vmax.f32 %v7528, 0.0
  %v7645 = vmax.f32 %v7529, 0.0
  %v7646 = vmax.f32 %v7530, 0.0
  %v7647 = vmax.f32 %v7531, 0.0
  %v7648 = vmax.f32 %v7532, 0.0
  %v7649 = vmax.f32 %v7533, 0.0
  %v7650 = vmax.f32 %v7534, 0.0
  %v7651 = vmax.f32 %v7535, 0.0
  %v7652 = vmax.f32 %v7536, 0.0
  %v7653 = vmax.f32 %v7537, 0.0
  %v7654 = vmax.f32 %v7538, 0.0
  %v7655 = vmax.f32 %v7539, 0.0
  %v7656 = vmax.f32 %v7540, 0.0
  %v7657 = vmax.f32 %v7541, 0.0
  %v7658 = vmax.f32 %v7542, 0.0
  %v7659 = vmax.f32 %v7543, 0.0
  %v7660 = vmax.f32 %v7544, 0.0
  %v7661 = vmax.f32 %v7545, 0.0
  %v7662 = vmax.f32 %v7546, 0.0
  %v7663 = vmax.f32 %v7547, 0.0
  %v7664 = vmax.f32 %v7548, 0.0
  %v7665 = vmax.f32 %v7549, 0.0
  %v7666 = vmax.f32 %v7550, 0.0
  %v7667 = vmax.f32 %v7551, 0.0
  %v7668 = vmax.f32 %v7552, 0.0
  %v7669 = vmax.f32 %v7553, 0.0
  %v7670 = vmax.f32 %v7554, 0.0
  %v7671 = vmax.f32 %v7555, 0.0
  %v7672 = vmax.f32 %v7556, 0.0
  %v7673 = vmax.f32 %v7557, 0.0
  %v7674 = vmax.f32 %v7558, 0.0
  %v7675 = vmax.f32 %v7559, 0.0
  %v7676 = vmax.f32 %v7560, 0.0
  %v7677 = vmax.f32 %v7561, 0.0
  %v7678 = vmax.f32 %v7562, 0.0
  %v7679 = vmax.f32 %v7563, %v7565
  %v7680 = vmax.f32 %v7564, %v7566
  %v7681 = vmax.f32 %v7567, %v7569
  %v7682 = vmax.f32 %v7568, %v7570
  %v7683 = vmax.f32 %v7571, %v7573
  %v7684 = vmax.f32 %v7572, %v7574
  %v7685 = vmax.f32 %v7575, %v7577
  %v7686 = vmax.f32 %v7576, %v7578
  %v7687 = vmax.f32 %v7579, %v7581
  %v7688 = vmax.f32 %v7580, %v7582
  %v7689 = vmax.f32 %v7583, %v7585
  %v7690 = vmax.f32 %v7584, %v7586
  %v7691 = vmax.f32 %v7587, %v7589
  %v7692 = vmax.f32 %v7588, %v7590
  %v7693 = vmax.f32 %v7591, %v7593
  %v7694 = vmax.f32 %v7592, %v7594
  %v7695 = vmax.f32 %v7595, %v7597
  %v7696 = vmax.f32 %v7596, %v7598
  %v7697 = vmax.f32 %v7599, %v7601
  %v7698 = vmax.f32 %v7600, %v7602
  %v7699 = vmax.f32 %v7603, %v7605
  %v7700 = vmax.f32 %v7604, %v7606
  %v7701 = vmax.f32 %v7607, %v7609
  %v7702 = vmax.f32 %v7608, %v7610
  %v7703 = vmax.f32 %v7611, %v7613
  %v7704 = vmax.f32 %v7612, %v7614
  %v7705 = vmax.f32 %v7615, %v7617
  %v7706 = vmax.f32 %v7616, %v7618
  %v7707 = vmax.f32 %v7619, %v7621
  %v7708 = vmax.f32 %v7620, %v7622
  %v7709 = vmax.f32 %v7623, %v7625
  %v7710 = vmax.f32 %v7624, %v7626
  %v7711 = vmax.f32 %v7627, %v7629
  %v7712 = vmax.f32 %v7628, %v7630
  %v7713 = vmax.f32 %v7631, %v7633
  %v7714 = vmax.f32 %v7632, %v7634
  %v7715 = vmax.f32 %v7635, %v7637
  %v7716 = vmax.f32 %v7636, %v7638
  %v7717 = vmax.f32 %v7639, %v7641
  %v7718 = vmax.f32 %v7640, %v7642
  %v7719 = vmax.f32 %v7643, %v7645
  %v7720 = vmax.f32 %v7644, %v7646
  %v7721 = vmax.f32 %v7647, %v7649
  %v7722 = vmax.f32 %v7648, %v7650
  %v7723 = vmax.f32 %v7651, %v7653
  %v7724 = vmax.f32 %v7652, %v7654
  %v7725 = vmax.f32 %v7655, %v7657
  %v7726 = vmax.f32 %v7656, %v7658
  %v7727 = vmax.f32 %v7659, %v7661
  %v7728 = vmax.f32 %v7660, %v7662
  %v7729 = vmax.f32 %v7663, %v7665
  %v7730 = vmax.f32 %v7664, %v7666
  %v7731 = vmax.f32 %v7667, %v7669
  %v7732 = vmax.f32 %v7668, %v7670
  %v7733 = vmax.f32 %v7671, %v7673
  %v7734 = vmax.f32 %v7672, %v7674
  %v7735 = vmax.f32 %v7675, %v7677
  %v7736 = vmax.f32 %v7676, %v7678
  %v7737 = vpack.c.bf16 %v7680, %v7679
  %v7738 = vpack.c.bf16 %v7682, %v7681
  %v7739 = vpack.c.bf16 %v7684, %v7683
  %v7740 = vpack.c.bf16 %v7686, %v7685
  %v7741 = vpack.c.bf16 %v7688, %v7687
  %v7742 = vpack.c.bf16 %v7690, %v7689
  %v7743 = vpack.c.bf16 %v7692, %v7691
  %v7744 = vpack.c.bf16 %v7694, %v7693
  %v7745 = vpack.c.bf16 %v7696, %v7695
  %v7746 = vpack.c.bf16 %v7698, %v7697
  %v7747 = vpack.c.bf16 %v7700, %v7699
  %v7748 = vpack.c.bf16 %v7702, %v7701
  %v7749 = vpack.c.bf16 %v7704, %v7703
  %v7750 = vpack.c.bf16 %v7706, %v7705
  %v7751 = vpack.c.bf16 %v7708, %v7707
  %v7752 = vpack.c.bf16 %v7710, %v7709
  %v7753 = vpack.c.bf16 %v7712, %v7711
  %v7754 = vpack.c.bf16 %v7714, %v7713
  %v7755 = vpack.c.bf16 %v7716, %v7715
  %v7756 = vpack.c.bf16 %v7718, %v7717
  %v7757 = vpack.c.bf16 %v7720, %v7719
  %v7758 = vpack.c.bf16 %v7722, %v7721
  %v7759 = vpack.c.bf16 %v7724, %v7723
  %v7760 = vpack.c.bf16 %v7726, %v7725
  %v7761 = vpack.c.bf16 %v7728, %v7727
  %v7762 = vpack.c.bf16 %v7730, %v7729
  %v7763 = vpack.c.bf16 %v7732, %v7731
  %v7764 = vpack.c.bf16 %v7734, %v7733
  %v7765 = vpack.c.bf16 %v7736, %v7735
  %v7766 = vld [vmem:[%s7] sm:$0xf]
  %v7767 = vld [vmem:[%s7 + $0x4] sm:$0xf]
  %v7768 = vld [vmem:[%s7 + $0x8] sm:$0xf]
  %v7769 = vld [vmem:[%s7 + $0xc] sm:$0xf]
  %s7770 = scalar_lea.vmem %s7, 16
  %v7771 = vld [vmem:[%s7770] sm:$0xf]
  %v7772 = vld [vmem:[%s7770 + $0x4] sm:$0xf]
  %v7773 = vld [vmem:[%s7770 + $0x8] sm:$0xf]
  %v7774 = vld [vmem:[%s7770 + $0xc] sm:$0xf]
  %v7779 = vunpack.c.l.b16 %v7771
  %v7780 = vunpack.c.l.b16 %v7772
  %v7781 = vunpack.c.l.b16 %v7773
  %v7782 = vunpack.c.l.b16 %v7774
  %v7783 = vpack.c.b16 %v7780, %v7779
  %v7784 = vpack.c.b16 %v7782, %v7781
  %vm7787 = vcmask 261120
  %v7789 = vsel %vm7787, %v7738, 0
  %v7792 = vsel %vm7787, %v7739, 0
  %v7795 = vsel %vm7787, %v7740, 0
  %v7798 = vsel %vm7787, %v7741, 0
  %v7801 = vsel %vm7787, %v7742, 0
  %v7804 = vsel %vm7787, %v7743, 0
  %v7807 = vsel %vm7787, %v7744, 0
  %v7810 = vsel %vm7787, %v7745, 0
  %v7813 = vsel %vm7787, %v7746, 0
  %v7816 = vsel %vm7787, %v7747, 0
  %v7819 = vsel %vm7787, %v7748, 0
  %v7822 = vsel %vm7787, %v7749, 0
  %v7825 = vsel %vm7787, %v7750, 0
  %v7828 = vsel %vm7787, %v7751, 0
  %v7831 = vsel %vm7787, %v7752, 0
  %v7834 = vsel %vm7787, %v7753, 0
  %v7837 = vsel %vm7787, %v7754, 0
  %v7840 = vsel %vm7787, %v7755, 0
  %v7843 = vsel %vm7787, %v7756, 0
  %v7846 = vsel %vm7787, %v7757, 0
  %v7849 = vsel %vm7787, %v7758, 0
  %v7852 = vsel %vm7787, %v7759, 0
  %v7855 = vsel %vm7787, %v7760, 0
  %v7858 = vsel %vm7787, %v7761, 0
  %v7861 = vsel %vm7787, %v7762, 0
  %v7864 = vsel %vm7787, %v7763, 0
  %v7867 = vsel %vm7787, %v7764, 0
  %7869 = vmatprep.subr.bf16.mxu0 0
  %7870 = vmatpush1.bf16.msra.mxu0 %v7783
  %7871 = vmatprep.subr.bf16.mxu0 0
  %7872 = vmatpush1.bf16.msra.mxu0 %v7784
  %7873 = vmatprep.subr.bf16.mxu0 0
  %7874 = vmatpush1.bf16.msra.mxu0 0
  %7875 = vmatprep.subr.bf16.mxu0 0
  %7876 = vmatpush1.bf16.msra.mxu0 0
  %7877 = vmatprep.subr.bf16.mxu0 0
  %7878 = vmatpush1.bf16.msra.mxu0 0
  %7879 = vmatprep.subr.bf16.mxu0 0
  %7880 = vmatpush1.bf16.msra.mxu0 0
  %7881 = vmatprep.subr.bf16.mxu0 0
  %7882 = vmatpush1.bf16.msra.mxu0 0
  %7883 = vmatprep.subr.bf16.mxu0 0
  %7884 = vmatpush1.bf16.msra.mxu0 0
  %7885 = vmatprep.subr.bf16.mxu0 0
  %7886 = vmatpush1.bf16.msra.mxu0 0
  %7887 = vmatprep.subr.bf16.mxu0 0
  %7888 = vmatpush1.bf16.msra.mxu0 0
  %7889 = vmatprep.subr.bf16.mxu0 0
  %7890 = vmatpush1.bf16.msra.mxu0 0
  %7891 = vmatprep.subr.bf16.mxu0 0
  %7892 = vmatpush1.bf16.msra.mxu0 0
  %7893 = vmatprep.subr.bf16.mxu0 0
  %7894 = vmatpush1.bf16.msra.mxu0 0
  %7895 = vmatprep.subr.bf16.mxu0 0
  %7896 = vmatpush1.bf16.msra.mxu0 0
  %7897 = vmatprep.subr.bf16.mxu0 0
  %7898 = vmatpush1.bf16.msra.mxu0 0
  %7899 = vmatprep.subr.bf16.mxu0 0
  %7900 = vmatpush1.bf16.msra.mxu0 0
  %7901 = vmatprep.mubr.bf16.mxu0 0
  %7902 = vmatmul.mubr.bf16.gmra.mrb[0].mxu0 %v7789
  %v7903 = vpop.f32.mrb[0].mxu0
  %v7904 = vadd.f32 0.0, %v7903
  %v7905 = vpop.f32.mrb[0].mxu0
  %v7906 = vpop.f32.mrb[0].mxu0
  %v7907 = vadd.f32 0.0, %v7906
  %v7908 = vpop.f32.mrb[0].mxu0
  %7909 = vmatprep.mubr.bf16.mxu0 0
  %7910 = vmatmul.mubr.bf16.gmra.mrb[0].mxu0 %v7792
  %v7911 = vpop.f32.mrb[0].mxu0
  %v7912 = vadd.f32 0.0, %v7911
  %v7913 = vpop.f32.mrb[0].mxu0
  %v7914 = vpop.f32.mrb[0].mxu0
  %v7915 = vadd.f32 0.0, %v7914
  %v7916 = vpop.f32.mrb[0].mxu0
  %7917 = vmatprep.mubr.bf16.mxu0 0
  %7918 = vmatmul.mubr.bf16.gmra.mrb[0].mxu0 %v7795
  %v7919 = vpop.f32.mrb[0].mxu0
  %v7920 = vadd.f32 0.0, %v7919
  %v7921 = vpop.f32.mrb[0].mxu0
  %v7922 = vpop.f32.mrb[0].mxu0
  %v7923 = vadd.f32 0.0, %v7922
  %v7924 = vpop.f32.mrb[0].mxu0
  %7925 = vmatprep.mubr.bf16.mxu0 0
  %7926 = vmatmul.mubr.bf16.gmra.mrb[0].mxu0 %v7798
  %v7927 = vpop.f32.mrb[0].mxu0
  %v7928 = vadd.f32 0.0, %v7927
  %v7929 = vpop.f32.mrb[0].mxu0
  %v7930 = vpop.f32.mrb[0].mxu0
  %v7931 = vadd.f32 0.0, %v7930
  %v7932 = vpop.f32.mrb[0].mxu0
  %7933 = vmatprep.mubr.bf16.mxu0 0
  %7934 = vmatmul.mubr.bf16.gmra.mrb[0].mxu0 %v7801
  %v7935 = vpop.f32.mrb[0].mxu0
  %v7936 = vadd.f32 0.0, %v7935
  %v7937 = vpop.f32.mrb[0].mxu0
  %v7938 = vpop.f32.mrb[0].mxu0
  %v7939 = vadd.f32 0.0, %v7938
  %v7940 = vpop.f32.mrb[0].mxu0
  %7941 = vmatprep.mubr.bf16.mxu0 0
  %7942 = vmatmul.mubr.bf16.gmra.mrb[0].mxu0 %v7804
  %v7943 = vpop.f32.mrb[0].mxu0
  %v7944 = vadd.f32 0.0, %v7943
  %v7945 = vpop.f32.mrb[0].mxu0
  %v7946 = vpop.f32.mrb[0].mxu0
  %v7947 = vadd.f32 0.0, %v7946
  %v7948 = vpop.f32.mrb[0].mxu0
  %7949 = vmatprep.mubr.bf16.mxu0 0
  %7950 = vmatmul.mubr.bf16.gmra.mrb[0].mxu0 %v7807
  %v7951 = vpop.f32.mrb[0].mxu0
  %v7952 = vadd.f32 0.0, %v7951
  %v7953 = vpop.f32.mrb[0].mxu0
  %v7954 = vpop.f32.mrb[0].mxu0
  %v7955 = vadd.f32 0.0, %v7954
  %v7956 = vpop.f32.mrb[0].mxu0
  %7957 = vmatprep.mubr.bf16.mxu0 0
  %7958 = vmatmul.mubr.bf16.gmra.mrb[0].mxu0 %v7810
  %v7959 = vpop.f32.mrb[0].mxu0
  %v7960 = vadd.f32 0.0, %v7959
  %v7961 = vpop.f32.mrb[0].mxu0
  %v7962 = vpop.f32.mrb[0].mxu0
  %v7963 = vadd.f32 0.0, %v7962
  %v7964 = vpop.f32.mrb[0].mxu0
  %7965 = vmatprep.mubr.bf16.mxu0 0
  %7966 = vmatmul.mubr.bf16.gmra.mrb[0].mxu0 %v7813
  %v7967 = vpop.f32.mrb[0].mxu0
  %v7968 = vadd.f32 0.0, %v7967
  %v7969 = vpop.f32.mrb[0].mxu0
  %v7970 = vpop.f32.mrb[0].mxu0
  %v7971 = vadd.f32 0.0, %v7970
  %v7972 = vpop.f32.mrb[0].mxu0
  %7973 = vmatprep.mubr.bf16.mxu0 0
  %7974 = vmatmul.mubr.bf16.gmra.mrb[0].mxu0 %v7816
  %v7975 = vpop.f32.mrb[0].mxu0
  %v7976 = vadd.f32 0.0, %v7975
  %v7977 = vpop.f32.mrb[0].mxu0
  %v7978 = vpop.f32.mrb[0].mxu0
  %v7979 = vadd.f32 0.0, %v7978
  %v7980 = vpop.f32.mrb[0].mxu0
  %7981 = vmatprep.mubr.bf16.mxu0 0
  %7982 = vmatmul.mubr.bf16.gmra.mrb[0].mxu0 %v7819
  %v7983 = vpop.f32.mrb[0].mxu0
  %v7984 = vadd.f32 0.0, %v7983
  %v7985 = vpop.f32.mrb[0].mxu0
  %v7986 = vpop.f32.mrb[0].mxu0
  %v7987 = vadd.f32 0.0, %v7986
  %v7988 = vpop.f32.mrb[0].mxu0
  %7989 = vmatprep.mubr.bf16.mxu0 0
  %7990 = vmatmul.mubr.bf16.gmra.mrb[0].mxu0 %v7822
  %v7991 = vpop.f32.mrb[0].mxu0
  %v7992 = vadd.f32 0.0, %v7991
  %v7993 = vpop.f32.mrb[0].mxu0
  %v7994 = vpop.f32.mrb[0].mxu0
  %v7995 = vadd.f32 0.0, %v7994
  %v7996 = vpop.f32.mrb[0].mxu0
  %7997 = vmatprep.mubr.bf16.mxu0 0
  %7998 = vmatmul.mubr.bf16.gmra.mrb[0].mxu0 %v7825
  %v7999 = vpop.f32.mrb[0].mxu0
  %v8000 = vadd.f32 0.0, %v7999
  %v8001 = vpop.f32.mrb[0].mxu0
  %v8002 = vpop.f32.mrb[0].mxu0
  %v8003 = vadd.f32 0.0, %v8002
  %v8004 = vpop.f32.mrb[0].mxu0
  %8005 = vmatprep.mubr.bf16.mxu0 0
  %8006 = vmatmul.mubr.bf16.gmra.mrb[0].mxu0 %v7828
  %v8007 = vpop.f32.mrb[0].mxu0
  %v8008 = vadd.f32 0.0, %v8007
  %v8009 = vpop.f32.mrb[0].mxu0
  %v8010 = vpop.f32.mrb[0].mxu0
  %v8011 = vadd.f32 0.0, %v8010
  %v8012 = vpop.f32.mrb[0].mxu0
  %8013 = vmatprep.mubr.bf16.mxu0 0
  %8014 = vmatmul.mubr.bf16.gmra.mrb[0].mxu0 %v7831
  %v8015 = vpop.f32.mrb[0].mxu0
  %v8016 = vadd.f32 0.0, %v8015
  %v8017 = vpop.f32.mrb[0].mxu0
  %v8018 = vpop.f32.mrb[0].mxu0
  %v8019 = vadd.f32 0.0, %v8018
  %v8020 = vpop.f32.mrb[0].mxu0
  %8021 = vmatprep.mubr.bf16.mxu0 0
  %8022 = vmatmul.mubr.bf16.gmra.mrb[0].mxu0 %v7834
  %v8023 = vpop.f32.mrb[0].mxu0
  %v8024 = vadd.f32 0.0, %v8023
  %v8025 = vpop.f32.mrb[0].mxu0
  %v8026 = vpop.f32.mrb[0].mxu0
  %v8027 = vadd.f32 0.0, %v8026
  %v8028 = vpop.f32.mrb[0].mxu0
  %8029 = vmatprep.mubr.bf16.mxu0 0
  %8030 = vmatmul.mubr.bf16.gmra.mrb[0].mxu0 %v7837
  %v8031 = vpop.f32.mrb[0].mxu0
  %v8032 = vadd.f32 0.0, %v8031
  %v8033 = vpop.f32.mrb[0].mxu0
  %v8034 = vpop.f32.mrb[0].mxu0
  %v8035 = vadd.f32 0.0, %v8034
  %v8036 = vpop.f32.mrb[0].mxu0
  %8037 = vmatprep.mubr.bf16.mxu0 0
  %8038 = vmatmul.mubr.bf16.gmra.mrb[0].mxu0 %v7840
  %v8039 = vpop.f32.mrb[0].mxu0
  %v8040 = vadd.f32 0.0, %v8039
  %v8041 = vpop.f32.mrb[0].mxu0
  %v8042 = vpop.f32.mrb[0].mxu0
  %v8043 = vadd.f32 0.0, %v8042
  %v8044 = vpop.f32.mrb[0].mxu0
  %8045 = vmatprep.mubr.bf16.mxu0 0
  %8046 = vmatmul.mubr.bf16.gmra.mrb[0].mxu0 %v7843
  %v8047 = vpop.f32.mrb[0].mxu0
  %v8048 = vadd.f32 0.0, %v8047
  %v8049 = vpop.f32.mrb[0].mxu0
  %v8050 = vpop.f32.mrb[0].mxu0
  %v8051 = vadd.f32 0.0, %v8050
  %v8052 = vpop.f32.mrb[0].mxu0
  %8053 = vmatprep.mubr.bf16.mxu0 0
  %8054 = vmatmul.mubr.bf16.gmra.mrb[0].mxu0 %v7846
  %v8055 = vpop.f32.mrb[0].mxu0
  %v8056 = vadd.f32 0.0, %v8055
  %v8057 = vpop.f32.mrb[0].mxu0
  %v8058 = vpop.f32.mrb[0].mxu0
  %v8059 = vadd.f32 0.0, %v8058
  %v8060 = vpop.f32.mrb[0].mxu0
  %8061 = vmatprep.mubr.bf16.mxu0 0
  %8062 = vmatmul.mubr.bf16.gmra.mrb[0].mxu0 %v7849
  %v8063 = vpop.f32.mrb[0].mxu0
  %v8064 = vadd.f32 0.0, %v8063
  %v8065 = vpop.f32.mrb[0].mxu0
  %v8066 = vpop.f32.mrb[0].mxu0
  %v8067 = vadd.f32 0.0, %v8066
  %v8068 = vpop.f32.mrb[0].mxu0
  %8069 = vmatprep.mubr.bf16.mxu0 0
  %8070 = vmatmul.mubr.bf16.gmra.mrb[0].mxu0 %v7852
  %v8071 = vpop.f32.mrb[0].mxu0
  %v8072 = vadd.f32 0.0, %v8071
  %v8073 = vpop.f32.mrb[0].mxu0
  %v8074 = vpop.f32.mrb[0].mxu0
  %v8075 = vadd.f32 0.0, %v8074
  %v8076 = vpop.f32.mrb[0].mxu0
  %8077 = vmatprep.mubr.bf16.mxu0 0
  %8078 = vmatmul.mubr.bf16.gmra.mrb[0].mxu0 %v7855
  %v8079 = vpop.f32.mrb[0].mxu0
  %v8080 = vadd.f32 0.0, %v8079
  %v8081 = vpop.f32.mrb[0].mxu0
  %v8082 = vpop.f32.mrb[0].mxu0
  %v8083 = vadd.f32 0.0, %v8082
  %v8084 = vpop.f32.mrb[0].mxu0
  %8085 = vmatprep.mubr.bf16.mxu0 0
  %8086 = vmatmul.mubr.bf16.gmra.mrb[0].mxu0 %v7858
  %v8087 = vpop.f32.mrb[0].mxu0
  %v8088 = vadd.f32 0.0, %v8087
  %v8089 = vpop.f32.mrb[0].mxu0
  %v8090 = vpop.f32.mrb[0].mxu0
  %v8091 = vadd.f32 0.0, %v8090
  %v8092 = vpop.f32.mrb[0].mxu0
  %8093 = vmatprep.mubr.bf16.mxu0 0
  %8094 = vmatmul.mubr.bf16.gmra.mrb[0].mxu0 %v7861
  %v8095 = vpop.f32.mrb[0].mxu0
  %v8096 = vadd.f32 0.0, %v8095
  %v8097 = vpop.f32.mrb[0].mxu0
  %v8098 = vpop.f32.mrb[0].mxu0
  %v8099 = vadd.f32 0.0, %v8098
  %v8100 = vpop.f32.mrb[0].mxu0
  %8101 = vmatprep.mubr.bf16.mxu0 0
  %8102 = vmatmul.mubr.bf16.gmra.mrb[0].mxu0 %v7864
  %v8103 = vpop.f32.mrb[0].mxu0
  %v8104 = vadd.f32 0.0, %v8103
  %v8105 = vpop.f32.mrb[0].mxu0
  %v8106 = vpop.f32.mrb[0].mxu0
  %v8107 = vadd.f32 0.0, %v8106
  %v8108 = vpop.f32.mrb[0].mxu0
  %8109 = vmatprep.mubr.bf16.mxu0 0
  %8110 = vmatmul.mubr.bf16.gmra.mrb[0].mxu0 %v7867
  %v8111 = vpop.f32.mrb[0].mxu0
  %v8112 = vpop.f32.mrb[0].mxu0
  %v8113 = vpop.f32.mrb[0].mxu0
  %v8114 = vpop.f32.mrb[0].mxu0
  %8115 = vdwg.mxu0
  %v8120 = vunpack.c.l.b16 %v7766
  %v8121 = vunpack.c.l.b16 %v7767
  %v8122 = vunpack.c.l.b16 %v7768
  %v8123 = vunpack.c.l.b16 %v7769
  %v8124 = vpack.c.b16 %v8121, %v8120
  %v8125 = vpack.c.b16 %v8123, %v8122
  %v8129 = vsel %vm7787, %v7737, 0
  %8131 = vmatprep.subr.bf16.mxu0 0
  %8132 = vmatpush1.bf16.msra.mxu0 %v8124
  %8133 = vmatprep.subr.bf16.mxu0 0
  %8134 = vmatpush1.bf16.msra.mxu0 %v8125
  %8135 = vmatprep.subr.bf16.mxu0 0
  %8136 = vmatpush1.bf16.msra.mxu0 0
  %8137 = vmatprep.subr.bf16.mxu0 0
  %8138 = vmatpush1.bf16.msra.mxu0 0
  %8139 = vmatprep.subr.bf16.mxu0 0
  %8140 = vmatpush1.bf16.msra.mxu0 0
  %8141 = vmatprep.subr.bf16.mxu0 0
  %8142 = vmatpush1.bf16.msra.mxu0 0
  %8143 = vmatprep.subr.bf16.mxu0 0
  %8144 = vmatpush1.bf16.msra.mxu0 0
  %8145 = vmatprep.subr.bf16.mxu0 0
  %8146 = vmatpush1.bf16.msra.mxu0 0
  %8147 = vmatprep.subr.bf16.mxu0 0
  %8148 = vmatpush1.bf16.msra.mxu0 0
  %8149 = vmatprep.subr.bf16.mxu0 0
  %8150 = vmatpush1.bf16.msra.mxu0 0
  %8151 = vmatprep.subr.bf16.mxu0 0
  %8152 = vmatpush1.bf16.msra.mxu0 0
  %8153 = vmatprep.subr.bf16.mxu0 0
  %8154 = vmatpush1.bf16.msra.mxu0 0
  %8155 = vmatprep.subr.bf16.mxu0 0
  %8156 = vmatpush1.bf16.msra.mxu0 0
  %8157 = vmatprep.subr.bf16.mxu0 0
  %8158 = vmatpush1.bf16.msra.mxu0 0
  %8159 = vmatprep.subr.bf16.mxu0 0
  %8160 = vmatpush1.bf16.msra.mxu0 0
  %8161 = vmatprep.subr.bf16.mxu0 0
  %8162 = vmatpush1.bf16.msra.mxu0 0
  %8163 = vmatprep.mubr.bf16.mxu0 0
  %8164 = vmatmul.mubr.bf16.gmra.mrb[0].mxu0 %v8129
  %v8165 = vpop.f32.mrb[0].mxu0
  %v8166 = vadd.f32 %v7904, %v8165
  %v8167 = vpop.f32.mrb[0].mxu0
  %v8168 = vpop.f32.mrb[0].mxu0
  %v8169 = vadd.f32 %v7907, %v8168
  %v8170 = vpop.f32.mrb[0].mxu0
  %8171 = vmatprep.mubr.bf16.mxu0 0
  %8172 = vmatmul.mubr.bf16.gmra.mrb[0].mxu0 %v7789
  %v8173 = vpop.f32.mrb[0].mxu0
  %v8174 = vadd.f32 %v7912, %v8173
  %v8175 = vpop.f32.mrb[0].mxu0
  %v8176 = vpop.f32.mrb[0].mxu0
  %v8177 = vadd.f32 %v7915, %v8176
  %v8178 = vpop.f32.mrb[0].mxu0
  %8179 = vmatprep.mubr.bf16.mxu0 0
  %8180 = vmatmul.mubr.bf16.gmra.mrb[0].mxu0 %v7792
  %v8181 = vpop.f32.mrb[0].mxu0
  %v8182 = vadd.f32 %v7920, %v8181
  %v8183 = vpop.f32.mrb[0].mxu0
  %v8184 = vpop.f32.mrb[0].mxu0
  %v8185 = vadd.f32 %v7923, %v8184
  %v8186 = vpop.f32.mrb[0].mxu0
  %8187 = vmatprep.mubr.bf16.mxu0 0
  %8188 = vmatmul.mubr.bf16.gmra.mrb[0].mxu0 %v7795
  %v8189 = vpop.f32.mrb[0].mxu0
  %v8190 = vadd.f32 %v7928, %v8189
  %v8191 = vpop.f32.mrb[0].mxu0
  %v8192 = vpop.f32.mrb[0].mxu0
  %v8193 = vadd.f32 %v7931, %v8192
  %v8194 = vpop.f32.mrb[0].mxu0
  %8195 = vmatprep.mubr.bf16.mxu0 0
  %8196 = vmatmul.mubr.bf16.gmra.mrb[0].mxu0 %v7798
  %v8197 = vpop.f32.mrb[0].mxu0
  %v8198 = vadd.f32 %v7936, %v8197
  %v8199 = vpop.f32.mrb[0].mxu0
  %v8200 = vpop.f32.mrb[0].mxu0
  %v8201 = vadd.f32 %v7939, %v8200
  %v8202 = vpop.f32.mrb[0].mxu0
  %8203 = vmatprep.mubr.bf16.mxu0 0
  %8204 = vmatmul.mubr.bf16.gmra.mrb[0].mxu0 %v7801
  %v8205 = vpop.f32.mrb[0].mxu0
  %v8206 = vadd.f32 %v7944, %v8205
  %v8207 = vpop.f32.mrb[0].mxu0
  %v8208 = vpop.f32.mrb[0].mxu0
  %v8209 = vadd.f32 %v7947, %v8208
  %v8210 = vpop.f32.mrb[0].mxu0
  %8211 = vmatprep.mubr.bf16.mxu0 0
  %8212 = vmatmul.mubr.bf16.gmra.mrb[0].mxu0 %v7804
  %v8213 = vpop.f32.mrb[0].mxu0
  %v8214 = vadd.f32 %v7952, %v8213
  %v8215 = vpop.f32.mrb[0].mxu0
  %v8216 = vpop.f32.mrb[0].mxu0
  %v8217 = vadd.f32 %v7955, %v8216
  %v8218 = vpop.f32.mrb[0].mxu0
  %8219 = vmatprep.mubr.bf16.mxu0 0
  %8220 = vmatmul.mubr.bf16.gmra.mrb[0].mxu0 %v7807
  %v8221 = vpop.f32.mrb[0].mxu0
  %v8222 = vadd.f32 %v7960, %v8221
  %v8223 = vpop.f32.mrb[0].mxu0
  %v8224 = vpop.f32.mrb[0].mxu0
  %v8225 = vadd.f32 %v7963, %v8224
  %v8226 = vpop.f32.mrb[0].mxu0
  %8227 = vmatprep.mubr.bf16.mxu0 0
  %8228 = vmatmul.mubr.bf16.gmra.mrb[0].mxu0 %v7810
  %v8229 = vpop.f32.mrb[0].mxu0
  %v8230 = vadd.f32 %v7968, %v8229
  %v8231 = vpop.f32.mrb[0].mxu0
  %v8232 = vpop.f32.mrb[0].mxu0
  %v8233 = vadd.f32 %v7971, %v8232
  %v8234 = vpop.f32.mrb[0].mxu0
  %8235 = vmatprep.mubr.bf16.mxu0 0
  %8236 = vmatmul.mubr.bf16.gmra.mrb[0].mxu0 %v7813
  %v8237 = vpop.f32.mrb[0].mxu0
  %v8238 = vadd.f32 %v7976, %v8237
  %v8239 = vpop.f32.mrb[0].mxu0
  %v8240 = vpop.f32.mrb[0].mxu0
  %v8241 = vadd.f32 %v7979, %v8240
  %v8242 = vpop.f32.mrb[0].mxu0
  %8243 = vmatprep.mubr.bf16.mxu0 0
  %8244 = vmatmul.mubr.bf16.gmra.mrb[0].mxu0 %v7816
  %v8245 = vpop.f32.mrb[0].mxu0
  %v8246 = vadd.f32 %v7984, %v8245
  %v8247 = vpop.f32.mrb[0].mxu0
  %v8248 = vpop.f32.mrb[0].mxu0
  %v8249 = vadd.f32 %v7987, %v8248
  %v8250 = vpop.f32.mrb[0].mxu0
  %8251 = vmatprep.mubr.bf16.mxu0 0
  %8252 = vmatmul.mubr.bf16.gmra.mrb[0].mxu0 %v7819
  %v8253 = vpop.f32.mrb[0].mxu0
  %v8254 = vadd.f32 %v7992, %v8253
  %v8255 = vpop.f32.mrb[0].mxu0
  %v8256 = vpop.f32.mrb[0].mxu0
  %v8257 = vadd.f32 %v7995, %v8256
  %v8258 = vpop.f32.mrb[0].mxu0
  %8259 = vmatprep.mubr.bf16.mxu0 0
  %8260 = vmatmul.mubr.bf16.gmra.mrb[0].mxu0 %v7822
  %v8261 = vpop.f32.mrb[0].mxu0
  %v8262 = vadd.f32 %v8000, %v8261
  %v8263 = vpop.f32.mrb[0].mxu0
  %v8264 = vpop.f32.mrb[0].mxu0
  %v8265 = vadd.f32 %v8003, %v8264
  %v8266 = vpop.f32.mrb[0].mxu0
  %8267 = vmatprep.mubr.bf16.mxu0 0
  %8268 = vmatmul.mubr.bf16.gmra.mrb[0].mxu0 %v7825
  %v8269 = vpop.f32.mrb[0].mxu0
  %v8270 = vadd.f32 %v8008, %v8269
  %v8271 = vpop.f32.mrb[0].mxu0
  %v8272 = vpop.f32.mrb[0].mxu0
  %v8273 = vadd.f32 %v8011, %v8272
  %v8274 = vpop.f32.mrb[0].mxu0
  %8275 = vmatprep.mubr.bf16.mxu0 0
  %8276 = vmatmul.mubr.bf16.gmra.mrb[0].mxu0 %v7828
  %v8277 = vpop.f32.mrb[0].mxu0
  %v8278 = vadd.f32 %v8016, %v8277
  %v8279 = vpop.f32.mrb[0].mxu0
  %v8280 = vpop.f32.mrb[0].mxu0
  %v8281 = vadd.f32 %v8019, %v8280
  %v8282 = vpop.f32.mrb[0].mxu0
  %8283 = vmatprep.mubr.bf16.mxu0 0
  %8284 = vmatmul.mubr.bf16.gmra.mrb[0].mxu0 %v7831
  %v8285 = vpop.f32.mrb[0].mxu0
  %v8286 = vadd.f32 %v8024, %v8285
  %v8287 = vpop.f32.mrb[0].mxu0
  %v8288 = vpop.f32.mrb[0].mxu0
  %v8289 = vadd.f32 %v8027, %v8288
  %v8290 = vpop.f32.mrb[0].mxu0
  %8291 = vmatprep.mubr.bf16.mxu0 0
  %8292 = vmatmul.mubr.bf16.gmra.mrb[0].mxu0 %v7834
  %v8293 = vpop.f32.mrb[0].mxu0
  %v8294 = vadd.f32 %v8032, %v8293
  %v8295 = vpop.f32.mrb[0].mxu0
  %v8296 = vpop.f32.mrb[0].mxu0
  %v8297 = vadd.f32 %v8035, %v8296
  %v8298 = vpop.f32.mrb[0].mxu0
  %8299 = vmatprep.mubr.bf16.mxu0 0
  %8300 = vmatmul.mubr.bf16.gmra.mrb[0].mxu0 %v7837
  %v8301 = vpop.f32.mrb[0].mxu0
  %v8302 = vadd.f32 %v8040, %v8301
  %v8303 = vpop.f32.mrb[0].mxu0
  %v8304 = vpop.f32.mrb[0].mxu0
  %v8305 = vadd.f32 %v8043, %v8304
  %v8306 = vpop.f32.mrb[0].mxu0
  %8307 = vmatprep.mubr.bf16.mxu0 0
  %8308 = vmatmul.mubr.bf16.gmra.mrb[0].mxu0 %v7840
  %v8309 = vpop.f32.mrb[0].mxu0
  %v8310 = vadd.f32 %v8048, %v8309
  %v8311 = vpop.f32.mrb[0].mxu0
  %v8312 = vpop.f32.mrb[0].mxu0
  %v8313 = vadd.f32 %v8051, %v8312
  %v8314 = vpop.f32.mrb[0].mxu0
  %8315 = vmatprep.mubr.bf16.mxu0 0
  %8316 = vmatmul.mubr.bf16.gmra.mrb[0].mxu0 %v7843
  %v8317 = vpop.f32.mrb[0].mxu0
  %v8318 = vadd.f32 %v8056, %v8317
  %v8319 = vpop.f32.mrb[0].mxu0
  %v8320 = vpop.f32.mrb[0].mxu0
  %v8321 = vadd.f32 %v8059, %v8320
  %v8322 = vpop.f32.mrb[0].mxu0
  %8323 = vmatprep.mubr.bf16.mxu0 0
  %8324 = vmatmul.mubr.bf16.gmra.mrb[0].mxu0 %v7846
  %v8325 = vpop.f32.mrb[0].mxu0
  %v8326 = vadd.f32 %v8064, %v8325
  %v8327 = vpop.f32.mrb[0].mxu0
  %v8328 = vpop.f32.mrb[0].mxu0
  %v8329 = vadd.f32 %v8067, %v8328
  %v8330 = vpop.f32.mrb[0].mxu0
  %8331 = vmatprep.mubr.bf16.mxu0 0
  %8332 = vmatmul.mubr.bf16.gmra.mrb[0].mxu0 %v7849
  %v8333 = vpop.f32.mrb[0].mxu0
  %v8334 = vadd.f32 %v8072, %v8333
  %v8335 = vpop.f32.mrb[0].mxu0
  %v8336 = vpop.f32.mrb[0].mxu0
  %v8337 = vadd.f32 %v8075, %v8336
  %v8338 = vpop.f32.mrb[0].mxu0
  %8339 = vmatprep.mubr.bf16.mxu0 0
  %8340 = vmatmul.mubr.bf16.gmra.mrb[0].mxu0 %v7852
  %v8341 = vpop.f32.mrb[0].mxu0
  %v8342 = vadd.f32 %v8080, %v8341
  %v8343 = vpop.f32.mrb[0].mxu0
  %v8344 = vpop.f32.mrb[0].mxu0
  %v8345 = vadd.f32 %v8083, %v8344
  %v8346 = vpop.f32.mrb[0].mxu0
  %8347 = vmatprep.mubr.bf16.mxu0 0
  %8348 = vmatmul.mubr.bf16.gmra.mrb[0].mxu0 %v7855
  %v8349 = vpop.f32.mrb[0].mxu0
  %v8350 = vadd.f32 %v8088, %v8349
  %v8351 = vpop.f32.mrb[0].mxu0
  %v8352 = vpop.f32.mrb[0].mxu0
  %v8353 = vadd.f32 %v8091, %v8352
  %v8354 = vpop.f32.mrb[0].mxu0
  %8355 = vmatprep.mubr.bf16.mxu0 0
  %8356 = vmatmul.mubr.bf16.gmra.mrb[0].mxu0 %v7858
  %v8357 = vpop.f32.mrb[0].mxu0
  %v8358 = vadd.f32 %v8096, %v8357
  %v8359 = vpop.f32.mrb[0].mxu0
  %v8360 = vpop.f32.mrb[0].mxu0
  %v8361 = vadd.f32 %v8099, %v8360
  %v8362 = vpop.f32.mrb[0].mxu0
  %8363 = vmatprep.mubr.bf16.mxu0 0
  %8364 = vmatmul.mubr.bf16.gmra.mrb[0].mxu0 %v7861
  %v8365 = vpop.f32.mrb[0].mxu0
  %v8366 = vadd.f32 %v8104, %v8365
  %v8367 = vpop.f32.mrb[0].mxu0
  %v8368 = vpop.f32.mrb[0].mxu0
  %v8369 = vadd.f32 %v8107, %v8368
  %v8370 = vpop.f32.mrb[0].mxu0
  %8371 = vmatprep.mubr.bf16.mxu0 0
  %8372 = vmatmul.mubr.bf16.gmra.mrb[0].mxu0 %v7864
  %v8373 = vpop.f32.mrb[0].mxu0
  %v8374 = vpop.f32.mrb[0].mxu0
  %v8375 = vpop.f32.mrb[0].mxu0
  %v8376 = vpop.f32.mrb[0].mxu0
  %8377 = vdwg.mxu0
  %s8378 = scalar_lea.vmem %s7, 32
  %v8379 = vld [vmem:[%s8378] sm:$0xf]
  %v8380 = vld [vmem:[%s8378 + $0x4] sm:$0xf]
  %v8381 = vld [vmem:[%s8378 + $0x8] sm:$0xf]
  %v8382 = vld [vmem:[%s8378 + $0xc] sm:$0xf]
  %v8387 = vunpack.c.l.b16 %v8379
  %v8388 = vunpack.c.l.b16 %v8380
  %v8389 = vunpack.c.l.b16 %v8381
  %v8390 = vunpack.c.l.b16 %v8382
  %v8391 = vpack.c.b16 %v8388, %v8387
  %v8392 = vpack.c.b16 %v8390, %v8389
  %v8396 = vsel %vm7787, %v7765, 0
  %8398 = vmatprep.subr.bf16.mxu0 0
  %8399 = vmatpush1.bf16.msra.mxu0 %v8391
  %8400 = vmatprep.subr.bf16.mxu0 0
  %8401 = vmatpush1.bf16.msra.mxu0 %v8392
  %8402 = vmatprep.subr.bf16.mxu0 0
  %8403 = vmatpush1.bf16.msra.mxu0 0
  %8404 = vmatprep.subr.bf16.mxu0 0
  %8405 = vmatpush1.bf16.msra.mxu0 0
  %8406 = vmatprep.subr.bf16.mxu0 0
  %8407 = vmatpush1.bf16.msra.mxu0 0
  %8408 = vmatprep.subr.bf16.mxu0 0
  %8409 = vmatpush1.bf16.msra.mxu0 0
  %8410 = vmatprep.subr.bf16.mxu0 0
  %8411 = vmatpush1.bf16.msra.mxu0 0
  %8412 = vmatprep.subr.bf16.mxu0 0
  %8413 = vmatpush1.bf16.msra.mxu0 0
  %8414 = vmatprep.subr.bf16.mxu0 0
  %8415 = vmatpush1.bf16.msra.mxu0 0
  %8416 = vmatprep.subr.bf16.mxu0 0
  %8417 = vmatpush1.bf16.msra.mxu0 0
  %8418 = vmatprep.subr.bf16.mxu0 0
  %8419 = vmatpush1.bf16.msra.mxu0 0
  %8420 = vmatprep.subr.bf16.mxu0 0
  %8421 = vmatpush1.bf16.msra.mxu0 0
  %8422 = vmatprep.subr.bf16.mxu0 0
  %8423 = vmatpush1.bf16.msra.mxu0 0
  %8424 = vmatprep.subr.bf16.mxu0 0
  %8425 = vmatpush1.bf16.msra.mxu0 0
  %8426 = vmatprep.subr.bf16.mxu0 0
  %8427 = vmatpush1.bf16.msra.mxu0 0
  %8428 = vmatprep.subr.bf16.mxu0 0
  %8429 = vmatpush1.bf16.msra.mxu0 0
  %8430 = vmatprep.mubr.bf16.mxu0 0
  %8431 = vmatmul.mubr.bf16.gmra.mrb[0].mxu0 %v7792
  %v8432 = vpop.f32.mrb[0].mxu0
  %v8433 = vadd.f32 0.0, %v8432
  %v8434 = vpop.f32.mrb[0].mxu0
  %v8435 = vpop.f32.mrb[0].mxu0
  %v8436 = vadd.f32 0.0, %v8435
  %v8437 = vpop.f32.mrb[0].mxu0
  %8438 = vmatprep.mubr.bf16.mxu0 0
  %8439 = vmatmul.mubr.bf16.gmra.mrb[0].mxu0 %v7795
  %v8440 = vpop.f32.mrb[0].mxu0
  %v8441 = vadd.f32 0.0, %v8440
  %v8442 = vpop.f32.mrb[0].mxu0
  %v8443 = vpop.f32.mrb[0].mxu0
  %v8444 = vadd.f32 0.0, %v8443
  %v8445 = vpop.f32.mrb[0].mxu0
  %8446 = vmatprep.mubr.bf16.mxu0 0
  %8447 = vmatmul.mubr.bf16.gmra.mrb[0].mxu0 %v7798
  %v8448 = vpop.f32.mrb[0].mxu0
  %v8449 = vadd.f32 0.0, %v8448
  %v8450 = vpop.f32.mrb[0].mxu0
  %v8451 = vpop.f32.mrb[0].mxu0
  %v8452 = vadd.f32 0.0, %v8451
  %v8453 = vpop.f32.mrb[0].mxu0
  %8454 = vmatprep.mubr.bf16.mxu0 0
  %8455 = vmatmul.mubr.bf16.gmra.mrb[0].mxu0 %v7801
  %v8456 = vpop.f32.mrb[0].mxu0
  %v8457 = vadd.f32 0.0, %v8456
  %v8458 = vpop.f32.mrb[0].mxu0
  %v8459 = vpop.f32.mrb[0].mxu0
  %v8460 = vadd.f32 0.0, %v8459
  %v8461 = vpop.f32.mrb[0].mxu0
  %8462 = vmatprep.mubr.bf16.mxu0 0
  %8463 = vmatmul.mubr.bf16.gmra.mrb[0].mxu0 %v7804
  %v8464 = vpop.f32.mrb[0].mxu0
  %v8465 = vadd.f32 0.0, %v8464
  %v8466 = vpop.f32.mrb[0].mxu0
  %v8467 = vpop.f32.mrb[0].mxu0
  %v8468 = vadd.f32 0.0, %v8467
  %v8469 = vpop.f32.mrb[0].mxu0
  %8470 = vmatprep.mubr.bf16.mxu0 0
  %8471 = vmatmul.mubr.bf16.gmra.mrb[0].mxu0 %v7807
  %v8472 = vpop.f32.mrb[0].mxu0
  %v8473 = vadd.f32 0.0, %v8472
  %v8474 = vpop.f32.mrb[0].mxu0
  %v8475 = vpop.f32.mrb[0].mxu0
  %v8476 = vadd.f32 0.0, %v8475
  %v8477 = vpop.f32.mrb[0].mxu0
  %8478 = vmatprep.mubr.bf16.mxu0 0
  %8479 = vmatmul.mubr.bf16.gmra.mrb[0].mxu0 %v7810
  %v8480 = vpop.f32.mrb[0].mxu0
  %v8481 = vadd.f32 0.0, %v8480
  %v8482 = vpop.f32.mrb[0].mxu0
  %v8483 = vpop.f32.mrb[0].mxu0
  %v8484 = vadd.f32 0.0, %v8483
  %v8485 = vpop.f32.mrb[0].mxu0
  %8486 = vmatprep.mubr.bf16.mxu0 0
  %8487 = vmatmul.mubr.bf16.gmra.mrb[0].mxu0 %v7813
  %v8488 = vpop.f32.mrb[0].mxu0
  %v8489 = vadd.f32 0.0, %v8488
  %v8490 = vpop.f32.mrb[0].mxu0
  %v8491 = vpop.f32.mrb[0].mxu0
  %v8492 = vadd.f32 0.0, %v8491
  %v8493 = vpop.f32.mrb[0].mxu0
  %8494 = vmatprep.mubr.bf16.mxu0 0
  %8495 = vmatmul.mubr.bf16.gmra.mrb[0].mxu0 %v7816
  %v8496 = vpop.f32.mrb[0].mxu0
  %v8497 = vadd.f32 0.0, %v8496
  %v8498 = vpop.f32.mrb[0].mxu0
  %v8499 = vpop.f32.mrb[0].mxu0
  %v8500 = vadd.f32 0.0, %v8499
  %v8501 = vpop.f32.mrb[0].mxu0
  %8502 = vmatprep.mubr.bf16.mxu0 0
  %8503 = vmatmul.mubr.bf16.gmra.mrb[0].mxu0 %v7819
  %v8504 = vpop.f32.mrb[0].mxu0
  %v8505 = vadd.f32 0.0, %v8504
  %v8506 = vpop.f32.mrb[0].mxu0
  %v8507 = vpop.f32.mrb[0].mxu0
  %v8508 = vadd.f32 0.0, %v8507
  %v8509 = vpop.f32.mrb[0].mxu0
  %8510 = vmatprep.mubr.bf16.mxu0 0
  %8511 = vmatmul.mubr.bf16.gmra.mrb[0].mxu0 %v7822
  %v8512 = vpop.f32.mrb[0].mxu0
  %v8513 = vadd.f32 0.0, %v8512
  %v8514 = vpop.f32.mrb[0].mxu0
  %v8515 = vpop.f32.mrb[0].mxu0
  %v8516 = vadd.f32 0.0, %v8515
  %v8517 = vpop.f32.mrb[0].mxu0
  %8518 = vmatprep.mubr.bf16.mxu0 0
  %8519 = vmatmul.mubr.bf16.gmra.mrb[0].mxu0 %v7825
  %v8520 = vpop.f32.mrb[0].mxu0
  %v8521 = vadd.f32 0.0, %v8520
  %v8522 = vpop.f32.mrb[0].mxu0
  %v8523 = vpop.f32.mrb[0].mxu0
  %v8524 = vadd.f32 0.0, %v8523
  %v8525 = vpop.f32.mrb[0].mxu0
  %8526 = vmatprep.mubr.bf16.mxu0 0
  %8527 = vmatmul.mubr.bf16.gmra.mrb[0].mxu0 %v7828
  %v8528 = vpop.f32.mrb[0].mxu0
  %v8529 = vadd.f32 0.0, %v8528
  %v8530 = vpop.f32.mrb[0].mxu0
  %v8531 = vpop.f32.mrb[0].mxu0
  %v8532 = vadd.f32 0.0, %v8531
  %v8533 = vpop.f32.mrb[0].mxu0
  %8534 = vmatprep.mubr.bf16.mxu0 0
  %8535 = vmatmul.mubr.bf16.gmra.mrb[0].mxu0 %v7831
  %v8536 = vpop.f32.mrb[0].mxu0
  %v8537 = vadd.f32 0.0, %v8536
  %v8538 = vpop.f32.mrb[0].mxu0
  %v8539 = vpop.f32.mrb[0].mxu0
  %v8540 = vadd.f32 0.0, %v8539
  %v8541 = vpop.f32.mrb[0].mxu0
  %8542 = vmatprep.mubr.bf16.mxu0 0
  %8543 = vmatmul.mubr.bf16.gmra.mrb[0].mxu0 %v7834
  %v8544 = vpop.f32.mrb[0].mxu0
  %v8545 = vadd.f32 0.0, %v8544
  %v8546 = vpop.f32.mrb[0].mxu0
  %v8547 = vpop.f32.mrb[0].mxu0
  %v8548 = vadd.f32 0.0, %v8547
  %v8549 = vpop.f32.mrb[0].mxu0
  %8550 = vmatprep.mubr.bf16.mxu0 0
  %8551 = vmatmul.mubr.bf16.gmra.mrb[0].mxu0 %v7837
  %v8552 = vpop.f32.mrb[0].mxu0
  %v8553 = vadd.f32 0.0, %v8552
  %v8554 = vpop.f32.mrb[0].mxu0
  %v8555 = vpop.f32.mrb[0].mxu0
  %v8556 = vadd.f32 0.0, %v8555
  %v8557 = vpop.f32.mrb[0].mxu0
  %8558 = vmatprep.mubr.bf16.mxu0 0
  %8559 = vmatmul.mubr.bf16.gmra.mrb[0].mxu0 %v7840
  %v8560 = vpop.f32.mrb[0].mxu0
  %v8561 = vadd.f32 0.0, %v8560
  %v8562 = vpop.f32.mrb[0].mxu0
  %v8563 = vpop.f32.mrb[0].mxu0
  %v8564 = vadd.f32 0.0, %v8563
  %v8565 = vpop.f32.mrb[0].mxu0
  %8566 = vmatprep.mubr.bf16.mxu0 0
  %8567 = vmatmul.mubr.bf16.gmra.mrb[0].mxu0 %v7843
  %v8568 = vpop.f32.mrb[0].mxu0
  %v8569 = vadd.f32 0.0, %v8568
  %v8570 = vpop.f32.mrb[0].mxu0
  %v8571 = vpop.f32.mrb[0].mxu0
  %v8572 = vadd.f32 0.0, %v8571
  %v8573 = vpop.f32.mrb[0].mxu0
  %8574 = vmatprep.mubr.bf16.mxu0 0
  %8575 = vmatmul.mubr.bf16.gmra.mrb[0].mxu0 %v7846
  %v8576 = vpop.f32.mrb[0].mxu0
  %v8577 = vadd.f32 0.0, %v8576
  %v8578 = vpop.f32.mrb[0].mxu0
  %v8579 = vpop.f32.mrb[0].mxu0
  %v8580 = vadd.f32 0.0, %v8579
  %v8581 = vpop.f32.mrb[0].mxu0
  %8582 = vmatprep.mubr.bf16.mxu0 0
  %8583 = vmatmul.mubr.bf16.gmra.mrb[0].mxu0 %v7849
  %v8584 = vpop.f32.mrb[0].mxu0
  %v8585 = vadd.f32 0.0, %v8584
  %v8586 = vpop.f32.mrb[0].mxu0
  %v8587 = vpop.f32.mrb[0].mxu0
  %v8588 = vadd.f32 0.0, %v8587
  %v8589 = vpop.f32.mrb[0].mxu0
  %8590 = vmatprep.mubr.bf16.mxu0 0
  %8591 = vmatmul.mubr.bf16.gmra.mrb[0].mxu0 %v7852
  %v8592 = vpop.f32.mrb[0].mxu0
  %v8593 = vadd.f32 0.0, %v8592
  %v8594 = vpop.f32.mrb[0].mxu0
  %v8595 = vpop.f32.mrb[0].mxu0
  %v8596 = vadd.f32 0.0, %v8595
  %v8597 = vpop.f32.mrb[0].mxu0
  %8598 = vmatprep.mubr.bf16.mxu0 0
  %8599 = vmatmul.mubr.bf16.gmra.mrb[0].mxu0 %v7855
  %v8600 = vpop.f32.mrb[0].mxu0
  %v8601 = vadd.f32 0.0, %v8600
  %v8602 = vpop.f32.mrb[0].mxu0
  %v8603 = vpop.f32.mrb[0].mxu0
  %v8604 = vadd.f32 0.0, %v8603
  %v8605 = vpop.f32.mrb[0].mxu0
  %8606 = vmatprep.mubr.bf16.mxu0 0
  %8607 = vmatmul.mubr.bf16.gmra.mrb[0].mxu0 %v7858
  %v8608 = vpop.f32.mrb[0].mxu0
  %v8609 = vadd.f32 0.0, %v8608
  %v8610 = vpop.f32.mrb[0].mxu0
  %v8611 = vpop.f32.mrb[0].mxu0
  %v8612 = vadd.f32 0.0, %v8611
  %v8613 = vpop.f32.mrb[0].mxu0
  %8614 = vmatprep.mubr.bf16.mxu0 0
  %8615 = vmatmul.mubr.bf16.gmra.mrb[0].mxu0 %v7861
  %v8616 = vpop.f32.mrb[0].mxu0
  %v8617 = vadd.f32 0.0, %v8616
  %v8618 = vpop.f32.mrb[0].mxu0
  %v8619 = vpop.f32.mrb[0].mxu0
  %v8620 = vadd.f32 0.0, %v8619
  %v8621 = vpop.f32.mrb[0].mxu0
  %8622 = vmatprep.mubr.bf16.mxu0 0
  %8623 = vmatmul.mubr.bf16.gmra.mrb[0].mxu0 %v7864
  %v8624 = vpop.f32.mrb[0].mxu0
  %v8625 = vadd.f32 0.0, %v8624
  %v8626 = vpop.f32.mrb[0].mxu0
  %v8627 = vpop.f32.mrb[0].mxu0
  %v8628 = vadd.f32 0.0, %v8627
  %v8629 = vpop.f32.mrb[0].mxu0
  %8630 = vmatprep.mubr.bf16.mxu0 0
  %8631 = vmatmul.mubr.bf16.gmra.mrb[0].mxu0 %v7867
  %v8632 = vpop.f32.mrb[0].mxu0
  %v8633 = vadd.f32 0.0, %v8632
  %v8634 = vpop.f32.mrb[0].mxu0
  %v8635 = vpop.f32.mrb[0].mxu0
  %v8636 = vadd.f32 0.0, %v8635
  %v8637 = vpop.f32.mrb[0].mxu0
  %8638 = vmatprep.mubr.bf16.mxu0 0
  %8639 = vmatmul.mubr.bf16.gmra.mrb[0].mxu0 %v8396
  %v8640 = vpop.f32.mrb[0].mxu0
  %v8641 = vpop.f32.mrb[0].mxu0
  %v8642 = vpop.f32.mrb[0].mxu0
  %v8643 = vpop.f32.mrb[0].mxu0
  %8644 = vdwg.mxu0
  %v8645 = vadd.f32 %v8166, %v8433
  %v8646 = vadd.f32 %v8169, %v8436
  %v8647 = vadd.f32 %v8174, %v8441
  %v8648 = vadd.f32 %v8177, %v8444
  %v8649 = vadd.f32 %v8182, %v8449
  %v8650 = vadd.f32 %v8185, %v8452
  %v8651 = vadd.f32 %v8190, %v8457
  %v8652 = vadd.f32 %v8193, %v8460
  %v8653 = vadd.f32 %v8198, %v8465
  %v8654 = vadd.f32 %v8201, %v8468
  %v8655 = vadd.f32 %v8206, %v8473
  %v8656 = vadd.f32 %v8209, %v8476
  %v8657 = vadd.f32 %v8214, %v8481
  %v8658 = vadd.f32 %v8217, %v8484
  %v8659 = vadd.f32 %v8222, %v8489
  %v8660 = vadd.f32 %v8225, %v8492
  %v8661 = vadd.f32 %v8230, %v8497
  %v8662 = vadd.f32 %v8233, %v8500
  %v8663 = vadd.f32 %v8238, %v8505
  %v8664 = vadd.f32 %v8241, %v8508
  %v8665 = vadd.f32 %v8246, %v8513
  %v8666 = vadd.f32 %v8249, %v8516
  %v8667 = vadd.f32 %v8254, %v8521
  %v8668 = vadd.f32 %v8257, %v8524
  %v8669 = vadd.f32 %v8262, %v8529
  %v8670 = vadd.f32 %v8265, %v8532
  %v8671 = vadd.f32 %v8270, %v8537
  %v8672 = vadd.f32 %v8273, %v8540
  %v8673 = vadd.f32 %v8278, %v8545
  %v8674 = vadd.f32 %v8281, %v8548
  %v8675 = vadd.f32 %v8286, %v8553
  %v8676 = vadd.f32 %v8289, %v8556
  %v8677 = vadd.f32 %v8294, %v8561
  %v8678 = vadd.f32 %v8297, %v8564
  %v8679 = vadd.f32 %v8302, %v8569
  %v8680 = vadd.f32 %v8305, %v8572
  %v8681 = vadd.f32 %v8310, %v8577
  %v8682 = vadd.f32 %v8313, %v8580
  %v8683 = vadd.f32 %v8318, %v8585
  %v8684 = vadd.f32 %v8321, %v8588
  %v8685 = vadd.f32 %v8326, %v8593
  %v8686 = vadd.f32 %v8329, %v8596
  %v8687 = vadd.f32 %v8334, %v8601
  %v8688 = vadd.f32 %v8337, %v8604
  %v8689 = vadd.f32 %v8342, %v8609
  %v8690 = vadd.f32 %v8345, %v8612
  %v8691 = vadd.f32 %v8350, %v8617
  %v8692 = vadd.f32 %v8353, %v8620
  %v8693 = vadd.f32 %v8358, %v8625
  %v8694 = vadd.f32 %v8361, %v8628
  %v8695 = vadd.f32 %v8366, %v8633
  %v8696 = vadd.f32 %v8369, %v8636
  %v8697 = vld [vmem:[%s8] sm:$0x1]
  %v8699 = vlaneseq
  %v8700 = vshrl.u32 %v8699, 7
  %v8701 = vsub.s32 0, %v8700
  %v8702 = vrot.slane %v8697, %v8701
  %v8704 = vmul.f32 %v8645, %v8702
  %v8705 = vmul.f32 %v8646, %v8702
  %v8706 = vmul.f32 %v8647, %v8702
  %v8707 = vmul.f32 %v8648, %v8702
  %v8708 = vmul.f32 %v8649, %v8702
  %v8709 = vmul.f32 %v8650, %v8702
  %v8710 = vmul.f32 %v8651, %v8702
  %v8711 = vmul.f32 %v8652, %v8702
  %v8712 = vmul.f32 %v8653, %v8702
  %v8713 = vmul.f32 %v8654, %v8702
  %v8714 = vmul.f32 %v8655, %v8702
  %v8715 = vmul.f32 %v8656, %v8702
  %v8716 = vmul.f32 %v8657, %v8702
  %v8717 = vmul.f32 %v8658, %v8702
  %v8718 = vmul.f32 %v8659, %v8702
  %v8719 = vmul.f32 %v8660, %v8702
  %v8720 = vmul.f32 %v8661, %v8702
  %v8721 = vmul.f32 %v8662, %v8702
  %v8722 = vmul.f32 %v8663, %v8702
  %v8723 = vmul.f32 %v8664, %v8702
  %v8724 = vmul.f32 %v8665, %v8702
  %v8725 = vmul.f32 %v8666, %v8702
  %v8726 = vmul.f32 %v8667, %v8702
  %v8727 = vmul.f32 %v8668, %v8702
  %v8728 = vmul.f32 %v8669, %v8702
  %v8729 = vmul.f32 %v8670, %v8702
  %v8730 = vmul.f32 %v8671, %v8702
  %v8731 = vmul.f32 %v8672, %v8702
  %v8732 = vmul.f32 %v8673, %v8702
  %v8733 = vmul.f32 %v8674, %v8702
  %v8734 = vmul.f32 %v8675, %v8702
  %v8735 = vmul.f32 %v8676, %v8702
  %v8736 = vmul.f32 %v8677, %v8702
  %v8737 = vmul.f32 %v8678, %v8702
  %v8738 = vmul.f32 %v8679, %v8702
  %v8739 = vmul.f32 %v8680, %v8702
  %v8740 = vmul.f32 %v8681, %v8702
  %v8741 = vmul.f32 %v8682, %v8702
  %v8742 = vmul.f32 %v8683, %v8702
  %v8743 = vmul.f32 %v8684, %v8702
  %v8744 = vmul.f32 %v8685, %v8702
  %v8745 = vmul.f32 %v8686, %v8702
  %v8746 = vmul.f32 %v8687, %v8702
  %v8747 = vmul.f32 %v8688, %v8702
  %v8748 = vmul.f32 %v8689, %v8702
  %v8749 = vmul.f32 %v8690, %v8702
  %v8750 = vmul.f32 %v8691, %v8702
  %v8751 = vmul.f32 %v8692, %v8702
  %v8752 = vmul.f32 %v8693, %v8702
  %v8753 = vmul.f32 %v8694, %v8702
  %v8754 = vmul.f32 %v8695, %v8702
  %v8755 = vmul.f32 %v8696, %v8702
  %v8756 = vld [vmem:[%s9] sm:$0x1]
  %v8758 = vlaneseq
  %v8759 = vshrl.u32 %v8758, 7
  %v8760 = vsub.s32 0, %v8759
  %v8761 = vrot.slane %v8756, %v8760
  %v8763 = vadd.f32 %v8704, %v8761
  %v8764 = vadd.f32 %v8705, %v8761
  %v8765 = vadd.f32 %v8706, %v8761
  %v8766 = vadd.f32 %v8707, %v8761
  %v8767 = vadd.f32 %v8708, %v8761
  %v8768 = vadd.f32 %v8709, %v8761
  %v8769 = vadd.f32 %v8710, %v8761
  %v8770 = vadd.f32 %v8711, %v8761
  %v8771 = vadd.f32 %v8712, %v8761
  %v8772 = vadd.f32 %v8713, %v8761
  %v8773 = vadd.f32 %v8714, %v8761
  %v8774 = vadd.f32 %v8715, %v8761
  %v8775 = vadd.f32 %v8716, %v8761
  %v8776 = vadd.f32 %v8717, %v8761
  %v8777 = vadd.f32 %v8718, %v8761
  %v8778 = vadd.f32 %v8719, %v8761
  %v8779 = vadd.f32 %v8720, %v8761
  %v8780 = vadd.f32 %v8721, %v8761
  %v8781 = vadd.f32 %v8722, %v8761
  %v8782 = vadd.f32 %v8723, %v8761
  %v8783 = vadd.f32 %v8724, %v8761
  %v8784 = vadd.f32 %v8725, %v8761
  %v8785 = vadd.f32 %v8726, %v8761
  %v8786 = vadd.f32 %v8727, %v8761
  %v8787 = vadd.f32 %v8728, %v8761
  %v8788 = vadd.f32 %v8729, %v8761
  %v8789 = vadd.f32 %v8730, %v8761
  %v8790 = vadd.f32 %v8731, %v8761
  %v8791 = vadd.f32 %v8732, %v8761
  %v8792 = vadd.f32 %v8733, %v8761
  %v8793 = vadd.f32 %v8734, %v8761
  %v8794 = vadd.f32 %v8735, %v8761
  %v8795 = vadd.f32 %v8736, %v8761
  %v8796 = vadd.f32 %v8737, %v8761
  %v8797 = vadd.f32 %v8738, %v8761
  %v8798 = vadd.f32 %v8739, %v8761
  %v8799 = vadd.f32 %v8740, %v8761
  %v8800 = vadd.f32 %v8741, %v8761
  %v8801 = vadd.f32 %v8742, %v8761
  %v8802 = vadd.f32 %v8743, %v8761
  %v8803 = vadd.f32 %v8744, %v8761
  %v8804 = vadd.f32 %v8745, %v8761
  %v8805 = vadd.f32 %v8746, %v8761
  %v8806 = vadd.f32 %v8747, %v8761
  %v8807 = vadd.f32 %v8748, %v8761
  %v8808 = vadd.f32 %v8749, %v8761
  %v8809 = vadd.f32 %v8750, %v8761
  %v8810 = vadd.f32 %v8751, %v8761
  %v8811 = vadd.f32 %v8752, %v8761
  %v8812 = vadd.f32 %v8753, %v8761
  %v8813 = vadd.f32 %v8754, %v8761
  %v8814 = vadd.f32 %v8755, %v8761
  %v8815 = vmax.f32 %v8763, 0.0
  %v8816 = vmax.f32 %v8764, 0.0
  %v8817 = vmax.f32 %v8765, 0.0
  %v8818 = vmax.f32 %v8766, 0.0
  %v8819 = vmax.f32 %v8767, 0.0
  %v8820 = vmax.f32 %v8768, 0.0
  %v8821 = vmax.f32 %v8769, 0.0
  %v8822 = vmax.f32 %v8770, 0.0
  %v8823 = vmax.f32 %v8771, 0.0
  %v8824 = vmax.f32 %v8772, 0.0
  %v8825 = vmax.f32 %v8773, 0.0
  %v8826 = vmax.f32 %v8774, 0.0
  %v8827 = vmax.f32 %v8775, 0.0
  %v8828 = vmax.f32 %v8776, 0.0
  %v8829 = vmax.f32 %v8777, 0.0
  %v8830 = vmax.f32 %v8778, 0.0
  %v8831 = vmax.f32 %v8779, 0.0
  %v8832 = vmax.f32 %v8780, 0.0
  %v8833 = vmax.f32 %v8781, 0.0
  %v8834 = vmax.f32 %v8782, 0.0
  %v8835 = vmax.f32 %v8783, 0.0
  %v8836 = vmax.f32 %v8784, 0.0
  %v8837 = vmax.f32 %v8785, 0.0
  %v8838 = vmax.f32 %v8786, 0.0
  %v8839 = vmax.f32 %v8787, 0.0
  %v8840 = vmax.f32 %v8788, 0.0
  %v8841 = vmax.f32 %v8789, 0.0
  %v8842 = vmax.f32 %v8790, 0.0
  %v8843 = vmax.f32 %v8791, 0.0
  %v8844 = vmax.f32 %v8792, 0.0
  %v8845 = vmax.f32 %v8793, 0.0
  %v8846 = vmax.f32 %v8794, 0.0
  %v8847 = vmax.f32 %v8795, 0.0
  %v8848 = vmax.f32 %v8796, 0.0
  %v8849 = vmax.f32 %v8797, 0.0
  %v8850 = vmax.f32 %v8798, 0.0
  %v8851 = vmax.f32 %v8799, 0.0
  %v8852 = vmax.f32 %v8800, 0.0
  %v8853 = vmax.f32 %v8801, 0.0
  %v8854 = vmax.f32 %v8802, 0.0
  %v8855 = vmax.f32 %v8803, 0.0
  %v8856 = vmax.f32 %v8804, 0.0
  %v8857 = vmax.f32 %v8805, 0.0
  %v8858 = vmax.f32 %v8806, 0.0
  %v8859 = vmax.f32 %v8807, 0.0
  %v8860 = vmax.f32 %v8808, 0.0
  %v8861 = vmax.f32 %v8809, 0.0
  %v8862 = vmax.f32 %v8810, 0.0
  %v8863 = vmax.f32 %v8811, 0.0
  %v8864 = vmax.f32 %v8812, 0.0
  %v8865 = vmax.f32 %v8813, 0.0
  %v8866 = vmax.f32 %v8814, 0.0
  %v8867 = vmax.f32 %v8815, %v8817
  %v8868 = vmax.f32 %v8816, %v8818
  %v8869 = vmax.f32 %v8819, %v8821
  %v8870 = vmax.f32 %v8820, %v8822
  %v8871 = vmax.f32 %v8823, %v8825
  %v8872 = vmax.f32 %v8824, %v8826
  %v8873 = vmax.f32 %v8827, %v8829
  %v8874 = vmax.f32 %v8828, %v8830
  %v8875 = vmax.f32 %v8831, %v8833
  %v8876 = vmax.f32 %v8832, %v8834
  %v8877 = vmax.f32 %v8835, %v8837
  %v8878 = vmax.f32 %v8836, %v8838
  %v8879 = vmax.f32 %v8839, %v8841
  %v8880 = vmax.f32 %v8840, %v8842
  %v8881 = vmax.f32 %v8843, %v8845
  %v8882 = vmax.f32 %v8844, %v8846
  %v8883 = vmax.f32 %v8847, %v8849
  %v8884 = vmax.f32 %v8848, %v8850
  %v8885 = vmax.f32 %v8851, %v8853
  %v8886 = vmax.f32 %v8852, %v8854
  %v8887 = vmax.f32 %v8855, %v8857
  %v8888 = vmax.f32 %v8856, %v8858
  %v8889 = vmax.f32 %v8859, %v8861
  %v8890 = vmax.f32 %v8860, %v8862
  %v8891 = vmax.f32 %v8863, %v8865
  %v8892 = vmax.f32 %v8864, %v8866
  %v8893 = vpack.c.bf16 %v8868, %v8867
  %v8894 = vpack.c.bf16 %v8870, %v8869
  %v8895 = vpack.c.bf16 %v8872, %v8871
  %v8896 = vpack.c.bf16 %v8874, %v8873
  %v8897 = vpack.c.bf16 %v8876, %v8875
  %v8898 = vpack.c.bf16 %v8878, %v8877
  %v8899 = vpack.c.bf16 %v8880, %v8879
  %v8900 = vpack.c.bf16 %v8882, %v8881
  %v8901 = vpack.c.bf16 %v8884, %v8883
  %v8902 = vpack.c.bf16 %v8886, %v8885
  %v8903 = vpack.c.bf16 %v8888, %v8887
  %v8904 = vpack.c.bf16 %v8890, %v8889
  %v8905 = vpack.c.bf16 %v8892, %v8891
  %v8906 = vld [vmem:[%s10] sm:$0xf]
  %v8907 = vld [vmem:[%s10 + $0x4] sm:$0xf]
  %v8908 = vld [vmem:[%s10 + $0x8] sm:$0xf]
  %v8909 = vld [vmem:[%s10 + $0xc] sm:$0xf]
  %v8910 = vld [vmem:[%s10 + $0x10] sm:$0xf]
  %v8911 = vld [vmem:[%s10 + $0x14] sm:$0xf]
  %v8912 = vld [vmem:[%s10 + $0x18] sm:$0xf]
  %v8913 = vld [vmem:[%s10 + $0x1c] sm:$0xf]
  %s8914 = scalar_lea.vmem %s10, 32
  %v8915 = vld [vmem:[%s8914] sm:$0xf]
  %v8916 = vld [vmem:[%s8914 + $0x4] sm:$0xf]
  %v8917 = vld [vmem:[%s8914 + $0x8] sm:$0xf]
  %v8918 = vld [vmem:[%s8914 + $0xc] sm:$0xf]
  %v8919 = vld [vmem:[%s8914 + $0x10] sm:$0xf]
  %v8920 = vld [vmem:[%s8914 + $0x14] sm:$0xf]
  %v8921 = vld [vmem:[%s8914 + $0x18] sm:$0xf]
  %v8922 = vld [vmem:[%s8914 + $0x1c] sm:$0xf]
  %v8931 = vunpack.c.l.b16 %v8915
  %v8932 = vunpack.c.l.b16 %v8916
  %v8933 = vunpack.c.l.b16 %v8917
  %v8934 = vunpack.c.l.b16 %v8918
  %v8935 = vunpack.c.l.b16 %v8919
  %v8936 = vunpack.c.l.b16 %v8920
  %v8937 = vunpack.c.l.b16 %v8921
  %v8938 = vunpack.c.l.b16 %v8922
  %v8939 = vpack.c.b16 %v8932, %v8931
  %v8940 = vpack.c.b16 %v8934, %v8933
  %v8941 = vpack.c.b16 %v8936, %v8935
  %v8942 = vpack.c.b16 %v8938, %v8937
  %vm8947 = vcmask 523264
  %v8949 = vsel %vm8947, %v8894, 0
  %v8952 = vsel %vm8947, %v8895, 0
  %v8955 = vsel %vm8947, %v8896, 0
  %v8958 = vsel %vm8947, %v8897, 0
  %v8961 = vsel %vm8947, %v8898, 0
  %v8964 = vsel %vm8947, %v8899, 0
  %v8967 = vsel %vm8947, %v8900, 0
  %v8970 = vsel %vm8947, %v8901, 0
  %v8973 = vsel %vm8947, %v8902, 0
  %v8976 = vsel %vm8947, %v8903, 0
  %v8979 = vsel %vm8947, %v8904, 0
  %8981 = vmatprep.subr.bf16.mxu0 0
  %8982 = vmatpush1.bf16.msra.mxu0 %v8939
  %8983 = vmatprep.subr.bf16.mxu0 0
  %8984 = vmatpush1.bf16.msra.mxu0 %v8940
  %8985 = vmatprep.subr.bf16.mxu0 0
  %8986 = vmatpush1.bf16.msra.mxu0 %v8941
  %8987 = vmatprep.subr.bf16.mxu0 0
  %8988 = vmatpush1.bf16.msra.mxu0 %v8942
  %8989 = vmatprep.subr.bf16.mxu0 0
  %8990 = vmatpush1.bf16.msra.mxu0 0
  %8991 = vmatprep.subr.bf16.mxu0 0
  %8992 = vmatpush1.bf16.msra.mxu0 0
  %8993 = vmatprep.subr.bf16.mxu0 0
  %8994 = vmatpush1.bf16.msra.mxu0 0
  %8995 = vmatprep.subr.bf16.mxu0 0
  %8996 = vmatpush1.bf16.msra.mxu0 0
  %8997 = vmatprep.subr.bf16.mxu0 0
  %8998 = vmatpush1.bf16.msra.mxu0 0
  %8999 = vmatprep.subr.bf16.mxu0 0
  %9000 = vmatpush1.bf16.msra.mxu0 0
  %9001 = vmatprep.subr.bf16.mxu0 0
  %9002 = vmatpush1.bf16.msra.mxu0 0
  %9003 = vmatprep.subr.bf16.mxu0 0
  %9004 = vmatpush1.bf16.msra.mxu0 0
  %9005 = vmatprep.subr.bf16.mxu0 0
  %9006 = vmatpush1.bf16.msra.mxu0 0
  %9007 = vmatprep.subr.bf16.mxu0 0
  %9008 = vmatpush1.bf16.msra.mxu0 0
  %9009 = vmatprep.subr.bf16.mxu0 0
  %9010 = vmatpush1.bf16.msra.mxu0 0
  %9011 = vmatprep.subr.bf16.mxu0 0
  %9012 = vmatpush1.bf16.msra.mxu0 0
  %9013 = vmatprep.mubr.bf16.mxu0 0
  %9014 = vmatmul.mubr.bf16.gmra.mrb[0].mxu0 %v8949
  %v9015 = vpop.f32.mrb[0].mxu0
  %v9016 = vadd.f32 0.0, %v9015
  %v9017 = vpop.f32.mrb[0].mxu0
  %v9018 = vpop.f32.mrb[0].mxu0
  %v9019 = vadd.f32 0.0, %v9018
  %v9020 = vpop.f32.mrb[0].mxu0
  %9021 = vmatprep.mubr.bf16.mxu0 0
  %9022 = vmatmul.mubr.bf16.gmra.mrb[0].mxu0 %v8952
  %v9023 = vpop.f32.mrb[0].mxu0
  %v9024 = vadd.f32 0.0, %v9023
  %v9025 = vpop.f32.mrb[0].mxu0
  %v9026 = vpop.f32.mrb[0].mxu0
  %v9027 = vadd.f32 0.0, %v9026
  %v9028 = vpop.f32.mrb[0].mxu0
  %9029 = vmatprep.mubr.bf16.mxu0 0
  %9030 = vmatmul.mubr.bf16.gmra.mrb[0].mxu0 %v8955
  %v9031 = vpop.f32.mrb[0].mxu0
  %v9032 = vadd.f32 0.0, %v9031
  %v9033 = vpop.f32.mrb[0].mxu0
  %v9034 = vpop.f32.mrb[0].mxu0
  %v9035 = vadd.f32 0.0, %v9034
  %v9036 = vpop.f32.mrb[0].mxu0
  %9037 = vmatprep.mubr.bf16.mxu0 0
  %9038 = vmatmul.mubr.bf16.gmra.mrb[0].mxu0 %v8958
  %v9039 = vpop.f32.mrb[0].mxu0
  %v9040 = vadd.f32 0.0, %v9039
  %v9041 = vpop.f32.mrb[0].mxu0
  %v9042 = vpop.f32.mrb[0].mxu0
  %v9043 = vadd.f32 0.0, %v9042
  %v9044 = vpop.f32.mrb[0].mxu0
  %9045 = vmatprep.mubr.bf16.mxu0 0
  %9046 = vmatmul.mubr.bf16.gmra.mrb[0].mxu0 %v8961
  %v9047 = vpop.f32.mrb[0].mxu0
  %v9048 = vadd.f32 0.0, %v9047
  %v9049 = vpop.f32.mrb[0].mxu0
  %v9050 = vpop.f32.mrb[0].mxu0
  %v9051 = vadd.f32 0.0, %v9050
  %v9052 = vpop.f32.mrb[0].mxu0
  %9053 = vmatprep.mubr.bf16.mxu0 0
  %9054 = vmatmul.mubr.bf16.gmra.mrb[0].mxu0 %v8964
  %v9055 = vpop.f32.mrb[0].mxu0
  %v9056 = vadd.f32 0.0, %v9055
  %v9057 = vpop.f32.mrb[0].mxu0
  %v9058 = vpop.f32.mrb[0].mxu0
  %v9059 = vadd.f32 0.0, %v9058
  %v9060 = vpop.f32.mrb[0].mxu0
  %9061 = vmatprep.mubr.bf16.mxu0 0
  %9062 = vmatmul.mubr.bf16.gmra.mrb[0].mxu0 %v8967
  %v9063 = vpop.f32.mrb[0].mxu0
  %v9064 = vadd.f32 0.0, %v9063
  %v9065 = vpop.f32.mrb[0].mxu0
  %v9066 = vpop.f32.mrb[0].mxu0
  %v9067 = vadd.f32 0.0, %v9066
  %v9068 = vpop.f32.mrb[0].mxu0
  %9069 = vmatprep.mubr.bf16.mxu0 0
  %9070 = vmatmul.mubr.bf16.gmra.mrb[0].mxu0 %v8970
  %v9071 = vpop.f32.mrb[0].mxu0
  %v9072 = vadd.f32 0.0, %v9071
  %v9073 = vpop.f32.mrb[0].mxu0
  %v9074 = vpop.f32.mrb[0].mxu0
  %v9075 = vadd.f32 0.0, %v9074
  %v9076 = vpop.f32.mrb[0].mxu0
  %9077 = vmatprep.mubr.bf16.mxu0 0
  %9078 = vmatmul.mubr.bf16.gmra.mrb[0].mxu0 %v8973
  %v9079 = vpop.f32.mrb[0].mxu0
  %v9080 = vadd.f32 0.0, %v9079
  %v9081 = vpop.f32.mrb[0].mxu0
  %v9082 = vpop.f32.mrb[0].mxu0
  %v9083 = vadd.f32 0.0, %v9082
  %v9084 = vpop.f32.mrb[0].mxu0
  %9085 = vmatprep.mubr.bf16.mxu0 0
  %9086 = vmatmul.mubr.bf16.gmra.mrb[0].mxu0 %v8976
  %v9087 = vpop.f32.mrb[0].mxu0
  %v9088 = vadd.f32 0.0, %v9087
  %v9089 = vpop.f32.mrb[0].mxu0
  %v9090 = vpop.f32.mrb[0].mxu0
  %v9091 = vadd.f32 0.0, %v9090
  %v9092 = vpop.f32.mrb[0].mxu0
  %9093 = vmatprep.mubr.bf16.mxu0 0
  %9094 = vmatmul.mubr.bf16.gmra.mrb[0].mxu0 %v8979
  %v9095 = vpop.f32.mrb[0].mxu0
  %v9096 = vpop.f32.mrb[0].mxu0
  %v9097 = vpop.f32.mrb[0].mxu0
  %v9098 = vpop.f32.mrb[0].mxu0
  %9099 = vdwg.mxu0
  %v9108 = vunpack.c.l.b16 %v8906
  %v9109 = vunpack.c.l.b16 %v8907
  %v9110 = vunpack.c.l.b16 %v8908
  %v9111 = vunpack.c.l.b16 %v8909
  %v9112 = vunpack.c.l.b16 %v8910
  %v9113 = vunpack.c.l.b16 %v8911
  %v9114 = vunpack.c.l.b16 %v8912
  %v9115 = vunpack.c.l.b16 %v8913
  %v9116 = vpack.c.b16 %v9109, %v9108
  %v9117 = vpack.c.b16 %v9111, %v9110
  %v9118 = vpack.c.b16 %v9113, %v9112
  %v9119 = vpack.c.b16 %v9115, %v9114
  %v9125 = vsel %vm8947, %v8893, 0
  %9127 = vmatprep.subr.bf16.mxu0 0
  %9128 = vmatpush1.bf16.msra.mxu0 %v9116
  %9129 = vmatprep.subr.bf16.mxu0 0
  %9130 = vmatpush1.bf16.msra.mxu0 %v9117
  %9131 = vmatprep.subr.bf16.mxu0 0
  %9132 = vmatpush1.bf16.msra.mxu0 %v9118
  %9133 = vmatprep.subr.bf16.mxu0 0
  %9134 = vmatpush1.bf16.msra.mxu0 %v9119
  %9135 = vmatprep.subr.bf16.mxu0 0
  %9136 = vmatpush1.bf16.msra.mxu0 0
  %9137 = vmatprep.subr.bf16.mxu0 0
  %9138 = vmatpush1.bf16.msra.mxu0 0
  %9139 = vmatprep.subr.bf16.mxu0 0
  %9140 = vmatpush1.bf16.msra.mxu0 0
  %9141 = vmatprep.subr.bf16.mxu0 0
  %9142 = vmatpush1.bf16.msra.mxu0 0
  %9143 = vmatprep.subr.bf16.mxu0 0
  %9144 = vmatpush1.bf16.msra.mxu0 0
  %9145 = vmatprep.subr.bf16.mxu0 0
  %9146 = vmatpush1.bf16.msra.mxu0 0
  %9147 = vmatprep.subr.bf16.mxu0 0
  %9148 = vmatpush1.bf16.msra.mxu0 0
  %9149 = vmatprep.subr.bf16.mxu0 0
  %9150 = vmatpush1.bf16.msra.mxu0 0
  %9151 = vmatprep.subr.bf16.mxu0 0
  %9152 = vmatpush1.bf16.msra.mxu0 0
  %9153 = vmatprep.subr.bf16.mxu0 0
  %9154 = vmatpush1.bf16.msra.mxu0 0
  %9155 = vmatprep.subr.bf16.mxu0 0
  %9156 = vmatpush1.bf16.msra.mxu0 0
  %9157 = vmatprep.subr.bf16.mxu0 0
  %9158 = vmatpush1.bf16.msra.mxu0 0
  %9159 = vmatprep.mubr.bf16.mxu0 0
  %9160 = vmatmul.mubr.bf16.gmra.mrb[0].mxu0 %v9125
  %v9161 = vpop.f32.mrb[0].mxu0
  %v9162 = vadd.f32 %v9016, %v9161
  %v9163 = vpop.f32.mrb[0].mxu0
  %v9164 = vpop.f32.mrb[0].mxu0
  %v9165 = vadd.f32 %v9019, %v9164
  %v9166 = vpop.f32.mrb[0].mxu0
  %9167 = vmatprep.mubr.bf16.mxu0 0
  %9168 = vmatmul.mubr.bf16.gmra.mrb[0].mxu0 %v8949
  %v9169 = vpop.f32.mrb[0].mxu0
  %v9170 = vadd.f32 %v9024, %v9169
  %v9171 = vpop.f32.mrb[0].mxu0
  %v9172 = vpop.f32.mrb[0].mxu0
  %v9173 = vadd.f32 %v9027, %v9172
  %v9174 = vpop.f32.mrb[0].mxu0
  %9175 = vmatprep.mubr.bf16.mxu0 0
  %9176 = vmatmul.mubr.bf16.gmra.mrb[0].mxu0 %v8952
  %v9177 = vpop.f32.mrb[0].mxu0
  %v9178 = vadd.f32 %v9032, %v9177
  %v9179 = vpop.f32.mrb[0].mxu0
  %v9180 = vpop.f32.mrb[0].mxu0
  %v9181 = vadd.f32 %v9035, %v9180
  %v9182 = vpop.f32.mrb[0].mxu0
  %9183 = vmatprep.mubr.bf16.mxu0 0
  %9184 = vmatmul.mubr.bf16.gmra.mrb[0].mxu0 %v8955
  %v9185 = vpop.f32.mrb[0].mxu0
  %v9186 = vadd.f32 %v9040, %v9185
  %v9187 = vpop.f32.mrb[0].mxu0
  %v9188 = vpop.f32.mrb[0].mxu0
  %v9189 = vadd.f32 %v9043, %v9188
  %v9190 = vpop.f32.mrb[0].mxu0
  %9191 = vmatprep.mubr.bf16.mxu0 0
  %9192 = vmatmul.mubr.bf16.gmra.mrb[0].mxu0 %v8958
  %v9193 = vpop.f32.mrb[0].mxu0
  %v9194 = vadd.f32 %v9048, %v9193
  %v9195 = vpop.f32.mrb[0].mxu0
  %v9196 = vpop.f32.mrb[0].mxu0
  %v9197 = vadd.f32 %v9051, %v9196
  %v9198 = vpop.f32.mrb[0].mxu0
  %9199 = vmatprep.mubr.bf16.mxu0 0
  %9200 = vmatmul.mubr.bf16.gmra.mrb[0].mxu0 %v8961
  %v9201 = vpop.f32.mrb[0].mxu0
  %v9202 = vadd.f32 %v9056, %v9201
  %v9203 = vpop.f32.mrb[0].mxu0
  %v9204 = vpop.f32.mrb[0].mxu0
  %v9205 = vadd.f32 %v9059, %v9204
  %v9206 = vpop.f32.mrb[0].mxu0
  %9207 = vmatprep.mubr.bf16.mxu0 0
  %9208 = vmatmul.mubr.bf16.gmra.mrb[0].mxu0 %v8964
  %v9209 = vpop.f32.mrb[0].mxu0
  %v9210 = vadd.f32 %v9064, %v9209
  %v9211 = vpop.f32.mrb[0].mxu0
  %v9212 = vpop.f32.mrb[0].mxu0
  %v9213 = vadd.f32 %v9067, %v9212
  %v9214 = vpop.f32.mrb[0].mxu0
  %9215 = vmatprep.mubr.bf16.mxu0 0
  %9216 = vmatmul.mubr.bf16.gmra.mrb[0].mxu0 %v8967
  %v9217 = vpop.f32.mrb[0].mxu0
  %v9218 = vadd.f32 %v9072, %v9217
  %v9219 = vpop.f32.mrb[0].mxu0
  %v9220 = vpop.f32.mrb[0].mxu0
  %v9221 = vadd.f32 %v9075, %v9220
  %v9222 = vpop.f32.mrb[0].mxu0
  %9223 = vmatprep.mubr.bf16.mxu0 0
  %9224 = vmatmul.mubr.bf16.gmra.mrb[0].mxu0 %v8970
  %v9225 = vpop.f32.mrb[0].mxu0
  %v9226 = vadd.f32 %v9080, %v9225
  %v9227 = vpop.f32.mrb[0].mxu0
  %v9228 = vpop.f32.mrb[0].mxu0
  %v9229 = vadd.f32 %v9083, %v9228
  %v9230 = vpop.f32.mrb[0].mxu0
  %9231 = vmatprep.mubr.bf16.mxu0 0
  %9232 = vmatmul.mubr.bf16.gmra.mrb[0].mxu0 %v8973
  %v9233 = vpop.f32.mrb[0].mxu0
  %v9234 = vadd.f32 %v9088, %v9233
  %v9235 = vpop.f32.mrb[0].mxu0
  %v9236 = vpop.f32.mrb[0].mxu0
  %v9237 = vadd.f32 %v9091, %v9236
  %v9238 = vpop.f32.mrb[0].mxu0
  %9239 = vmatprep.mubr.bf16.mxu0 0
  %9240 = vmatmul.mubr.bf16.gmra.mrb[0].mxu0 %v8976
  %v9241 = vpop.f32.mrb[0].mxu0
  %v9242 = vpop.f32.mrb[0].mxu0
  %v9243 = vpop.f32.mrb[0].mxu0
  %v9244 = vpop.f32.mrb[0].mxu0
  %9245 = vdwg.mxu0
  %s9246 = scalar_lea.vmem %s10, 64
  %v9247 = vld [vmem:[%s9246] sm:$0xf]
  %v9248 = vld [vmem:[%s9246 + $0x4] sm:$0xf]
  %v9249 = vld [vmem:[%s9246 + $0x8] sm:$0xf]
  %v9250 = vld [vmem:[%s9246 + $0xc] sm:$0xf]
  %v9251 = vld [vmem:[%s9246 + $0x10] sm:$0xf]
  %v9252 = vld [vmem:[%s9246 + $0x14] sm:$0xf]
  %v9253 = vld [vmem:[%s9246 + $0x18] sm:$0xf]
  %v9254 = vld [vmem:[%s9246 + $0x1c] sm:$0xf]
  %v9263 = vunpack.c.l.b16 %v9247
  %v9264 = vunpack.c.l.b16 %v9248
  %v9265 = vunpack.c.l.b16 %v9249
  %v9266 = vunpack.c.l.b16 %v9250
  %v9267 = vunpack.c.l.b16 %v9251
  %v9268 = vunpack.c.l.b16 %v9252
  %v9269 = vunpack.c.l.b16 %v9253
  %v9270 = vunpack.c.l.b16 %v9254
  %v9271 = vpack.c.b16 %v9264, %v9263
  %v9272 = vpack.c.b16 %v9266, %v9265
  %v9273 = vpack.c.b16 %v9268, %v9267
  %v9274 = vpack.c.b16 %v9270, %v9269
  %v9280 = vsel %vm8947, %v8905, 0
  %9282 = vmatprep.subr.bf16.mxu0 0
  %9283 = vmatpush1.bf16.msra.mxu0 %v9271
  %9284 = vmatprep.subr.bf16.mxu0 0
  %9285 = vmatpush1.bf16.msra.mxu0 %v9272
  %9286 = vmatprep.subr.bf16.mxu0 0
  %9287 = vmatpush1.bf16.msra.mxu0 %v9273
  %9288 = vmatprep.subr.bf16.mxu0 0
  %9289 = vmatpush1.bf16.msra.mxu0 %v9274
  %9290 = vmatprep.subr.bf16.mxu0 0
  %9291 = vmatpush1.bf16.msra.mxu0 0
  %9292 = vmatprep.subr.bf16.mxu0 0
  %9293 = vmatpush1.bf16.msra.mxu0 0
  %9294 = vmatprep.subr.bf16.mxu0 0
  %9295 = vmatpush1.bf16.msra.mxu0 0
  %9296 = vmatprep.subr.bf16.mxu0 0
  %9297 = vmatpush1.bf16.msra.mxu0 0
  %9298 = vmatprep.subr.bf16.mxu0 0
  %9299 = vmatpush1.bf16.msra.mxu0 0
  %9300 = vmatprep.subr.bf16.mxu0 0
  %9301 = vmatpush1.bf16.msra.mxu0 0
  %9302 = vmatprep.subr.bf16.mxu0 0
  %9303 = vmatpush1.bf16.msra.mxu0 0
  %9304 = vmatprep.subr.bf16.mxu0 0
  %9305 = vmatpush1.bf16.msra.mxu0 0
  %9306 = vmatprep.subr.bf16.mxu0 0
  %9307 = vmatpush1.bf16.msra.mxu0 0
  %9308 = vmatprep.subr.bf16.mxu0 0
  %9309 = vmatpush1.bf16.msra.mxu0 0
  %9310 = vmatprep.subr.bf16.mxu0 0
  %9311 = vmatpush1.bf16.msra.mxu0 0
  %9312 = vmatprep.subr.bf16.mxu0 0
  %9313 = vmatpush1.bf16.msra.mxu0 0
  %9314 = vmatprep.mubr.bf16.mxu0 0
  %9315 = vmatmul.mubr.bf16.gmra.mrb[0].mxu0 %v8952
  %v9316 = vpop.f32.mrb[0].mxu0
  %v9317 = vadd.f32 0.0, %v9316
  %v9318 = vpop.f32.mrb[0].mxu0
  %v9319 = vpop.f32.mrb[0].mxu0
  %v9320 = vadd.f32 0.0, %v9319
  %v9321 = vpop.f32.mrb[0].mxu0
  %9322 = vmatprep.mubr.bf16.mxu0 0
  %9323 = vmatmul.mubr.bf16.gmra.mrb[0].mxu0 %v8955
  %v9324 = vpop.f32.mrb[0].mxu0
  %v9325 = vadd.f32 0.0, %v9324
  %v9326 = vpop.f32.mrb[0].mxu0
  %v9327 = vpop.f32.mrb[0].mxu0
  %v9328 = vadd.f32 0.0, %v9327
  %v9329 = vpop.f32.mrb[0].mxu0
  %9330 = vmatprep.mubr.bf16.mxu0 0
  %9331 = vmatmul.mubr.bf16.gmra.mrb[0].mxu0 %v8958
  %v9332 = vpop.f32.mrb[0].mxu0
  %v9333 = vadd.f32 0.0, %v9332
  %v9334 = vpop.f32.mrb[0].mxu0
  %v9335 = vpop.f32.mrb[0].mxu0
  %v9336 = vadd.f32 0.0, %v9335
  %v9337 = vpop.f32.mrb[0].mxu0
  %9338 = vmatprep.mubr.bf16.mxu0 0
  %9339 = vmatmul.mubr.bf16.gmra.mrb[0].mxu0 %v8961
  %v9340 = vpop.f32.mrb[0].mxu0
  %v9341 = vadd.f32 0.0, %v9340
  %v9342 = vpop.f32.mrb[0].mxu0
  %v9343 = vpop.f32.mrb[0].mxu0
  %v9344 = vadd.f32 0.0, %v9343
  %v9345 = vpop.f32.mrb[0].mxu0
  %9346 = vmatprep.mubr.bf16.mxu0 0
  %9347 = vmatmul.mubr.bf16.gmra.mrb[0].mxu0 %v8964
  %v9348 = vpop.f32.mrb[0].mxu0
  %v9349 = vadd.f32 0.0, %v9348
  %v9350 = vpop.f32.mrb[0].mxu0
  %v9351 = vpop.f32.mrb[0].mxu0
  %v9352 = vadd.f32 0.0, %v9351
  %v9353 = vpop.f32.mrb[0].mxu0
  %9354 = vmatprep.mubr.bf16.mxu0 0
  %9355 = vmatmul.mubr.bf16.gmra.mrb[0].mxu0 %v8967
  %v9356 = vpop.f32.mrb[0].mxu0
  %v9357 = vadd.f32 0.0, %v9356
  %v9358 = vpop.f32.mrb[0].mxu0
  %v9359 = vpop.f32.mrb[0].mxu0
  %v9360 = vadd.f32 0.0, %v9359
  %v9361 = vpop.f32.mrb[0].mxu0
  %9362 = vmatprep.mubr.bf16.mxu0 0
  %9363 = vmatmul.mubr.bf16.gmra.mrb[0].mxu0 %v8970
  %v9364 = vpop.f32.mrb[0].mxu0
  %v9365 = vadd.f32 0.0, %v9364
  %v9366 = vpop.f32.mrb[0].mxu0
  %v9367 = vpop.f32.mrb[0].mxu0
  %v9368 = vadd.f32 0.0, %v9367
  %v9369 = vpop.f32.mrb[0].mxu0
  %9370 = vmatprep.mubr.bf16.mxu0 0
  %9371 = vmatmul.mubr.bf16.gmra.mrb[0].mxu0 %v8973
  %v9372 = vpop.f32.mrb[0].mxu0
  %v9373 = vadd.f32 0.0, %v9372
  %v9374 = vpop.f32.mrb[0].mxu0
  %v9375 = vpop.f32.mrb[0].mxu0
  %v9376 = vadd.f32 0.0, %v9375
  %v9377 = vpop.f32.mrb[0].mxu0
  %9378 = vmatprep.mubr.bf16.mxu0 0
  %9379 = vmatmul.mubr.bf16.gmra.mrb[0].mxu0 %v8976
  %v9380 = vpop.f32.mrb[0].mxu0
  %v9381 = vadd.f32 0.0, %v9380
  %v9382 = vpop.f32.mrb[0].mxu0
  %v9383 = vpop.f32.mrb[0].mxu0
  %v9384 = vadd.f32 0.0, %v9383
  %v9385 = vpop.f32.mrb[0].mxu0
  %9386 = vmatprep.mubr.bf16.mxu0 0
  %9387 = vmatmul.mubr.bf16.gmra.mrb[0].mxu0 %v8979
  %v9388 = vpop.f32.mrb[0].mxu0
  %v9389 = vadd.f32 0.0, %v9388
  %v9390 = vpop.f32.mrb[0].mxu0
  %v9391 = vpop.f32.mrb[0].mxu0
  %v9392 = vadd.f32 0.0, %v9391
  %v9393 = vpop.f32.mrb[0].mxu0
  %9394 = vmatprep.mubr.bf16.mxu0 0
  %9395 = vmatmul.mubr.bf16.gmra.mrb[0].mxu0 %v9280
  %v9396 = vpop.f32.mrb[0].mxu0
  %v9397 = vpop.f32.mrb[0].mxu0
  %v9398 = vpop.f32.mrb[0].mxu0
  %v9399 = vpop.f32.mrb[0].mxu0
  %9400 = vdwg.mxu0
  %v9401 = vadd.f32 %v9162, %v9317
  %v9402 = vadd.f32 %v9165, %v9320
  %v9403 = vadd.f32 %v9170, %v9325
  %v9404 = vadd.f32 %v9173, %v9328
  %v9405 = vadd.f32 %v9178, %v9333
  %v9406 = vadd.f32 %v9181, %v9336
  %v9407 = vadd.f32 %v9186, %v9341
  %v9408 = vadd.f32 %v9189, %v9344
  %v9409 = vadd.f32 %v9194, %v9349
  %v9410 = vadd.f32 %v9197, %v9352
  %v9411 = vadd.f32 %v9202, %v9357
  %v9412 = vadd.f32 %v9205, %v9360
  %v9413 = vadd.f32 %v9210, %v9365
  %v9414 = vadd.f32 %v9213, %v9368
  %v9415 = vadd.f32 %v9218, %v9373
  %v9416 = vadd.f32 %v9221, %v9376
  %v9417 = vadd.f32 %v9226, %v9381
  %v9418 = vadd.f32 %v9229, %v9384
  %v9419 = vadd.f32 %v9234, %v9389
  %v9420 = vadd.f32 %v9237, %v9392
  %v9421 = vld [vmem:[%s11] sm:$0x1]
  %v9423 = vlaneseq
  %v9424 = vshrl.u32 %v9423, 7
  %v9425 = vsub.s32 0, %v9424
  %v9426 = vrot.slane %v9421, %v9425
  %v9428 = vmul.f32 %v9401, %v9426
  %v9429 = vmul.f32 %v9402, %v9426
  %v9430 = vmul.f32 %v9403, %v9426
  %v9431 = vmul.f32 %v9404, %v9426
  %v9432 = vmul.f32 %v9405, %v9426
  %v9433 = vmul.f32 %v9406, %v9426
  %v9434 = vmul.f32 %v9407, %v9426
  %v9435 = vmul.f32 %v9408, %v9426
  %v9436 = vmul.f32 %v9409, %v9426
  %v9437 = vmul.f32 %v9410, %v9426
  %v9438 = vmul.f32 %v9411, %v9426
  %v9439 = vmul.f32 %v9412, %v9426
  %v9440 = vmul.f32 %v9413, %v9426
  %v9441 = vmul.f32 %v9414, %v9426
  %v9442 = vmul.f32 %v9415, %v9426
  %v9443 = vmul.f32 %v9416, %v9426
  %v9444 = vmul.f32 %v9417, %v9426
  %v9445 = vmul.f32 %v9418, %v9426
  %v9446 = vmul.f32 %v9419, %v9426
  %v9447 = vmul.f32 %v9420, %v9426
  %v9448 = vld [vmem:[%s12] sm:$0x1]
  %v9450 = vlaneseq
  %v9451 = vshrl.u32 %v9450, 7
  %v9452 = vsub.s32 0, %v9451
  %v9453 = vrot.slane %v9448, %v9452
  %v9455 = vadd.f32 %v9428, %v9453
  %v9456 = vadd.f32 %v9429, %v9453
  %v9457 = vadd.f32 %v9430, %v9453
  %v9458 = vadd.f32 %v9431, %v9453
  %v9459 = vadd.f32 %v9432, %v9453
  %v9460 = vadd.f32 %v9433, %v9453
  %v9461 = vadd.f32 %v9434, %v9453
  %v9462 = vadd.f32 %v9435, %v9453
  %v9463 = vadd.f32 %v9436, %v9453
  %v9464 = vadd.f32 %v9437, %v9453
  %v9465 = vadd.f32 %v9438, %v9453
  %v9466 = vadd.f32 %v9439, %v9453
  %v9467 = vadd.f32 %v9440, %v9453
  %v9468 = vadd.f32 %v9441, %v9453
  %v9469 = vadd.f32 %v9442, %v9453
  %v9470 = vadd.f32 %v9443, %v9453
  %v9471 = vadd.f32 %v9444, %v9453
  %v9472 = vadd.f32 %v9445, %v9453
  %v9473 = vadd.f32 %v9446, %v9453
  %v9474 = vadd.f32 %v9447, %v9453
  %v9475 = vmax.f32 %v9455, 0.0
  %v9476 = vmax.f32 %v9456, 0.0
  %v9477 = vmax.f32 %v9457, 0.0
  %v9478 = vmax.f32 %v9458, 0.0
  %v9479 = vmax.f32 %v9459, 0.0
  %v9480 = vmax.f32 %v9460, 0.0
  %v9481 = vmax.f32 %v9461, 0.0
  %v9482 = vmax.f32 %v9462, 0.0
  %v9483 = vmax.f32 %v9463, 0.0
  %v9484 = vmax.f32 %v9464, 0.0
  %v9485 = vmax.f32 %v9465, 0.0
  %v9486 = vmax.f32 %v9466, 0.0
  %v9487 = vmax.f32 %v9467, 0.0
  %v9488 = vmax.f32 %v9468, 0.0
  %v9489 = vmax.f32 %v9469, 0.0
  %v9490 = vmax.f32 %v9470, 0.0
  %v9491 = vmax.f32 %v9471, 0.0
  %v9492 = vmax.f32 %v9472, 0.0
  %v9493 = vmax.f32 %v9473, 0.0
  %v9494 = vmax.f32 %v9474, 0.0
  %v9495 = vmax.f32 %v9475, %v9477
  %v9496 = vmax.f32 %v9476, %v9478
  %v9497 = vmax.f32 %v9479, %v9481
  %v9498 = vmax.f32 %v9480, %v9482
  %v9499 = vmax.f32 %v9483, %v9485
  %v9500 = vmax.f32 %v9484, %v9486
  %v9501 = vmax.f32 %v9487, %v9489
  %v9502 = vmax.f32 %v9488, %v9490
  %v9503 = vmax.f32 %v9491, %v9493
  %v9504 = vmax.f32 %v9492, %v9494
  %v9505 = vpack.c.bf16 %v9496, %v9495
  %v9506 = vpack.c.bf16 %v9498, %v9497
  %v9507 = vpack.c.bf16 %v9500, %v9499
  %v9508 = vpack.c.bf16 %v9502, %v9501
  %v9509 = vpack.c.bf16 %v9504, %v9503
  %v9510 = vld [vmem:[%s13] sm:$0xf]
  %v9511 = vld [vmem:[%s13 + $0x4] sm:$0xf]
  %v9512 = vld [vmem:[%s13 + $0x8] sm:$0xf]
  %v9513 = vld [vmem:[%s13 + $0xc] sm:$0xf]
  %v9514 = vld [vmem:[%s13 + $0x10] sm:$0xf]
  %v9515 = vld [vmem:[%s13 + $0x14] sm:$0xf]
  %v9516 = vld [vmem:[%s13 + $0x18] sm:$0xf]
  %v9517 = vld [vmem:[%s13 + $0x1c] sm:$0xf]
  %s9518 = scalar_lea.vmem %s13, 32
  %v9519 = vld [vmem:[%s9518] sm:$0xf]
  %v9520 = vld [vmem:[%s9518 + $0x4] sm:$0xf]
  %v9521 = vld [vmem:[%s9518 + $0x8] sm:$0xf]
  %v9522 = vld [vmem:[%s9518 + $0xc] sm:$0xf]
  %v9523 = vld [vmem:[%s9518 + $0x10] sm:$0xf]
  %v9524 = vld [vmem:[%s9518 + $0x14] sm:$0xf]
  %v9525 = vld [vmem:[%s9518 + $0x18] sm:$0xf]
  %v9526 = vld [vmem:[%s9518 + $0x1c] sm:$0xf]
  %v9535 = vunpack.c.l.b16 %v9519
  %v9536 = vunpack.c.l.b16 %v9520
  %v9537 = vunpack.c.l.b16 %v9521
  %v9538 = vunpack.c.l.b16 %v9522
  %v9539 = vunpack.c.l.b16 %v9523
  %v9540 = vunpack.c.l.b16 %v9524
  %v9541 = vunpack.c.l.b16 %v9525
  %v9542 = vunpack.c.l.b16 %v9526
  %v9543 = vpack.c.b16 %v9536, %v9535
  %v9544 = vpack.c.b16 %v9538, %v9537
  %v9545 = vpack.c.b16 %v9540, %v9539
  %v9546 = vpack.c.b16 %v9542, %v9541
  %v9552 = vsel %vm8947, %v9506, 0
  %v9555 = vsel %vm8947, %v9507, 0
  %v9558 = vsel %vm8947, %v9508, 0
  %9560 = vmatprep.subr.bf16.mxu0 0
  %9561 = vmatpush1.bf16.msra.mxu0 %v9543
  %9562 = vmatprep.subr.bf16.mxu0 0
  %9563 = vmatpush1.bf16.msra.mxu0 %v9544
  %9564 = vmatprep.subr.bf16.mxu0 0
  %9565 = vmatpush1.bf16.msra.mxu0 %v9545
  %9566 = vmatprep.subr.bf16.mxu0 0
  %9567 = vmatpush1.bf16.msra.mxu0 %v9546
  %9568 = vmatprep.subr.bf16.mxu0 0
  %9569 = vmatpush1.bf16.msra.mxu0 0
  %9570 = vmatprep.subr.bf16.mxu0 0
  %9571 = vmatpush1.bf16.msra.mxu0 0
  %9572 = vmatprep.subr.bf16.mxu0 0
  %9573 = vmatpush1.bf16.msra.mxu0 0
  %9574 = vmatprep.subr.bf16.mxu0 0
  %9575 = vmatpush1.bf16.msra.mxu0 0
  %9576 = vmatprep.subr.bf16.mxu0 0
  %9577 = vmatpush1.bf16.msra.mxu0 0
  %9578 = vmatprep.subr.bf16.mxu0 0
  %9579 = vmatpush1.bf16.msra.mxu0 0
  %9580 = vmatprep.subr.bf16.mxu0 0
  %9581 = vmatpush1.bf16.msra.mxu0 0
  %9582 = vmatprep.subr.bf16.mxu0 0
  %9583 = vmatpush1.bf16.msra.mxu0 0
  %9584 = vmatprep.subr.bf16.mxu0 0
  %9585 = vmatpush1.bf16.msra.mxu0 0
  %9586 = vmatprep.subr.bf16.mxu0 0
  %9587 = vmatpush1.bf16.msra.mxu0 0
  %9588 = vmatprep.subr.bf16.mxu0 0
  %9589 = vmatpush1.bf16.msra.mxu0 0
  %9590 = vmatprep.subr.bf16.mxu0 0
  %9591 = vmatpush1.bf16.msra.mxu0 0
  %9592 = vmatprep.mubr.bf16.mxu0 0
  %9593 = vmatmul.mubr.bf16.gmra.mrb[0].mxu0 %v9552
  %v9594 = vpop.f32.mrb[0].mxu0
  %v9595 = vadd.f32 0.0, %v9594
  %v9596 = vpop.f32.mrb[0].mxu0
  %v9597 = vpop.f32.mrb[0].mxu0
  %v9598 = vadd.f32 0.0, %v9597
  %v9599 = vpop.f32.mrb[0].mxu0
  %9600 = vmatprep.mubr.bf16.mxu0 0
  %9601 = vmatmul.mubr.bf16.gmra.mrb[0].mxu0 %v9555
  %v9602 = vpop.f32.mrb[0].mxu0
  %v9603 = vadd.f32 0.0, %v9602
  %v9604 = vpop.f32.mrb[0].mxu0
  %v9605 = vpop.f32.mrb[0].mxu0
  %v9606 = vadd.f32 0.0, %v9605
  %v9607 = vpop.f32.mrb[0].mxu0
  %9608 = vmatprep.mubr.bf16.mxu0 0
  %9609 = vmatmul.mubr.bf16.gmra.mrb[0].mxu0 %v9558
  %v9610 = vpop.f32.mrb[0].mxu0
  %v9611 = vpop.f32.mrb[0].mxu0
  %v9612 = vpop.f32.mrb[0].mxu0
  %v9613 = vpop.f32.mrb[0].mxu0
  %9614 = vdwg.mxu0
  %v9623 = vunpack.c.l.b16 %v9510
  %v9624 = vunpack.c.l.b16 %v9511
  %v9625 = vunpack.c.l.b16 %v9512
  %v9626 = vunpack.c.l.b16 %v9513
  %v9627 = vunpack.c.l.b16 %v9514
  %v9628 = vunpack.c.l.b16 %v9515
  %v9629 = vunpack.c.l.b16 %v9516
  %v9630 = vunpack.c.l.b16 %v9517
  %v9631 = vpack.c.b16 %v9624, %v9623
  %v9632 = vpack.c.b16 %v9626, %v9625
  %v9633 = vpack.c.b16 %v9628, %v9627
  %v9634 = vpack.c.b16 %v9630, %v9629
  %v9640 = vsel %vm8947, %v9505, 0
  %9642 = vmatprep.subr.bf16.mxu0 0
  %9643 = vmatpush1.bf16.msra.mxu0 %v9631
  %9644 = vmatprep.subr.bf16.mxu0 0
  %9645 = vmatpush1.bf16.msra.mxu0 %v9632
  %9646 = vmatprep.subr.bf16.mxu0 0
  %9647 = vmatpush1.bf16.msra.mxu0 %v9633
  %9648 = vmatprep.subr.bf16.mxu0 0
  %9649 = vmatpush1.bf16.msra.mxu0 %v9634
  %9650 = vmatprep.subr.bf16.mxu0 0
  %9651 = vmatpush1.bf16.msra.mxu0 0
  %9652 = vmatprep.subr.bf16.mxu0 0
  %9653 = vmatpush1.bf16.msra.mxu0 0
  %9654 = vmatprep.subr.bf16.mxu0 0
  %9655 = vmatpush1.bf16.msra.mxu0 0
  %9656 = vmatprep.subr.bf16.mxu0 0
  %9657 = vmatpush1.bf16.msra.mxu0 0
  %9658 = vmatprep.subr.bf16.mxu0 0
  %9659 = vmatpush1.bf16.msra.mxu0 0
  %9660 = vmatprep.subr.bf16.mxu0 0
  %9661 = vmatpush1.bf16.msra.mxu0 0
  %9662 = vmatprep.subr.bf16.mxu0 0
  %9663 = vmatpush1.bf16.msra.mxu0 0
  %9664 = vmatprep.subr.bf16.mxu0 0
  %9665 = vmatpush1.bf16.msra.mxu0 0
  %9666 = vmatprep.subr.bf16.mxu0 0
  %9667 = vmatpush1.bf16.msra.mxu0 0
  %9668 = vmatprep.subr.bf16.mxu0 0
  %9669 = vmatpush1.bf16.msra.mxu0 0
  %9670 = vmatprep.subr.bf16.mxu0 0
  %9671 = vmatpush1.bf16.msra.mxu0 0
  %9672 = vmatprep.subr.bf16.mxu0 0
  %9673 = vmatpush1.bf16.msra.mxu0 0
  %9674 = vmatprep.mubr.bf16.mxu0 0
  %9675 = vmatmul.mubr.bf16.gmra.mrb[0].mxu0 %v9640
  %v9676 = vpop.f32.mrb[0].mxu0
  %v9677 = vadd.f32 %v9595, %v9676
  %v9678 = vpop.f32.mrb[0].mxu0
  %v9679 = vpop.f32.mrb[0].mxu0
  %v9680 = vadd.f32 %v9598, %v9679
  %v9681 = vpop.f32.mrb[0].mxu0
  %9682 = vmatprep.mubr.bf16.mxu0 0
  %9683 = vmatmul.mubr.bf16.gmra.mrb[0].mxu0 %v9552
  %v9684 = vpop.f32.mrb[0].mxu0
  %v9685 = vadd.f32 %v9603, %v9684
  %v9686 = vpop.f32.mrb[0].mxu0
  %v9687 = vpop.f32.mrb[0].mxu0
  %v9688 = vadd.f32 %v9606, %v9687
  %v9689 = vpop.f32.mrb[0].mxu0
  %9690 = vmatprep.mubr.bf16.mxu0 0
  %9691 = vmatmul.mubr.bf16.gmra.mrb[0].mxu0 %v9555
  %v9692 = vpop.f32.mrb[0].mxu0
  %v9693 = vpop.f32.mrb[0].mxu0
  %v9694 = vpop.f32.mrb[0].mxu0
  %v9695 = vpop.f32.mrb[0].mxu0
  %9696 = vdwg.mxu0
  %s9697 = scalar_lea.vmem %s13, 64
  %v9698 = vld [vmem:[%s9697] sm:$0xf]
  %v9699 = vld [vmem:[%s9697 + $0x4] sm:$0xf]
  %v9700 = vld [vmem:[%s9697 + $0x8] sm:$0xf]
  %v9701 = vld [vmem:[%s9697 + $0xc] sm:$0xf]
  %v9702 = vld [vmem:[%s9697 + $0x10] sm:$0xf]
  %v9703 = vld [vmem:[%s9697 + $0x14] sm:$0xf]
  %v9704 = vld [vmem:[%s9697 + $0x18] sm:$0xf]
  %v9705 = vld [vmem:[%s9697 + $0x1c] sm:$0xf]
  %v9714 = vunpack.c.l.b16 %v9698
  %v9715 = vunpack.c.l.b16 %v9699
  %v9716 = vunpack.c.l.b16 %v9700
  %v9717 = vunpack.c.l.b16 %v9701
  %v9718 = vunpack.c.l.b16 %v9702
  %v9719 = vunpack.c.l.b16 %v9703
  %v9720 = vunpack.c.l.b16 %v9704
  %v9721 = vunpack.c.l.b16 %v9705
  %v9722 = vpack.c.b16 %v9715, %v9714
  %v9723 = vpack.c.b16 %v9717, %v9716
  %v9724 = vpack.c.b16 %v9719, %v9718
  %v9725 = vpack.c.b16 %v9721, %v9720
  %v9731 = vsel %vm8947, %v9509, 0
  %9733 = vmatprep.subr.bf16.mxu0 0
  %9734 = vmatpush1.bf16.msra.mxu0 %v9722
  %9735 = vmatprep.subr.bf16.mxu0 0
  %9736 = vmatpush1.bf16.msra.mxu0 %v9723
  %9737 = vmatprep.subr.bf16.mxu0 0
  %9738 = vmatpush1.bf16.msra.mxu0 %v9724
  %9739 = vmatprep.subr.bf16.mxu0 0
  %9740 = vmatpush1.bf16.msra.mxu0 %v9725
  %9741 = vmatprep.subr.bf16.mxu0 0
  %9742 = vmatpush1.bf16.msra.mxu0 0
  %9743 = vmatprep.subr.bf16.mxu0 0
  %9744 = vmatpush1.bf16.msra.mxu0 0
  %9745 = vmatprep.subr.bf16.mxu0 0
  %9746 = vmatpush1.bf16.msra.mxu0 0
  %9747 = vmatprep.subr.bf16.mxu0 0
  %9748 = vmatpush1.bf16.msra.mxu0 0
  %9749 = vmatprep.subr.bf16.mxu0 0
  %9750 = vmatpush1.bf16.msra.mxu0 0
  %9751 = vmatprep.subr.bf16.mxu0 0
  %9752 = vmatpush1.bf16.msra.mxu0 0
  %9753 = vmatprep.subr.bf16.mxu0 0
  %9754 = vmatpush1.bf16.msra.mxu0 0
  %9755 = vmatprep.subr.bf16.mxu0 0
  %9756 = vmatpush1.bf16.msra.mxu0 0
  %9757 = vmatprep.subr.bf16.mxu0 0
  %9758 = vmatpush1.bf16.msra.mxu0 0
  %9759 = vmatprep.subr.bf16.mxu0 0
  %9760 = vmatpush1.bf16.msra.mxu0 0
  %9761 = vmatprep.subr.bf16.mxu0 0
  %9762 = vmatpush1.bf16.msra.mxu0 0
  %9763 = vmatprep.subr.bf16.mxu0 0
  %9764 = vmatpush1.bf16.msra.mxu0 0
  %9765 = vmatprep.mubr.bf16.mxu0 0
  %9766 = vmatmul.mubr.bf16.gmra.mrb[0].mxu0 %v9555
  %v9767 = vpop.f32.mrb[0].mxu0
  %v9768 = vadd.f32 0.0, %v9767
  %v9769 = vpop.f32.mrb[0].mxu0
  %v9770 = vpop.f32.mrb[0].mxu0
  %v9771 = vadd.f32 0.0, %v9770
  %v9772 = vpop.f32.mrb[0].mxu0
  %9773 = vmatprep.mubr.bf16.mxu0 0
  %9774 = vmatmul.mubr.bf16.gmra.mrb[0].mxu0 %v9558
  %v9775 = vpop.f32.mrb[0].mxu0
  %v9776 = vadd.f32 0.0, %v9775
  %v9777 = vpop.f32.mrb[0].mxu0
  %v9778 = vpop.f32.mrb[0].mxu0
  %v9779 = vadd.f32 0.0, %v9778
  %v9780 = vpop.f32.mrb[0].mxu0
  %9781 = vmatprep.mubr.bf16.mxu0 0
  %9782 = vmatmul.mubr.bf16.gmra.mrb[0].mxu0 %v9731
  %v9783 = vpop.f32.mrb[0].mxu0
  %v9784 = vpop.f32.mrb[0].mxu0
  %v9785 = vpop.f32.mrb[0].mxu0
  %v9786 = vpop.f32.mrb[0].mxu0
  %9787 = vdwg.mxu0
  %v9788 = vadd.f32 %v9677, %v9768
  %v9789 = vadd.f32 %v9680, %v9771
  %v9790 = vadd.f32 %v9685, %v9776
  %v9791 = vadd.f32 %v9688, %v9779
  %v9792 = vld [vmem:[%s14] sm:$0x1]
  %v9794 = vlaneseq
  %v9795 = vshrl.u32 %v9794, 7
  %v9796 = vsub.s32 0, %v9795
  %v9797 = vrot.slane %v9792, %v9796
  %v9799 = vmul.f32 %v9788, %v9797
  %v9800 = vmul.f32 %v9789, %v9797
  %v9801 = vmul.f32 %v9790, %v9797
  %v9802 = vmul.f32 %v9791, %v9797
  %v9803 = vld [vmem:[%s15] sm:$0x1]
  %v9805 = vlaneseq
  %v9806 = vshrl.u32 %v9805, 7
  %v9807 = vsub.s32 0, %v9806
  %v9808 = vrot.slane %v9803, %v9807
  %v9810 = vadd.f32 %v9799, %v9808
  %v9811 = vadd.f32 %v9800, %v9808
  %v9812 = vadd.f32 %v9801, %v9808
  %v9813 = vadd.f32 %v9802, %v9808
  %v9814 = vmax.f32 %v9810, 0.0
  %v9815 = vmax.f32 %v9811, 0.0
  %v9816 = vmax.f32 %v9812, 0.0
  %v9817 = vmax.f32 %v9813, 0.0
  %v9818 = vmax.f32 %v9814, %v9816
  %v9819 = vmax.f32 %v9815, %v9817
  %v9820 = vpack.c.bf16 %v9819, %v9818
  %v9822 = vunpack.c.l.b16 %v9820
  %v9823 = vunpack.c.h.b16 %v9820
  %v9824 = vpack.c.b16 %v9822, %v9822
  %v9825 = vpack.c.b16 %v9823, %v9823
  %9828 = vst [vmem:[%s16] sm:$0xf] %v9824
  %9829 = vst [vmem:[%s16 + $0x4] sm:$0xf] %v9825
  // Predicated region
  $region66: #{transformer_model_forward.2} parent=0 // pred_check
    _
  $region67: #{transformer_model_forward.2} parent=0 // pred_check_branch
    %9831 = sbr.rel (0) target = $region69
  $region68: #{transformer_model_forward.2} parent=0 // pred_region
    _
  $region69: #{transformer_model_forward.2} parent=0 // pred_fallthru
    _
  // Predicated region
  $region70: #{transformer_model_forward.2} parent=0 // pred_check
    _
  $region71: #{transformer_model_forward.2} parent=0 // pred_check_branch
    %9833 = sbr.rel (0) target = $region73
  $region72: #{transformer_model_forward.2} parent=0 // pred_region
    _
  $region73: #{transformer_model_forward.2} parent=0 // pred_fallthru
    _

</llo_original>
